<compile_context>
chip_gen: v6e
topology: v6e:2x2x1
jax: 0.10.0
libtpu: 0.0.40
codegen_flags: <defaults>
</compile_context>

<pallas_src>
import functools
import math

import jax
import jax.numpy as jnp
from jax.experimental import pallas as pl
from jax.experimental.pallas import tpu as pltpu

_K = 5          # conv kernel size (both convs)
_P = _K // 2    # 'same' padding

# pltpu.CompilerParams was called TPUCompilerParams in older jax releases.
_CompilerParams = getattr(pltpu, "CompilerParams", None) or getattr(
    pltpu, "TPUCompilerParams")


# ----------------------------------------------------------------------------
# In-kernel helpers.  All operate on 2-D lane-dense (rows = h, cols = w*C + c)
# tiles and use only static slices, concats, matmuls and elementwise ops so
# they lower cleanly through Mosaic.
# ----------------------------------------------------------------------------
def _zero_pad_hw(y, w_in, c, p):
    """(H, W*C) -> (H+2p, (W+2p)*C), zero padded in h and w."""
    h_in = y.shape[0]
    zt = jnp.zeros((p, w_in * c), y.dtype)
    yh = jnp.concatenate([zt, y, zt], axis=0)               # (H+2p, W*C)
    zl = jnp.zeros((h_in + 2 * p, p * c), y.dtype)
    return jnp.concatenate([zl, yh, zl], axis=1)            # (H+2p, (W+2p)*C)


def _conv_rows_mxu(xpad2d, m_mats, bias_row, h_out, w_out, c_out):
    """5x5 'same' conv as K accumulated MXU matmuls.

    xpad2d:   (H+K-1, (W+K-1)*Cin) fp32 padded input, lane-dense (w, c).
    m_mats:   list of K arrays ((W+K-1)*Cin, W*Cout) bf16 block-Toeplitz weights.
    bias_row: (1, W*Cout) fp32 (bias tiled over w).
    returns   (H, W*Cout) fp32.
    """
    acc = jnp.zeros((h_out, w_out * c_out), jnp.float32)
    for kh in range(_K):
        lhs = xpad2d[kh:kh + h_out, :].astype(jnp.bfloat16)
        acc = acc + jnp.dot(lhs, m_mats[kh],
                            preferred_element_type=jnp.float32)
    return acc + bias_row


def _maxpool2x2_relu(y, h_in, w_in, c):
    """2x2 / stride-2 max pool + ReLU on a (H, W*C) lane-dense tile."""
    w2, h2 = w_in // 2, h_in // 2
    wcols = [jnp.maximum(y[:, (2 * j) * c:(2 * j + 1) * c],
                         y[:, (2 * j + 1) * c:(2 * j + 2) * c])
             for j in range(w2)]
    pw = jnp.concatenate(wcols, axis=1)                      # (H, (W/2)*C)
    hrows = [jnp.maximum(pw[2 * i:2 * i + 1, :], pw[2 * i + 1:2 * i + 2, :])
             for i in range(h2)]
    ph = jnp.concatenate(hrows, axis=0)                      # (H/2, (W/2)*C)
    return jnp.maximum(ph, 0.0)


# ----------------------------------------------------------------------------
# Fused forward kernel: one grid step = one tile of B_TILE images.
# ----------------------------------------------------------------------------
def _fused_forward_kernel(x_ref, m1_ref, b1_ref, m2_ref, b2_ref,
                          wf1_ref, bf1_ref, wf2_ref, bf2_ref, o_ref,
                          *, cin, c1, c2, b_tile):
    # Hoist weight loads out of the per-image loop (loaded once per grid step).
    m1 = [m1_ref[k] for k in range(_K)]                      # each (32*cin..,) bf16
    m2 = [m2_ref[k] for k in range(_K)]
    b1 = b1_ref[...]
    b2 = b2_ref[...]

    flats = []
    for b in range(b_tile):
        # conv1 (28x28xCin -> 28x28xC1)
        x = x_ref[b]                                         # (28, 28*Cin) f32
        xp1 = _zero_pad_hw(x, 28, cin, _P)                   # (32, 32*Cin)
        h = _conv_rows_mxu(xp1, m1, b1, 28, 28, c1)          # (28, 28*C1)
        # maxpool 2x2 + relu
        h = _maxpool2x2_relu(h, 28, 28, c1)                  # (14, 14*C1)
        # conv2 (14x14xC1 -> 14x14xC2)
        xp2 = _zero_pad_hw(h, 14, c1, _P)                    # (18, 18*C1)
        h = _conv_rows_mxu(xp2, m2, b2, 14, 14, c2)          # (14, 14*C2)
        # maxpool 2x2 + relu
        h = _maxpool2x2_relu(h, 14, 14, c2)                  # (7, 7*C2)
        # flatten in (h, w, c) order; w_fc1 rows were permuted at pack time.
        flats.append(
            jnp.concatenate([h[r:r + 1, :] for r in range(7)], axis=1))
    flat = jnp.concatenate(flats, axis=0)                    # (B_TILE, 7*7*C2)

    # fc1 + relu  (batched over the tile -> one MXU matmul)
    h1 = jnp.dot(flat.astype(jnp.bfloat16), wf1_ref[...],
                 preferred_element_type=jnp.float32) + bf1_ref[...]
    h1 = jnp.maximum(h1, 0.0)
    # fc_logits + softmax
    logits = jnp.dot(h1.astype(jnp.bfloat16), wf2_ref[...],
                     preferred_element_type=jnp.float32) + bf2_ref[...]
    m = jnp.max(logits, axis=-1, keepdims=True)
    e = jnp.exp(logits - m)
    o_ref[...] = e * pl.reciprocal(jnp.sum(e, axis=-1, keepdims=True))


def forward(x_nchw, kp, *, b_tile=8):
    """Full CovolutionalModel forward.

    x_nchw: (N, Cin, 28, 28).  Returns (N, class_count) softmax probabilities.
    """
    n, cin, himg, wimg = x_nchw.shape
    assert (himg, wimg) == (28, 28), "module's fc1 assumes 28x28 inputs"
    c1 = kp["b1"].shape[1] // 28
    c2 = kp["b2"].shape[1] // 14
    nc = kp["bf2"].shape[1]

    # Choose the batch tile: full batch if it fits in one step, otherwise a
    # multiple of 8 (keeps the (sublane) output-block dim layout friendly).
    if n <= b_tile:
        b_tile = n
    else:
        b_tile = max(8, (b_tile // 8) * 8)
    n_pad = pl.cdiv(n, b_tile) * b_tile

    # NCHW -> lane-dense (N, H, W*Cin)
    x = jnp.transpose(x_nchw, (0, 2, 3, 1)).reshape(n, 28, 28 * cin)
    x = x.astype(jnp.float32)
    if n_pad != n:
        x = jnp.pad(x, ((0, n_pad - n), (0, 0), (0, 0)))

    kern = functools.partial(_fused_forward_kernel,
                             cin=cin, c1=c1, c2=c2, b_tile=b_tile)
    out = pl.pallas_call(
        kern,
        out_shape=jax.ShapeDtypeStruct((n_pad, nc), jnp.float32),
        grid=(n_pad // b_tile,),
        in_specs=[
            pl.BlockSpec((b_tile, 28, 28 * cin), lambda i: (i, 0, 0)),
            pl.BlockSpec(kp["m1"].shape, lambda i: (0, 0, 0)),
            pl.BlockSpec(kp["b1"].shape, lambda i: (0, 0)),
            pl.BlockSpec(kp["m2"].shape, lambda i: (0, 0, 0)),
            pl.BlockSpec(kp["b2"].shape, lambda i: (0, 0)),
            pl.BlockSpec(kp["wf1"].shape, lambda i: (0, 0)),
            pl.BlockSpec(kp["bf1"].shape, lambda i: (0, 0)),
            pl.BlockSpec(kp["wf2"].shape, lambda i: (0, 0)),
            pl.BlockSpec(kp["bf2"].shape, lambda i: (0, 0)),
        ],
        out_specs=pl.BlockSpec((b_tile, nc), lambda i: (i, 0)),
        compiler_params=_CompilerParams(dimension_semantics=("parallel",)),
    )(x, kp["m1"], kp["b1"], kp["m2"], kp["b2"],
      kp["wf1"], kp["bf1"], kp["wf2"], kp["bf2"])
    return out[:n]


# ----------------------------------------------------------------------------
# Parameter init (PyTorch reset_parameters semantics) and one-time packing.
# ----------------------------------------------------------------------------
def init_params(key, in_channels, conv1_width, conv2_width, fc1_width,
                class_count, k=_K):
    k1, k2, k3, k4, k5 = jax.random.split(key, 5)
    std1 = math.sqrt(2.0 / (in_channels * k * k))
    std2 = math.sqrt(2.0 / (conv1_width * k * k))
    fc1_in = 7 * 7 * conv2_width
    std3 = math.sqrt(2.0 / fc1_in)
    bound = 1.0 / math.sqrt(fc1_width)
    return {
        # PyTorch layouts: conv (Cout, Cin, K, K), linear (out, in)
        "w_conv1": jax.random.normal(k1, (conv1_width, in_channels, k, k),
                                     jnp.float32) * std1,
        "b_conv1": jnp.zeros((conv1_width,), jnp.float32),
        "w_conv2": jax.random.normal(k2, (conv2_width, conv1_width, k, k),
                                     jnp.float32) * std2,
        "b_conv2": jnp.zeros((conv2_width,), jnp.float32),
        "w_fc1": jax.random.normal(k3, (fc1_width, fc1_in), jnp.float32) * std3,
        "b_fc1": jnp.zeros((fc1_width,), jnp.float32),
        "w_fc2": jax.random.uniform(k4, (class_count, fc1_width), jnp.float32,
                                    -bound, bound),
        "b_fc2": jax.random.uniform(k5, (class_count,), jnp.float32,
                                    -bound, bound),
    }


def _conv_block_toeplitz(w_oikk, w_out):
    """(Cout, Cin, K, K) torch weights -> (K, (W+K-1)*Cin, W*Cout) bf16 matrices
    so that conv(x) row h = sum_kh  xpad[h+kh, :] @ M[kh]  in (w, c) lane order."""
    w = jnp.transpose(w_oikk, (2, 3, 1, 0))                  # (kh, kw, Cin, Cout)
    kk, _, cin, cout = w.shape
    wp = w_out + kk - 1
    kwi = jnp.arange(kk)[:, None, None]
    wpi = jnp.arange(wp)[None, :, None]
    wi = jnp.arange(w_out)[None, None, :]
    t = (wpi == wi + kwi).astype(w.dtype)                    # (kw, wp, w) selector
    m = jnp.einsum("hkio,kpw->hpiwo", w, t)                  # (kh, wp, Cin, w, Cout)
    return m.reshape(kk, wp * cin, w_out * cout).astype(jnp.bfloat16)


def pack_params(p):
    """One-time preprocessing of torch-layout params into kernel operands."""
    c1 = p["w_conv1"].shape[0]
    c2 = p["w_conv2"].shape[0]
    f1 = p["w_fc1"].shape[0]
    nc = p["w_fc2"].shape[0]
    # fc1 rows permuted from torch (c, h, w) flatten order to our (h, w, c) order
    wf1 = p["w_fc1"].reshape(f1, c2, 7, 7)
    wf1 = jnp.transpose(wf1, (2, 3, 1, 0)).reshape(7 * 7 * c2, f1)
    return {
        "m1": _conv_block_toeplitz(p["w_conv1"], 28),
        "b1": jnp.tile(p["b_conv1"], 28).reshape(1, 28 * c1).astype(jnp.float32),
        "m2": _conv_block_toeplitz(p["w_conv2"], 14),
        "b2": jnp.tile(p["b_conv2"], 14).reshape(1, 14 * c2).astype(jnp.float32),
        "wf1": wf1.astype(jnp.bfloat16),
        "bf1": p["b_fc1"].reshape(1, f1).astype(jnp.float32),
        "wf2": jnp.transpose(p["w_fc2"]).astype(jnp.bfloat16),
        "bf2": p["b_fc2"].reshape(1, nc).astype(jnp.float32),
    }


# ----------------------------------------------------------------------------
# Pure-JAX reference (fp32) for validation.
# ----------------------------------------------------------------------------
def reference_forward(x_nchw, p):
    x = x_nchw.astype(jnp.float32)
    dn = ("NCHW", "OIHW", "NCHW")
    h = jax.lax.conv_general_dilated(x, p["w_conv1"], (1, 1), "SAME",
                                     dimension_numbers=dn)
    h = h + p["b_conv1"].reshape(1, -1, 1, 1)
    h = jax.lax.reduce_window(h, -jnp.inf, jax.lax.max,
                              (1, 1, 2, 2), (1, 1, 2, 2), "VALID")
    h = jnp.maximum(h, 0.0)
    h = jax.lax.conv_general_dilated(h, p["w_conv2"], (1, 1), "SAME",
                                     dimension_numbers=dn)
    h = h + p["b_conv2"].reshape(1, -1, 1, 1)
    h = jax.lax.reduce_window(h, -jnp.inf, jax.lax.max,
                              (1, 1, 2, 2), (1, 1, 2, 2), "VALID")
    h = jnp.maximum(h, 0.0)
    h = h.reshape(h.shape[0], -1)                            # torch NCHW flatten
    h = jnp.maximum(h @ p["w_fc1"].T + p["b_fc1"], 0.0)
    logits = h @ p["w_fc2"].T + p["b_fc2"]
    return jax.nn.softmax(logits, axis=1)


if __name__ == "__main__":
    # Module hyper-params (fc1 expects 7*7*32 -> 28x28 input, conv2_width=32).
    in_channels, conv1_width, conv2_width = 1, 16, 32
    fc1_width, class_count = 64, 10
    N, H, W = 2, 28, 28

    key = jax.random.PRNGKey(0)
    pkey, xkey = jax.random.split(key)
    params = init_params(pkey, in_channels, conv1_width, conv2_width,
                         fc1_width, class_count)
    kparams = pack_params(params)
    x = jax.random.normal(xkey, (N, in_channels, H, W), dtype=jnp.float32)

    probs = forward(x, kparams)
    probs = jax.block_until_ready(probs)

    assert probs.shape == (N, class_count)
    assert bool(jnp.all(jnp.isfinite(probs)))
    assert bool(jnp.allclose(jnp.sum(probs, axis=1), 1.0, atol=1e-4))

    # Validate against the fp32 pure-JAX reference (bf16 MXU operands -> loose tol).
    ref = jax.block_until_ready(reference_forward(x, params))
    max_err = float(jnp.max(jnp.abs(probs - ref)))
    assert max_err < 2e-2, f"mismatch vs reference: max |diff| = {max_err}"

    print("KERNEL_OK")
</pallas_src>

<mosaic_0001>
module attributes {stable_mosaic.version = 11 : i64} {
  func.func @_fused_forward_kernel(%arg0: i32, %arg1: memref<2x28x28xf32, #tpu.memory_space<vmem>>, %arg2: memref<5x32x448xbf16, #tpu.memory_space<vmem>>, %arg3: memref<1x448xf32, #tpu.memory_space<vmem>>, %arg4: memref<5x288x448xbf16, #tpu.memory_space<vmem>>, %arg5: memref<1x448xf32, #tpu.memory_space<vmem>>, %arg6: memref<1568x64xbf16, #tpu.memory_space<vmem>>, %arg7: memref<1x64xf32, #tpu.memory_space<vmem>>, %arg8: memref<64x10xbf16, #tpu.memory_space<vmem>>, %arg9: memref<1x10xf32, #tpu.memory_space<vmem>>, %arg10: memref<2x10xf32, #tpu.memory_space<vmem>>) attributes {dimension_semantics = [#tpu.dimension_semantics<parallel>], iteration_bounds = array<i64: 1>, scalar_prefetch = 0 : i64, scratch_operands = 0 : i64, tpu.core_type = #tpu.core_type<tc>, window_params = [{transform_indices = @transform_0, window_bounds = array<i64: 2, 28, 28>}, {pipeline_mode = #tpu.pipeline_mode<synchronous>, transform_indices = @transform_1, window_bounds = array<i64: 5, 32, 448>}, {pipeline_mode = #tpu.pipeline_mode<synchronous>, transform_indices = @transform_2, window_bounds = array<i64: 1, 448>}, {pipeline_mode = #tpu.pipeline_mode<synchronous>, transform_indices = @transform_3, window_bounds = array<i64: 5, 288, 448>}, {pipeline_mode = #tpu.pipeline_mode<synchronous>, transform_indices = @transform_4, window_bounds = array<i64: 1, 448>}, {pipeline_mode = #tpu.pipeline_mode<synchronous>, transform_indices = @transform_5, window_bounds = array<i64: 1568, 64>}, {pipeline_mode = #tpu.pipeline_mode<synchronous>, transform_indices = @transform_6, window_bounds = array<i64: 1, 64>}, {pipeline_mode = #tpu.pipeline_mode<synchronous>, transform_indices = @transform_7, window_bounds = array<i64: 64, 10>}, {pipeline_mode = #tpu.pipeline_mode<synchronous>, transform_indices = @transform_8, window_bounds = array<i64: 1, 10>}, {transform_indices = @transform_9, window_bounds = array<i64: 2, 10>}]} {
    %c0 = arith.constant 0 : index
    %c0_0 = arith.constant 0 : index
    %c0_1 = arith.constant 0 : index
    %0 = vector.load %arg2[%c0, %c0_0, %c0_1] : memref<5x32x448xbf16, #tpu.memory_space<vmem>>, vector<1x32x448xbf16>
    %1 = vector.shape_cast %0 : vector<1x32x448xbf16> to vector<32x448xbf16>
    %c1 = arith.constant 1 : index
    %c0_2 = arith.constant 0 : index
    %c0_3 = arith.constant 0 : index
    %2 = vector.load %arg2[%c1, %c0_2, %c0_3] : memref<5x32x448xbf16, #tpu.memory_space<vmem>>, vector<1x32x448xbf16>
    %3 = vector.shape_cast %2 : vector<1x32x448xbf16> to vector<32x448xbf16>
    %c2 = arith.constant 2 : index
    %c0_4 = arith.constant 0 : index
    %c0_5 = arith.constant 0 : index
    %4 = vector.load %arg2[%c2, %c0_4, %c0_5] : memref<5x32x448xbf16, #tpu.memory_space<vmem>>, vector<1x32x448xbf16>
    %5 = vector.shape_cast %4 : vector<1x32x448xbf16> to vector<32x448xbf16>
    %c3 = arith.constant 3 : index
    %c0_6 = arith.constant 0 : index
    %c0_7 = arith.constant 0 : index
    %6 = vector.load %arg2[%c3, %c0_6, %c0_7] : memref<5x32x448xbf16, #tpu.memory_space<vmem>>, vector<1x32x448xbf16>
    %7 = vector.shape_cast %6 : vector<1x32x448xbf16> to vector<32x448xbf16>
    %c4 = arith.constant 4 : index
    %c0_8 = arith.constant 0 : index
    %c0_9 = arith.constant 0 : index
    %8 = vector.load %arg2[%c4, %c0_8, %c0_9] : memref<5x32x448xbf16, #tpu.memory_space<vmem>>, vector<1x32x448xbf16>
    %9 = vector.shape_cast %8 : vector<1x32x448xbf16> to vector<32x448xbf16>
    %c0_10 = arith.constant 0 : index
    %c0_11 = arith.constant 0 : index
    %c0_12 = arith.constant 0 : index
    %10 = vector.load %arg4[%c0_10, %c0_11, %c0_12] : memref<5x288x448xbf16, #tpu.memory_space<vmem>>, vector<1x288x448xbf16>
    %11 = vector.shape_cast %10 : vector<1x288x448xbf16> to vector<288x448xbf16>
    %c1_13 = arith.constant 1 : index
    %c0_14 = arith.constant 0 : index
    %c0_15 = arith.constant 0 : index
    %12 = vector.load %arg4[%c1_13, %c0_14, %c0_15] : memref<5x288x448xbf16, #tpu.memory_space<vmem>>, vector<1x288x448xbf16>
    %13 = vector.shape_cast %12 : vector<1x288x448xbf16> to vector<288x448xbf16>
    %c2_16 = arith.constant 2 : index
    %c0_17 = arith.constant 0 : index
    %c0_18 = arith.constant 0 : index
    %14 = vector.load %arg4[%c2_16, %c0_17, %c0_18] : memref<5x288x448xbf16, #tpu.memory_space<vmem>>, vector<1x288x448xbf16>
    %15 = vector.shape_cast %14 : vector<1x288x448xbf16> to vector<288x448xbf16>
    %c3_19 = arith.constant 3 : index
    %c0_20 = arith.constant 0 : index
    %c0_21 = arith.constant 0 : index
    %16 = vector.load %arg4[%c3_19, %c0_20, %c0_21] : memref<5x288x448xbf16, #tpu.memory_space<vmem>>, vector<1x288x448xbf16>
    %17 = vector.shape_cast %16 : vector<1x288x448xbf16> to vector<288x448xbf16>
    %c4_22 = arith.constant 4 : index
    %c0_23 = arith.constant 0 : index
    %c0_24 = arith.constant 0 : index
    %18 = vector.load %arg4[%c4_22, %c0_23, %c0_24] : memref<5x288x448xbf16, #tpu.memory_space<vmem>>, vector<1x288x448xbf16>
    %19 = vector.shape_cast %18 : vector<1x288x448xbf16> to vector<288x448xbf16>
    %c0_25 = arith.constant 0 : index
    %c0_26 = arith.constant 0 : index
    %20 = vector.load %arg3[%c0_25, %c0_26] : memref<1x448xf32, #tpu.memory_space<vmem>>, vector<1x448xf32>
    %c0_27 = arith.constant 0 : index
    %c0_28 = arith.constant 0 : index
    %21 = vector.load %arg5[%c0_27, %c0_28] : memref<1x448xf32, #tpu.memory_space<vmem>>, vector<1x448xf32>
    %c0_29 = arith.constant 0 : index
    %c0_30 = arith.constant 0 : index
    %c0_31 = arith.constant 0 : index
    %22 = vector.load %arg1[%c0_29, %c0_30, %c0_31] : memref<2x28x28xf32, #tpu.memory_space<vmem>>, vector<1x28x28xf32>
    %23 = vector.shape_cast %22 : vector<1x28x28xf32> to vector<28x28xf32>
    %cst = arith.constant 0.000000e+00 : f32
    %24 = vector.broadcast %cst : f32 to vector<2x28xf32>
    %25 = tpu.concatenate %24, %23, %24 in 0 : vector<2x28xf32>, vector<28x28xf32>, vector<2x28xf32> -> vector<32x28xf32>
    %cst_32 = arith.constant 0.000000e+00 : f32
    %26 = vector.broadcast %cst_32 : f32 to vector<32x2xf32>
    %27 = tpu.concatenate %26, %25, %26 in 1 : vector<32x2xf32>, vector<32x28xf32>, vector<32x2xf32> -> vector<32x32xf32>
    %cst_33 = arith.constant 0.000000e+00 : f32
    %28 = vector.broadcast %cst_33 : f32 to vector<28x448xf32>
    %29 = vector.extract_strided_slice %27 {offsets = [0, 0], sizes = [28, 32], strides = [1, 1]} : vector<32x32xf32> to vector<28x32xf32>
    %30 = arith.truncf %29 : vector<28x32xf32> to vector<28x32xbf16>
    %cst_34 = arith.constant dense<0.000000e+00> : vector<28x448xf32>
    %31 = tpu.matmul %30, %1, %cst_34 {dimension_numbers = #tpu.dot_dimension_numbers<[1], [0], [0], [1], [0, 0, 1, 1], [], []>} : vector<28x32xbf16>, vector<32x448xbf16>, vector<28x448xf32> -> vector<28x448xf32>
    %32 = arith.addf %28, %31 : vector<28x448xf32>
    %33 = vector.extract_strided_slice %27 {offsets = [1, 0], sizes = [28, 32], strides = [1, 1]} : vector<32x32xf32> to vector<28x32xf32>
    %34 = arith.truncf %33 : vector<28x32xf32> to vector<28x32xbf16>
    %cst_35 = arith.constant dense<0.000000e+00> : vector<28x448xf32>
    %35 = tpu.matmul %34, %3, %cst_35 {dimension_numbers = #tpu.dot_dimension_numbers<[1], [0], [0], [1], [0, 0, 1, 1], [], []>} : vector<28x32xbf16>, vector<32x448xbf16>, vector<28x448xf32> -> vector<28x448xf32>
    %36 = arith.addf %32, %35 : vector<28x448xf32>
    %37 = vector.extract_strided_slice %27 {offsets = [2, 0], sizes = [28, 32], strides = [1, 1]} : vector<32x32xf32> to vector<28x32xf32>
    %38 = arith.truncf %37 : vector<28x32xf32> to vector<28x32xbf16>
    %cst_36 = arith.constant dense<0.000000e+00> : vector<28x448xf32>
    %39 = tpu.matmul %38, %5, %cst_36 {dimension_numbers = #tpu.dot_dimension_numbers<[1], [0], [0], [1], [0, 0, 1, 1], [], []>} : vector<28x32xbf16>, vector<32x448xbf16>, vector<28x448xf32> -> vector<28x448xf32>
    %40 = arith.addf %36, %39 : vector<28x448xf32>
    %41 = vector.extract_strided_slice %27 {offsets = [3, 0], sizes = [28, 32], strides = [1, 1]} : vector<32x32xf32> to vector<28x32xf32>
    %42 = arith.truncf %41 : vector<28x32xf32> to vector<28x32xbf16>
    %cst_37 = arith.constant dense<0.000000e+00> : vector<28x448xf32>
    %43 = tpu.matmul %42, %7, %cst_37 {dimension_numbers = #tpu.dot_dimension_numbers<[1], [0], [0], [1], [0, 0, 1, 1], [], []>} : vector<28x32xbf16>, vector<32x448xbf16>, vector<28x448xf32> -> vector<28x448xf32>
    %44 = arith.addf %40, %43 : vector<28x448xf32>
    %45 = vector.extract_strided_slice %27 {offsets = [4, 0], sizes = [28, 32], strides = [1, 1]} : vector<32x32xf32> to vector<28x32xf32>
    %46 = arith.truncf %45 : vector<28x32xf32> to vector<28x32xbf16>
    %cst_38 = arith.constant dense<0.000000e+00> : vector<28x448xf32>
    %47 = tpu.matmul %46, %9, %cst_38 {dimension_numbers = #tpu.dot_dimension_numbers<[1], [0], [0], [1], [0, 0, 1, 1], [], []>} : vector<28x32xbf16>, vector<32x448xbf16>, vector<28x448xf32> -> vector<28x448xf32>
    %48 = arith.addf %44, %47 : vector<28x448xf32>
    %49 = vector.broadcast %20 : vector<1x448xf32> to vector<28x448xf32>
    %50 = arith.addf %48, %49 : vector<28x448xf32>
    %51 = vector.extract_strided_slice %50 {offsets = [0, 0], sizes = [28, 16], strides = [1, 1]} : vector<28x448xf32> to vector<28x16xf32>
    %52 = vector.extract_strided_slice %50 {offsets = [0, 16], sizes = [28, 16], strides = [1, 1]} : vector<28x448xf32> to vector<28x16xf32>
    %53 = arith.maximumf %51, %52 : vector<28x16xf32>
    %54 = vector.extract_strided_slice %50 {offsets = [0, 32], sizes = [28, 16], strides = [1, 1]} : vector<28x448xf32> to vector<28x16xf32>
    %55 = vector.extract_strided_slice %50 {offsets = [0, 48], sizes = [28, 16], strides = [1, 1]} : vector<28x448xf32> to vector<28x16xf32>
    %56 = arith.maximumf %54, %55 : vector<28x16xf32>
    %57 = vector.extract_strided_slice %50 {offsets = [0, 64], sizes = [28, 16], strides = [1, 1]} : vector<28x448xf32> to vector<28x16xf32>
    %58 = vector.extract_strided_slice %50 {offsets = [0, 80], sizes = [28, 16], strides = [1, 1]} : vector<28x448xf32> to vector<28x16xf32>
    %59 = arith.maximumf %57, %58 : vector<28x16xf32>
    %60 = vector.extract_strided_slice %50 {offsets = [0, 96], sizes = [28, 16], strides = [1, 1]} : vector<28x448xf32> to vector<28x16xf32>
    %61 = vector.extract_strided_slice %50 {offsets = [0, 112], sizes = [28, 16], strides = [1, 1]} : vector<28x448xf32> to vector<28x16xf32>
    %62 = arith.maximumf %60, %61 : vector<28x16xf32>
    %63 = vector.extract_strided_slice %50 {offsets = [0, 128], sizes = [28, 16], strides = [1, 1]} : vector<28x448xf32> to vector<28x16xf32>
    %64 = vector.extract_strided_slice %50 {offsets = [0, 144], sizes = [28, 16], strides = [1, 1]} : vector<28x448xf32> to vector<28x16xf32>
    %65 = arith.maximumf %63, %64 : vector<28x16xf32>
    %66 = vector.extract_strided_slice %50 {offsets = [0, 160], sizes = [28, 16], strides = [1, 1]} : vector<28x448xf32> to vector<28x16xf32>
    %67 = vector.extract_strided_slice %50 {offsets = [0, 176], sizes = [28, 16], strides = [1, 1]} : vector<28x448xf32> to vector<28x16xf32>
    %68 = arith.maximumf %66, %67 : vector<28x16xf32>
    %69 = vector.extract_strided_slice %50 {offsets = [0, 192], sizes = [28, 16], strides = [1, 1]} : vector<28x448xf32> to vector<28x16xf32>
    %70 = vector.extract_strided_slice %50 {offsets = [0, 208], sizes = [28, 16], strides = [1, 1]} : vector<28x448xf32> to vector<28x16xf32>
    %71 = arith.maximumf %69, %70 : vector<28x16xf32>
    %72 = vector.extract_strided_slice %50 {offsets = [0, 224], sizes = [28, 16], strides = [1, 1]} : vector<28x448xf32> to vector<28x16xf32>
    %73 = vector.extract_strided_slice %50 {offsets = [0, 240], sizes = [28, 16], strides = [1, 1]} : vector<28x448xf32> to vector<28x16xf32>
    %74 = arith.maximumf %72, %73 : vector<28x16xf32>
    %75 = vector.extract_strided_slice %50 {offsets = [0, 256], sizes = [28, 16], strides = [1, 1]} : vector<28x448xf32> to vector<28x16xf32>
    %76 = vector.extract_strided_slice %50 {offsets = [0, 272], sizes = [28, 16], strides = [1, 1]} : vector<28x448xf32> to vector<28x16xf32>
    %77 = arith.maximumf %75, %76 : vector<28x16xf32>
    %78 = vector.extract_strided_slice %50 {offsets = [0, 288], sizes = [28, 16], strides = [1, 1]} : vector<28x448xf32> to vector<28x16xf32>
    %79 = vector.extract_strided_slice %50 {offsets = [0, 304], sizes = [28, 16], strides = [1, 1]} : vector<28x448xf32> to vector<28x16xf32>
    %80 = arith.maximumf %78, %79 : vector<28x16xf32>
    %81 = vector.extract_strided_slice %50 {offsets = [0, 320], sizes = [28, 16], strides = [1, 1]} : vector<28x448xf32> to vector<28x16xf32>
    %82 = vector.extract_strided_slice %50 {offsets = [0, 336], sizes = [28, 16], strides = [1, 1]} : vector<28x448xf32> to vector<28x16xf32>
    %83 = arith.maximumf %81, %82 : vector<28x16xf32>
    %84 = vector.extract_strided_slice %50 {offsets = [0, 352], sizes = [28, 16], strides = [1, 1]} : vector<28x448xf32> to vector<28x16xf32>
    %85 = vector.extract_strided_slice %50 {offsets = [0, 368], sizes = [28, 16], strides = [1, 1]} : vector<28x448xf32> to vector<28x16xf32>
    %86 = arith.maximumf %84, %85 : vector<28x16xf32>
    %87 = vector.extract_strided_slice %50 {offsets = [0, 384], sizes = [28, 16], strides = [1, 1]} : vector<28x448xf32> to vector<28x16xf32>
    %88 = vector.extract_strided_slice %50 {offsets = [0, 400], sizes = [28, 16], strides = [1, 1]} : vector<28x448xf32> to vector<28x16xf32>
    %89 = arith.maximumf %87, %88 : vector<28x16xf32>
    %90 = vector.extract_strided_slice %50 {offsets = [0, 416], sizes = [28, 16], strides = [1, 1]} : vector<28x448xf32> to vector<28x16xf32>
    %91 = vector.extract_strided_slice %50 {offsets = [0, 432], sizes = [28, 16], strides = [1, 1]} : vector<28x448xf32> to vector<28x16xf32>
    %92 = arith.maximumf %90, %91 : vector<28x16xf32>
    %93 = tpu.concatenate %53, %56, %59, %62, %65, %68, %71, %74, %77, %80, %83, %86, %89, %92 in 1 : vector<28x16xf32>, vector<28x16xf32>, vector<28x16xf32>, vector<28x16xf32>, vector<28x16xf32>, vector<28x16xf32>, vector<28x16xf32>, vector<28x16xf32>, vector<28x16xf32>, vector<28x16xf32>, vector<28x16xf32>, vector<28x16xf32>, vector<28x16xf32>, vector<28x16xf32> -> vector<28x224xf32>
    %94 = vector.extract_strided_slice %93 {offsets = [0, 0], sizes = [1, 224], strides = [1, 1]} : vector<28x224xf32> to vector<1x224xf32>
    %95 = vector.extract_strided_slice %93 {offsets = [1, 0], sizes = [1, 224], strides = [1, 1]} : vector<28x224xf32> to vector<1x224xf32>
    %96 = arith.maximumf %94, %95 : vector<1x224xf32>
    %97 = vector.extract_strided_slice %93 {offsets = [2, 0], sizes = [1, 224], strides = [1, 1]} : vector<28x224xf32> to vector<1x224xf32>
    %98 = vector.extract_strided_slice %93 {offsets = [3, 0], sizes = [1, 224], strides = [1, 1]} : vector<28x224xf32> to vector<1x224xf32>
    %99 = arith.maximumf %97, %98 : vector<1x224xf32>
    %100 = vector.extract_strided_slice %93 {offsets = [4, 0], sizes = [1, 224], strides = [1, 1]} : vector<28x224xf32> to vector<1x224xf32>
    %101 = vector.extract_strided_slice %93 {offsets = [5, 0], sizes = [1, 224], strides = [1, 1]} : vector<28x224xf32> to vector<1x224xf32>
    %102 = arith.maximumf %100, %101 : vector<1x224xf32>
    %103 = vector.extract_strided_slice %93 {offsets = [6, 0], sizes = [1, 224], strides = [1, 1]} : vector<28x224xf32> to vector<1x224xf32>
    %104 = vector.extract_strided_slice %93 {offsets = [7, 0], sizes = [1, 224], strides = [1, 1]} : vector<28x224xf32> to vector<1x224xf32>
    %105 = arith.maximumf %103, %104 : vector<1x224xf32>
    %106 = vector.extract_strided_slice %93 {offsets = [8, 0], sizes = [1, 224], strides = [1, 1]} : vector<28x224xf32> to vector<1x224xf32>
    %107 = vector.extract_strided_slice %93 {offsets = [9, 0], sizes = [1, 224], strides = [1, 1]} : vector<28x224xf32> to vector<1x224xf32>
    %108 = arith.maximumf %106, %107 : vector<1x224xf32>
    %109 = vector.extract_strided_slice %93 {offsets = [10, 0], sizes = [1, 224], strides = [1, 1]} : vector<28x224xf32> to vector<1x224xf32>
    %110 = vector.extract_strided_slice %93 {offsets = [11, 0], sizes = [1, 224], strides = [1, 1]} : vector<28x224xf32> to vector<1x224xf32>
    %111 = arith.maximumf %109, %110 : vector<1x224xf32>
    %112 = vector.extract_strided_slice %93 {offsets = [12, 0], sizes = [1, 224], strides = [1, 1]} : vector<28x224xf32> to vector<1x224xf32>
    %113 = vector.extract_strided_slice %93 {offsets = [13, 0], sizes = [1, 224], strides = [1, 1]} : vector<28x224xf32> to vector<1x224xf32>
    %114 = arith.maximumf %112, %113 : vector<1x224xf32>
    %115 = vector.extract_strided_slice %93 {offsets = [14, 0], sizes = [1, 224], strides = [1, 1]} : vector<28x224xf32> to vector<1x224xf32>
    %116 = vector.extract_strided_slice %93 {offsets = [15, 0], sizes = [1, 224], strides = [1, 1]} : vector<28x224xf32> to vector<1x224xf32>
    %117 = arith.maximumf %115, %116 : vector<1x224xf32>
    %118 = vector.extract_strided_slice %93 {offsets = [16, 0], sizes = [1, 224], strides = [1, 1]} : vector<28x224xf32> to vector<1x224xf32>
    %119 = vector.extract_strided_slice %93 {offsets = [17, 0], sizes = [1, 224], strides = [1, 1]} : vector<28x224xf32> to vector<1x224xf32>
    %120 = arith.maximumf %118, %119 : vector<1x224xf32>
    %121 = vector.extract_strided_slice %93 {offsets = [18, 0], sizes = [1, 224], strides = [1, 1]} : vector<28x224xf32> to vector<1x224xf32>
    %122 = vector.extract_strided_slice %93 {offsets = [19, 0], sizes = [1, 224], strides = [1, 1]} : vector<28x224xf32> to vector<1x224xf32>
    %123 = arith.maximumf %121, %122 : vector<1x224xf32>
    %124 = vector.extract_strided_slice %93 {offsets = [20, 0], sizes = [1, 224], strides = [1, 1]} : vector<28x224xf32> to vector<1x224xf32>
    %125 = vector.extract_strided_slice %93 {offsets = [21, 0], sizes = [1, 224], strides = [1, 1]} : vector<28x224xf32> to vector<1x224xf32>
    %126 = arith.maximumf %124, %125 : vector<1x224xf32>
    %127 = vector.extract_strided_slice %93 {offsets = [22, 0], sizes = [1, 224], strides = [1, 1]} : vector<28x224xf32> to vector<1x224xf32>
    %128 = vector.extract_strided_slice %93 {offsets = [23, 0], sizes = [1, 224], strides = [1, 1]} : vector<28x224xf32> to vector<1x224xf32>
    %129 = arith.maximumf %127, %128 : vector<1x224xf32>
    %130 = vector.extract_strided_slice %93 {offsets = [24, 0], sizes = [1, 224], strides = [1, 1]} : vector<28x224xf32> to vector<1x224xf32>
    %131 = vector.extract_strided_slice %93 {offsets = [25, 0], sizes = [1, 224], strides = [1, 1]} : vector<28x224xf32> to vector<1x224xf32>
    %132 = arith.maximumf %130, %131 : vector<1x224xf32>
    %133 = vector.extract_strided_slice %93 {offsets = [26, 0], sizes = [1, 224], strides = [1, 1]} : vector<28x224xf32> to vector<1x224xf32>
    %134 = vector.extract_strided_slice %93 {offsets = [27, 0], sizes = [1, 224], strides = [1, 1]} : vector<28x224xf32> to vector<1x224xf32>
    %135 = arith.maximumf %133, %134 : vector<1x224xf32>
    %136 = tpu.concatenate %96, %99, %102, %105, %108, %111, %114, %117, %120, %123, %126, %129, %132, %135 in 0 : vector<1x224xf32>, vector<1x224xf32>, vector<1x224xf32>, vector<1x224xf32>, vector<1x224xf32>, vector<1x224xf32>, vector<1x224xf32>, vector<1x224xf32>, vector<1x224xf32>, vector<1x224xf32>, vector<1x224xf32>, vector<1x224xf32>, vector<1x224xf32>, vector<1x224xf32> -> vector<14x224xf32>
    %cst_39 = arith.constant 0.000000e+00 : f32
    %137 = vector.broadcast %cst_39 : f32 to vector<14x224xf32>
    %138 = arith.maximumf %136, %137 : vector<14x224xf32>
    %cst_40 = arith.constant 0.000000e+00 : f32
    %139 = vector.broadcast %cst_40 : f32 to vector<2x224xf32>
    %140 = tpu.concatenate %139, %138, %139 in 0 : vector<2x224xf32>, vector<14x224xf32>, vector<2x224xf32> -> vector<18x224xf32>
    %cst_41 = arith.constant 0.000000e+00 : f32
    %141 = vector.broadcast %cst_41 : f32 to vector<18x32xf32>
    %142 = tpu.concatenate %141, %140, %141 in 1 : vector<18x32xf32>, vector<18x224xf32>, vector<18x32xf32> -> vector<18x288xf32>
    %cst_42 = arith.constant 0.000000e+00 : f32
    %143 = vector.broadcast %cst_42 : f32 to vector<14x448xf32>
    %144 = vector.extract_strided_slice %142 {offsets = [0, 0], sizes = [14, 288], strides = [1, 1]} : vector<18x288xf32> to vector<14x288xf32>
    %145 = arith.truncf %144 : vector<14x288xf32> to vector<14x288xbf16>
    %cst_43 = arith.constant dense<0.000000e+00> : vector<14x448xf32>
    %146 = tpu.matmul %145, %11, %cst_43 {dimension_numbers = #tpu.dot_dimension_numbers<[1], [0], [0], [1], [0, 0, 1, 1], [], []>} : vector<14x288xbf16>, vector<288x448xbf16>, vector<14x448xf32> -> vector<14x448xf32>
    %147 = arith.addf %143, %146 : vector<14x448xf32>
    %148 = vector.extract_strided_slice %142 {offsets = [1, 0], sizes = [14, 288], strides = [1, 1]} : vector<18x288xf32> to vector<14x288xf32>
    %149 = arith.truncf %148 : vector<14x288xf32> to vector<14x288xbf16>
    %cst_44 = arith.constant dense<0.000000e+00> : vector<14x448xf32>
    %150 = tpu.matmul %149, %13, %cst_44 {dimension_numbers = #tpu.dot_dimension_numbers<[1], [0], [0], [1], [0, 0, 1, 1], [], []>} : vector<14x288xbf16>, vector<288x448xbf16>, vector<14x448xf32> -> vector<14x448xf32>
    %151 = arith.addf %147, %150 : vector<14x448xf32>
    %152 = vector.extract_strided_slice %142 {offsets = [2, 0], sizes = [14, 288], strides = [1, 1]} : vector<18x288xf32> to vector<14x288xf32>
    %153 = arith.truncf %152 : vector<14x288xf32> to vector<14x288xbf16>
    %cst_45 = arith.constant dense<0.000000e+00> : vector<14x448xf32>
    %154 = tpu.matmul %153, %15, %cst_45 {dimension_numbers = #tpu.dot_dimension_numbers<[1], [0], [0], [1], [0, 0, 1, 1], [], []>} : vector<14x288xbf16>, vector<288x448xbf16>, vector<14x448xf32> -> vector<14x448xf32>
    %155 = arith.addf %151, %154 : vector<14x448xf32>
    %156 = vector.extract_strided_slice %142 {offsets = [3, 0], sizes = [14, 288], strides = [1, 1]} : vector<18x288xf32> to vector<14x288xf32>
    %157 = arith.truncf %156 : vector<14x288xf32> to vector<14x288xbf16>
    %cst_46 = arith.constant dense<0.000000e+00> : vector<14x448xf32>
    %158 = tpu.matmul %157, %17, %cst_46 {dimension_numbers = #tpu.dot_dimension_numbers<[1], [0], [0], [1], [0, 0, 1, 1], [], []>} : vector<14x288xbf16>, vector<288x448xbf16>, vector<14x448xf32> -> vector<14x448xf32>
    %159 = arith.addf %155, %158 : vector<14x448xf32>
    %160 = vector.extract_strided_slice %142 {offsets = [4, 0], sizes = [14, 288], strides = [1, 1]} : vector<18x288xf32> to vector<14x288xf32>
    %161 = arith.truncf %160 : vector<14x288xf32> to vector<14x288xbf16>
    %cst_47 = arith.constant dense<0.000000e+00> : vector<14x448xf32>
    %162 = tpu.matmul %161, %19, %cst_47 {dimension_numbers = #tpu.dot_dimension_numbers<[1], [0], [0], [1], [0, 0, 1, 1], [], []>} : vector<14x288xbf16>, vector<288x448xbf16>, vector<14x448xf32> -> vector<14x448xf32>
    %163 = arith.addf %159, %162 : vector<14x448xf32>
    %164 = vector.broadcast %21 : vector<1x448xf32> to vector<14x448xf32>
    %165 = arith.addf %163, %164 : vector<14x448xf32>
    %166 = vector.extract_strided_slice %165 {offsets = [0, 0], sizes = [14, 32], strides = [1, 1]} : vector<14x448xf32> to vector<14x32xf32>
    %167 = vector.extract_strided_slice %165 {offsets = [0, 32], sizes = [14, 32], strides = [1, 1]} : vector<14x448xf32> to vector<14x32xf32>
    %168 = arith.maximumf %166, %167 : vector<14x32xf32>
    %169 = vector.extract_strided_slice %165 {offsets = [0, 64], sizes = [14, 32], strides = [1, 1]} : vector<14x448xf32> to vector<14x32xf32>
    %170 = vector.extract_strided_slice %165 {offsets = [0, 96], sizes = [14, 32], strides = [1, 1]} : vector<14x448xf32> to vector<14x32xf32>
    %171 = arith.maximumf %169, %170 : vector<14x32xf32>
    %172 = vector.extract_strided_slice %165 {offsets = [0, 128], sizes = [14, 32], strides = [1, 1]} : vector<14x448xf32> to vector<14x32xf32>
    %173 = vector.extract_strided_slice %165 {offsets = [0, 160], sizes = [14, 32], strides = [1, 1]} : vector<14x448xf32> to vector<14x32xf32>
    %174 = arith.maximumf %172, %173 : vector<14x32xf32>
    %175 = vector.extract_strided_slice %165 {offsets = [0, 192], sizes = [14, 32], strides = [1, 1]} : vector<14x448xf32> to vector<14x32xf32>
    %176 = vector.extract_strided_slice %165 {offsets = [0, 224], sizes = [14, 32], strides = [1, 1]} : vector<14x448xf32> to vector<14x32xf32>
    %177 = arith.maximumf %175, %176 : vector<14x32xf32>
    %178 = vector.extract_strided_slice %165 {offsets = [0, 256], sizes = [14, 32], strides = [1, 1]} : vector<14x448xf32> to vector<14x32xf32>
    %179 = vector.extract_strided_slice %165 {offsets = [0, 288], sizes = [14, 32], strides = [1, 1]} : vector<14x448xf32> to vector<14x32xf32>
    %180 = arith.maximumf %178, %179 : vector<14x32xf32>
    %181 = vector.extract_strided_slice %165 {offsets = [0, 320], sizes = [14, 32], strides = [1, 1]} : vector<14x448xf32> to vector<14x32xf32>
    %182 = vector.extract_strided_slice %165 {offsets = [0, 352], sizes = [14, 32], strides = [1, 1]} : vector<14x448xf32> to vector<14x32xf32>
    %183 = arith.maximumf %181, %182 : vector<14x32xf32>
    %184 = vector.extract_strided_slice %165 {offsets = [0, 384], sizes = [14, 32], strides = [1, 1]} : vector<14x448xf32> to vector<14x32xf32>
    %185 = vector.extract_strided_slice %165 {offsets = [0, 416], sizes = [14, 32], strides = [1, 1]} : vector<14x448xf32> to vector<14x32xf32>
    %186 = arith.maximumf %184, %185 : vector<14x32xf32>
    %187 = tpu.concatenate %168, %171, %174, %177, %180, %183, %186 in 1 : vector<14x32xf32>, vector<14x32xf32>, vector<14x32xf32>, vector<14x32xf32>, vector<14x32xf32>, vector<14x32xf32>, vector<14x32xf32> -> vector<14x224xf32>
    %188 = vector.extract_strided_slice %187 {offsets = [0, 0], sizes = [1, 224], strides = [1, 1]} : vector<14x224xf32> to vector<1x224xf32>
    %189 = vector.extract_strided_slice %187 {offsets = [1, 0], sizes = [1, 224], strides = [1, 1]} : vector<14x224xf32> to vector<1x224xf32>
    %190 = arith.maximumf %188, %189 : vector<1x224xf32>
    %191 = vector.extract_strided_slice %187 {offsets = [2, 0], sizes = [1, 224], strides = [1, 1]} : vector<14x224xf32> to vector<1x224xf32>
    %192 = vector.extract_strided_slice %187 {offsets = [3, 0], sizes = [1, 224], strides = [1, 1]} : vector<14x224xf32> to vector<1x224xf32>
    %193 = arith.maximumf %191, %192 : vector<1x224xf32>
    %194 = vector.extract_strided_slice %187 {offsets = [4, 0], sizes = [1, 224], strides = [1, 1]} : vector<14x224xf32> to vector<1x224xf32>
    %195 = vector.extract_strided_slice %187 {offsets = [5, 0], sizes = [1, 224], strides = [1, 1]} : vector<14x224xf32> to vector<1x224xf32>
    %196 = arith.maximumf %194, %195 : vector<1x224xf32>
    %197 = vector.extract_strided_slice %187 {offsets = [6, 0], sizes = [1, 224], strides = [1, 1]} : vector<14x224xf32> to vector<1x224xf32>
    %198 = vector.extract_strided_slice %187 {offsets = [7, 0], sizes = [1, 224], strides = [1, 1]} : vector<14x224xf32> to vector<1x224xf32>
    %199 = arith.maximumf %197, %198 : vector<1x224xf32>
    %200 = vector.extract_strided_slice %187 {offsets = [8, 0], sizes = [1, 224], strides = [1, 1]} : vector<14x224xf32> to vector<1x224xf32>
    %201 = vector.extract_strided_slice %187 {offsets = [9, 0], sizes = [1, 224], strides = [1, 1]} : vector<14x224xf32> to vector<1x224xf32>
    %202 = arith.maximumf %200, %201 : vector<1x224xf32>
    %203 = vector.extract_strided_slice %187 {offsets = [10, 0], sizes = [1, 224], strides = [1, 1]} : vector<14x224xf32> to vector<1x224xf32>
    %204 = vector.extract_strided_slice %187 {offsets = [11, 0], sizes = [1, 224], strides = [1, 1]} : vector<14x224xf32> to vector<1x224xf32>
    %205 = arith.maximumf %203, %204 : vector<1x224xf32>
    %206 = vector.extract_strided_slice %187 {offsets = [12, 0], sizes = [1, 224], strides = [1, 1]} : vector<14x224xf32> to vector<1x224xf32>
    %207 = vector.extract_strided_slice %187 {offsets = [13, 0], sizes = [1, 224], strides = [1, 1]} : vector<14x224xf32> to vector<1x224xf32>
    %208 = arith.maximumf %206, %207 : vector<1x224xf32>
    %209 = tpu.concatenate %190, %193, %196, %199, %202, %205, %208 in 0 : vector<1x224xf32>, vector<1x224xf32>, vector<1x224xf32>, vector<1x224xf32>, vector<1x224xf32>, vector<1x224xf32>, vector<1x224xf32> -> vector<7x224xf32>
    %cst_48 = arith.constant 0.000000e+00 : f32
    %210 = vector.broadcast %cst_48 : f32 to vector<7x224xf32>
    %211 = arith.maximumf %209, %210 : vector<7x224xf32>
    %212 = vector.extract_strided_slice %211 {offsets = [0, 0], sizes = [1, 224], strides = [1, 1]} : vector<7x224xf32> to vector<1x224xf32>
    %213 = vector.extract_strided_slice %211 {offsets = [1, 0], sizes = [1, 224], strides = [1, 1]} : vector<7x224xf32> to vector<1x224xf32>
    %214 = vector.extract_strided_slice %211 {offsets = [2, 0], sizes = [1, 224], strides = [1, 1]} : vector<7x224xf32> to vector<1x224xf32>
    %215 = vector.extract_strided_slice %211 {offsets = [3, 0], sizes = [1, 224], strides = [1, 1]} : vector<7x224xf32> to vector<1x224xf32>
    %216 = vector.extract_strided_slice %211 {offsets = [4, 0], sizes = [1, 224], strides = [1, 1]} : vector<7x224xf32> to vector<1x224xf32>
    %217 = vector.extract_strided_slice %211 {offsets = [5, 0], sizes = [1, 224], strides = [1, 1]} : vector<7x224xf32> to vector<1x224xf32>
    %218 = vector.extract_strided_slice %211 {offsets = [6, 0], sizes = [1, 224], strides = [1, 1]} : vector<7x224xf32> to vector<1x224xf32>
    %219 = tpu.concatenate %212, %213, %214, %215, %216, %217, %218 in 1 : vector<1x224xf32>, vector<1x224xf32>, vector<1x224xf32>, vector<1x224xf32>, vector<1x224xf32>, vector<1x224xf32>, vector<1x224xf32> -> vector<1x1568xf32>
    %c1_49 = arith.constant 1 : index
    %c0_50 = arith.constant 0 : index
    %c0_51 = arith.constant 0 : index
    %220 = vector.load %arg1[%c1_49, %c0_50, %c0_51] : memref<2x28x28xf32, #tpu.memory_space<vmem>>, vector<1x28x28xf32>
    %221 = vector.shape_cast %220 : vector<1x28x28xf32> to vector<28x28xf32>
    %cst_52 = arith.constant 0.000000e+00 : f32
    %222 = vector.broadcast %cst_52 : f32 to vector<2x28xf32>
    %223 = tpu.concatenate %222, %221, %222 in 0 : vector<2x28xf32>, vector<28x28xf32>, vector<2x28xf32> -> vector<32x28xf32>
    %cst_53 = arith.constant 0.000000e+00 : f32
    %224 = vector.broadcast %cst_53 : f32 to vector<32x2xf32>
    %225 = tpu.concatenate %224, %223, %224 in 1 : vector<32x2xf32>, vector<32x28xf32>, vector<32x2xf32> -> vector<32x32xf32>
    %cst_54 = arith.constant 0.000000e+00 : f32
    %226 = vector.broadcast %cst_54 : f32 to vector<28x448xf32>
    %227 = vector.extract_strided_slice %225 {offsets = [0, 0], sizes = [28, 32], strides = [1, 1]} : vector<32x32xf32> to vector<28x32xf32>
    %228 = arith.truncf %227 : vector<28x32xf32> to vector<28x32xbf16>
    %cst_55 = arith.constant dense<0.000000e+00> : vector<28x448xf32>
    %229 = tpu.matmul %228, %1, %cst_55 {dimension_numbers = #tpu.dot_dimension_numbers<[1], [0], [0], [1], [0, 0, 1, 1], [], []>} : vector<28x32xbf16>, vector<32x448xbf16>, vector<28x448xf32> -> vector<28x448xf32>
    %230 = arith.addf %226, %229 : vector<28x448xf32>
    %231 = vector.extract_strided_slice %225 {offsets = [1, 0], sizes = [28, 32], strides = [1, 1]} : vector<32x32xf32> to vector<28x32xf32>
    %232 = arith.truncf %231 : vector<28x32xf32> to vector<28x32xbf16>
    %cst_56 = arith.constant dense<0.000000e+00> : vector<28x448xf32>
    %233 = tpu.matmul %232, %3, %cst_56 {dimension_numbers = #tpu.dot_dimension_numbers<[1], [0], [0], [1], [0, 0, 1, 1], [], []>} : vector<28x32xbf16>, vector<32x448xbf16>, vector<28x448xf32> -> vector<28x448xf32>
    %234 = arith.addf %230, %233 : vector<28x448xf32>
    %235 = vector.extract_strided_slice %225 {offsets = [2, 0], sizes = [28, 32], strides = [1, 1]} : vector<32x32xf32> to vector<28x32xf32>
    %236 = arith.truncf %235 : vector<28x32xf32> to vector<28x32xbf16>
    %cst_57 = arith.constant dense<0.000000e+00> : vector<28x448xf32>
    %237 = tpu.matmul %236, %5, %cst_57 {dimension_numbers = #tpu.dot_dimension_numbers<[1], [0], [0], [1], [0, 0, 1, 1], [], []>} : vector<28x32xbf16>, vector<32x448xbf16>, vector<28x448xf32> -> vector<28x448xf32>
    %238 = arith.addf %234, %237 : vector<28x448xf32>
    %239 = vector.extract_strided_slice %225 {offsets = [3, 0], sizes = [28, 32], strides = [1, 1]} : vector<32x32xf32> to vector<28x32xf32>
    %240 = arith.truncf %239 : vector<28x32xf32> to vector<28x32xbf16>
    %cst_58 = arith.constant dense<0.000000e+00> : vector<28x448xf32>
    %241 = tpu.matmul %240, %7, %cst_58 {dimension_numbers = #tpu.dot_dimension_numbers<[1], [0], [0], [1], [0, 0, 1, 1], [], []>} : vector<28x32xbf16>, vector<32x448xbf16>, vector<28x448xf32> -> vector<28x448xf32>
    %242 = arith.addf %238, %241 : vector<28x448xf32>
    %243 = vector.extract_strided_slice %225 {offsets = [4, 0], sizes = [28, 32], strides = [1, 1]} : vector<32x32xf32> to vector<28x32xf32>
    %244 = arith.truncf %243 : vector<28x32xf32> to vector<28x32xbf16>
    %cst_59 = arith.constant dense<0.000000e+00> : vector<28x448xf32>
    %245 = tpu.matmul %244, %9, %cst_59 {dimension_numbers = #tpu.dot_dimension_numbers<[1], [0], [0], [1], [0, 0, 1, 1], [], []>} : vector<28x32xbf16>, vector<32x448xbf16>, vector<28x448xf32> -> vector<28x448xf32>
    %246 = arith.addf %242, %245 : vector<28x448xf32>
    %247 = vector.broadcast %20 : vector<1x448xf32> to vector<28x448xf32>
    %248 = arith.addf %246, %247 : vector<28x448xf32>
    %249 = vector.extract_strided_slice %248 {offsets = [0, 0], sizes = [28, 16], strides = [1, 1]} : vector<28x448xf32> to vector<28x16xf32>
    %250 = vector.extract_strided_slice %248 {offsets = [0, 16], sizes = [28, 16], strides = [1, 1]} : vector<28x448xf32> to vector<28x16xf32>
    %251 = arith.maximumf %249, %250 : vector<28x16xf32>
    %252 = vector.extract_strided_slice %248 {offsets = [0, 32], sizes = [28, 16], strides = [1, 1]} : vector<28x448xf32> to vector<28x16xf32>
    %253 = vector.extract_strided_slice %248 {offsets = [0, 48], sizes = [28, 16], strides = [1, 1]} : vector<28x448xf32> to vector<28x16xf32>
    %254 = arith.maximumf %252, %253 : vector<28x16xf32>
    %255 = vector.extract_strided_slice %248 {offsets = [0, 64], sizes = [28, 16], strides = [1, 1]} : vector<28x448xf32> to vector<28x16xf32>
    %256 = vector.extract_strided_slice %248 {offsets = [0, 80], sizes = [28, 16], strides = [1, 1]} : vector<28x448xf32> to vector<28x16xf32>
    %257 = arith.maximumf %255, %256 : vector<28x16xf32>
    %258 = vector.extract_strided_slice %248 {offsets = [0, 96], sizes = [28, 16], strides = [1, 1]} : vector<28x448xf32> to vector<28x16xf32>
    %259 = vector.extract_strided_slice %248 {offsets = [0, 112], sizes = [28, 16], strides = [1, 1]} : vector<28x448xf32> to vector<28x16xf32>
    %260 = arith.maximumf %258, %259 : vector<28x16xf32>
    %261 = vector.extract_strided_slice %248 {offsets = [0, 128], sizes = [28, 16], strides = [1, 1]} : vector<28x448xf32> to vector<28x16xf32>
    %262 = vector.extract_strided_slice %248 {offsets = [0, 144], sizes = [28, 16], strides = [1, 1]} : vector<28x448xf32> to vector<28x16xf32>
    %263 = arith.maximumf %261, %262 : vector<28x16xf32>
    %264 = vector.extract_strided_slice %248 {offsets = [0, 160], sizes = [28, 16], strides = [1, 1]} : vector<28x448xf32> to vector<28x16xf32>
    %265 = vector.extract_strided_slice %248 {offsets = [0, 176], sizes = [28, 16], strides = [1, 1]} : vector<28x448xf32> to vector<28x16xf32>
    %266 = arith.maximumf %264, %265 : vector<28x16xf32>
    %267 = vector.extract_strided_slice %248 {offsets = [0, 192], sizes = [28, 16], strides = [1, 1]} : vector<28x448xf32> to vector<28x16xf32>
    %268 = vector.extract_strided_slice %248 {offsets = [0, 208], sizes = [28, 16], strides = [1, 1]} : vector<28x448xf32> to vector<28x16xf32>
    %269 = arith.maximumf %267, %268 : vector<28x16xf32>
    %270 = vector.extract_strided_slice %248 {offsets = [0, 224], sizes = [28, 16], strides = [1, 1]} : vector<28x448xf32> to vector<28x16xf32>
    %271 = vector.extract_strided_slice %248 {offsets = [0, 240], sizes = [28, 16], strides = [1, 1]} : vector<28x448xf32> to vector<28x16xf32>
    %272 = arith.maximumf %270, %271 : vector<28x16xf32>
    %273 = vector.extract_strided_slice %248 {offsets = [0, 256], sizes = [28, 16], strides = [1, 1]} : vector<28x448xf32> to vector<28x16xf32>
    %274 = vector.extract_strided_slice %248 {offsets = [0, 272], sizes = [28, 16], strides = [1, 1]} : vector<28x448xf32> to vector<28x16xf32>
    %275 = arith.maximumf %273, %274 : vector<28x16xf32>
    %276 = vector.extract_strided_slice %248 {offsets = [0, 288], sizes = [28, 16], strides = [1, 1]} : vector<28x448xf32> to vector<28x16xf32>
    %277 = vector.extract_strided_slice %248 {offsets = [0, 304], sizes = [28, 16], strides = [1, 1]} : vector<28x448xf32> to vector<28x16xf32>
    %278 = arith.maximumf %276, %277 : vector<28x16xf32>
    %279 = vector.extract_strided_slice %248 {offsets = [0, 320], sizes = [28, 16], strides = [1, 1]} : vector<28x448xf32> to vector<28x16xf32>
    %280 = vector.extract_strided_slice %248 {offsets = [0, 336], sizes = [28, 16], strides = [1, 1]} : vector<28x448xf32> to vector<28x16xf32>
    %281 = arith.maximumf %279, %280 : vector<28x16xf32>
    %282 = vector.extract_strided_slice %248 {offsets = [0, 352], sizes = [28, 16], strides = [1, 1]} : vector<28x448xf32> to vector<28x16xf32>
    %283 = vector.extract_strided_slice %248 {offsets = [0, 368], sizes = [28, 16], strides = [1, 1]} : vector<28x448xf32> to vector<28x16xf32>
    %284 = arith.maximumf %282, %283 : vector<28x16xf32>
    %285 = vector.extract_strided_slice %248 {offsets = [0, 384], sizes = [28, 16], strides = [1, 1]} : vector<28x448xf32> to vector<28x16xf32>
    %286 = vector.extract_strided_slice %248 {offsets = [0, 400], sizes = [28, 16], strides = [1, 1]} : vector<28x448xf32> to vector<28x16xf32>
    %287 = arith.maximumf %285, %286 : vector<28x16xf32>
    %288 = vector.extract_strided_slice %248 {offsets = [0, 416], sizes = [28, 16], strides = [1, 1]} : vector<28x448xf32> to vector<28x16xf32>
    %289 = vector.extract_strided_slice %248 {offsets = [0, 432], sizes = [28, 16], strides = [1, 1]} : vector<28x448xf32> to vector<28x16xf32>
    %290 = arith.maximumf %288, %289 : vector<28x16xf32>
    %291 = tpu.concatenate %251, %254, %257, %260, %263, %266, %269, %272, %275, %278, %281, %284, %287, %290 in 1 : vector<28x16xf32>, vector<28x16xf32>, vector<28x16xf32>, vector<28x16xf32>, vector<28x16xf32>, vector<28x16xf32>, vector<28x16xf32>, vector<28x16xf32>, vector<28x16xf32>, vector<28x16xf32>, vector<28x16xf32>, vector<28x16xf32>, vector<28x16xf32>, vector<28x16xf32> -> vector<28x224xf32>
    %292 = vector.extract_strided_slice %291 {offsets = [0, 0], sizes = [1, 224], strides = [1, 1]} : vector<28x224xf32> to vector<1x224xf32>
    %293 = vector.extract_strided_slice %291 {offsets = [1, 0], sizes = [1, 224], strides = [1, 1]} : vector<28x224xf32> to vector<1x224xf32>
    %294 = arith.maximumf %292, %293 : vector<1x224xf32>
    %295 = vector.extract_strided_slice %291 {offsets = [2, 0], sizes = [1, 224], strides = [1, 1]} : vector<28x224xf32> to vector<1x224xf32>
    %296 = vector.extract_strided_slice %291 {offsets = [3, 0], sizes = [1, 224], strides = [1, 1]} : vector<28x224xf32> to vector<1x224xf32>
    %297 = arith.maximumf %295, %296 : vector<1x224xf32>
    %298 = vector.extract_strided_slice %291 {offsets = [4, 0], sizes = [1, 224], strides = [1, 1]} : vector<28x224xf32> to vector<1x224xf32>
    %299 = vector.extract_strided_slice %291 {offsets = [5, 0], sizes = [1, 224], strides = [1, 1]} : vector<28x224xf32> to vector<1x224xf32>
    %300 = arith.maximumf %298, %299 : vector<1x224xf32>
    %301 = vector.extract_strided_slice %291 {offsets = [6, 0], sizes = [1, 224], strides = [1, 1]} : vector<28x224xf32> to vector<1x224xf32>
    %302 = vector.extract_strided_slice %291 {offsets = [7, 0], sizes = [1, 224], strides = [1, 1]} : vector<28x224xf32> to vector<1x224xf32>
    %303 = arith.maximumf %301, %302 : vector<1x224xf32>
    %304 = vector.extract_strided_slice %291 {offsets = [8, 0], sizes = [1, 224], strides = [1, 1]} : vector<28x224xf32> to vector<1x224xf32>
    %305 = vector.extract_strided_slice %291 {offsets = [9, 0], sizes = [1, 224], strides = [1, 1]} : vector<28x224xf32> to vector<1x224xf32>
    %306 = arith.maximumf %304, %305 : vector<1x224xf32>
    %307 = vector.extract_strided_slice %291 {offsets = [10, 0], sizes = [1, 224], strides = [1, 1]} : vector<28x224xf32> to vector<1x224xf32>
    %308 = vector.extract_strided_slice %291 {offsets = [11, 0], sizes = [1, 224], strides = [1, 1]} : vector<28x224xf32> to vector<1x224xf32>
    %309 = arith.maximumf %307, %308 : vector<1x224xf32>
    %310 = vector.extract_strided_slice %291 {offsets = [12, 0], sizes = [1, 224], strides = [1, 1]} : vector<28x224xf32> to vector<1x224xf32>
    %311 = vector.extract_strided_slice %291 {offsets = [13, 0], sizes = [1, 224], strides = [1, 1]} : vector<28x224xf32> to vector<1x224xf32>
    %312 = arith.maximumf %310, %311 : vector<1x224xf32>
    %313 = vector.extract_strided_slice %291 {offsets = [14, 0], sizes = [1, 224], strides = [1, 1]} : vector<28x224xf32> to vector<1x224xf32>
    %314 = vector.extract_strided_slice %291 {offsets = [15, 0], sizes = [1, 224], strides = [1, 1]} : vector<28x224xf32> to vector<1x224xf32>
    %315 = arith.maximumf %313, %314 : vector<1x224xf32>
    %316 = vector.extract_strided_slice %291 {offsets = [16, 0], sizes = [1, 224], strides = [1, 1]} : vector<28x224xf32> to vector<1x224xf32>
    %317 = vector.extract_strided_slice %291 {offsets = [17, 0], sizes = [1, 224], strides = [1, 1]} : vector<28x224xf32> to vector<1x224xf32>
    %318 = arith.maximumf %316, %317 : vector<1x224xf32>
    %319 = vector.extract_strided_slice %291 {offsets = [18, 0], sizes = [1, 224], strides = [1, 1]} : vector<28x224xf32> to vector<1x224xf32>
    %320 = vector.extract_strided_slice %291 {offsets = [19, 0], sizes = [1, 224], strides = [1, 1]} : vector<28x224xf32> to vector<1x224xf32>
    %321 = arith.maximumf %319, %320 : vector<1x224xf32>
    %322 = vector.extract_strided_slice %291 {offsets = [20, 0], sizes = [1, 224], strides = [1, 1]} : vector<28x224xf32> to vector<1x224xf32>
    %323 = vector.extract_strided_slice %291 {offsets = [21, 0], sizes = [1, 224], strides = [1, 1]} : vector<28x224xf32> to vector<1x224xf32>
    %324 = arith.maximumf %322, %323 : vector<1x224xf32>
    %325 = vector.extract_strided_slice %291 {offsets = [22, 0], sizes = [1, 224], strides = [1, 1]} : vector<28x224xf32> to vector<1x224xf32>
    %326 = vector.extract_strided_slice %291 {offsets = [23, 0], sizes = [1, 224], strides = [1, 1]} : vector<28x224xf32> to vector<1x224xf32>
    %327 = arith.maximumf %325, %326 : vector<1x224xf32>
    %328 = vector.extract_strided_slice %291 {offsets = [24, 0], sizes = [1, 224], strides = [1, 1]} : vector<28x224xf32> to vector<1x224xf32>
    %329 = vector.extract_strided_slice %291 {offsets = [25, 0], sizes = [1, 224], strides = [1, 1]} : vector<28x224xf32> to vector<1x224xf32>
    %330 = arith.maximumf %328, %329 : vector<1x224xf32>
    %331 = vector.extract_strided_slice %291 {offsets = [26, 0], sizes = [1, 224], strides = [1, 1]} : vector<28x224xf32> to vector<1x224xf32>
    %332 = vector.extract_strided_slice %291 {offsets = [27, 0], sizes = [1, 224], strides = [1, 1]} : vector<28x224xf32> to vector<1x224xf32>
    %333 = arith.maximumf %331, %332 : vector<1x224xf32>
    %334 = tpu.concatenate %294, %297, %300, %303, %306, %309, %312, %315, %318, %321, %324, %327, %330, %333 in 0 : vector<1x224xf32>, vector<1x224xf32>, vector<1x224xf32>, vector<1x224xf32>, vector<1x224xf32>, vector<1x224xf32>, vector<1x224xf32>, vector<1x224xf32>, vector<1x224xf32>, vector<1x224xf32>, vector<1x224xf32>, vector<1x224xf32>, vector<1x224xf32>, vector<1x224xf32> -> vector<14x224xf32>
    %cst_60 = arith.constant 0.000000e+00 : f32
    %335 = vector.broadcast %cst_60 : f32 to vector<14x224xf32>
    %336 = arith.maximumf %334, %335 : vector<14x224xf32>
    %cst_61 = arith.constant 0.000000e+00 : f32
    %337 = vector.broadcast %cst_61 : f32 to vector<2x224xf32>
    %338 = tpu.concatenate %337, %336, %337 in 0 : vector<2x224xf32>, vector<14x224xf32>, vector<2x224xf32> -> vector<18x224xf32>
    %cst_62 = arith.constant 0.000000e+00 : f32
    %339 = vector.broadcast %cst_62 : f32 to vector<18x32xf32>
    %340 = tpu.concatenate %339, %338, %339 in 1 : vector<18x32xf32>, vector<18x224xf32>, vector<18x32xf32> -> vector<18x288xf32>
    %cst_63 = arith.constant 0.000000e+00 : f32
    %341 = vector.broadcast %cst_63 : f32 to vector<14x448xf32>
    %342 = vector.extract_strided_slice %340 {offsets = [0, 0], sizes = [14, 288], strides = [1, 1]} : vector<18x288xf32> to vector<14x288xf32>
    %343 = arith.truncf %342 : vector<14x288xf32> to vector<14x288xbf16>
    %cst_64 = arith.constant dense<0.000000e+00> : vector<14x448xf32>
    %344 = tpu.matmul %343, %11, %cst_64 {dimension_numbers = #tpu.dot_dimension_numbers<[1], [0], [0], [1], [0, 0, 1, 1], [], []>} : vector<14x288xbf16>, vector<288x448xbf16>, vector<14x448xf32> -> vector<14x448xf32>
    %345 = arith.addf %341, %344 : vector<14x448xf32>
    %346 = vector.extract_strided_slice %340 {offsets = [1, 0], sizes = [14, 288], strides = [1, 1]} : vector<18x288xf32> to vector<14x288xf32>
    %347 = arith.truncf %346 : vector<14x288xf32> to vector<14x288xbf16>
    %cst_65 = arith.constant dense<0.000000e+00> : vector<14x448xf32>
    %348 = tpu.matmul %347, %13, %cst_65 {dimension_numbers = #tpu.dot_dimension_numbers<[1], [0], [0], [1], [0, 0, 1, 1], [], []>} : vector<14x288xbf16>, vector<288x448xbf16>, vector<14x448xf32> -> vector<14x448xf32>
    %349 = arith.addf %345, %348 : vector<14x448xf32>
    %350 = vector.extract_strided_slice %340 {offsets = [2, 0], sizes = [14, 288], strides = [1, 1]} : vector<18x288xf32> to vector<14x288xf32>
    %351 = arith.truncf %350 : vector<14x288xf32> to vector<14x288xbf16>
    %cst_66 = arith.constant dense<0.000000e+00> : vector<14x448xf32>
    %352 = tpu.matmul %351, %15, %cst_66 {dimension_numbers = #tpu.dot_dimension_numbers<[1], [0], [0], [1], [0, 0, 1, 1], [], []>} : vector<14x288xbf16>, vector<288x448xbf16>, vector<14x448xf32> -> vector<14x448xf32>
    %353 = arith.addf %349, %352 : vector<14x448xf32>
    %354 = vector.extract_strided_slice %340 {offsets = [3, 0], sizes = [14, 288], strides = [1, 1]} : vector<18x288xf32> to vector<14x288xf32>
    %355 = arith.truncf %354 : vector<14x288xf32> to vector<14x288xbf16>
    %cst_67 = arith.constant dense<0.000000e+00> : vector<14x448xf32>
    %356 = tpu.matmul %355, %17, %cst_67 {dimension_numbers = #tpu.dot_dimension_numbers<[1], [0], [0], [1], [0, 0, 1, 1], [], []>} : vector<14x288xbf16>, vector<288x448xbf16>, vector<14x448xf32> -> vector<14x448xf32>
    %357 = arith.addf %353, %356 : vector<14x448xf32>
    %358 = vector.extract_strided_slice %340 {offsets = [4, 0], sizes = [14, 288], strides = [1, 1]} : vector<18x288xf32> to vector<14x288xf32>
    %359 = arith.truncf %358 : vector<14x288xf32> to vector<14x288xbf16>
    %cst_68 = arith.constant dense<0.000000e+00> : vector<14x448xf32>
    %360 = tpu.matmul %359, %19, %cst_68 {dimension_numbers = #tpu.dot_dimension_numbers<[1], [0], [0], [1], [0, 0, 1, 1], [], []>} : vector<14x288xbf16>, vector<288x448xbf16>, vector<14x448xf32> -> vector<14x448xf32>
    %361 = arith.addf %357, %360 : vector<14x448xf32>
    %362 = vector.broadcast %21 : vector<1x448xf32> to vector<14x448xf32>
    %363 = arith.addf %361, %362 : vector<14x448xf32>
    %364 = vector.extract_strided_slice %363 {offsets = [0, 0], sizes = [14, 32], strides = [1, 1]} : vector<14x448xf32> to vector<14x32xf32>
    %365 = vector.extract_strided_slice %363 {offsets = [0, 32], sizes = [14, 32], strides = [1, 1]} : vector<14x448xf32> to vector<14x32xf32>
    %366 = arith.maximumf %364, %365 : vector<14x32xf32>
    %367 = vector.extract_strided_slice %363 {offsets = [0, 64], sizes = [14, 32], strides = [1, 1]} : vector<14x448xf32> to vector<14x32xf32>
    %368 = vector.extract_strided_slice %363 {offsets = [0, 96], sizes = [14, 32], strides = [1, 1]} : vector<14x448xf32> to vector<14x32xf32>
    %369 = arith.maximumf %367, %368 : vector<14x32xf32>
    %370 = vector.extract_strided_slice %363 {offsets = [0, 128], sizes = [14, 32], strides = [1, 1]} : vector<14x448xf32> to vector<14x32xf32>
    %371 = vector.extract_strided_slice %363 {offsets = [0, 160], sizes = [14, 32], strides = [1, 1]} : vector<14x448xf32> to vector<14x32xf32>
    %372 = arith.maximumf %370, %371 : vector<14x32xf32>
    %373 = vector.extract_strided_slice %363 {offsets = [0, 192], sizes = [14, 32], strides = [1, 1]} : vector<14x448xf32> to vector<14x32xf32>
    %374 = vector.extract_strided_slice %363 {offsets = [0, 224], sizes = [14, 32], strides = [1, 1]} : vector<14x448xf32> to vector<14x32xf32>
    %375 = arith.maximumf %373, %374 : vector<14x32xf32>
    %376 = vector.extract_strided_slice %363 {offsets = [0, 256], sizes = [14, 32], strides = [1, 1]} : vector<14x448xf32> to vector<14x32xf32>
    %377 = vector.extract_strided_slice %363 {offsets = [0, 288], sizes = [14, 32], strides = [1, 1]} : vector<14x448xf32> to vector<14x32xf32>
    %378 = arith.maximumf %376, %377 : vector<14x32xf32>
    %379 = vector.extract_strided_slice %363 {offsets = [0, 320], sizes = [14, 32], strides = [1, 1]} : vector<14x448xf32> to vector<14x32xf32>
    %380 = vector.extract_strided_slice %363 {offsets = [0, 352], sizes = [14, 32], strides = [1, 1]} : vector<14x448xf32> to vector<14x32xf32>
    %381 = arith.maximumf %379, %380 : vector<14x32xf32>
    %382 = vector.extract_strided_slice %363 {offsets = [0, 384], sizes = [14, 32], strides = [1, 1]} : vector<14x448xf32> to vector<14x32xf32>
    %383 = vector.extract_strided_slice %363 {offsets = [0, 416], sizes = [14, 32], strides = [1, 1]} : vector<14x448xf32> to vector<14x32xf32>
    %384 = arith.maximumf %382, %383 : vector<14x32xf32>
    %385 = tpu.concatenate %366, %369, %372, %375, %378, %381, %384 in 1 : vector<14x32xf32>, vector<14x32xf32>, vector<14x32xf32>, vector<14x32xf32>, vector<14x32xf32>, vector<14x32xf32>, vector<14x32xf32> -> vector<14x224xf32>
    %386 = vector.extract_strided_slice %385 {offsets = [0, 0], sizes = [1, 224], strides = [1, 1]} : vector<14x224xf32> to vector<1x224xf32>
    %387 = vector.extract_strided_slice %385 {offsets = [1, 0], sizes = [1, 224], strides = [1, 1]} : vector<14x224xf32> to vector<1x224xf32>
    %388 = arith.maximumf %386, %387 : vector<1x224xf32>
    %389 = vector.extract_strided_slice %385 {offsets = [2, 0], sizes = [1, 224], strides = [1, 1]} : vector<14x224xf32> to vector<1x224xf32>
    %390 = vector.extract_strided_slice %385 {offsets = [3, 0], sizes = [1, 224], strides = [1, 1]} : vector<14x224xf32> to vector<1x224xf32>
    %391 = arith.maximumf %389, %390 : vector<1x224xf32>
    %392 = vector.extract_strided_slice %385 {offsets = [4, 0], sizes = [1, 224], strides = [1, 1]} : vector<14x224xf32> to vector<1x224xf32>
    %393 = vector.extract_strided_slice %385 {offsets = [5, 0], sizes = [1, 224], strides = [1, 1]} : vector<14x224xf32> to vector<1x224xf32>
    %394 = arith.maximumf %392, %393 : vector<1x224xf32>
    %395 = vector.extract_strided_slice %385 {offsets = [6, 0], sizes = [1, 224], strides = [1, 1]} : vector<14x224xf32> to vector<1x224xf32>
    %396 = vector.extract_strided_slice %385 {offsets = [7, 0], sizes = [1, 224], strides = [1, 1]} : vector<14x224xf32> to vector<1x224xf32>
    %397 = arith.maximumf %395, %396 : vector<1x224xf32>
    %398 = vector.extract_strided_slice %385 {offsets = [8, 0], sizes = [1, 224], strides = [1, 1]} : vector<14x224xf32> to vector<1x224xf32>
    %399 = vector.extract_strided_slice %385 {offsets = [9, 0], sizes = [1, 224], strides = [1, 1]} : vector<14x224xf32> to vector<1x224xf32>
    %400 = arith.maximumf %398, %399 : vector<1x224xf32>
    %401 = vector.extract_strided_slice %385 {offsets = [10, 0], sizes = [1, 224], strides = [1, 1]} : vector<14x224xf32> to vector<1x224xf32>
    %402 = vector.extract_strided_slice %385 {offsets = [11, 0], sizes = [1, 224], strides = [1, 1]} : vector<14x224xf32> to vector<1x224xf32>
    %403 = arith.maximumf %401, %402 : vector<1x224xf32>
    %404 = vector.extract_strided_slice %385 {offsets = [12, 0], sizes = [1, 224], strides = [1, 1]} : vector<14x224xf32> to vector<1x224xf32>
    %405 = vector.extract_strided_slice %385 {offsets = [13, 0], sizes = [1, 224], strides = [1, 1]} : vector<14x224xf32> to vector<1x224xf32>
    %406 = arith.maximumf %404, %405 : vector<1x224xf32>
    %407 = tpu.concatenate %388, %391, %394, %397, %400, %403, %406 in 0 : vector<1x224xf32>, vector<1x224xf32>, vector<1x224xf32>, vector<1x224xf32>, vector<1x224xf32>, vector<1x224xf32>, vector<1x224xf32> -> vector<7x224xf32>
    %cst_69 = arith.constant 0.000000e+00 : f32
    %408 = vector.broadcast %cst_69 : f32 to vector<7x224xf32>
    %409 = arith.maximumf %407, %408 : vector<7x224xf32>
    %410 = vector.extract_strided_slice %409 {offsets = [0, 0], sizes = [1, 224], strides = [1, 1]} : vector<7x224xf32> to vector<1x224xf32>
    %411 = vector.extract_strided_slice %409 {offsets = [1, 0], sizes = [1, 224], strides = [1, 1]} : vector<7x224xf32> to vector<1x224xf32>
    %412 = vector.extract_strided_slice %409 {offsets = [2, 0], sizes = [1, 224], strides = [1, 1]} : vector<7x224xf32> to vector<1x224xf32>
    %413 = vector.extract_strided_slice %409 {offsets = [3, 0], sizes = [1, 224], strides = [1, 1]} : vector<7x224xf32> to vector<1x224xf32>
    %414 = vector.extract_strided_slice %409 {offsets = [4, 0], sizes = [1, 224], strides = [1, 1]} : vector<7x224xf32> to vector<1x224xf32>
    %415 = vector.extract_strided_slice %409 {offsets = [5, 0], sizes = [1, 224], strides = [1, 1]} : vector<7x224xf32> to vector<1x224xf32>
    %416 = vector.extract_strided_slice %409 {offsets = [6, 0], sizes = [1, 224], strides = [1, 1]} : vector<7x224xf32> to vector<1x224xf32>
    %417 = tpu.concatenate %410, %411, %412, %413, %414, %415, %416 in 1 : vector<1x224xf32>, vector<1x224xf32>, vector<1x224xf32>, vector<1x224xf32>, vector<1x224xf32>, vector<1x224xf32>, vector<1x224xf32> -> vector<1x1568xf32>
    %418 = tpu.concatenate %219, %417 in 0 : vector<1x1568xf32>, vector<1x1568xf32> -> vector<2x1568xf32>
    %419 = arith.truncf %418 : vector<2x1568xf32> to vector<2x1568xbf16>
    %c0_70 = arith.constant 0 : index
    %c0_71 = arith.constant 0 : index
    %420 = vector.load %arg6[%c0_70, %c0_71] : memref<1568x64xbf16, #tpu.memory_space<vmem>>, vector<1568x64xbf16>
    %cst_72 = arith.constant dense<0.000000e+00> : vector<2x64xf32>
    %421 = tpu.matmul %419, %420, %cst_72 {dimension_numbers = #tpu.dot_dimension_numbers<[1], [0], [0], [1], [0, 0, 1, 1], [], []>} : vector<2x1568xbf16>, vector<1568x64xbf16>, vector<2x64xf32> -> vector<2x64xf32>
    %c0_73 = arith.constant 0 : index
    %c0_74 = arith.constant 0 : index
    %422 = vector.load %arg7[%c0_73, %c0_74] : memref<1x64xf32, #tpu.memory_space<vmem>>, vector<1x64xf32>
    %423 = vector.broadcast %422 : vector<1x64xf32> to vector<2x64xf32>
    %424 = arith.addf %421, %423 : vector<2x64xf32>
    %cst_75 = arith.constant 0.000000e+00 : f32
    %425 = vector.broadcast %cst_75 : f32 to vector<2x64xf32>
    %426 = arith.maximumf %424, %425 : vector<2x64xf32>
    %427 = arith.truncf %426 : vector<2x64xf32> to vector<2x64xbf16>
    %c0_76 = arith.constant 0 : index
    %c0_77 = arith.constant 0 : index
    %428 = vector.load %arg8[%c0_76, %c0_77] : memref<64x10xbf16, #tpu.memory_space<vmem>>, vector<64x10xbf16>
    %cst_78 = arith.constant dense<0.000000e+00> : vector<2x10xf32>
    %429 = tpu.matmul %427, %428, %cst_78 {dimension_numbers = #tpu.dot_dimension_numbers<[1], [0], [0], [1], [0, 0, 1, 1], [], []>} : vector<2x64xbf16>, vector<64x10xbf16>, vector<2x10xf32> -> vector<2x10xf32>
    %c0_79 = arith.constant 0 : index
    %c0_80 = arith.constant 0 : index
    %430 = vector.load %arg9[%c0_79, %c0_80] : memref<1x10xf32, #tpu.memory_space<vmem>>, vector<1x10xf32>
    %431 = vector.broadcast %430 : vector<1x10xf32> to vector<2x10xf32>
    %432 = arith.addf %429, %431 : vector<2x10xf32>
    %cst_81 = arith.constant dense<0xFF800000> : vector<2xf32>
    %433 = vector.multi_reduction <maximumf>, %432, %cst_81 [1] : vector<2x10xf32> to vector<2xf32>
    %434 = vector.shape_cast %433 : vector<2xf32> to vector<2x1xf32>
    %435 = vector.broadcast %434 : vector<2x1xf32> to vector<2x10xf32>
    %436 = arith.subf %432, %435 : vector<2x10xf32>
    %437 = math.exp %436 : vector<2x10xf32>
    %cst_82 = arith.constant dense<0.000000e+00> : vector<2xf32>
    %438 = vector.multi_reduction <add>, %437, %cst_82 [1] : vector<2x10xf32> to vector<2xf32>
    %439 = vector.shape_cast %438 : vector<2xf32> to vector<2x1xf32>
    %440 = tpu.reciprocal %439 : vector<2x1xf32> -> vector<2x1xf32>
    %441 = vector.broadcast %440 : vector<2x1xf32> to vector<2x10xf32>
    %442 = arith.mulf %437, %441 : vector<2x10xf32>
    %c0_83 = arith.constant 0 : index
    %c0_84 = arith.constant 0 : index
    %443 = vector.load %arg10[%c0_83, %c0_84] : memref<2x10xf32, #tpu.memory_space<vmem>>, vector<2x10xf32>
    tpu.vector_store %arg10[%c0_83, %c0_84], %442 {strides = array<i32>} : memref<2x10xf32, #tpu.memory_space<vmem>>, vector<2x10xf32>,
    return
  }
  func.func @transform_0(%arg0: i32) -> (i32, i32, i32) {
    %c0_i32 = arith.constant 0 : i32
    %c0_i32_0 = arith.constant 0 : i32
    %c0_i32_1 = arith.constant 0 : i32
    return %arg0, %c0_i32, %c0_i32_0 : i32, i32, i32
  }
  func.func @transform_1(%arg0: i32) -> (i32, i32, i32) {
    %c0_i32 = arith.constant 0 : i32
    %c0_i32_0 = arith.constant 0 : i32
    %c0_i32_1 = arith.constant 0 : i32
    %c0_i32_2 = arith.constant 0 : i32
    return %c0_i32, %c0_i32_0, %c0_i32_1 : i32, i32, i32
  }
  func.func @transform_2(%arg0: i32) -> (i32, i32) {
    %c0_i32 = arith.constant 0 : i32
    %c0_i32_0 = arith.constant 0 : i32
    %c0_i32_1 = arith.constant 0 : i32
    return %c0_i32, %c0_i32_0 : i32, i32
  }
  func.func @transform_3(%arg0: i32) -> (i32, i32, i32) {
    %c0_i32 = arith.constant 0 : i32
    %c0_i32_0 = arith.constant 0 : i32
    %c0_i32_1 = arith.constant 0 : i32
    %c0_i32_2 = arith.constant 0 : i32
    return %c0_i32, %c0_i32_0, %c0_i32_1 : i32, i32, i32
  }
  func.func @transform_4(%arg0: i32) -> (i32, i32) {
    %c0_i32 = arith.constant 0 : i32
    %c0_i32_0 = arith.constant 0 : i32
    %c0_i32_1 = arith.constant 0 : i32
    return %c0_i32, %c0_i32_0 : i32, i32
  }
  func.func @transform_5(%arg0: i32) -> (i32, i32) {
    %c0_i32 = arith.constant 0 : i32
    %c0_i32_0 = arith.constant 0 : i32
    %c0_i32_1 = arith.constant 0 : i32
    return %c0_i32, %c0_i32_0 : i32, i32
  }
  func.func @transform_6(%arg0: i32) -> (i32, i32) {
    %c0_i32 = arith.constant 0 : i32
    %c0_i32_0 = arith.constant 0 : i32
    %c0_i32_1 = arith.constant 0 : i32
    return %c0_i32, %c0_i32_0 : i32, i32
  }
  func.func @transform_7(%arg0: i32) -> (i32, i32) {
    %c0_i32 = arith.constant 0 : i32
    %c0_i32_0 = arith.constant 0 : i32
    %c0_i32_1 = arith.constant 0 : i32
    return %c0_i32, %c0_i32_0 : i32, i32
  }
  func.func @transform_8(%arg0: i32) -> (i32, i32) {
    %c0_i32 = arith.constant 0 : i32
    %c0_i32_0 = arith.constant 0 : i32
    %c0_i32_1 = arith.constant 0 : i32
    return %c0_i32, %c0_i32_0 : i32, i32
  }
  func.func @transform_9(%arg0: i32) -> (i32, i32) {
    %c0_i32 = arith.constant 0 : i32
    %c0_i32_0 = arith.constant 0 : i32
    return %arg0, %c0_i32 : i32, i32
  }
}

</mosaic_0001>

<llo_original>
// kernel: tpu_custom_call.1
$region0: #{tpu_custom_call.1}
  #allocation0 [shape = 'u32[]', space=smem, size = 0x4, offset = 0x4, fixed_abs, tag = 'smem constant byte address 0x4 - core index']
  #allocation1 [shape = 'u32[144,128]{1,0:T(1,128)}', space=vmem, size = 0x12000, scoped, tag = 'internal scratch']
  %s0 = inlined_call_operand.vmem [shape: f32[2,28,28], index: 0, kind: input, shape index: {}]
  %s1 = inlined_call_operand.hbm [shape: bf16[5,32,448], index: 1, kind: input, shape index: {}]
  %s2 = inlined_call_operand.hbm [shape: f32[1,448], index: 2, kind: input, shape index: {}]
  %s3 = inlined_call_operand.hbm [shape: bf16[5,288,448], index: 3, kind: input, shape index: {}]
  %s4 = inlined_call_operand.hbm [shape: f32[1,448], index: 4, kind: input, shape index: {}]
  %s5 = inlined_call_operand.vmem [shape: bf16[1568,64], index: 5, kind: input, shape index: {}]
  %s6 = inlined_call_operand.hbm [shape: f32[1,64], index: 6, kind: input, shape index: {}]
  %s7 = inlined_call_operand.vmem [shape: bf16[64,10], index: 7, kind: input, shape index: {}]
  %s8 = inlined_call_operand.hbm [shape: f32[1,10], index: 8, kind: input, shape index: {}]
  %s9 = inlined_call_operand.hbm [shape: f32[2,10], index: 9, kind: output, shape index: {}]
  %s10 = sld [smem:[#allocation0]]
  $region70: #{tpu_custom_call.1} parent=0
    _
  %s12 = ssub.s32 1, %s10
  %s13 = scalar_select 0, %s12, %s10
  $region1: #{tpu_custom_call.1} parent=0
    #allocation2 [shape = 'u8[163840]{0}', space=vmem, size = 0x28000, scoped, tag = 'input window, operand 1, single buffered']
    #allocation3 [shape = 's32[1]{0}', space=sflag, size = 0x4, scoped, tag = 'scoped memory for tpu_custom_call.1']
    #allocation4 [shape = 's32[1]{0}', space=sflag, size = 0x4, scoped, tag = 'scoped memory for tpu_custom_call.1']
    #allocation5 [shape = 'u8[2048]{0}', space=vmem, size = 0x800, scoped, tag = 'input window, operand 2, single buffered']
    #allocation6 [shape = 's32[1]{0}', space=sflag, size = 0x4, scoped, tag = 'scoped memory for tpu_custom_call.1']
    #allocation7 [shape = 'u8[1474560]{0}', space=vmem, size = 0x168000, scoped, tag = 'input window, operand 3, single buffered']
    #allocation8 [shape = 'u8[2048]{0}', space=vmem, size = 0x800, scoped, tag = 'input window, operand 4, single buffered']
    #allocation9 [shape = 's32[1]{0}', space=sflag, size = 0x4, scoped, tag = 'scoped memory for tpu_custom_call.1']
    #allocation10 [shape = 'u8[512]{0}', space=vmem, size = 0x400, scoped, tag = 'input window, operand 6, single buffered']
    #allocation11 [shape = 'u8[512]{0}', space=vmem, size = 0x400, scoped, tag = 'input window, operand 8, single buffered']
    #allocation12 [shape = 's32[1]{0}', space=sflag, size = 0x4, scoped, tag = 'scoped memory for tpu_custom_call.1']
    #allocation13 [shape = 'u8[1024]{0}', space=vmem, size = 0x400, scoped, tag = 'output window, operand 0, single buffered']
    %14 = vsyncpa [#allocation3], 0
    %15 = vsyncpa [#allocation6], 0
    %16 = vsyncpa [#allocation9], 0
    %17 = vsyncpa [#allocation12], 0
    %18 = vsyncpa [#allocation4], 0
    // Predicated region
    $region2: #{tpu_custom_call.1} parent=1 // pred_check
      _
    $region3: #{tpu_custom_call.1} parent=1 // pred_check_branch
      %20 = sbr.rel (0) target = $region5
    $region4: #{tpu_custom_call.1} parent=1 // pred_region
      _
    $region5: #{tpu_custom_call.1} parent=1 // pred_fallthru
      _
    // Predicated region
    $region6: #{tpu_custom_call.1} parent=1 // pred_check
      _
    $region7: #{tpu_custom_call.1} parent=1 // pred_check_branch
      %22 = sbr.rel (0) target = $region9
    $region8: #{tpu_custom_call.1} parent=1 // pred_region
      %s24 = ssub.s32 5120, 5120
      %25 = vsyncadd [#allocation3], %s24
      %s26 = sshll.u32 [#allocation2], 4
      %s27 = int_to_ptr.vmem [resolvable:$true] %s26
      %32 = dma.hbm_to_vmem [thread:$0]  %s1, 5120, %s27, [#allocation3], 256, 256, 16
    $region9: #{tpu_custom_call.1} parent=1 // pred_fallthru
      _
    // Predicated region
    $region10: #{tpu_custom_call.1} parent=1 // pred_check
      _
    $region11: #{tpu_custom_call.1} parent=1 // pred_check_branch
      %34 = sbr.rel (0) target = $region13
    $region12: #{tpu_custom_call.1} parent=1 // pred_region
      %s36 = ssub.s32 64, 64
      %37 = vsyncadd [#allocation6], %s36
      %s39 = sshll.u32 [#allocation5], 4
      %s40 = int_to_ptr.vmem [resolvable:$true] %s39
      %42 = dma.hbm_to_vmem [thread:$0]  %s2, 64, %s40, [#allocation6]
    $region13: #{tpu_custom_call.1} parent=1 // pred_fallthru
      _
    // Predicated region
    $region14: #{tpu_custom_call.1} parent=1 // pred_check
      _
    $region15: #{tpu_custom_call.1} parent=1 // pred_check_branch
      %44 = sbr.rel (0) target = $region17
    $region16: #{tpu_custom_call.1} parent=1 // pred_region
      %s46 = ssub.s32 46080, 46080
      %47 = vsyncadd [#allocation6], %s46
      %s48 = sshll.u32 [#allocation7], 4
      %s49 = int_to_ptr.vmem [resolvable:$true] %s48
      %54 = dma.hbm_to_vmem [thread:$0]  %s3, 46080, %s49, [#allocation6], 256, 256, 16
    $region17: #{tpu_custom_call.1} parent=1 // pred_fallthru
      _
    // Predicated region
    $region18: #{tpu_custom_call.1} parent=1 // pred_check
      _
    $region19: #{tpu_custom_call.1} parent=1 // pred_check_branch
      %56 = sbr.rel (0) target = $region21
    $region20: #{tpu_custom_call.1} parent=1 // pred_region
      %s58 = ssub.s32 64, 64
      %59 = vsyncadd [#allocation9], %s58
      %s61 = sshll.u32 [#allocation8], 4
      %s62 = int_to_ptr.vmem [resolvable:$true] %s61
      %64 = dma.hbm_to_vmem [thread:$0]  %s4, 64, %s62, [#allocation9]
    $region21: #{tpu_custom_call.1} parent=1 // pred_fallthru
      _
    // Predicated region
    $region22: #{tpu_custom_call.1} parent=1 // pred_check
      _
    $region23: #{tpu_custom_call.1} parent=1 // pred_check_branch
      %66 = sbr.rel (0) target = $region25
    $region24: #{tpu_custom_call.1} parent=1 // pred_region
      _
    $region25: #{tpu_custom_call.1} parent=1 // pred_fallthru
      _
    // Predicated region
    $region26: #{tpu_custom_call.1} parent=1 // pred_check
      _
    $region27: #{tpu_custom_call.1} parent=1 // pred_check_branch
      %68 = sbr.rel (0) target = $region29
    $region28: #{tpu_custom_call.1} parent=1 // pred_region
      %s70 = ssub.s32 16, 16
      %71 = vsyncadd [#allocation9], %s70
      %s73 = sshll.u32 [#allocation10], 4
      %s74 = int_to_ptr.vmem [resolvable:$true] %s73
      %76 = dma.hbm_to_vmem [thread:$0]  %s6, 16, %s74, [#allocation9]
    $region29: #{tpu_custom_call.1} parent=1 // pred_fallthru
      _
    // Predicated region
    $region30: #{tpu_custom_call.1} parent=1 // pred_check
      _
    $region31: #{tpu_custom_call.1} parent=1 // pred_check_branch
      %78 = sbr.rel (0) target = $region33
    $region32: #{tpu_custom_call.1} parent=1 // pred_region
      _
    $region33: #{tpu_custom_call.1} parent=1 // pred_fallthru
      _
    // Predicated region
    $region34: #{tpu_custom_call.1} parent=1 // pred_check
      _
    $region35: #{tpu_custom_call.1} parent=1 // pred_check_branch
      %80 = sbr.rel (0) target = $region37
    $region36: #{tpu_custom_call.1} parent=1 // pred_region
      %s82 = ssub.s32 16, 16
      %83 = vsyncadd [#allocation12], %s82
      %s85 = sshll.u32 [#allocation11], 4
      %s86 = int_to_ptr.vmem [resolvable:$true] %s85
      %88 = dma.hbm_to_vmem [thread:$0]  %s8, 16, %s86, [#allocation12]
    $region37: #{tpu_custom_call.1} parent=1 // pred_fallthru
      _
    // Predicated region
    $region38: #{tpu_custom_call.1} parent=1 // pred_check
      _
    $region39: #{tpu_custom_call.1} parent=1 // pred_check_branch
      %90 = sbr.rel (0) target = $region41
    $region40: #{tpu_custom_call.1} parent=1 // pred_region
      %91 = dma.done [#allocation3], 5120
    $region41: #{tpu_custom_call.1} parent=1 // pred_fallthru
      _
    // Predicated region
    $region42: #{tpu_custom_call.1} parent=1 // pred_check
      _
    $region43: #{tpu_custom_call.1} parent=1 // pred_check_branch
      %93 = sbr.rel (0) target = $region45
    $region44: #{tpu_custom_call.1} parent=1 // pred_region
      %94 = dma.done [#allocation6], 64
    $region45: #{tpu_custom_call.1} parent=1 // pred_fallthru
      _
    // Predicated region
    $region46: #{tpu_custom_call.1} parent=1 // pred_check
      _
    $region47: #{tpu_custom_call.1} parent=1 // pred_check_branch
      %96 = sbr.rel (0) target = $region49
    $region48: #{tpu_custom_call.1} parent=1 // pred_region
      %97 = dma.done [#allocation6], 46080
    $region49: #{tpu_custom_call.1} parent=1 // pred_fallthru
      _
    // Predicated region
    $region50: #{tpu_custom_call.1} parent=1 // pred_check
      _
    $region51: #{tpu_custom_call.1} parent=1 // pred_check_branch
      %99 = sbr.rel (0) target = $region53
    $region52: #{tpu_custom_call.1} parent=1 // pred_region
      %100 = dma.done [#allocation9], 64
    $region53: #{tpu_custom_call.1} parent=1 // pred_fallthru
      _
    // Predicated region
    $region54: #{tpu_custom_call.1} parent=1 // pred_check
      _
    $region55: #{tpu_custom_call.1} parent=1 // pred_check_branch
      %102 = sbr.rel (0) target = $region57
    $region56: #{tpu_custom_call.1} parent=1 // pred_region
      %103 = dma.done [#allocation9], 16
    $region57: #{tpu_custom_call.1} parent=1 // pred_fallthru
      _
    // Predicated region
    $region58: #{tpu_custom_call.1} parent=1 // pred_check
      _
    $region59: #{tpu_custom_call.1} parent=1 // pred_check_branch
      %105 = sbr.rel (0) target = $region61
    $region60: #{tpu_custom_call.1} parent=1 // pred_region
      %106 = dma.done [#allocation12], 16
    $region61: #{tpu_custom_call.1} parent=1 // pred_fallthru
      _
    %v108 = vld [vmem:[#allocation2] sm:$0xff]
    %v109 = vld [vmem:[#allocation2 + $0x8] sm:$0xff]
    %v110 = vld [vmem:[#allocation2 + $0x10] sm:$0xff]
    %v111 = vld [vmem:[#allocation2 + $0x18] sm:$0xff]
    %v112 = vld [vmem:[#allocation2 + $0x20] sm:$0xff]
    %v113 = vld [vmem:[#allocation2 + $0x28] sm:$0xff]
    %v114 = vld [vmem:[#allocation2 + $0x30] sm:$0xff]
    %v115 = vld [vmem:[#allocation2 + $0x38] sm:$0xff]
    %s116 = scalar_lea.vmem [#allocation2], 64
    %v117 = vld [vmem:[%s116] sm:$0xff]
    %v118 = vld [vmem:[%s116 + $0x8] sm:$0xff]
    %v119 = vld [vmem:[%s116 + $0x10] sm:$0xff]
    %v120 = vld [vmem:[%s116 + $0x18] sm:$0xff]
    %v121 = vld [vmem:[%s116 + $0x20] sm:$0xff]
    %v122 = vld [vmem:[%s116 + $0x28] sm:$0xff]
    %v123 = vld [vmem:[%s116 + $0x30] sm:$0xff]
    %v124 = vld [vmem:[%s116 + $0x38] sm:$0xff]
    %s125 = scalar_lea.vmem [#allocation2], 128
    %v126 = vld [vmem:[%s125] sm:$0xff]
    %v127 = vld [vmem:[%s125 + $0x8] sm:$0xff]
    %v128 = vld [vmem:[%s125 + $0x10] sm:$0xff]
    %v129 = vld [vmem:[%s125 + $0x18] sm:$0xff]
    %v130 = vld [vmem:[%s125 + $0x20] sm:$0xff]
    %v131 = vld [vmem:[%s125 + $0x28] sm:$0xff]
    %v132 = vld [vmem:[%s125 + $0x30] sm:$0xff]
    %v133 = vld [vmem:[%s125 + $0x38] sm:$0xff]
    %s134 = scalar_lea.vmem [#allocation2], 192
    %v135 = vld [vmem:[%s134] sm:$0xff]
    %v136 = vld [vmem:[%s134 + $0x8] sm:$0xff]
    %v137 = vld [vmem:[%s134 + $0x10] sm:$0xff]
    %v138 = vld [vmem:[%s134 + $0x18] sm:$0xff]
    %v139 = vld [vmem:[%s134 + $0x20] sm:$0xff]
    %v140 = vld [vmem:[%s134 + $0x28] sm:$0xff]
    %v141 = vld [vmem:[%s134 + $0x30] sm:$0xff]
    %v142 = vld [vmem:[%s134 + $0x38] sm:$0xff]
    %s143 = scalar_lea.vmem [#allocation2], 256
    %v144 = vld [vmem:[%s143] sm:$0xff]
    %v145 = vld [vmem:[%s143 + $0x8] sm:$0xff]
    %v146 = vld [vmem:[%s143 + $0x10] sm:$0xff]
    %v147 = vld [vmem:[%s143 + $0x18] sm:$0xff]
    %v148 = vld [vmem:[%s143 + $0x20] sm:$0xff]
    %v149 = vld [vmem:[%s143 + $0x28] sm:$0xff]
    %v150 = vld [vmem:[%s143 + $0x30] sm:$0xff]
    %v151 = vld [vmem:[%s143 + $0x38] sm:$0xff]
    %v152 = vld [vmem:[#allocation7] sm:$0xff]
    %v153 = vld [vmem:[#allocation7 + $0x8] sm:$0xff]
    %v154 = vld [vmem:[#allocation7 + $0x10] sm:$0xff]
    %v155 = vld [vmem:[#allocation7 + $0x18] sm:$0xff]
    %v156 = vld [vmem:[#allocation7 + $0x20] sm:$0xff]
    %v157 = vld [vmem:[#allocation7 + $0x28] sm:$0xff]
    %v158 = vld [vmem:[#allocation7 + $0x30] sm:$0xff]
    %v159 = vld [vmem:[#allocation7 + $0x38] sm:$0xff]
    %v160 = vld [vmem:[#allocation7 + $0x40] sm:$0xff]
    %v161 = vld [vmem:[#allocation7 + $0x48] sm:$0xff]
    %v162 = vld [vmem:[#allocation7 + $0x50] sm:$0xff]
    %v163 = vld [vmem:[#allocation7 + $0x58] sm:$0xff]
    %v164 = vld [vmem:[#allocation7 + $0x60] sm:$0xff]
    %v165 = vld [vmem:[#allocation7 + $0x68] sm:$0xff]
    %v166 = vld [vmem:[#allocation7 + $0x70] sm:$0xff]
    %v167 = vld [vmem:[#allocation7 + $0x78] sm:$0xff]
    %v168 = vld [vmem:[#allocation7 + $0x80] sm:$0xff]
    %v169 = vld [vmem:[#allocation7 + $0x88] sm:$0xff]
    %v170 = vld [vmem:[#allocation7 + $0x90] sm:$0xff]
    %v171 = vld [vmem:[#allocation7 + $0x98] sm:$0xff]
    %v172 = vld [vmem:[#allocation7 + $0xa0] sm:$0xff]
    %v173 = vld [vmem:[#allocation7 + $0xa8] sm:$0xff]
    %v174 = vld [vmem:[#allocation7 + $0xb0] sm:$0xff]
    %v175 = vld [vmem:[#allocation7 + $0xb8] sm:$0xff]
    %v176 = vld [vmem:[#allocation7 + $0xc0] sm:$0xff]
    %v177 = vld [vmem:[#allocation7 + $0xc8] sm:$0xff]
    %v178 = vld [vmem:[#allocation7 + $0xd0] sm:$0xff]
    %v179 = vld [vmem:[#allocation7 + $0xd8] sm:$0xff]
    %v180 = vld [vmem:[#allocation7 + $0xe0] sm:$0xff]
    %v181 = vld [vmem:[#allocation7 + $0xe8] sm:$0xff]
    %v182 = vld [vmem:[#allocation7 + $0xf0] sm:$0xff]
    %v183 = vld [vmem:[#allocation7 + $0xf8] sm:$0xff]
    %v184 = vld [vmem:[#allocation7 + $0x100] sm:$0xff]
    %v185 = vld [vmem:[#allocation7 + $0x108] sm:$0xff]
    %v186 = vld [vmem:[#allocation7 + $0x110] sm:$0xff]
    %v187 = vld [vmem:[#allocation7 + $0x118] sm:$0xff]
    %v188 = vld [vmem:[#allocation7 + $0x120] sm:$0xff]
    %v189 = vld [vmem:[#allocation7 + $0x128] sm:$0xff]
    %v190 = vld [vmem:[#allocation7 + $0x130] sm:$0xff]
    %v191 = vld [vmem:[#allocation7 + $0x138] sm:$0xff]
    %v192 = vld [vmem:[#allocation7 + $0x140] sm:$0xff]
    %v193 = vld [vmem:[#allocation7 + $0x148] sm:$0xff]
    %v194 = vld [vmem:[#allocation7 + $0x150] sm:$0xff]
    %v195 = vld [vmem:[#allocation7 + $0x158] sm:$0xff]
    %v196 = vld [vmem:[#allocation7 + $0x160] sm:$0xff]
    %v197 = vld [vmem:[#allocation7 + $0x168] sm:$0xff]
    %v198 = vld [vmem:[#allocation7 + $0x170] sm:$0xff]
    %v199 = vld [vmem:[#allocation7 + $0x178] sm:$0xff]
    %v200 = vld [vmem:[#allocation7 + $0x180] sm:$0xff]
    %v201 = vld [vmem:[#allocation7 + $0x188] sm:$0xff]
    %v202 = vld [vmem:[#allocation7 + $0x190] sm:$0xff]
    %v203 = vld [vmem:[#allocation7 + $0x198] sm:$0xff]
    %v204 = vld [vmem:[#allocation7 + $0x1a0] sm:$0xff]
    %v205 = vld [vmem:[#allocation7 + $0x1a8] sm:$0xff]
    %v206 = vld [vmem:[#allocation7 + $0x1b0] sm:$0xff]
    %v207 = vld [vmem:[#allocation7 + $0x1b8] sm:$0xff]
    %v208 = vld [vmem:[#allocation7 + $0x1c0] sm:$0xff]
    %v209 = vld [vmem:[#allocation7 + $0x1c8] sm:$0xff]
    %v210 = vld [vmem:[#allocation7 + $0x1d0] sm:$0xff]
    %v211 = vld [vmem:[#allocation7 + $0x1d8] sm:$0xff]
    %v212 = vld [vmem:[#allocation7 + $0x1e0] sm:$0xff]
    %v213 = vld [vmem:[#allocation7 + $0x1e8] sm:$0xff]
    %v214 = vld [vmem:[#allocation7 + $0x1f0] sm:$0xff]
    %v215 = vld [vmem:[#allocation7 + $0x1f8] sm:$0xff]
    %v216 = vld [vmem:[#allocation7 + $0x200] sm:$0xff]
    %v217 = vld [vmem:[#allocation7 + $0x208] sm:$0xff]
    %v218 = vld [vmem:[#allocation7 + $0x210] sm:$0xff]
    %v219 = vld [vmem:[#allocation7 + $0x218] sm:$0xff]
    %v220 = vld [vmem:[#allocation7 + $0x220] sm:$0xff]
    %v221 = vld [vmem:[#allocation7 + $0x228] sm:$0xff]
    %v222 = vld [vmem:[#allocation7 + $0x230] sm:$0xff]
    %v223 = vld [vmem:[#allocation7 + $0x238] sm:$0xff]
    %s224 = scalar_lea.vmem [#allocation7], 576
    %v225 = vld [vmem:[%s224] sm:$0xff]
    %v226 = vld [vmem:[%s224 + $0x8] sm:$0xff]
    %v227 = vld [vmem:[%s224 + $0x10] sm:$0xff]
    %v228 = vld [vmem:[%s224 + $0x18] sm:$0xff]
    %v229 = vld [vmem:[%s224 + $0x20] sm:$0xff]
    %v230 = vld [vmem:[%s224 + $0x28] sm:$0xff]
    %v231 = vld [vmem:[%s224 + $0x30] sm:$0xff]
    %v232 = vld [vmem:[%s224 + $0x38] sm:$0xff]
    %v233 = vld [vmem:[%s224 + $0x40] sm:$0xff]
    %v234 = vld [vmem:[%s224 + $0x48] sm:$0xff]
    %v235 = vld [vmem:[%s224 + $0x50] sm:$0xff]
    %v236 = vld [vmem:[%s224 + $0x58] sm:$0xff]
    %v237 = vld [vmem:[%s224 + $0x60] sm:$0xff]
    %v238 = vld [vmem:[%s224 + $0x68] sm:$0xff]
    %v239 = vld [vmem:[%s224 + $0x70] sm:$0xff]
    %v240 = vld [vmem:[%s224 + $0x78] sm:$0xff]
    %v241 = vld [vmem:[%s224 + $0x80] sm:$0xff]
    %v242 = vld [vmem:[%s224 + $0x88] sm:$0xff]
    %v243 = vld [vmem:[%s224 + $0x90] sm:$0xff]
    %v244 = vld [vmem:[%s224 + $0x98] sm:$0xff]
    %v245 = vld [vmem:[%s224 + $0xa0] sm:$0xff]
    %v246 = vld [vmem:[%s224 + $0xa8] sm:$0xff]
    %v247 = vld [vmem:[%s224 + $0xb0] sm:$0xff]
    %v248 = vld [vmem:[%s224 + $0xb8] sm:$0xff]
    %v249 = vld [vmem:[%s224 + $0xc0] sm:$0xff]
    %v250 = vld [vmem:[%s224 + $0xc8] sm:$0xff]
    %v251 = vld [vmem:[%s224 + $0xd0] sm:$0xff]
    %v252 = vld [vmem:[%s224 + $0xd8] sm:$0xff]
    %v253 = vld [vmem:[%s224 + $0xe0] sm:$0xff]
    %v254 = vld [vmem:[%s224 + $0xe8] sm:$0xff]
    %v255 = vld [vmem:[%s224 + $0xf0] sm:$0xff]
    %v256 = vld [vmem:[%s224 + $0xf8] sm:$0xff]
    %v257 = vld [vmem:[%s224 + $0x100] sm:$0xff]
    %v258 = vld [vmem:[%s224 + $0x108] sm:$0xff]
    %v259 = vld [vmem:[%s224 + $0x110] sm:$0xff]
    %v260 = vld [vmem:[%s224 + $0x118] sm:$0xff]
    %v261 = vld [vmem:[%s224 + $0x120] sm:$0xff]
    %v262 = vld [vmem:[%s224 + $0x128] sm:$0xff]
    %v263 = vld [vmem:[%s224 + $0x130] sm:$0xff]
    %v264 = vld [vmem:[%s224 + $0x138] sm:$0xff]
    %v265 = vld [vmem:[%s224 + $0x140] sm:$0xff]
    %v266 = vld [vmem:[%s224 + $0x148] sm:$0xff]
    %v267 = vld [vmem:[%s224 + $0x150] sm:$0xff]
    %v268 = vld [vmem:[%s224 + $0x158] sm:$0xff]
    %v269 = vld [vmem:[%s224 + $0x160] sm:$0xff]
    %v270 = vld [vmem:[%s224 + $0x168] sm:$0xff]
    %v271 = vld [vmem:[%s224 + $0x170] sm:$0xff]
    %v272 = vld [vmem:[%s224 + $0x178] sm:$0xff]
    %v273 = vld [vmem:[%s224 + $0x180] sm:$0xff]
    %v274 = vld [vmem:[%s224 + $0x188] sm:$0xff]
    %v275 = vld [vmem:[%s224 + $0x190] sm:$0xff]
    %v276 = vld [vmem:[%s224 + $0x198] sm:$0xff]
    %v277 = vld [vmem:[%s224 + $0x1a0] sm:$0xff]
    %v278 = vld [vmem:[%s224 + $0x1a8] sm:$0xff]
    %v279 = vld [vmem:[%s224 + $0x1b0] sm:$0xff]
    %v280 = vld [vmem:[%s224 + $0x1b8] sm:$0xff]
    %v281 = vld [vmem:[%s224 + $0x1c0] sm:$0xff]
    %v282 = vld [vmem:[%s224 + $0x1c8] sm:$0xff]
    %v283 = vld [vmem:[%s224 + $0x1d0] sm:$0xff]
    %v284 = vld [vmem:[%s224 + $0x1d8] sm:$0xff]
    %v285 = vld [vmem:[%s224 + $0x1e0] sm:$0xff]
    %v286 = vld [vmem:[%s224 + $0x1e8] sm:$0xff]
    %v287 = vld [vmem:[%s224 + $0x1f0] sm:$0xff]
    %v288 = vld [vmem:[%s224 + $0x1f8] sm:$0xff]
    %v289 = vld [vmem:[%s224 + $0x200] sm:$0xff]
    %v290 = vld [vmem:[%s224 + $0x208] sm:$0xff]
    %v291 = vld [vmem:[%s224 + $0x210] sm:$0xff]
    %v292 = vld [vmem:[%s224 + $0x218] sm:$0xff]
    %v293 = vld [vmem:[%s224 + $0x220] sm:$0xff]
    %v294 = vld [vmem:[%s224 + $0x228] sm:$0xff]
    %v295 = vld [vmem:[%s224 + $0x230] sm:$0xff]
    %v296 = vld [vmem:[%s224 + $0x238] sm:$0xff]
    %s297 = scalar_lea.vmem [#allocation7], 1152
    %v298 = vld [vmem:[%s297] sm:$0xff]
    %v299 = vld [vmem:[%s297 + $0x8] sm:$0xff]
    %v300 = vld [vmem:[%s297 + $0x10] sm:$0xff]
    %v301 = vld [vmem:[%s297 + $0x18] sm:$0xff]
    %v302 = vld [vmem:[%s297 + $0x20] sm:$0xff]
    %v303 = vld [vmem:[%s297 + $0x28] sm:$0xff]
    %v304 = vld [vmem:[%s297 + $0x30] sm:$0xff]
    %v305 = vld [vmem:[%s297 + $0x38] sm:$0xff]
    %v306 = vld [vmem:[%s297 + $0x40] sm:$0xff]
    %v307 = vld [vmem:[%s297 + $0x48] sm:$0xff]
    %v308 = vld [vmem:[%s297 + $0x50] sm:$0xff]
    %v309 = vld [vmem:[%s297 + $0x58] sm:$0xff]
    %v310 = vld [vmem:[%s297 + $0x60] sm:$0xff]
    %v311 = vld [vmem:[%s297 + $0x68] sm:$0xff]
    %v312 = vld [vmem:[%s297 + $0x70] sm:$0xff]
    %v313 = vld [vmem:[%s297 + $0x78] sm:$0xff]
    %v314 = vld [vmem:[%s297 + $0x80] sm:$0xff]
    %v315 = vld [vmem:[%s297 + $0x88] sm:$0xff]
    %v316 = vld [vmem:[%s297 + $0x90] sm:$0xff]
    %v317 = vld [vmem:[%s297 + $0x98] sm:$0xff]
    %v318 = vld [vmem:[%s297 + $0xa0] sm:$0xff]
    %v319 = vld [vmem:[%s297 + $0xa8] sm:$0xff]
    %v320 = vld [vmem:[%s297 + $0xb0] sm:$0xff]
    %v321 = vld [vmem:[%s297 + $0xb8] sm:$0xff]
    %v322 = vld [vmem:[%s297 + $0xc0] sm:$0xff]
    %v323 = vld [vmem:[%s297 + $0xc8] sm:$0xff]
    %v324 = vld [vmem:[%s297 + $0xd0] sm:$0xff]
    %v325 = vld [vmem:[%s297 + $0xd8] sm:$0xff]
    %v326 = vld [vmem:[%s297 + $0xe0] sm:$0xff]
    %v327 = vld [vmem:[%s297 + $0xe8] sm:$0xff]
    %v328 = vld [vmem:[%s297 + $0xf0] sm:$0xff]
    %v329 = vld [vmem:[%s297 + $0xf8] sm:$0xff]
    %v330 = vld [vmem:[%s297 + $0x100] sm:$0xff]
    %v331 = vld [vmem:[%s297 + $0x108] sm:$0xff]
    %v332 = vld [vmem:[%s297 + $0x110] sm:$0xff]
    %v333 = vld [vmem:[%s297 + $0x118] sm:$0xff]
    %v334 = vld [vmem:[%s297 + $0x120] sm:$0xff]
    %v335 = vld [vmem:[%s297 + $0x128] sm:$0xff]
    %v336 = vld [vmem:[%s297 + $0x130] sm:$0xff]
    %v337 = vld [vmem:[%s297 + $0x138] sm:$0xff]
    %v338 = vld [vmem:[%s297 + $0x140] sm:$0xff]
    %v339 = vld [vmem:[%s297 + $0x148] sm:$0xff]
    %v340 = vld [vmem:[%s297 + $0x150] sm:$0xff]
    %v341 = vld [vmem:[%s297 + $0x158] sm:$0xff]
    %v342 = vld [vmem:[%s297 + $0x160] sm:$0xff]
    %v343 = vld [vmem:[%s297 + $0x168] sm:$0xff]
    %v344 = vld [vmem:[%s297 + $0x170] sm:$0xff]
    %v345 = vld [vmem:[%s297 + $0x178] sm:$0xff]
    %v346 = vld [vmem:[%s297 + $0x180] sm:$0xff]
    %v347 = vld [vmem:[%s297 + $0x188] sm:$0xff]
    %v348 = vld [vmem:[%s297 + $0x190] sm:$0xff]
    %v349 = vld [vmem:[%s297 + $0x198] sm:$0xff]
    %v350 = vld [vmem:[%s297 + $0x1a0] sm:$0xff]
    %v351 = vld [vmem:[%s297 + $0x1a8] sm:$0xff]
    %v352 = vld [vmem:[%s297 + $0x1b0] sm:$0xff]
    %v353 = vld [vmem:[%s297 + $0x1b8] sm:$0xff]
    %v354 = vld [vmem:[%s297 + $0x1c0] sm:$0xff]
    %v355 = vld [vmem:[%s297 + $0x1c8] sm:$0xff]
    %v356 = vld [vmem:[%s297 + $0x1d0] sm:$0xff]
    %v357 = vld [vmem:[%s297 + $0x1d8] sm:$0xff]
    %v358 = vld [vmem:[%s297 + $0x1e0] sm:$0xff]
    %v359 = vld [vmem:[%s297 + $0x1e8] sm:$0xff]
    %v360 = vld [vmem:[%s297 + $0x1f0] sm:$0xff]
    %v361 = vld [vmem:[%s297 + $0x1f8] sm:$0xff]
    %v362 = vld [vmem:[%s297 + $0x200] sm:$0xff]
    %v363 = vld [vmem:[%s297 + $0x208] sm:$0xff]
    %v364 = vld [vmem:[%s297 + $0x210] sm:$0xff]
    %v365 = vld [vmem:[%s297 + $0x218] sm:$0xff]
    %v366 = vld [vmem:[%s297 + $0x220] sm:$0xff]
    %v367 = vld [vmem:[%s297 + $0x228] sm:$0xff]
    %v368 = vld [vmem:[%s297 + $0x230] sm:$0xff]
    %v369 = vld [vmem:[%s297 + $0x238] sm:$0xff]
    %s370 = scalar_lea.vmem [#allocation7], 1728
    %v371 = vld [vmem:[%s370] sm:$0xff]
    %v372 = vld [vmem:[%s370 + $0x8] sm:$0xff]
    %v373 = vld [vmem:[%s370 + $0x10] sm:$0xff]
    %v374 = vld [vmem:[%s370 + $0x18] sm:$0xff]
    %v375 = vld [vmem:[%s370 + $0x20] sm:$0xff]
    %v376 = vld [vmem:[%s370 + $0x28] sm:$0xff]
    %v377 = vld [vmem:[%s370 + $0x30] sm:$0xff]
    %v378 = vld [vmem:[%s370 + $0x38] sm:$0xff]
    %v379 = vld [vmem:[%s370 + $0x40] sm:$0xff]
    %v380 = vld [vmem:[%s370 + $0x48] sm:$0xff]
    %v381 = vld [vmem:[%s370 + $0x50] sm:$0xff]
    %v382 = vld [vmem:[%s370 + $0x58] sm:$0xff]
    %v383 = vld [vmem:[%s370 + $0x60] sm:$0xff]
    %v384 = vld [vmem:[%s370 + $0x68] sm:$0xff]
    %v385 = vld [vmem:[%s370 + $0x70] sm:$0xff]
    %v386 = vld [vmem:[%s370 + $0x78] sm:$0xff]
    %v387 = vld [vmem:[%s370 + $0x80] sm:$0xff]
    %v388 = vld [vmem:[%s370 + $0x88] sm:$0xff]
    %v389 = vld [vmem:[%s370 + $0x90] sm:$0xff]
    %v390 = vld [vmem:[%s370 + $0x98] sm:$0xff]
    %v391 = vld [vmem:[%s370 + $0xa0] sm:$0xff]
    %v392 = vld [vmem:[%s370 + $0xa8] sm:$0xff]
    %v393 = vld [vmem:[%s370 + $0xb0] sm:$0xff]
    %v394 = vld [vmem:[%s370 + $0xb8] sm:$0xff]
    %v395 = vld [vmem:[%s370 + $0xc0] sm:$0xff]
    %v396 = vld [vmem:[%s370 + $0xc8] sm:$0xff]
    %v397 = vld [vmem:[%s370 + $0xd0] sm:$0xff]
    %v398 = vld [vmem:[%s370 + $0xd8] sm:$0xff]
    %v399 = vld [vmem:[%s370 + $0xe0] sm:$0xff]
    %v400 = vld [vmem:[%s370 + $0xe8] sm:$0xff]
    %v401 = vld [vmem:[%s370 + $0xf0] sm:$0xff]
    %v402 = vld [vmem:[%s370 + $0xf8] sm:$0xff]
    %v403 = vld [vmem:[%s370 + $0x100] sm:$0xff]
    %v404 = vld [vmem:[%s370 + $0x108] sm:$0xff]
    %v405 = vld [vmem:[%s370 + $0x110] sm:$0xff]
    %v406 = vld [vmem:[%s370 + $0x118] sm:$0xff]
    %v407 = vld [vmem:[%s370 + $0x120] sm:$0xff]
    %v408 = vld [vmem:[%s370 + $0x128] sm:$0xff]
    %v409 = vld [vmem:[%s370 + $0x130] sm:$0xff]
    %v410 = vld [vmem:[%s370 + $0x138] sm:$0xff]
    %v411 = vld [vmem:[%s370 + $0x140] sm:$0xff]
    %v412 = vld [vmem:[%s370 + $0x148] sm:$0xff]
    %v413 = vld [vmem:[%s370 + $0x150] sm:$0xff]
    %v414 = vld [vmem:[%s370 + $0x158] sm:$0xff]
    %v415 = vld [vmem:[%s370 + $0x160] sm:$0xff]
    %v416 = vld [vmem:[%s370 + $0x168] sm:$0xff]
    %v417 = vld [vmem:[%s370 + $0x170] sm:$0xff]
    %v418 = vld [vmem:[%s370 + $0x178] sm:$0xff]
    %v419 = vld [vmem:[%s370 + $0x180] sm:$0xff]
    %v420 = vld [vmem:[%s370 + $0x188] sm:$0xff]
    %v421 = vld [vmem:[%s370 + $0x190] sm:$0xff]
    %v422 = vld [vmem:[%s370 + $0x198] sm:$0xff]
    %v423 = vld [vmem:[%s370 + $0x1a0] sm:$0xff]
    %v424 = vld [vmem:[%s370 + $0x1a8] sm:$0xff]
    %v425 = vld [vmem:[%s370 + $0x1b0] sm:$0xff]
    %v426 = vld [vmem:[%s370 + $0x1b8] sm:$0xff]
    %v427 = vld [vmem:[%s370 + $0x1c0] sm:$0xff]
    %v428 = vld [vmem:[%s370 + $0x1c8] sm:$0xff]
    %v429 = vld [vmem:[%s370 + $0x1d0] sm:$0xff]
    %v430 = vld [vmem:[%s370 + $0x1d8] sm:$0xff]
    %v431 = vld [vmem:[%s370 + $0x1e0] sm:$0xff]
    %v432 = vld [vmem:[%s370 + $0x1e8] sm:$0xff]
    %v433 = vld [vmem:[%s370 + $0x1f0] sm:$0xff]
    %v434 = vld [vmem:[%s370 + $0x1f8] sm:$0xff]
    %v435 = vld [vmem:[%s370 + $0x200] sm:$0xff]
    %v436 = vld [vmem:[%s370 + $0x208] sm:$0xff]
    %v437 = vld [vmem:[%s370 + $0x210] sm:$0xff]
    %v438 = vld [vmem:[%s370 + $0x218] sm:$0xff]
    %v439 = vld [vmem:[%s370 + $0x220] sm:$0xff]
    %v440 = vld [vmem:[%s370 + $0x228] sm:$0xff]
    %v441 = vld [vmem:[%s370 + $0x230] sm:$0xff]
    %v442 = vld [vmem:[%s370 + $0x238] sm:$0xff]
    %s443 = scalar_lea.vmem [#allocation7], 2304
    %v444 = vld [vmem:[%s443] sm:$0xff]
    %v445 = vld [vmem:[%s443 + $0x8] sm:$0xff]
    %v446 = vld [vmem:[%s443 + $0x10] sm:$0xff]
    %v447 = vld [vmem:[%s443 + $0x18] sm:$0xff]
    %v448 = vld [vmem:[%s443 + $0x20] sm:$0xff]
    %v449 = vld [vmem:[%s443 + $0x28] sm:$0xff]
    %v450 = vld [vmem:[%s443 + $0x30] sm:$0xff]
    %v451 = vld [vmem:[%s443 + $0x38] sm:$0xff]
    %v452 = vld [vmem:[%s443 + $0x40] sm:$0xff]
    %v453 = vld [vmem:[%s443 + $0x48] sm:$0xff]
    %v454 = vld [vmem:[%s443 + $0x50] sm:$0xff]
    %v455 = vld [vmem:[%s443 + $0x58] sm:$0xff]
    %v456 = vld [vmem:[%s443 + $0x60] sm:$0xff]
    %v457 = vld [vmem:[%s443 + $0x68] sm:$0xff]
    %v458 = vld [vmem:[%s443 + $0x70] sm:$0xff]
    %v459 = vld [vmem:[%s443 + $0x78] sm:$0xff]
    %v460 = vld [vmem:[%s443 + $0x80] sm:$0xff]
    %v461 = vld [vmem:[%s443 + $0x88] sm:$0xff]
    %v462 = vld [vmem:[%s443 + $0x90] sm:$0xff]
    %v463 = vld [vmem:[%s443 + $0x98] sm:$0xff]
    %v464 = vld [vmem:[%s443 + $0xa0] sm:$0xff]
    %v465 = vld [vmem:[%s443 + $0xa8] sm:$0xff]
    %v466 = vld [vmem:[%s443 + $0xb0] sm:$0xff]
    %v467 = vld [vmem:[%s443 + $0xb8] sm:$0xff]
    %v468 = vld [vmem:[%s443 + $0xc0] sm:$0xff]
    %v469 = vld [vmem:[%s443 + $0xc8] sm:$0xff]
    %v470 = vld [vmem:[%s443 + $0xd0] sm:$0xff]
    %v471 = vld [vmem:[%s443 + $0xd8] sm:$0xff]
    %v472 = vld [vmem:[%s443 + $0xe0] sm:$0xff]
    %v473 = vld [vmem:[%s443 + $0xe8] sm:$0xff]
    %v474 = vld [vmem:[%s443 + $0xf0] sm:$0xff]
    %v475 = vld [vmem:[%s443 + $0xf8] sm:$0xff]
    %v476 = vld [vmem:[%s443 + $0x100] sm:$0xff]
    %v477 = vld [vmem:[%s443 + $0x108] sm:$0xff]
    %v478 = vld [vmem:[%s443 + $0x110] sm:$0xff]
    %v479 = vld [vmem:[%s443 + $0x118] sm:$0xff]
    %v480 = vld [vmem:[%s443 + $0x120] sm:$0xff]
    %v481 = vld [vmem:[%s443 + $0x128] sm:$0xff]
    %v482 = vld [vmem:[%s443 + $0x130] sm:$0xff]
    %v483 = vld [vmem:[%s443 + $0x138] sm:$0xff]
    %v484 = vld [vmem:[%s443 + $0x140] sm:$0xff]
    %v485 = vld [vmem:[%s443 + $0x148] sm:$0xff]
    %v486 = vld [vmem:[%s443 + $0x150] sm:$0xff]
    %v487 = vld [vmem:[%s443 + $0x158] sm:$0xff]
    %v488 = vld [vmem:[%s443 + $0x160] sm:$0xff]
    %v489 = vld [vmem:[%s443 + $0x168] sm:$0xff]
    %v490 = vld [vmem:[%s443 + $0x170] sm:$0xff]
    %v491 = vld [vmem:[%s443 + $0x178] sm:$0xff]
    %v492 = vld [vmem:[%s443 + $0x180] sm:$0xff]
    %v493 = vld [vmem:[%s443 + $0x188] sm:$0xff]
    %v494 = vld [vmem:[%s443 + $0x190] sm:$0xff]
    %v495 = vld [vmem:[%s443 + $0x198] sm:$0xff]
    %v496 = vld [vmem:[%s443 + $0x1a0] sm:$0xff]
    %v497 = vld [vmem:[%s443 + $0x1a8] sm:$0xff]
    %v498 = vld [vmem:[%s443 + $0x1b0] sm:$0xff]
    %v499 = vld [vmem:[%s443 + $0x1b8] sm:$0xff]
    %v500 = vld [vmem:[%s443 + $0x1c0] sm:$0xff]
    %v501 = vld [vmem:[%s443 + $0x1c8] sm:$0xff]
    %v502 = vld [vmem:[%s443 + $0x1d0] sm:$0xff]
    %v503 = vld [vmem:[%s443 + $0x1d8] sm:$0xff]
    %v504 = vld [vmem:[%s443 + $0x1e0] sm:$0xff]
    %v505 = vld [vmem:[%s443 + $0x1e8] sm:$0xff]
    %v506 = vld [vmem:[%s443 + $0x1f0] sm:$0xff]
    %v507 = vld [vmem:[%s443 + $0x1f8] sm:$0xff]
    %v508 = vld [vmem:[%s443 + $0x200] sm:$0xff]
    %v509 = vld [vmem:[%s443 + $0x208] sm:$0xff]
    %v510 = vld [vmem:[%s443 + $0x210] sm:$0xff]
    %v511 = vld [vmem:[%s443 + $0x218] sm:$0xff]
    %v512 = vld [vmem:[%s443 + $0x220] sm:$0xff]
    %v513 = vld [vmem:[%s443 + $0x228] sm:$0xff]
    %v514 = vld [vmem:[%s443 + $0x230] sm:$0xff]
    %v515 = vld [vmem:[%s443 + $0x238] sm:$0xff]
    %v516 = vld [vmem:[#allocation5] sm:$0xf]
    %v517 = vld [vmem:[#allocation8] sm:$0xf]
    %v518 = vld [vmem:[%s0] sm:$0xff]
    %v519 = vld [vmem:[%s0 + $0x8] sm:$0xff]
    %v520 = vld [vmem:[%s0 + $0x10] sm:$0xff]
    %v521 = vld [vmem:[%s0 + $0x18] sm:$0xf]
    %vm526 = vcmask 1041408
    %v527 = vrot.slane %v518, 6
    %v528 = vrot.slane %v519, 6
    %v529 = vsel %vm526, %v527, %v528
    %v530 = vrot.slane %v520, 6
    %v531 = vsel %vm526, %v528, %v530
    %v532 = vrot.slane %v521, 6
    %v533 = vsel %vm526, %v530, %v532
    %v536 = vsel %vm526, 0.0, %v527
    %vm537 = vcmask 1045504
    %v538 = vsel %vm537, %v533, 0.0
    %541 = vrot.lane.b32.xlu0 %v536, 2
    %v542 = vpop.permute.xlu0 %541
    %543 = vrot.lane.b32.xlu0 %v529, 2
    %v544 = vpop.permute.xlu0 %543
    %545 = vrot.lane.b32.xlu0 %v531, 2
    %v546 = vpop.permute.xlu0 %545
    %547 = vrot.lane.b32.xlu0 %v538, 2
    %v548 = vpop.permute.xlu0 %547
    %vm553 = vcmask 15360
    %v554 = vsel %vm553, 0.0, %v542
    %v555 = vsel %vm553, 0.0, %v544
    %v556 = vsel %vm553, 0.0, %v546
    %v557 = vsel %vm553, 0.0, %v548
    %vm558 = vcmask 244736
    %v559 = vsel %vm558, %v554, 0.0
    %v560 = vsel %vm558, %v555, 0.0
    %v561 = vsel %vm558, %v556, 0.0
    %v562 = vsel %vm558, %v557, 0.0
    %v563 = vpack.c.bf16 %v560, %v559
    %v564 = vpack.c.bf16 %v562, %v561
    %vm565 = vsmask.f32 7424
    %v567 = vshrl.u32 %v563, 16
    %v569 = vshll.u32 %v563, 16
    %v571 = vrot.slane %v569, 1
    %v572 = vor.u32 %v567, %v571
    %v574 = vshll.u32 %v564, 16
    %v576 = vrot.slane %v574, 1
    %v577 = vsel %vm565, %v572, %v576
    %v578 = vshrl.u32 %v564, 16
    %v580 = vor.u32 %v578, %v576
    %v589 = vunpack.c.l.b16 %v117
    %v590 = vunpack.c.h.b16 %v117
    %v591 = vunpack.c.l.b16 %v118
    %v592 = vunpack.c.h.b16 %v118
    %v593 = vunpack.c.l.b16 %v119
    %v594 = vunpack.c.h.b16 %v119
    %v595 = vunpack.c.l.b16 %v120
    %v596 = vunpack.c.h.b16 %v120
    %v597 = vunpack.c.l.b16 %v121
    %v598 = vunpack.c.h.b16 %v121
    %v599 = vunpack.c.l.b16 %v122
    %v600 = vunpack.c.h.b16 %v122
    %v601 = vunpack.c.l.b16 %v123
    %v602 = vunpack.c.h.b16 %v123
    %v603 = vunpack.c.l.b16 %v124
    %v604 = vunpack.c.h.b16 %v124
    %v605 = vpack.c.b16 %v593, %v589
    %v606 = vpack.c.b16 %v594, %v590
    %v607 = vpack.c.b16 %v595, %v591
    %v608 = vpack.c.b16 %v596, %v592
    %v609 = vpack.c.b16 %v601, %v597
    %v610 = vpack.c.b16 %v602, %v598
    %v611 = vpack.c.b16 %v603, %v599
    %v612 = vpack.c.b16 %v604, %v600
    %vm621 = vcmask 261120
    %v623 = vsel %vm621, %v577, 0
    %v626 = vsel %vm621, %v580, 0
    %628 = vmatprep.subr.bf16.mxu0 0
    %629 = vmatpush1.bf16.msra.mxu0 0
    %630 = vmatprep.subr.bf16.mxu0 0
    %631 = vmatpush1.bf16.msra.mxu0 0
    %632 = vmatprep.subr.bf16.mxu0 0
    %633 = vmatpush1.bf16.msra.mxu0 0
    %634 = vmatprep.subr.bf16.mxu0 0
    %635 = vmatpush1.bf16.msra.mxu0 0
    %636 = vmatprep.subr.bf16.mxu0 0
    %637 = vmatpush1.bf16.msra.mxu0 0
    %638 = vmatprep.subr.bf16.mxu0 0
    %639 = vmatpush1.bf16.msra.mxu0 0
    %640 = vmatprep.subr.bf16.mxu0 %v610
    %641 = vmatpush1.bf16.msra.mxu0 %v609
    %642 = vmatprep.subr.bf16.mxu0 %v606
    %643 = vmatpush1.bf16.msra.mxu0 %v605
    %644 = vmatprep.subr.bf16.mxu0 0
    %645 = vmatpush2.bf16.msra.mxu0 0
    %646 = vmatprep.subr.bf16.mxu0 0
    %647 = vmatpush2.bf16.msra.mxu0 0
    %648 = vmatprep.subr.bf16.mxu0 0
    %649 = vmatpush2.bf16.msra.mxu0 0
    %650 = vmatprep.subr.bf16.mxu0 0
    %651 = vmatpush2.bf16.msra.mxu0 0
    %652 = vmatprep.subr.bf16.mxu0 0
    %653 = vmatpush2.bf16.msra.mxu0 0
    %654 = vmatprep.subr.bf16.mxu0 0
    %655 = vmatpush2.bf16.msra.mxu0 0
    %656 = vmatprep.subr.bf16.mxu0 0
    %657 = vmatpush2.bf16.msra.mxu0 0
    %658 = vmatprep.subr.bf16.mxu0 0
    %659 = vmatpush2.bf16.msra.mxu0 0
    %660 = vmatprep.mubr.bf16.mxu0 0
    %661 = vmatmul.mubr.bf16.gmra.mxu0 %v623
    %v662 = vpop.f32.mrf.mxu0
    %v663 = vadd.f32 0.0, %v662
    %v664 = vpop.f32.mrf.mxu0
    %v665 = vadd.f32 0.0, %v664
    %v666 = vpop.f32.mrf.mxu0
    %v667 = vadd.f32 0.0, %v666
    %v668 = vpop.f32.mrf.mxu0
    %v669 = vadd.f32 0.0, %v668
    %670 = vmatprep.mubr.bf16.mxu0 0
    %671 = vmatmul.mubr.bf16.gmra.mxu0 %v626
    %v672 = vpop.f32.mrf.mxu0
    %v673 = vadd.f32 0.0, %v672
    %v674 = vpop.f32.mrf.mxu0
    %v675 = vadd.f32 0.0, %v674
    %v676 = vpop.f32.mrf.mxu0
    %v677 = vadd.f32 0.0, %v676
    %v678 = vpop.f32.mrf.mxu0
    %v679 = vadd.f32 0.0, %v678
    %680 = vdwg.mxu0
    %681 = vmatprep.subr.bf16.mxu0 0
    %682 = vmatpush1.bf16.msra.mxu0 0
    %683 = vmatprep.subr.bf16.mxu0 0
    %684 = vmatpush1.bf16.msra.mxu0 0
    %685 = vmatprep.subr.bf16.mxu0 0
    %686 = vmatpush1.bf16.msra.mxu0 0
    %687 = vmatprep.subr.bf16.mxu0 0
    %688 = vmatpush1.bf16.msra.mxu0 0
    %689 = vmatprep.subr.bf16.mxu0 0
    %690 = vmatpush1.bf16.msra.mxu0 0
    %691 = vmatprep.subr.bf16.mxu0 0
    %692 = vmatpush1.bf16.msra.mxu0 0
    %693 = vmatprep.subr.bf16.mxu0 %v612
    %694 = vmatpush1.bf16.msra.mxu0 %v611
    %695 = vmatprep.subr.bf16.mxu0 %v608
    %696 = vmatpush1.bf16.msra.mxu0 %v607
    %697 = vmatprep.subr.bf16.mxu0 0
    %698 = vmatpush2.bf16.msra.mxu0 0
    %699 = vmatprep.subr.bf16.mxu0 0
    %700 = vmatpush2.bf16.msra.mxu0 0
    %701 = vmatprep.subr.bf16.mxu0 0
    %702 = vmatpush2.bf16.msra.mxu0 0
    %703 = vmatprep.subr.bf16.mxu0 0
    %704 = vmatpush2.bf16.msra.mxu0 0
    %705 = vmatprep.subr.bf16.mxu0 0
    %706 = vmatpush2.bf16.msra.mxu0 0
    %707 = vmatprep.subr.bf16.mxu0 0
    %708 = vmatpush2.bf16.msra.mxu0 0
    %709 = vmatprep.subr.bf16.mxu0 0
    %710 = vmatpush2.bf16.msra.mxu0 0
    %711 = vmatprep.subr.bf16.mxu0 0
    %712 = vmatpush2.bf16.msra.mxu0 0
    %713 = vmatprep.mubr.bf16.mxu0 0
    %714 = vmatmul.mubr.bf16.gmra.mxu0 %v623
    %v715 = vpop.f32.mrf.mxu0
    %v716 = vadd.f32 0.0, %v715
    %v717 = vpop.f32.mrf.mxu0
    %v718 = vadd.f32 0.0, %v717
    %v719 = vpop.f32.mrf.mxu0
    %v720 = vadd.f32 0.0, %v719
    %v721 = vpop.f32.mrf.mxu0
    %v722 = vadd.f32 0.0, %v721
    %723 = vmatprep.mubr.bf16.mxu0 0
    %724 = vmatmul.mubr.bf16.gmra.mxu0 %v626
    %v725 = vpop.f32.mrf.mxu0
    %v726 = vadd.f32 0.0, %v725
    %v727 = vpop.f32.mrf.mxu0
    %v728 = vadd.f32 0.0, %v727
    %v729 = vpop.f32.mrf.mxu0
    %v730 = vadd.f32 0.0, %v729
    %v731 = vpop.f32.mrf.mxu0
    %v732 = vadd.f32 0.0, %v731
    %733 = vdwg.mxu0
    %v742 = vunpack.c.l.b16 %v108
    %v743 = vunpack.c.h.b16 %v108
    %v744 = vunpack.c.l.b16 %v109
    %v745 = vunpack.c.h.b16 %v109
    %v746 = vunpack.c.l.b16 %v110
    %v747 = vunpack.c.h.b16 %v110
    %v748 = vunpack.c.l.b16 %v111
    %v749 = vunpack.c.h.b16 %v111
    %v750 = vunpack.c.l.b16 %v112
    %v751 = vunpack.c.h.b16 %v112
    %v752 = vunpack.c.l.b16 %v113
    %v753 = vunpack.c.h.b16 %v113
    %v754 = vunpack.c.l.b16 %v114
    %v755 = vunpack.c.h.b16 %v114
    %v756 = vunpack.c.l.b16 %v115
    %v757 = vunpack.c.h.b16 %v115
    %v758 = vpack.c.b16 %v746, %v742
    %v759 = vpack.c.b16 %v747, %v743
    %v760 = vpack.c.b16 %v748, %v744
    %v761 = vpack.c.b16 %v749, %v745
    %v762 = vpack.c.b16 %v754, %v750
    %v763 = vpack.c.b16 %v755, %v751
    %v764 = vpack.c.b16 %v756, %v752
    %v765 = vpack.c.b16 %v757, %v753
    %v774 = vsel %vm621, %v563, 0
    %v776 = vsel %vm621, %v564, 0
    %778 = vmatprep.subr.bf16.mxu0 0
    %779 = vmatpush1.bf16.msra.mxu0 0
    %780 = vmatprep.subr.bf16.mxu0 0
    %781 = vmatpush1.bf16.msra.mxu0 0
    %782 = vmatprep.subr.bf16.mxu0 0
    %783 = vmatpush1.bf16.msra.mxu0 0
    %784 = vmatprep.subr.bf16.mxu0 0
    %785 = vmatpush1.bf16.msra.mxu0 0
    %786 = vmatprep.subr.bf16.mxu0 0
    %787 = vmatpush1.bf16.msra.mxu0 0
    %788 = vmatprep.subr.bf16.mxu0 0
    %789 = vmatpush1.bf16.msra.mxu0 0
    %790 = vmatprep.subr.bf16.mxu0 %v763
    %791 = vmatpush1.bf16.msra.mxu0 %v762
    %792 = vmatprep.subr.bf16.mxu0 %v759
    %793 = vmatpush1.bf16.msra.mxu0 %v758
    %794 = vmatprep.subr.bf16.mxu0 0
    %795 = vmatpush2.bf16.msra.mxu0 0
    %796 = vmatprep.subr.bf16.mxu0 0
    %797 = vmatpush2.bf16.msra.mxu0 0
    %798 = vmatprep.subr.bf16.mxu0 0
    %799 = vmatpush2.bf16.msra.mxu0 0
    %800 = vmatprep.subr.bf16.mxu0 0
    %801 = vmatpush2.bf16.msra.mxu0 0
    %802 = vmatprep.subr.bf16.mxu0 0
    %803 = vmatpush2.bf16.msra.mxu0 0
    %804 = vmatprep.subr.bf16.mxu0 0
    %805 = vmatpush2.bf16.msra.mxu0 0
    %806 = vmatprep.subr.bf16.mxu0 0
    %807 = vmatpush2.bf16.msra.mxu0 0
    %808 = vmatprep.subr.bf16.mxu0 0
    %809 = vmatpush2.bf16.msra.mxu0 0
    %810 = vmatprep.mubr.bf16.mxu0 0
    %811 = vmatmul.mubr.bf16.gmra.mxu0 %v774
    %v812 = vpop.f32.mrf.mxu0
    %v813 = vadd.f32 %v663, %v812
    %v814 = vpop.f32.mrf.mxu0
    %v815 = vadd.f32 %v665, %v814
    %v816 = vpop.f32.mrf.mxu0
    %v817 = vadd.f32 %v667, %v816
    %v818 = vpop.f32.mrf.mxu0
    %v819 = vadd.f32 %v669, %v818
    %820 = vmatprep.mubr.bf16.mxu0 0
    %821 = vmatmul.mubr.bf16.gmra.mxu0 %v776
    %v822 = vpop.f32.mrf.mxu0
    %v823 = vadd.f32 %v673, %v822
    %v824 = vpop.f32.mrf.mxu0
    %v825 = vadd.f32 %v675, %v824
    %v826 = vpop.f32.mrf.mxu0
    %v827 = vadd.f32 %v677, %v826
    %v828 = vpop.f32.mrf.mxu0
    %v829 = vadd.f32 %v679, %v828
    %830 = vdwg.mxu0
    %831 = vmatprep.subr.bf16.mxu0 0
    %832 = vmatpush1.bf16.msra.mxu0 0
    %833 = vmatprep.subr.bf16.mxu0 0
    %834 = vmatpush1.bf16.msra.mxu0 0
    %835 = vmatprep.subr.bf16.mxu0 0
    %836 = vmatpush1.bf16.msra.mxu0 0
    %837 = vmatprep.subr.bf16.mxu0 0
    %838 = vmatpush1.bf16.msra.mxu0 0
    %839 = vmatprep.subr.bf16.mxu0 0
    %840 = vmatpush1.bf16.msra.mxu0 0
    %841 = vmatprep.subr.bf16.mxu0 0
    %842 = vmatpush1.bf16.msra.mxu0 0
    %843 = vmatprep.subr.bf16.mxu0 %v765
    %844 = vmatpush1.bf16.msra.mxu0 %v764
    %845 = vmatprep.subr.bf16.mxu0 %v761
    %846 = vmatpush1.bf16.msra.mxu0 %v760
    %847 = vmatprep.subr.bf16.mxu0 0
    %848 = vmatpush2.bf16.msra.mxu0 0
    %849 = vmatprep.subr.bf16.mxu0 0
    %850 = vmatpush2.bf16.msra.mxu0 0
    %851 = vmatprep.subr.bf16.mxu0 0
    %852 = vmatpush2.bf16.msra.mxu0 0
    %853 = vmatprep.subr.bf16.mxu0 0
    %854 = vmatpush2.bf16.msra.mxu0 0
    %855 = vmatprep.subr.bf16.mxu0 0
    %856 = vmatpush2.bf16.msra.mxu0 0
    %857 = vmatprep.subr.bf16.mxu0 0
    %858 = vmatpush2.bf16.msra.mxu0 0
    %859 = vmatprep.subr.bf16.mxu0 0
    %860 = vmatpush2.bf16.msra.mxu0 0
    %861 = vmatprep.subr.bf16.mxu0 0
    %862 = vmatpush2.bf16.msra.mxu0 0
    %863 = vmatprep.mubr.bf16.mxu0 0
    %864 = vmatmul.mubr.bf16.gmra.mxu0 %v774
    %v865 = vpop.f32.mrf.mxu0
    %v866 = vadd.f32 %v716, %v865
    %v867 = vpop.f32.mrf.mxu0
    %v868 = vadd.f32 %v718, %v867
    %v869 = vpop.f32.mrf.mxu0
    %v870 = vadd.f32 %v720, %v869
    %v871 = vpop.f32.mrf.mxu0
    %v872 = vadd.f32 %v722, %v871
    %873 = vmatprep.mubr.bf16.mxu0 0
    %874 = vmatmul.mubr.bf16.gmra.mxu0 %v776
    %v875 = vpop.f32.mrf.mxu0
    %v876 = vadd.f32 %v726, %v875
    %v877 = vpop.f32.mrf.mxu0
    %v878 = vadd.f32 %v728, %v877
    %v879 = vpop.f32.mrf.mxu0
    %v880 = vadd.f32 %v730, %v879
    %v881 = vpop.f32.mrf.mxu0
    %v882 = vadd.f32 %v732, %v881
    %883 = vdwg.mxu0
    %vm886 = vcmask 1046528
    %v887 = vrot.slane %v563, 1
    %v888 = vrot.slane %v564, 1
    %v889 = vsel %vm886, %v887, %v888
    %v898 = vunpack.c.l.b16 %v126
    %v899 = vunpack.c.h.b16 %v126
    %v900 = vunpack.c.l.b16 %v127
    %v901 = vunpack.c.h.b16 %v127
    %v902 = vunpack.c.l.b16 %v128
    %v903 = vunpack.c.h.b16 %v128
    %v904 = vunpack.c.l.b16 %v129
    %v905 = vunpack.c.h.b16 %v129
    %v906 = vunpack.c.l.b16 %v130
    %v907 = vunpack.c.h.b16 %v130
    %v908 = vunpack.c.l.b16 %v131
    %v909 = vunpack.c.h.b16 %v131
    %v910 = vunpack.c.l.b16 %v132
    %v911 = vunpack.c.h.b16 %v132
    %v912 = vunpack.c.l.b16 %v133
    %v913 = vunpack.c.h.b16 %v133
    %v914 = vpack.c.b16 %v902, %v898
    %v915 = vpack.c.b16 %v903, %v899
    %v916 = vpack.c.b16 %v904, %v900
    %v917 = vpack.c.b16 %v905, %v901
    %v918 = vpack.c.b16 %v910, %v906
    %v919 = vpack.c.b16 %v911, %v907
    %v920 = vpack.c.b16 %v912, %v908
    %v921 = vpack.c.b16 %v913, %v909
    %v931 = vsel %vm621, %v889, 0
    %v934 = vsel %vm621, %v888, 0
    %936 = vmatprep.subr.bf16.mxu0 0
    %937 = vmatpush1.bf16.msra.mxu0 0
    %938 = vmatprep.subr.bf16.mxu0 0
    %939 = vmatpush1.bf16.msra.mxu0 0
    %940 = vmatprep.subr.bf16.mxu0 0
    %941 = vmatpush1.bf16.msra.mxu0 0
    %942 = vmatprep.subr.bf16.mxu0 0
    %943 = vmatpush1.bf16.msra.mxu0 0
    %944 = vmatprep.subr.bf16.mxu0 0
    %945 = vmatpush1.bf16.msra.mxu0 0
    %946 = vmatprep.subr.bf16.mxu0 0
    %947 = vmatpush1.bf16.msra.mxu0 0
    %948 = vmatprep.subr.bf16.mxu0 %v919
    %949 = vmatpush1.bf16.msra.mxu0 %v918
    %950 = vmatprep.subr.bf16.mxu0 %v915
    %951 = vmatpush1.bf16.msra.mxu0 %v914
    %952 = vmatprep.subr.bf16.mxu0 0
    %953 = vmatpush2.bf16.msra.mxu0 0
    %954 = vmatprep.subr.bf16.mxu0 0
    %955 = vmatpush2.bf16.msra.mxu0 0
    %956 = vmatprep.subr.bf16.mxu0 0
    %957 = vmatpush2.bf16.msra.mxu0 0
    %958 = vmatprep.subr.bf16.mxu0 0
    %959 = vmatpush2.bf16.msra.mxu0 0
    %960 = vmatprep.subr.bf16.mxu0 0
    %961 = vmatpush2.bf16.msra.mxu0 0
    %962 = vmatprep.subr.bf16.mxu0 0
    %963 = vmatpush2.bf16.msra.mxu0 0
    %964 = vmatprep.subr.bf16.mxu0 0
    %965 = vmatpush2.bf16.msra.mxu0 0
    %966 = vmatprep.subr.bf16.mxu0 0
    %967 = vmatpush2.bf16.msra.mxu0 0
    %968 = vmatprep.mubr.bf16.mxu0 0
    %969 = vmatmul.mubr.bf16.gmra.mxu0 %v931
    %v970 = vpop.f32.mrf.mxu0
    %v971 = vadd.f32 0.0, %v970
    %v972 = vpop.f32.mrf.mxu0
    %v973 = vadd.f32 0.0, %v972
    %v974 = vpop.f32.mrf.mxu0
    %v975 = vadd.f32 0.0, %v974
    %v976 = vpop.f32.mrf.mxu0
    %v977 = vadd.f32 0.0, %v976
    %978 = vmatprep.mubr.bf16.mxu0 0
    %979 = vmatmul.mubr.bf16.gmra.mxu0 %v934
    %v980 = vpop.f32.mrf.mxu0
    %v981 = vadd.f32 0.0, %v980
    %v982 = vpop.f32.mrf.mxu0
    %v983 = vadd.f32 0.0, %v982
    %v984 = vpop.f32.mrf.mxu0
    %v985 = vadd.f32 0.0, %v984
    %v986 = vpop.f32.mrf.mxu0
    %v987 = vadd.f32 0.0, %v986
    %988 = vdwg.mxu0
    %989 = vmatprep.subr.bf16.mxu0 0
    %990 = vmatpush1.bf16.msra.mxu0 0
    %991 = vmatprep.subr.bf16.mxu0 0
    %992 = vmatpush1.bf16.msra.mxu0 0
    %993 = vmatprep.subr.bf16.mxu0 0
    %994 = vmatpush1.bf16.msra.mxu0 0
    %995 = vmatprep.subr.bf16.mxu0 0
    %996 = vmatpush1.bf16.msra.mxu0 0
    %997 = vmatprep.subr.bf16.mxu0 0
    %998 = vmatpush1.bf16.msra.mxu0 0
    %999 = vmatprep.subr.bf16.mxu0 0
    %1000 = vmatpush1.bf16.msra.mxu0 0
    %1001 = vmatprep.subr.bf16.mxu0 %v921
    %1002 = vmatpush1.bf16.msra.mxu0 %v920
    %1003 = vmatprep.subr.bf16.mxu0 %v917
    %1004 = vmatpush1.bf16.msra.mxu0 %v916
    %1005 = vmatprep.subr.bf16.mxu0 0
    %1006 = vmatpush2.bf16.msra.mxu0 0
    %1007 = vmatprep.subr.bf16.mxu0 0
    %1008 = vmatpush2.bf16.msra.mxu0 0
    %1009 = vmatprep.subr.bf16.mxu0 0
    %1010 = vmatpush2.bf16.msra.mxu0 0
    %1011 = vmatprep.subr.bf16.mxu0 0
    %1012 = vmatpush2.bf16.msra.mxu0 0
    %1013 = vmatprep.subr.bf16.mxu0 0
    %1014 = vmatpush2.bf16.msra.mxu0 0
    %1015 = vmatprep.subr.bf16.mxu0 0
    %1016 = vmatpush2.bf16.msra.mxu0 0
    %1017 = vmatprep.subr.bf16.mxu0 0
    %1018 = vmatpush2.bf16.msra.mxu0 0
    %1019 = vmatprep.subr.bf16.mxu0 0
    %1020 = vmatpush2.bf16.msra.mxu0 0
    %1021 = vmatprep.mubr.bf16.mxu0 0
    %1022 = vmatmul.mubr.bf16.gmra.mxu0 %v931
    %v1023 = vpop.f32.mrf.mxu0
    %v1024 = vadd.f32 0.0, %v1023
    %v1025 = vpop.f32.mrf.mxu0
    %v1026 = vadd.f32 0.0, %v1025
    %v1027 = vpop.f32.mrf.mxu0
    %v1028 = vadd.f32 0.0, %v1027
    %v1029 = vpop.f32.mrf.mxu0
    %v1030 = vadd.f32 0.0, %v1029
    %1031 = vmatprep.mubr.bf16.mxu0 0
    %1032 = vmatmul.mubr.bf16.gmra.mxu0 %v934
    %v1033 = vpop.f32.mrf.mxu0
    %v1034 = vadd.f32 0.0, %v1033
    %v1035 = vpop.f32.mrf.mxu0
    %v1036 = vadd.f32 0.0, %v1035
    %v1037 = vpop.f32.mrf.mxu0
    %v1038 = vadd.f32 0.0, %v1037
    %v1039 = vpop.f32.mrf.mxu0
    %v1040 = vadd.f32 0.0, %v1039
    %1041 = vdwg.mxu0
    %v1042 = vadd.f32 %v813, %v971
    %v1043 = vadd.f32 %v815, %v973
    %v1044 = vadd.f32 %v866, %v1024
    %v1045 = vadd.f32 %v868, %v1026
    %v1046 = vadd.f32 %v817, %v975
    %v1047 = vadd.f32 %v819, %v977
    %v1048 = vadd.f32 %v870, %v1028
    %v1049 = vadd.f32 %v872, %v1030
    %v1050 = vadd.f32 %v823, %v981
    %v1051 = vadd.f32 %v825, %v983
    %v1052 = vadd.f32 %v876, %v1034
    %v1053 = vadd.f32 %v878, %v1036
    %v1054 = vadd.f32 %v827, %v985
    %v1055 = vadd.f32 %v829, %v987
    %v1056 = vadd.f32 %v880, %v1038
    %v1057 = vadd.f32 %v882, %v1040
    %vm1058 = vsmask.f32 6400
    %v1059 = vrot.slane %v567, 1
    %v1060 = vrot.slane %v569, 2
    %v1061 = vor.u32 %v1059, %v1060
    %v1062 = vrot.slane %v578, 1
    %v1063 = vrot.slane %v574, 2
    %v1064 = vor.u32 %v1062, %v1063
    %v1065 = vsel %vm1058, %v1061, %v1064
    %v1074 = vunpack.c.l.b16 %v135
    %v1075 = vunpack.c.h.b16 %v135
    %v1076 = vunpack.c.l.b16 %v136
    %v1077 = vunpack.c.h.b16 %v136
    %v1078 = vunpack.c.l.b16 %v137
    %v1079 = vunpack.c.h.b16 %v137
    %v1080 = vunpack.c.l.b16 %v138
    %v1081 = vunpack.c.h.b16 %v138
    %v1082 = vunpack.c.l.b16 %v139
    %v1083 = vunpack.c.h.b16 %v139
    %v1084 = vunpack.c.l.b16 %v140
    %v1085 = vunpack.c.h.b16 %v140
    %v1086 = vunpack.c.l.b16 %v141
    %v1087 = vunpack.c.h.b16 %v141
    %v1088 = vunpack.c.l.b16 %v142
    %v1089 = vunpack.c.h.b16 %v142
    %v1090 = vpack.c.b16 %v1078, %v1074
    %v1091 = vpack.c.b16 %v1079, %v1075
    %v1092 = vpack.c.b16 %v1080, %v1076
    %v1093 = vpack.c.b16 %v1081, %v1077
    %v1094 = vpack.c.b16 %v1086, %v1082
    %v1095 = vpack.c.b16 %v1087, %v1083
    %v1096 = vpack.c.b16 %v1088, %v1084
    %v1097 = vpack.c.b16 %v1089, %v1085
    %v1107 = vsel %vm621, %v1065, 0
    %v1110 = vsel %vm621, %v1064, 0
    %1112 = vmatprep.subr.bf16.mxu0 0
    %1113 = vmatpush1.bf16.msra.mxu0 0
    %1114 = vmatprep.subr.bf16.mxu0 0
    %1115 = vmatpush1.bf16.msra.mxu0 0
    %1116 = vmatprep.subr.bf16.mxu0 0
    %1117 = vmatpush1.bf16.msra.mxu0 0
    %1118 = vmatprep.subr.bf16.mxu0 0
    %1119 = vmatpush1.bf16.msra.mxu0 0
    %1120 = vmatprep.subr.bf16.mxu0 0
    %1121 = vmatpush1.bf16.msra.mxu0 0
    %1122 = vmatprep.subr.bf16.mxu0 0
    %1123 = vmatpush1.bf16.msra.mxu0 0
    %1124 = vmatprep.subr.bf16.mxu0 %v1095
    %1125 = vmatpush1.bf16.msra.mxu0 %v1094
    %1126 = vmatprep.subr.bf16.mxu0 %v1091
    %1127 = vmatpush1.bf16.msra.mxu0 %v1090
    %1128 = vmatprep.subr.bf16.mxu0 0
    %1129 = vmatpush2.bf16.msra.mxu0 0
    %1130 = vmatprep.subr.bf16.mxu0 0
    %1131 = vmatpush2.bf16.msra.mxu0 0
    %1132 = vmatprep.subr.bf16.mxu0 0
    %1133 = vmatpush2.bf16.msra.mxu0 0
    %1134 = vmatprep.subr.bf16.mxu0 0
    %1135 = vmatpush2.bf16.msra.mxu0 0
    %1136 = vmatprep.subr.bf16.mxu0 0
    %1137 = vmatpush2.bf16.msra.mxu0 0
    %1138 = vmatprep.subr.bf16.mxu0 0
    %1139 = vmatpush2.bf16.msra.mxu0 0
    %1140 = vmatprep.subr.bf16.mxu0 0
    %1141 = vmatpush2.bf16.msra.mxu0 0
    %1142 = vmatprep.subr.bf16.mxu0 0
    %1143 = vmatpush2.bf16.msra.mxu0 0
    %1144 = vmatprep.mubr.bf16.mxu0 0
    %1145 = vmatmul.mubr.bf16.gmra.mxu0 %v1107
    %v1146 = vpop.f32.mrf.mxu0
    %v1147 = vadd.f32 0.0, %v1146
    %v1148 = vpop.f32.mrf.mxu0
    %v1149 = vadd.f32 0.0, %v1148
    %v1150 = vpop.f32.mrf.mxu0
    %v1151 = vadd.f32 0.0, %v1150
    %v1152 = vpop.f32.mrf.mxu0
    %v1153 = vadd.f32 0.0, %v1152
    %1154 = vmatprep.mubr.bf16.mxu0 0
    %1155 = vmatmul.mubr.bf16.gmra.mxu0 %v1110
    %v1156 = vpop.f32.mrf.mxu0
    %v1157 = vadd.f32 0.0, %v1156
    %v1158 = vpop.f32.mrf.mxu0
    %v1159 = vadd.f32 0.0, %v1158
    %v1160 = vpop.f32.mrf.mxu0
    %v1161 = vadd.f32 0.0, %v1160
    %v1162 = vpop.f32.mrf.mxu0
    %v1163 = vadd.f32 0.0, %v1162
    %1164 = vdwg.mxu0
    %1165 = vmatprep.subr.bf16.mxu0 0
    %1166 = vmatpush1.bf16.msra.mxu0 0
    %1167 = vmatprep.subr.bf16.mxu0 0
    %1168 = vmatpush1.bf16.msra.mxu0 0
    %1169 = vmatprep.subr.bf16.mxu0 0
    %1170 = vmatpush1.bf16.msra.mxu0 0
    %1171 = vmatprep.subr.bf16.mxu0 0
    %1172 = vmatpush1.bf16.msra.mxu0 0
    %1173 = vmatprep.subr.bf16.mxu0 0
    %1174 = vmatpush1.bf16.msra.mxu0 0
    %1175 = vmatprep.subr.bf16.mxu0 0
    %1176 = vmatpush1.bf16.msra.mxu0 0
    %1177 = vmatprep.subr.bf16.mxu0 %v1097
    %1178 = vmatpush1.bf16.msra.mxu0 %v1096
    %1179 = vmatprep.subr.bf16.mxu0 %v1093
    %1180 = vmatpush1.bf16.msra.mxu0 %v1092
    %1181 = vmatprep.subr.bf16.mxu0 0
    %1182 = vmatpush2.bf16.msra.mxu0 0
    %1183 = vmatprep.subr.bf16.mxu0 0
    %1184 = vmatpush2.bf16.msra.mxu0 0
    %1185 = vmatprep.subr.bf16.mxu0 0
    %1186 = vmatpush2.bf16.msra.mxu0 0
    %1187 = vmatprep.subr.bf16.mxu0 0
    %1188 = vmatpush2.bf16.msra.mxu0 0
    %1189 = vmatprep.subr.bf16.mxu0 0
    %1190 = vmatpush2.bf16.msra.mxu0 0
    %1191 = vmatprep.subr.bf16.mxu0 0
    %1192 = vmatpush2.bf16.msra.mxu0 0
    %1193 = vmatprep.subr.bf16.mxu0 0
    %1194 = vmatpush2.bf16.msra.mxu0 0
    %1195 = vmatprep.subr.bf16.mxu0 0
    %1196 = vmatpush2.bf16.msra.mxu0 0
    %1197 = vmatprep.mubr.bf16.mxu0 0
    %1198 = vmatmul.mubr.bf16.gmra.mxu0 %v1107
    %v1199 = vpop.f32.mrf.mxu0
    %v1200 = vadd.f32 0.0, %v1199
    %v1201 = vpop.f32.mrf.mxu0
    %v1202 = vadd.f32 0.0, %v1201
    %v1203 = vpop.f32.mrf.mxu0
    %v1204 = vadd.f32 0.0, %v1203
    %v1205 = vpop.f32.mrf.mxu0
    %v1206 = vadd.f32 0.0, %v1205
    %1207 = vmatprep.mubr.bf16.mxu0 0
    %1208 = vmatmul.mubr.bf16.gmra.mxu0 %v1110
    %v1209 = vpop.f32.mrf.mxu0
    %v1210 = vadd.f32 0.0, %v1209
    %v1211 = vpop.f32.mrf.mxu0
    %v1212 = vadd.f32 0.0, %v1211
    %v1213 = vpop.f32.mrf.mxu0
    %v1214 = vadd.f32 0.0, %v1213
    %v1215 = vpop.f32.mrf.mxu0
    %v1216 = vadd.f32 0.0, %v1215
    %1217 = vdwg.mxu0
    %v1218 = vadd.f32 %v1042, %v1147
    %v1219 = vadd.f32 %v1043, %v1149
    %v1220 = vadd.f32 %v1044, %v1200
    %v1221 = vadd.f32 %v1045, %v1202
    %v1222 = vadd.f32 %v1046, %v1151
    %v1223 = vadd.f32 %v1047, %v1153
    %v1224 = vadd.f32 %v1048, %v1204
    %v1225 = vadd.f32 %v1049, %v1206
    %v1226 = vadd.f32 %v1050, %v1157
    %v1227 = vadd.f32 %v1051, %v1159
    %v1228 = vadd.f32 %v1052, %v1210
    %v1229 = vadd.f32 %v1053, %v1212
    %v1230 = vadd.f32 %v1054, %v1161
    %v1231 = vadd.f32 %v1055, %v1163
    %v1232 = vadd.f32 %v1056, %v1214
    %v1233 = vadd.f32 %v1057, %v1216
    %vm1234 = vcmask 1045504
    %v1235 = vrot.slane %v563, 2
    %v1236 = vrot.slane %v564, 2
    %v1237 = vsel %vm1234, %v1235, %v1236
    %v1246 = vunpack.c.l.b16 %v144
    %v1247 = vunpack.c.h.b16 %v144
    %v1248 = vunpack.c.l.b16 %v145
    %v1249 = vunpack.c.h.b16 %v145
    %v1250 = vunpack.c.l.b16 %v146
    %v1251 = vunpack.c.h.b16 %v146
    %v1252 = vunpack.c.l.b16 %v147
    %v1253 = vunpack.c.h.b16 %v147
    %v1254 = vunpack.c.l.b16 %v148
    %v1255 = vunpack.c.h.b16 %v148
    %v1256 = vunpack.c.l.b16 %v149
    %v1257 = vunpack.c.h.b16 %v149
    %v1258 = vunpack.c.l.b16 %v150
    %v1259 = vunpack.c.h.b16 %v150
    %v1260 = vunpack.c.l.b16 %v151
    %v1261 = vunpack.c.h.b16 %v151
    %v1262 = vpack.c.b16 %v1250, %v1246
    %v1263 = vpack.c.b16 %v1251, %v1247
    %v1264 = vpack.c.b16 %v1252, %v1248
    %v1265 = vpack.c.b16 %v1253, %v1249
    %v1266 = vpack.c.b16 %v1258, %v1254
    %v1267 = vpack.c.b16 %v1259, %v1255
    %v1268 = vpack.c.b16 %v1260, %v1256
    %v1269 = vpack.c.b16 %v1261, %v1257
    %v1279 = vsel %vm621, %v1237, 0
    %v1282 = vsel %vm621, %v1236, 0
    %1284 = vmatprep.subr.bf16.mxu0 0
    %1285 = vmatpush1.bf16.msra.mxu0 0
    %1286 = vmatprep.subr.bf16.mxu0 0
    %1287 = vmatpush1.bf16.msra.mxu0 0
    %1288 = vmatprep.subr.bf16.mxu0 0
    %1289 = vmatpush1.bf16.msra.mxu0 0
    %1290 = vmatprep.subr.bf16.mxu0 0
    %1291 = vmatpush1.bf16.msra.mxu0 0
    %1292 = vmatprep.subr.bf16.mxu0 0
    %1293 = vmatpush1.bf16.msra.mxu0 0
    %1294 = vmatprep.subr.bf16.mxu0 0
    %1295 = vmatpush1.bf16.msra.mxu0 0
    %1296 = vmatprep.subr.bf16.mxu0 %v1267
    %1297 = vmatpush1.bf16.msra.mxu0 %v1266
    %1298 = vmatprep.subr.bf16.mxu0 %v1263
    %1299 = vmatpush1.bf16.msra.mxu0 %v1262
    %1300 = vmatprep.subr.bf16.mxu0 0
    %1301 = vmatpush2.bf16.msra.mxu0 0
    %1302 = vmatprep.subr.bf16.mxu0 0
    %1303 = vmatpush2.bf16.msra.mxu0 0
    %1304 = vmatprep.subr.bf16.mxu0 0
    %1305 = vmatpush2.bf16.msra.mxu0 0
    %1306 = vmatprep.subr.bf16.mxu0 0
    %1307 = vmatpush2.bf16.msra.mxu0 0
    %1308 = vmatprep.subr.bf16.mxu0 0
    %1309 = vmatpush2.bf16.msra.mxu0 0
    %1310 = vmatprep.subr.bf16.mxu0 0
    %1311 = vmatpush2.bf16.msra.mxu0 0
    %1312 = vmatprep.subr.bf16.mxu0 0
    %1313 = vmatpush2.bf16.msra.mxu0 0
    %1314 = vmatprep.subr.bf16.mxu0 0
    %1315 = vmatpush2.bf16.msra.mxu0 0
    %1316 = vmatprep.mubr.bf16.mxu0 0
    %1317 = vmatmul.mubr.bf16.gmra.mxu0 %v1279
    %v1318 = vpop.f32.mrf.mxu0
    %v1319 = vadd.f32 0.0, %v1318
    %v1320 = vpop.f32.mrf.mxu0
    %v1321 = vadd.f32 0.0, %v1320
    %v1322 = vpop.f32.mrf.mxu0
    %v1323 = vadd.f32 0.0, %v1322
    %v1324 = vpop.f32.mrf.mxu0
    %v1325 = vadd.f32 0.0, %v1324
    %1326 = vmatprep.mubr.bf16.mxu0 0
    %1327 = vmatmul.mubr.bf16.gmra.mxu0 %v1282
    %v1328 = vpop.f32.mrf.mxu0
    %v1329 = vadd.f32 0.0, %v1328
    %v1330 = vpop.f32.mrf.mxu0
    %v1331 = vadd.f32 0.0, %v1330
    %v1332 = vpop.f32.mrf.mxu0
    %v1333 = vadd.f32 0.0, %v1332
    %v1334 = vpop.f32.mrf.mxu0
    %v1335 = vadd.f32 0.0, %v1334
    %1336 = vdwg.mxu0
    %1337 = vmatprep.subr.bf16.mxu0 0
    %1338 = vmatpush1.bf16.msra.mxu0 0
    %1339 = vmatprep.subr.bf16.mxu0 0
    %1340 = vmatpush1.bf16.msra.mxu0 0
    %1341 = vmatprep.subr.bf16.mxu0 0
    %1342 = vmatpush1.bf16.msra.mxu0 0
    %1343 = vmatprep.subr.bf16.mxu0 0
    %1344 = vmatpush1.bf16.msra.mxu0 0
    %1345 = vmatprep.subr.bf16.mxu0 0
    %1346 = vmatpush1.bf16.msra.mxu0 0
    %1347 = vmatprep.subr.bf16.mxu0 0
    %1348 = vmatpush1.bf16.msra.mxu0 0
    %1349 = vmatprep.subr.bf16.mxu0 %v1269
    %1350 = vmatpush1.bf16.msra.mxu0 %v1268
    %1351 = vmatprep.subr.bf16.mxu0 %v1265
    %1352 = vmatpush1.bf16.msra.mxu0 %v1264
    %1353 = vmatprep.subr.bf16.mxu0 0
    %1354 = vmatpush2.bf16.msra.mxu0 0
    %1355 = vmatprep.subr.bf16.mxu0 0
    %1356 = vmatpush2.bf16.msra.mxu0 0
    %1357 = vmatprep.subr.bf16.mxu0 0
    %1358 = vmatpush2.bf16.msra.mxu0 0
    %1359 = vmatprep.subr.bf16.mxu0 0
    %1360 = vmatpush2.bf16.msra.mxu0 0
    %1361 = vmatprep.subr.bf16.mxu0 0
    %1362 = vmatpush2.bf16.msra.mxu0 0
    %1363 = vmatprep.subr.bf16.mxu0 0
    %1364 = vmatpush2.bf16.msra.mxu0 0
    %1365 = vmatprep.subr.bf16.mxu0 0
    %1366 = vmatpush2.bf16.msra.mxu0 0
    %1367 = vmatprep.subr.bf16.mxu0 0
    %1368 = vmatpush2.bf16.msra.mxu0 0
    %1369 = vmatprep.mubr.bf16.mxu0 0
    %1370 = vmatmul.mubr.bf16.gmra.mxu0 %v1279
    %v1371 = vpop.f32.mrf.mxu0
    %v1372 = vadd.f32 0.0, %v1371
    %v1373 = vpop.f32.mrf.mxu0
    %v1374 = vadd.f32 0.0, %v1373
    %v1375 = vpop.f32.mrf.mxu0
    %v1376 = vadd.f32 0.0, %v1375
    %v1377 = vpop.f32.mrf.mxu0
    %v1378 = vadd.f32 0.0, %v1377
    %1379 = vmatprep.mubr.bf16.mxu0 0
    %1380 = vmatmul.mubr.bf16.gmra.mxu0 %v1282
    %v1381 = vpop.f32.mrf.mxu0
    %v1382 = vadd.f32 0.0, %v1381
    %v1383 = vpop.f32.mrf.mxu0
    %v1384 = vadd.f32 0.0, %v1383
    %v1385 = vpop.f32.mrf.mxu0
    %v1386 = vadd.f32 0.0, %v1385
    %v1387 = vpop.f32.mrf.mxu0
    %v1388 = vadd.f32 0.0, %v1387
    %1389 = vdwg.mxu0
    %v1390 = vadd.f32 %v1218, %v1319
    %v1391 = vadd.f32 %v1219, %v1321
    %v1392 = vadd.f32 %v1220, %v1372
    %v1393 = vadd.f32 %v1221, %v1374
    %v1394 = vadd.f32 %v1222, %v1323
    %v1395 = vadd.f32 %v1223, %v1325
    %v1396 = vadd.f32 %v1224, %v1376
    %v1397 = vadd.f32 %v1225, %v1378
    %v1398 = vadd.f32 %v1226, %v1329
    %v1399 = vadd.f32 %v1227, %v1331
    %v1400 = vadd.f32 %v1228, %v1382
    %v1401 = vadd.f32 %v1229, %v1384
    %v1402 = vadd.f32 %v1230, %v1333
    %v1403 = vadd.f32 %v1231, %v1335
    %v1404 = vadd.f32 %v1232, %v1386
    %v1405 = vadd.f32 %v1233, %v1388
    %v1407 = vlaneseq
    %v1408 = vshrl.u32 %v1407, 7
    %v1409 = vsub.s32 0, %v1408
    %v1410 = vrot.slane %v516, %v1409
    %v1411 = vlaneseq
    %v1412 = vshrl.u32 %v1411, 7
    %v1413 = vsub.s32 1, %v1412
    %v1414 = vrot.slane %v516, %v1413
    %v1415 = vlaneseq
    %v1416 = vshrl.u32 %v1415, 7
    %v1417 = vsub.s32 2, %v1416
    %v1418 = vrot.slane %v516, %v1417
    %v1419 = vlaneseq
    %v1420 = vshrl.u32 %v1419, 7
    %v1421 = vsub.s32 3, %v1420
    %v1422 = vrot.slane %v516, %v1421
    %v1427 = vadd.f32 %v1390, %v1410
    %v1428 = vadd.f32 %v1391, %v1414
    %v1429 = vadd.f32 %v1392, %v1418
    %v1430 = vadd.f32 %v1393, %v1422
    %v1431 = vadd.f32 %v1394, %v1410
    %v1432 = vadd.f32 %v1395, %v1414
    %v1433 = vadd.f32 %v1396, %v1418
    %v1434 = vadd.f32 %v1397, %v1422
    %v1435 = vadd.f32 %v1398, %v1410
    %v1436 = vadd.f32 %v1399, %v1414
    %v1437 = vadd.f32 %v1400, %v1418
    %v1438 = vadd.f32 %v1401, %v1422
    %v1439 = vadd.f32 %v1402, %v1410
    %v1440 = vadd.f32 %v1403, %v1414
    %v1441 = vadd.f32 %v1404, %v1418
    %v1442 = vadd.f32 %v1405, %v1422
    %1447 = vrot.lane.b32.xlu0 %v1427, 112
    %v1448 = vpop.permute.xlu0 %1447
    %1449 = vrot.lane.b32.xlu0 %v1431, 112
    %v1450 = vpop.permute.xlu0 %1449
    %1451 = vrot.lane.b32.xlu0 %v1435, 112
    %v1452 = vpop.permute.xlu0 %1451
    %1453 = vrot.lane.b32.xlu0 %v1439, 112
    %v1454 = vpop.permute.xlu0 %1453
    %v1459 = vmax.f32 %v1427, %v1448
    %v1460 = vmax.f32 %v1431, %v1450
    %v1461 = vmax.f32 %v1435, %v1452
    %v1462 = vmax.f32 %v1439, %v1454
    %1467 = vrot.lane.b32.xlu0 %v1428, 112
    %v1468 = vpop.permute.xlu0 %1467
    %1469 = vrot.lane.b32.xlu0 %v1432, 112
    %v1470 = vpop.permute.xlu0 %1469
    %1471 = vrot.lane.b32.xlu0 %v1436, 112
    %v1472 = vpop.permute.xlu0 %1471
    %1473 = vrot.lane.b32.xlu0 %v1440, 112
    %v1474 = vpop.permute.xlu0 %1473
    %v1479 = vmax.f32 %v1428, %v1468
    %v1480 = vmax.f32 %v1432, %v1470
    %v1481 = vmax.f32 %v1436, %v1472
    %v1482 = vmax.f32 %v1440, %v1474
    %1487 = vrot.lane.b32.xlu0 %v1429, 112
    %v1488 = vpop.permute.xlu0 %1487
    %1489 = vrot.lane.b32.xlu0 %v1433, 112
    %v1490 = vpop.permute.xlu0 %1489
    %1491 = vrot.lane.b32.xlu0 %v1437, 112
    %v1492 = vpop.permute.xlu0 %1491
    %1493 = vrot.lane.b32.xlu0 %v1441, 112
    %v1494 = vpop.permute.xlu0 %1493
    %v1499 = vmax.f32 %v1429, %v1488
    %v1500 = vmax.f32 %v1433, %v1490
    %v1501 = vmax.f32 %v1437, %v1492
    %v1502 = vmax.f32 %v1441, %v1494
    %1507 = vrot.lane.b32.xlu0 %v1430, 112
    %v1508 = vpop.permute.xlu0 %1507
    %1509 = vrot.lane.b32.xlu0 %v1434, 112
    %v1510 = vpop.permute.xlu0 %1509
    %1511 = vrot.lane.b32.xlu0 %v1438, 112
    %v1512 = vpop.permute.xlu0 %1511
    %1513 = vrot.lane.b32.xlu0 %v1442, 112
    %v1514 = vpop.permute.xlu0 %1513
    %v1519 = vmax.f32 %v1430, %v1508
    %v1520 = vmax.f32 %v1434, %v1510
    %v1521 = vmax.f32 %v1438, %v1512
    %v1522 = vmax.f32 %v1442, %v1514
    %1527 = vrot.lane.b32.xlu0 %v1459, 112
    %v1528 = vpop.permute.xlu0 %1527
    %1529 = vrot.lane.b32.xlu0 %v1460, 112
    %v1530 = vpop.permute.xlu0 %1529
    %1531 = vrot.lane.b32.xlu0 %v1461, 112
    %v1532 = vpop.permute.xlu0 %1531
    %1533 = vrot.lane.b32.xlu0 %v1462, 112
    %v1534 = vpop.permute.xlu0 %1533
    %1539 = vrot.lane.b32.xlu0 %v1459, 96
    %v1540 = vpop.permute.xlu0 %1539
    %1541 = vrot.lane.b32.xlu0 %v1460, 96
    %v1542 = vpop.permute.xlu0 %1541
    %1543 = vrot.lane.b32.xlu0 %v1461, 96
    %v1544 = vpop.permute.xlu0 %1543
    %1545 = vrot.lane.b32.xlu0 %v1462, 96
    %v1546 = vpop.permute.xlu0 %1545
    %1551 = vrot.lane.b32.xlu0 %v1459, 80
    %v1552 = vpop.permute.xlu0 %1551
    %1553 = vrot.lane.b32.xlu0 %v1460, 80
    %v1554 = vpop.permute.xlu0 %1553
    %1555 = vrot.lane.b32.xlu0 %v1461, 80
    %v1556 = vpop.permute.xlu0 %1555
    %1557 = vrot.lane.b32.xlu0 %v1462, 80
    %v1558 = vpop.permute.xlu0 %1557
    %1567 = vrot.lane.b32.xlu0 %v1479, 64
    %v1568 = vpop.permute.xlu0 %1567
    %1569 = vrot.lane.b32.xlu0 %v1480, 64
    %v1570 = vpop.permute.xlu0 %1569
    %1571 = vrot.lane.b32.xlu0 %v1481, 64
    %v1572 = vpop.permute.xlu0 %1571
    %1573 = vrot.lane.b32.xlu0 %v1482, 64
    %v1574 = vpop.permute.xlu0 %1573
    %1579 = vrot.lane.b32.xlu0 %v1479, 48
    %v1580 = vpop.permute.xlu0 %1579
    %1581 = vrot.lane.b32.xlu0 %v1480, 48
    %v1582 = vpop.permute.xlu0 %1581
    %1583 = vrot.lane.b32.xlu0 %v1481, 48
    %v1584 = vpop.permute.xlu0 %1583
    %1585 = vrot.lane.b32.xlu0 %v1482, 48
    %v1586 = vpop.permute.xlu0 %1585
    %1591 = vrot.lane.b32.xlu0 %v1479, 32
    %v1592 = vpop.permute.xlu0 %1591
    %1593 = vrot.lane.b32.xlu0 %v1480, 32
    %v1594 = vpop.permute.xlu0 %1593
    %1595 = vrot.lane.b32.xlu0 %v1481, 32
    %v1596 = vpop.permute.xlu0 %1595
    %1597 = vrot.lane.b32.xlu0 %v1482, 32
    %v1598 = vpop.permute.xlu0 %1597
    %1603 = vrot.lane.b32.xlu0 %v1479, 16
    %v1604 = vpop.permute.xlu0 %1603
    %1605 = vrot.lane.b32.xlu0 %v1480, 16
    %v1606 = vpop.permute.xlu0 %1605
    %1607 = vrot.lane.b32.xlu0 %v1481, 16
    %v1608 = vpop.permute.xlu0 %1607
    %1609 = vrot.lane.b32.xlu0 %v1482, 16
    %v1610 = vpop.permute.xlu0 %1609
    %1619 = vrot.lane.b32.xlu0 %v1499, 112
    %v1620 = vpop.permute.xlu0 %1619
    %1621 = vrot.lane.b32.xlu0 %v1500, 112
    %v1622 = vpop.permute.xlu0 %1621
    %1623 = vrot.lane.b32.xlu0 %v1501, 112
    %v1624 = vpop.permute.xlu0 %1623
    %1625 = vrot.lane.b32.xlu0 %v1502, 112
    %v1626 = vpop.permute.xlu0 %1625
    %1631 = vrot.lane.b32.xlu0 %v1499, 96
    %v1632 = vpop.permute.xlu0 %1631
    %1633 = vrot.lane.b32.xlu0 %v1500, 96
    %v1634 = vpop.permute.xlu0 %1633
    %1635 = vrot.lane.b32.xlu0 %v1501, 96
    %v1636 = vpop.permute.xlu0 %1635
    %1637 = vrot.lane.b32.xlu0 %v1502, 96
    %v1638 = vpop.permute.xlu0 %1637
    %1643 = vrot.lane.b32.xlu0 %v1499, 80
    %v1644 = vpop.permute.xlu0 %1643
    %1645 = vrot.lane.b32.xlu0 %v1500, 80
    %v1646 = vpop.permute.xlu0 %1645
    %1647 = vrot.lane.b32.xlu0 %v1501, 80
    %v1648 = vpop.permute.xlu0 %1647
    %1649 = vrot.lane.b32.xlu0 %v1502, 80
    %v1650 = vpop.permute.xlu0 %1649
    %1659 = vrot.lane.b32.xlu0 %v1519, 64
    %v1660 = vpop.permute.xlu0 %1659
    %1661 = vrot.lane.b32.xlu0 %v1520, 64
    %v1662 = vpop.permute.xlu0 %1661
    %1663 = vrot.lane.b32.xlu0 %v1521, 64
    %v1664 = vpop.permute.xlu0 %1663
    %1665 = vrot.lane.b32.xlu0 %v1522, 64
    %v1666 = vpop.permute.xlu0 %1665
    %1671 = vrot.lane.b32.xlu0 %v1519, 48
    %v1672 = vpop.permute.xlu0 %1671
    %1673 = vrot.lane.b32.xlu0 %v1520, 48
    %v1674 = vpop.permute.xlu0 %1673
    %1675 = vrot.lane.b32.xlu0 %v1521, 48
    %v1676 = vpop.permute.xlu0 %1675
    %1677 = vrot.lane.b32.xlu0 %v1522, 48
    %v1678 = vpop.permute.xlu0 %1677
    %vm1683 = vcmask 130048
    %v1684 = vsel %vm1683, %v1459, %v1528
    %v1685 = vsel %vm1683, %v1460, %v1530
    %v1686 = vsel %vm1683, %v1461, %v1532
    %v1687 = vsel %vm1683, %v1462, %v1534
    %v1688 = vsel %vm621, %v1684, %v1540
    %v1689 = vsel %vm621, %v1685, %v1542
    %v1690 = vsel %vm621, %v1686, %v1544
    %v1691 = vsel %vm621, %v1687, %v1546
    %vm1692 = vcmask 392192
    %v1693 = vsel %vm1692, %v1688, %v1552
    %v1694 = vsel %vm1692, %v1689, %v1554
    %v1695 = vsel %vm1692, %v1690, %v1556
    %v1696 = vsel %vm1692, %v1691, %v1558
    %vm1697 = vcmask 523264
    %v1698 = vsel %vm1697, %v1693, %v1568
    %v1699 = vsel %vm1697, %v1694, %v1570
    %v1700 = vsel %vm1697, %v1695, %v1572
    %v1701 = vsel %vm1697, %v1696, %v1574
    %vm1702 = vcmask 654336
    %v1703 = vsel %vm1702, %v1698, %v1580
    %v1704 = vsel %vm1702, %v1699, %v1582
    %v1705 = vsel %vm1702, %v1700, %v1584
    %v1706 = vsel %vm1702, %v1701, %v1586
    %vm1707 = vcmask 785408
    %v1708 = vsel %vm1707, %v1703, %v1592
    %v1709 = vsel %vm1707, %v1704, %v1594
    %v1710 = vsel %vm1707, %v1705, %v1596
    %v1711 = vsel %vm1707, %v1706, %v1598
    %vm1712 = vcmask 916480
    %v1713 = vsel %vm1712, %v1708, %v1604
    %v1714 = vsel %vm1712, %v1709, %v1606
    %v1715 = vsel %vm1712, %v1710, %v1608
    %v1716 = vsel %vm1712, %v1711, %v1610
    %v1717 = vsel %vm1683, %v1499, %v1620
    %v1718 = vsel %vm1683, %v1500, %v1622
    %v1719 = vsel %vm1683, %v1501, %v1624
    %v1720 = vsel %vm1683, %v1502, %v1626
    %v1721 = vsel %vm621, %v1717, %v1632
    %v1722 = vsel %vm621, %v1718, %v1634
    %v1723 = vsel %vm621, %v1719, %v1636
    %v1724 = vsel %vm621, %v1720, %v1638
    %v1725 = vsel %vm1692, %v1721, %v1644
    %v1726 = vsel %vm1692, %v1722, %v1646
    %v1727 = vsel %vm1692, %v1723, %v1648
    %v1728 = vsel %vm1692, %v1724, %v1650
    %v1729 = vsel %vm1697, %v1725, %v1660
    %v1730 = vsel %vm1697, %v1726, %v1662
    %v1731 = vsel %vm1697, %v1727, %v1664
    %v1732 = vsel %vm1697, %v1728, %v1666
    %v1733 = vsel %vm1702, %v1729, %v1672
    %v1734 = vsel %vm1702, %v1730, %v1674
    %v1735 = vsel %vm1702, %v1731, %v1676
    %v1736 = vsel %vm1702, %v1732, %v1678
    %v1739 = vrot.slane %v1713, 1
    %v1740 = vrot.slane %v1733, 1
    %v1743 = vmax.f32 %v1713, %v1739
    %v1744 = vmax.f32 %v1733, %v1740
    %v1747 = vrot.slane %v1714, 1
    %v1748 = vrot.slane %v1734, 1
    %v1751 = vmax.f32 %v1714, %v1747
    %v1752 = vmax.f32 %v1734, %v1748
    %v1755 = vrot.slane %v1715, 1
    %v1756 = vrot.slane %v1735, 1
    %v1759 = vmax.f32 %v1715, %v1755
    %v1760 = vmax.f32 %v1735, %v1756
    %v1763 = vrot.slane %v1716, 1
    %v1764 = vrot.slane %v1736, 1
    %v1767 = vmax.f32 %v1716, %v1763
    %v1768 = vmax.f32 %v1736, %v1764
    %v1771 = vrot.slane %v1743, 1
    %v1772 = vrot.slane %v1744, 1
    %v1775 = vrot.slane %v1743, 2
    %v1776 = vrot.slane %v1744, 2
    %v1779 = vrot.slane %v1743, 3
    %v1780 = vrot.slane %v1744, 3
    %v1785 = vrot.slane %v1751, 4
    %v1786 = vrot.slane %v1752, 4
    %v1789 = vrot.slane %v1751, 5
    %v1790 = vrot.slane %v1752, 5
    %v1793 = vrot.slane %v1751, 6
    %v1794 = vrot.slane %v1752, 6
    %v1797 = vrot.slane %v1751, 7
    %v1798 = vrot.slane %v1752, 7
    %v1803 = vrot.slane %v1759, 1
    %v1804 = vrot.slane %v1760, 1
    %v1807 = vrot.slane %v1759, 2
    %v1808 = vrot.slane %v1760, 2
    %v1811 = vrot.slane %v1759, 3
    %v1812 = vrot.slane %v1760, 3
    %v1817 = vrot.slane %v1767, 4
    %v1818 = vrot.slane %v1768, 4
    %v1821 = vrot.slane %v1767, 5
    %v1822 = vrot.slane %v1768, 5
    %vm1825 = vcmask 1040384
    %v1826 = vsel %vm1825, %v1743, %v1771
    %v1827 = vsel %vm1825, %v1744, %v1772
    %v1828 = vsel %vm526, %v1826, %v1775
    %v1829 = vsel %vm526, %v1827, %v1776
    %vm1830 = vcmask 1042432
    %v1831 = vsel %vm1830, %v1828, %v1779
    %v1832 = vsel %vm1830, %v1829, %v1780
    %vm1833 = vcmask 1043456
    %v1834 = vsel %vm1833, %v1831, %v1785
    %v1835 = vsel %vm1833, %v1832, %v1786
    %vm1836 = vcmask 1044480
    %v1837 = vsel %vm1836, %v1834, %v1789
    %v1838 = vsel %vm1836, %v1835, %v1790
    %v1839 = vsel %vm537, %v1837, %v1793
    %v1840 = vsel %vm537, %v1838, %v1794
    %vm1841 = vcmask 1046528
    %v1842 = vsel %vm1841, %v1839, %v1797
    %v1843 = vsel %vm1841, %v1840, %v1798
    %v1844 = vsel %vm1825, %v1759, %v1803
    %v1845 = vsel %vm1825, %v1760, %v1804
    %v1846 = vsel %vm526, %v1844, %v1807
    %v1847 = vsel %vm526, %v1845, %v1808
    %v1848 = vsel %vm1830, %v1846, %v1811
    %v1849 = vsel %vm1830, %v1847, %v1812
    %v1850 = vsel %vm1833, %v1848, %v1817
    %v1851 = vsel %vm1833, %v1849, %v1818
    %v1852 = vsel %vm1836, %v1850, %v1821
    %v1853 = vsel %vm1836, %v1851, %v1822
    %v1854 = vmax.f32 %v1842, 0.0
    %v1855 = vmax.f32 %v1843, 0.0
    %v1856 = vmax.f32 %v1852, 0.0
    %v1857 = vmax.f32 %v1853, 0.0
    %v1862 = vrot.slane %v1854, 6
    %v1863 = vrot.slane %v1855, 6
    %v1864 = vrot.slane %v1856, 6
    %v1865 = vsel %vm526, %v1862, %v1864
    %v1866 = vrot.slane %v1857, 6
    %v1867 = vsel %vm526, %v1863, %v1866
    %v1870 = vsel %vm526, 0.0, %v1862
    %v1871 = vsel %vm526, 0.0, %v1863
    %1875 = vrot.lane.b32.xlu0 %v1870, 32
    %v1876 = vpop.permute.xlu0 %1875
    %1877 = vrot.lane.b32.xlu0 %v1871, 32
    %v1878 = vpop.permute.xlu0 %1877
    %1879 = vrot.lane.b32.xlu0 %v1865, 32
    %v1880 = vpop.permute.xlu0 %1879
    %1881 = vrot.lane.b32.xlu0 %v1867, 32
    %v1882 = vpop.permute.xlu0 %1881
    %1883 = vrot.lane.b32.xlu0 0.0, 32
    %v1884 = vpop.permute.xlu0 %1883
    %v1885 = vsel %vm621, %v1876, %v1878
    %v1886 = vsel %vm621, %v1880, %v1882
    %v1892 = vsel %vm621, 0.0, %v1876
    %v1893 = vsel %vm621, 0.0, %v1880
    %v1894 = vsel %vm621, 0.0, %v1884
    %v1895 = vpack.c.bf16 %v1893, %v1892
    %v1896 = vpack.c.bf16 %v1886, %v1885
    %v1897 = vpack.c.bf16 0.0, 0.0
    %v1899 = vshrl.u32 %v1895, 16
    %v1901 = vshll.u32 %v1895, 16
    %v1903 = vrot.slane %v1901, 1
    %v1904 = vor.u32 %v1899, %v1903
    %v1906 = vshrl.u32 %v1896, 16
    %v1908 = vshll.u32 %v1896, 16
    %v1910 = vrot.slane %v1908, 1
    %v1911 = vor.u32 %v1906, %v1910
    %v1913 = vshrl.u32 %v1897, 16
    %v1915 = vshll.u32 %v1897, 16
    %v1917 = vrot.slane %v1915, 1
    %v1918 = vor.u32 %v1913, %v1917
    %v1993 = vunpack.c.l.b16 %v225
    %v1994 = vunpack.c.h.b16 %v225
    %v1995 = vunpack.c.l.b16 %v226
    %v1996 = vunpack.c.h.b16 %v226
    %v1997 = vunpack.c.l.b16 %v227
    %v1998 = vunpack.c.h.b16 %v227
    %v1999 = vunpack.c.l.b16 %v228
    %v2000 = vunpack.c.h.b16 %v228
    %v2001 = vunpack.c.l.b16 %v229
    %v2002 = vunpack.c.h.b16 %v229
    %v2003 = vunpack.c.l.b16 %v230
    %v2004 = vunpack.c.h.b16 %v230
    %v2005 = vunpack.c.l.b16 %v231
    %v2006 = vunpack.c.h.b16 %v231
    %v2007 = vunpack.c.l.b16 %v232
    %v2008 = vunpack.c.h.b16 %v232
    %v2009 = vunpack.c.l.b16 %v233
    %v2010 = vunpack.c.h.b16 %v233
    %v2011 = vunpack.c.l.b16 %v234
    %v2012 = vunpack.c.h.b16 %v234
    %v2013 = vunpack.c.l.b16 %v235
    %v2014 = vunpack.c.h.b16 %v235
    %v2015 = vunpack.c.l.b16 %v236
    %v2016 = vunpack.c.h.b16 %v236
    %v2017 = vunpack.c.l.b16 %v237
    %v2018 = vunpack.c.h.b16 %v237
    %v2019 = vunpack.c.l.b16 %v238
    %v2020 = vunpack.c.h.b16 %v238
    %v2021 = vunpack.c.l.b16 %v239
    %v2022 = vunpack.c.h.b16 %v239
    %v2023 = vunpack.c.l.b16 %v240
    %v2024 = vunpack.c.h.b16 %v240
    %v2025 = vunpack.c.l.b16 %v241
    %v2026 = vunpack.c.h.b16 %v241
    %v2027 = vunpack.c.l.b16 %v242
    %v2028 = vunpack.c.h.b16 %v242
    %v2029 = vunpack.c.l.b16 %v243
    %v2030 = vunpack.c.h.b16 %v243
    %v2031 = vunpack.c.l.b16 %v244
    %v2032 = vunpack.c.h.b16 %v244
    %v2033 = vunpack.c.l.b16 %v245
    %v2034 = vunpack.c.h.b16 %v245
    %v2035 = vunpack.c.l.b16 %v246
    %v2036 = vunpack.c.h.b16 %v246
    %v2037 = vunpack.c.l.b16 %v247
    %v2038 = vunpack.c.h.b16 %v247
    %v2039 = vunpack.c.l.b16 %v248
    %v2040 = vunpack.c.h.b16 %v248
    %v2041 = vunpack.c.l.b16 %v249
    %v2042 = vunpack.c.h.b16 %v249
    %v2043 = vunpack.c.l.b16 %v250
    %v2044 = vunpack.c.h.b16 %v250
    %v2045 = vunpack.c.l.b16 %v251
    %v2046 = vunpack.c.h.b16 %v251
    %v2047 = vunpack.c.l.b16 %v252
    %v2048 = vunpack.c.h.b16 %v252
    %v2049 = vunpack.c.l.b16 %v253
    %v2050 = vunpack.c.h.b16 %v253
    %v2051 = vunpack.c.l.b16 %v254
    %v2052 = vunpack.c.h.b16 %v254
    %v2053 = vunpack.c.l.b16 %v255
    %v2054 = vunpack.c.h.b16 %v255
    %v2055 = vunpack.c.l.b16 %v256
    %v2056 = vunpack.c.h.b16 %v256
    %v2057 = vunpack.c.l.b16 %v257
    %v2058 = vunpack.c.h.b16 %v257
    %v2059 = vunpack.c.l.b16 %v258
    %v2060 = vunpack.c.h.b16 %v258
    %v2061 = vunpack.c.l.b16 %v259
    %v2062 = vunpack.c.h.b16 %v259
    %v2063 = vunpack.c.l.b16 %v260
    %v2064 = vunpack.c.h.b16 %v260
    %v2065 = vunpack.c.l.b16 %v261
    %v2066 = vunpack.c.h.b16 %v261
    %v2067 = vunpack.c.l.b16 %v262
    %v2068 = vunpack.c.h.b16 %v262
    %v2069 = vunpack.c.l.b16 %v263
    %v2070 = vunpack.c.h.b16 %v263
    %v2071 = vunpack.c.l.b16 %v264
    %v2072 = vunpack.c.h.b16 %v264
    %v2073 = vunpack.c.l.b16 %v265
    %v2074 = vunpack.c.h.b16 %v265
    %v2075 = vunpack.c.l.b16 %v266
    %v2076 = vunpack.c.h.b16 %v266
    %v2077 = vunpack.c.l.b16 %v267
    %v2078 = vunpack.c.h.b16 %v267
    %v2079 = vunpack.c.l.b16 %v268
    %v2080 = vunpack.c.h.b16 %v268
    %v2081 = vunpack.c.l.b16 %v269
    %v2082 = vunpack.c.h.b16 %v269
    %v2083 = vunpack.c.l.b16 %v270
    %v2084 = vunpack.c.h.b16 %v270
    %v2085 = vunpack.c.l.b16 %v271
    %v2086 = vunpack.c.h.b16 %v271
    %v2087 = vunpack.c.l.b16 %v272
    %v2088 = vunpack.c.h.b16 %v272
    %v2089 = vunpack.c.l.b16 %v273
    %v2090 = vunpack.c.h.b16 %v273
    %v2091 = vunpack.c.l.b16 %v274
    %v2092 = vunpack.c.h.b16 %v274
    %v2093 = vunpack.c.l.b16 %v275
    %v2094 = vunpack.c.h.b16 %v275
    %v2095 = vunpack.c.l.b16 %v276
    %v2096 = vunpack.c.h.b16 %v276
    %v2097 = vunpack.c.l.b16 %v277
    %v2098 = vunpack.c.h.b16 %v277
    %v2099 = vunpack.c.l.b16 %v278
    %v2100 = vunpack.c.h.b16 %v278
    %v2101 = vunpack.c.l.b16 %v279
    %v2102 = vunpack.c.h.b16 %v279
    %v2103 = vunpack.c.l.b16 %v280
    %v2104 = vunpack.c.h.b16 %v280
    %v2105 = vunpack.c.l.b16 %v281
    %v2106 = vunpack.c.h.b16 %v281
    %v2107 = vunpack.c.l.b16 %v282
    %v2108 = vunpack.c.h.b16 %v282
    %v2109 = vunpack.c.l.b16 %v283
    %v2110 = vunpack.c.h.b16 %v283
    %v2111 = vunpack.c.l.b16 %v284
    %v2112 = vunpack.c.h.b16 %v284
    %v2113 = vunpack.c.l.b16 %v285
    %v2114 = vunpack.c.h.b16 %v285
    %v2115 = vunpack.c.l.b16 %v286
    %v2116 = vunpack.c.h.b16 %v286
    %v2117 = vunpack.c.l.b16 %v287
    %v2118 = vunpack.c.h.b16 %v287
    %v2119 = vunpack.c.l.b16 %v288
    %v2120 = vunpack.c.h.b16 %v288
    %v2121 = vunpack.c.l.b16 %v289
    %v2122 = vunpack.c.h.b16 %v289
    %v2123 = vunpack.c.l.b16 %v290
    %v2124 = vunpack.c.h.b16 %v290
    %v2125 = vunpack.c.l.b16 %v291
    %v2126 = vunpack.c.h.b16 %v291
    %v2127 = vunpack.c.l.b16 %v292
    %v2128 = vunpack.c.h.b16 %v292
    %v2129 = vunpack.c.l.b16 %v293
    %v2130 = vunpack.c.h.b16 %v293
    %v2131 = vunpack.c.l.b16 %v294
    %v2132 = vunpack.c.h.b16 %v294
    %v2133 = vunpack.c.l.b16 %v295
    %v2134 = vunpack.c.h.b16 %v295
    %v2135 = vunpack.c.l.b16 %v296
    %v2136 = vunpack.c.h.b16 %v296
    %v2137 = vpack.c.b16 %v1997, %v1993
    %v2138 = vpack.c.b16 %v1998, %v1994
    %v2139 = vpack.c.b16 %v1999, %v1995
    %v2140 = vpack.c.b16 %v2000, %v1996
    %v2141 = vpack.c.b16 %v2005, %v2001
    %v2142 = vpack.c.b16 %v2006, %v2002
    %v2143 = vpack.c.b16 %v2007, %v2003
    %v2144 = vpack.c.b16 %v2008, %v2004
    %v2145 = vpack.c.b16 %v2013, %v2009
    %v2146 = vpack.c.b16 %v2014, %v2010
    %v2147 = vpack.c.b16 %v2015, %v2011
    %v2148 = vpack.c.b16 %v2016, %v2012
    %v2149 = vpack.c.b16 %v2021, %v2017
    %v2150 = vpack.c.b16 %v2022, %v2018
    %v2151 = vpack.c.b16 %v2023, %v2019
    %v2152 = vpack.c.b16 %v2024, %v2020
    %v2153 = vpack.c.b16 %v2029, %v2025
    %v2154 = vpack.c.b16 %v2030, %v2026
    %v2155 = vpack.c.b16 %v2031, %v2027
    %v2156 = vpack.c.b16 %v2032, %v2028
    %v2157 = vpack.c.b16 %v2037, %v2033
    %v2158 = vpack.c.b16 %v2038, %v2034
    %v2159 = vpack.c.b16 %v2039, %v2035
    %v2160 = vpack.c.b16 %v2040, %v2036
    %v2161 = vpack.c.b16 %v2045, %v2041
    %v2162 = vpack.c.b16 %v2046, %v2042
    %v2163 = vpack.c.b16 %v2047, %v2043
    %v2164 = vpack.c.b16 %v2048, %v2044
    %v2165 = vpack.c.b16 %v2053, %v2049
    %v2166 = vpack.c.b16 %v2054, %v2050
    %v2167 = vpack.c.b16 %v2055, %v2051
    %v2168 = vpack.c.b16 %v2056, %v2052
    %v2169 = vpack.c.b16 %v2061, %v2057
    %v2170 = vpack.c.b16 %v2062, %v2058
    %v2171 = vpack.c.b16 %v2063, %v2059
    %v2172 = vpack.c.b16 %v2064, %v2060
    %v2173 = vpack.c.b16 %v2069, %v2065
    %v2174 = vpack.c.b16 %v2070, %v2066
    %v2175 = vpack.c.b16 %v2071, %v2067
    %v2176 = vpack.c.b16 %v2072, %v2068
    %v2177 = vpack.c.b16 %v2077, %v2073
    %v2178 = vpack.c.b16 %v2078, %v2074
    %v2179 = vpack.c.b16 %v2079, %v2075
    %v2180 = vpack.c.b16 %v2080, %v2076
    %v2181 = vpack.c.b16 %v2085, %v2081
    %v2182 = vpack.c.b16 %v2086, %v2082
    %v2183 = vpack.c.b16 %v2087, %v2083
    %v2184 = vpack.c.b16 %v2088, %v2084
    %v2185 = vpack.c.b16 %v2093, %v2089
    %v2186 = vpack.c.b16 %v2094, %v2090
    %v2187 = vpack.c.b16 %v2095, %v2091
    %v2188 = vpack.c.b16 %v2096, %v2092
    %v2189 = vpack.c.b16 %v2101, %v2097
    %v2190 = vpack.c.b16 %v2102, %v2098
    %v2191 = vpack.c.b16 %v2103, %v2099
    %v2192 = vpack.c.b16 %v2104, %v2100
    %v2193 = vpack.c.b16 %v2109, %v2105
    %v2194 = vpack.c.b16 %v2110, %v2106
    %v2195 = vpack.c.b16 %v2111, %v2107
    %v2196 = vpack.c.b16 %v2112, %v2108
    %v2197 = vpack.c.b16 %v2117, %v2113
    %v2198 = vpack.c.b16 %v2118, %v2114
    %v2199 = vpack.c.b16 %v2119, %v2115
    %v2200 = vpack.c.b16 %v2120, %v2116
    %v2201 = vpack.c.b16 %v2125, %v2121
    %v2202 = vpack.c.b16 %v2126, %v2122
    %v2203 = vpack.c.b16 %v2127, %v2123
    %v2204 = vpack.c.b16 %v2128, %v2124
    %v2205 = vpack.c.b16 %v2133, %v2129
    %v2206 = vpack.c.b16 %v2134, %v2130
    %v2207 = vpack.c.b16 %v2135, %v2131
    %v2208 = vpack.c.b16 %v2136, %v2132
    %v2282 = vsel %vm621, %v1918, 0
    %2284 = vmatprep.subr.bf16.mxu0 %v2166
    %2285 = vmatpush1.bf16.msra.mxu0 %v2165
    %2286 = vmatprep.subr.bf16.mxu0 %v2162
    %2287 = vmatpush1.bf16.msra.mxu0 %v2161
    %2288 = vmatprep.subr.bf16.mxu0 %v2158
    %2289 = vmatpush1.bf16.msra.mxu0 %v2157
    %2290 = vmatprep.subr.bf16.mxu0 %v2154
    %2291 = vmatpush1.bf16.msra.mxu0 %v2153
    %2292 = vmatprep.subr.bf16.mxu0 %v2150
    %2293 = vmatpush1.bf16.msra.mxu0 %v2149
    %2294 = vmatprep.subr.bf16.mxu0 %v2146
    %2295 = vmatpush1.bf16.msra.mxu0 %v2145
    %2296 = vmatprep.subr.bf16.mxu0 %v2142
    %2297 = vmatpush1.bf16.msra.mxu0 %v2141
    %2298 = vmatprep.subr.bf16.mxu0 %v2138
    %2299 = vmatpush1.bf16.msra.mxu0 %v2137
    %2300 = vmatprep.subr.bf16.mxu0 %v2198
    %2301 = vmatpush2.bf16.msra.mxu0 %v2197
    %2302 = vmatprep.subr.bf16.mxu0 %v2194
    %2303 = vmatpush2.bf16.msra.mxu0 %v2193
    %2304 = vmatprep.subr.bf16.mxu0 %v2190
    %2305 = vmatpush2.bf16.msra.mxu0 %v2189
    %2306 = vmatprep.subr.bf16.mxu0 %v2186
    %2307 = vmatpush2.bf16.msra.mxu0 %v2185
    %2308 = vmatprep.subr.bf16.mxu0 %v2182
    %2309 = vmatpush2.bf16.msra.mxu0 %v2181
    %2310 = vmatprep.subr.bf16.mxu0 %v2178
    %2311 = vmatpush2.bf16.msra.mxu0 %v2177
    %2312 = vmatprep.subr.bf16.mxu0 %v2174
    %2313 = vmatpush2.bf16.msra.mxu0 %v2173
    %2314 = vmatprep.subr.bf16.mxu0 %v2170
    %2315 = vmatpush2.bf16.msra.mxu0 %v2169
    %2316 = vmatprep.mubr.bf16.mxu0 %v1911
    %2317 = vmatmul.mubr.bf16.gmra.mxu0 %v1904
    %v2318 = vpop.f32.mrf.mxu0
    %v2319 = vadd.f32 0.0, %v2318
    %v2320 = vpop.f32.mrf.mxu0
    %v2321 = vadd.f32 0.0, %v2320
    %v2322 = vpop.f32.mrf.mxu0
    %v2323 = vadd.f32 0.0, %v2322
    %v2324 = vpop.f32.mrf.mxu0
    %v2325 = vadd.f32 0.0, %v2324
    %2326 = vdwg.mxu0
    %2327 = vmatprep.subr.bf16.mxu0 0
    %2328 = vmatpush1.bf16.msra.mxu0 0
    %2329 = vmatprep.subr.bf16.mxu0 0
    %2330 = vmatpush1.bf16.msra.mxu0 0
    %2331 = vmatprep.subr.bf16.mxu0 0
    %2332 = vmatpush1.bf16.msra.mxu0 0
    %2333 = vmatprep.subr.bf16.mxu0 0
    %2334 = vmatpush1.bf16.msra.mxu0 0
    %2335 = vmatprep.subr.bf16.mxu0 0
    %2336 = vmatpush1.bf16.msra.mxu0 0
    %2337 = vmatprep.subr.bf16.mxu0 0
    %2338 = vmatpush1.bf16.msra.mxu0 0
    %2339 = vmatprep.subr.bf16.mxu0 %v2206
    %2340 = vmatpush1.bf16.msra.mxu0 %v2205
    %2341 = vmatprep.subr.bf16.mxu0 %v2202
    %2342 = vmatpush1.bf16.msra.mxu0 %v2201
    %2343 = vmatprep.subr.bf16.mxu0 0
    %2344 = vmatpush2.bf16.msra.mxu0 0
    %2345 = vmatprep.subr.bf16.mxu0 0
    %2346 = vmatpush2.bf16.msra.mxu0 0
    %2347 = vmatprep.subr.bf16.mxu0 0
    %2348 = vmatpush2.bf16.msra.mxu0 0
    %2349 = vmatprep.subr.bf16.mxu0 0
    %2350 = vmatpush2.bf16.msra.mxu0 0
    %2351 = vmatprep.subr.bf16.mxu0 0
    %2352 = vmatpush2.bf16.msra.mxu0 0
    %2353 = vmatprep.subr.bf16.mxu0 0
    %2354 = vmatpush2.bf16.msra.mxu0 0
    %2355 = vmatprep.subr.bf16.mxu0 0
    %2356 = vmatpush2.bf16.msra.mxu0 0
    %2357 = vmatprep.subr.bf16.mxu0 0
    %2358 = vmatpush2.bf16.msra.mxu0 0
    %2359 = vmatprep.mubr.bf16.mxu0 0
    %2360 = vmatmul.mubr.bf16.gmra.mxu0 %v2282
    %v2361 = vpop.f32.mrf.mxu0
    %v2362 = vadd.f32 %v2319, %v2361
    %v2363 = vpop.f32.mrf.mxu0
    %v2364 = vadd.f32 %v2321, %v2363
    %v2365 = vpop.f32.mrf.mxu0
    %v2366 = vadd.f32 %v2323, %v2365
    %v2367 = vpop.f32.mrf.mxu0
    %v2368 = vadd.f32 %v2325, %v2367
    %2369 = vdwg.mxu0
    %2370 = vmatprep.subr.bf16.mxu0 %v2168
    %2371 = vmatpush1.bf16.msra.mxu0 %v2167
    %2372 = vmatprep.subr.bf16.mxu0 %v2164
    %2373 = vmatpush1.bf16.msra.mxu0 %v2163
    %2374 = vmatprep.subr.bf16.mxu0 %v2160
    %2375 = vmatpush1.bf16.msra.mxu0 %v2159
    %2376 = vmatprep.subr.bf16.mxu0 %v2156
    %2377 = vmatpush1.bf16.msra.mxu0 %v2155
    %2378 = vmatprep.subr.bf16.mxu0 %v2152
    %2379 = vmatpush1.bf16.msra.mxu0 %v2151
    %2380 = vmatprep.subr.bf16.mxu0 %v2148
    %2381 = vmatpush1.bf16.msra.mxu0 %v2147
    %2382 = vmatprep.subr.bf16.mxu0 %v2144
    %2383 = vmatpush1.bf16.msra.mxu0 %v2143
    %2384 = vmatprep.subr.bf16.mxu0 %v2140
    %2385 = vmatpush1.bf16.msra.mxu0 %v2139
    %2386 = vmatprep.subr.bf16.mxu0 %v2200
    %2387 = vmatpush2.bf16.msra.mxu0 %v2199
    %2388 = vmatprep.subr.bf16.mxu0 %v2196
    %2389 = vmatpush2.bf16.msra.mxu0 %v2195
    %2390 = vmatprep.subr.bf16.mxu0 %v2192
    %2391 = vmatpush2.bf16.msra.mxu0 %v2191
    %2392 = vmatprep.subr.bf16.mxu0 %v2188
    %2393 = vmatpush2.bf16.msra.mxu0 %v2187
    %2394 = vmatprep.subr.bf16.mxu0 %v2184
    %2395 = vmatpush2.bf16.msra.mxu0 %v2183
    %2396 = vmatprep.subr.bf16.mxu0 %v2180
    %2397 = vmatpush2.bf16.msra.mxu0 %v2179
    %2398 = vmatprep.subr.bf16.mxu0 %v2176
    %2399 = vmatpush2.bf16.msra.mxu0 %v2175
    %2400 = vmatprep.subr.bf16.mxu0 %v2172
    %2401 = vmatpush2.bf16.msra.mxu0 %v2171
    %2402 = vmatprep.mubr.bf16.mxu0 %v1911
    %2403 = vmatmul.mubr.bf16.gmra.mxu0 %v1904
    %v2404 = vpop.f32.mrf.mxu0
    %v2405 = vadd.f32 0.0, %v2404
    %v2406 = vpop.f32.mrf.mxu0
    %v2407 = vadd.f32 0.0, %v2406
    %v2408 = vpop.f32.mrf.mxu0
    %v2409 = vadd.f32 0.0, %v2408
    %v2410 = vpop.f32.mrf.mxu0
    %v2411 = vadd.f32 0.0, %v2410
    %2412 = vdwg.mxu0
    %2413 = vmatprep.subr.bf16.mxu0 0
    %2414 = vmatpush1.bf16.msra.mxu0 0
    %2415 = vmatprep.subr.bf16.mxu0 0
    %2416 = vmatpush1.bf16.msra.mxu0 0
    %2417 = vmatprep.subr.bf16.mxu0 0
    %2418 = vmatpush1.bf16.msra.mxu0 0
    %2419 = vmatprep.subr.bf16.mxu0 0
    %2420 = vmatpush1.bf16.msra.mxu0 0
    %2421 = vmatprep.subr.bf16.mxu0 0
    %2422 = vmatpush1.bf16.msra.mxu0 0
    %2423 = vmatprep.subr.bf16.mxu0 0
    %2424 = vmatpush1.bf16.msra.mxu0 0
    %2425 = vmatprep.subr.bf16.mxu0 %v2208
    %2426 = vmatpush1.bf16.msra.mxu0 %v2207
    %2427 = vmatprep.subr.bf16.mxu0 %v2204
    %2428 = vmatpush1.bf16.msra.mxu0 %v2203
    %2429 = vmatprep.subr.bf16.mxu0 0
    %2430 = vmatpush2.bf16.msra.mxu0 0
    %2431 = vmatprep.subr.bf16.mxu0 0
    %2432 = vmatpush2.bf16.msra.mxu0 0
    %2433 = vmatprep.subr.bf16.mxu0 0
    %2434 = vmatpush2.bf16.msra.mxu0 0
    %2435 = vmatprep.subr.bf16.mxu0 0
    %2436 = vmatpush2.bf16.msra.mxu0 0
    %2437 = vmatprep.subr.bf16.mxu0 0
    %2438 = vmatpush2.bf16.msra.mxu0 0
    %2439 = vmatprep.subr.bf16.mxu0 0
    %2440 = vmatpush2.bf16.msra.mxu0 0
    %2441 = vmatprep.subr.bf16.mxu0 0
    %2442 = vmatpush2.bf16.msra.mxu0 0
    %2443 = vmatprep.subr.bf16.mxu0 0
    %2444 = vmatpush2.bf16.msra.mxu0 0
    %2445 = vmatprep.mubr.bf16.mxu0 0
    %2446 = vmatmul.mubr.bf16.gmra.mxu0 %v2282
    %v2447 = vpop.f32.mrf.mxu0
    %v2448 = vadd.f32 %v2405, %v2447
    %v2449 = vpop.f32.mrf.mxu0
    %v2450 = vadd.f32 %v2407, %v2449
    %v2451 = vpop.f32.mrf.mxu0
    %v2452 = vadd.f32 %v2409, %v2451
    %v2453 = vpop.f32.mrf.mxu0
    %v2454 = vadd.f32 %v2411, %v2453
    %2455 = vdwg.mxu0
    %v2528 = vunpack.c.l.b16 %v152
    %v2529 = vunpack.c.h.b16 %v152
    %v2530 = vunpack.c.l.b16 %v153
    %v2531 = vunpack.c.h.b16 %v153
    %v2532 = vunpack.c.l.b16 %v154
    %v2533 = vunpack.c.h.b16 %v154
    %v2534 = vunpack.c.l.b16 %v155
    %v2535 = vunpack.c.h.b16 %v155
    %v2536 = vunpack.c.l.b16 %v156
    %v2537 = vunpack.c.h.b16 %v156
    %v2538 = vunpack.c.l.b16 %v157
    %v2539 = vunpack.c.h.b16 %v157
    %v2540 = vunpack.c.l.b16 %v158
    %v2541 = vunpack.c.h.b16 %v158
    %v2542 = vunpack.c.l.b16 %v159
    %v2543 = vunpack.c.h.b16 %v159
    %v2544 = vunpack.c.l.b16 %v160
    %v2545 = vunpack.c.h.b16 %v160
    %v2546 = vunpack.c.l.b16 %v161
    %v2547 = vunpack.c.h.b16 %v161
    %v2548 = vunpack.c.l.b16 %v162
    %v2549 = vunpack.c.h.b16 %v162
    %v2550 = vunpack.c.l.b16 %v163
    %v2551 = vunpack.c.h.b16 %v163
    %v2552 = vunpack.c.l.b16 %v164
    %v2553 = vunpack.c.h.b16 %v164
    %v2554 = vunpack.c.l.b16 %v165
    %v2555 = vunpack.c.h.b16 %v165
    %v2556 = vunpack.c.l.b16 %v166
    %v2557 = vunpack.c.h.b16 %v166
    %v2558 = vunpack.c.l.b16 %v167
    %v2559 = vunpack.c.h.b16 %v167
    %v2560 = vunpack.c.l.b16 %v168
    %v2561 = vunpack.c.h.b16 %v168
    %v2562 = vunpack.c.l.b16 %v169
    %v2563 = vunpack.c.h.b16 %v169
    %v2564 = vunpack.c.l.b16 %v170
    %v2565 = vunpack.c.h.b16 %v170
    %v2566 = vunpack.c.l.b16 %v171
    %v2567 = vunpack.c.h.b16 %v171
    %v2568 = vunpack.c.l.b16 %v172
    %v2569 = vunpack.c.h.b16 %v172
    %v2570 = vunpack.c.l.b16 %v173
    %v2571 = vunpack.c.h.b16 %v173
    %v2572 = vunpack.c.l.b16 %v174
    %v2573 = vunpack.c.h.b16 %v174
    %v2574 = vunpack.c.l.b16 %v175
    %v2575 = vunpack.c.h.b16 %v175
    %v2576 = vunpack.c.l.b16 %v176
    %v2577 = vunpack.c.h.b16 %v176
    %v2578 = vunpack.c.l.b16 %v177
    %v2579 = vunpack.c.h.b16 %v177
    %v2580 = vunpack.c.l.b16 %v178
    %v2581 = vunpack.c.h.b16 %v178
    %v2582 = vunpack.c.l.b16 %v179
    %v2583 = vunpack.c.h.b16 %v179
    %v2584 = vunpack.c.l.b16 %v180
    %v2585 = vunpack.c.h.b16 %v180
    %v2586 = vunpack.c.l.b16 %v181
    %v2587 = vunpack.c.h.b16 %v181
    %v2588 = vunpack.c.l.b16 %v182
    %v2589 = vunpack.c.h.b16 %v182
    %v2590 = vunpack.c.l.b16 %v183
    %v2591 = vunpack.c.h.b16 %v183
    %v2592 = vunpack.c.l.b16 %v184
    %v2593 = vunpack.c.h.b16 %v184
    %v2594 = vunpack.c.l.b16 %v185
    %v2595 = vunpack.c.h.b16 %v185
    %v2596 = vunpack.c.l.b16 %v186
    %v2597 = vunpack.c.h.b16 %v186
    %v2598 = vunpack.c.l.b16 %v187
    %v2599 = vunpack.c.h.b16 %v187
    %v2600 = vunpack.c.l.b16 %v188
    %v2601 = vunpack.c.h.b16 %v188
    %v2602 = vunpack.c.l.b16 %v189
    %v2603 = vunpack.c.h.b16 %v189
    %v2604 = vunpack.c.l.b16 %v190
    %v2605 = vunpack.c.h.b16 %v190
    %v2606 = vunpack.c.l.b16 %v191
    %v2607 = vunpack.c.h.b16 %v191
    %v2608 = vunpack.c.l.b16 %v192
    %v2609 = vunpack.c.h.b16 %v192
    %v2610 = vunpack.c.l.b16 %v193
    %v2611 = vunpack.c.h.b16 %v193
    %v2612 = vunpack.c.l.b16 %v194
    %v2613 = vunpack.c.h.b16 %v194
    %v2614 = vunpack.c.l.b16 %v195
    %v2615 = vunpack.c.h.b16 %v195
    %v2616 = vunpack.c.l.b16 %v196
    %v2617 = vunpack.c.h.b16 %v196
    %v2618 = vunpack.c.l.b16 %v197
    %v2619 = vunpack.c.h.b16 %v197
    %v2620 = vunpack.c.l.b16 %v198
    %v2621 = vunpack.c.h.b16 %v198
    %v2622 = vunpack.c.l.b16 %v199
    %v2623 = vunpack.c.h.b16 %v199
    %v2624 = vunpack.c.l.b16 %v200
    %v2625 = vunpack.c.h.b16 %v200
    %v2626 = vunpack.c.l.b16 %v201
    %v2627 = vunpack.c.h.b16 %v201
    %v2628 = vunpack.c.l.b16 %v202
    %v2629 = vunpack.c.h.b16 %v202
    %v2630 = vunpack.c.l.b16 %v203
    %v2631 = vunpack.c.h.b16 %v203
    %v2632 = vunpack.c.l.b16 %v204
    %v2633 = vunpack.c.h.b16 %v204
    %v2634 = vunpack.c.l.b16 %v205
    %v2635 = vunpack.c.h.b16 %v205
    %v2636 = vunpack.c.l.b16 %v206
    %v2637 = vunpack.c.h.b16 %v206
    %v2638 = vunpack.c.l.b16 %v207
    %v2639 = vunpack.c.h.b16 %v207
    %v2640 = vunpack.c.l.b16 %v208
    %v2641 = vunpack.c.h.b16 %v208
    %v2642 = vunpack.c.l.b16 %v209
    %v2643 = vunpack.c.h.b16 %v209
    %v2644 = vunpack.c.l.b16 %v210
    %v2645 = vunpack.c.h.b16 %v210
    %v2646 = vunpack.c.l.b16 %v211
    %v2647 = vunpack.c.h.b16 %v211
    %v2648 = vunpack.c.l.b16 %v212
    %v2649 = vunpack.c.h.b16 %v212
    %v2650 = vunpack.c.l.b16 %v213
    %v2651 = vunpack.c.h.b16 %v213
    %v2652 = vunpack.c.l.b16 %v214
    %v2653 = vunpack.c.h.b16 %v214
    %v2654 = vunpack.c.l.b16 %v215
    %v2655 = vunpack.c.h.b16 %v215
    %v2656 = vunpack.c.l.b16 %v216
    %v2657 = vunpack.c.h.b16 %v216
    %v2658 = vunpack.c.l.b16 %v217
    %v2659 = vunpack.c.h.b16 %v217
    %v2660 = vunpack.c.l.b16 %v218
    %v2661 = vunpack.c.h.b16 %v218
    %v2662 = vunpack.c.l.b16 %v219
    %v2663 = vunpack.c.h.b16 %v219
    %v2664 = vunpack.c.l.b16 %v220
    %v2665 = vunpack.c.h.b16 %v220
    %v2666 = vunpack.c.l.b16 %v221
    %v2667 = vunpack.c.h.b16 %v221
    %v2668 = vunpack.c.l.b16 %v222
    %v2669 = vunpack.c.h.b16 %v222
    %v2670 = vunpack.c.l.b16 %v223
    %v2671 = vunpack.c.h.b16 %v223
    %v2672 = vpack.c.b16 %v2532, %v2528
    %v2673 = vpack.c.b16 %v2533, %v2529
    %v2674 = vpack.c.b16 %v2534, %v2530
    %v2675 = vpack.c.b16 %v2535, %v2531
    %v2676 = vpack.c.b16 %v2540, %v2536
    %v2677 = vpack.c.b16 %v2541, %v2537
    %v2678 = vpack.c.b16 %v2542, %v2538
    %v2679 = vpack.c.b16 %v2543, %v2539
    %v2680 = vpack.c.b16 %v2548, %v2544
    %v2681 = vpack.c.b16 %v2549, %v2545
    %v2682 = vpack.c.b16 %v2550, %v2546
    %v2683 = vpack.c.b16 %v2551, %v2547
    %v2684 = vpack.c.b16 %v2556, %v2552
    %v2685 = vpack.c.b16 %v2557, %v2553
    %v2686 = vpack.c.b16 %v2558, %v2554
    %v2687 = vpack.c.b16 %v2559, %v2555
    %v2688 = vpack.c.b16 %v2564, %v2560
    %v2689 = vpack.c.b16 %v2565, %v2561
    %v2690 = vpack.c.b16 %v2566, %v2562
    %v2691 = vpack.c.b16 %v2567, %v2563
    %v2692 = vpack.c.b16 %v2572, %v2568
    %v2693 = vpack.c.b16 %v2573, %v2569
    %v2694 = vpack.c.b16 %v2574, %v2570
    %v2695 = vpack.c.b16 %v2575, %v2571
    %v2696 = vpack.c.b16 %v2580, %v2576
    %v2697 = vpack.c.b16 %v2581, %v2577
    %v2698 = vpack.c.b16 %v2582, %v2578
    %v2699 = vpack.c.b16 %v2583, %v2579
    %v2700 = vpack.c.b16 %v2588, %v2584
    %v2701 = vpack.c.b16 %v2589, %v2585
    %v2702 = vpack.c.b16 %v2590, %v2586
    %v2703 = vpack.c.b16 %v2591, %v2587
    %v2704 = vpack.c.b16 %v2596, %v2592
    %v2705 = vpack.c.b16 %v2597, %v2593
    %v2706 = vpack.c.b16 %v2598, %v2594
    %v2707 = vpack.c.b16 %v2599, %v2595
    %v2708 = vpack.c.b16 %v2604, %v2600
    %v2709 = vpack.c.b16 %v2605, %v2601
    %v2710 = vpack.c.b16 %v2606, %v2602
    %v2711 = vpack.c.b16 %v2607, %v2603
    %v2712 = vpack.c.b16 %v2612, %v2608
    %v2713 = vpack.c.b16 %v2613, %v2609
    %v2714 = vpack.c.b16 %v2614, %v2610
    %v2715 = vpack.c.b16 %v2615, %v2611
    %v2716 = vpack.c.b16 %v2620, %v2616
    %v2717 = vpack.c.b16 %v2621, %v2617
    %v2718 = vpack.c.b16 %v2622, %v2618
    %v2719 = vpack.c.b16 %v2623, %v2619
    %v2720 = vpack.c.b16 %v2628, %v2624
    %v2721 = vpack.c.b16 %v2629, %v2625
    %v2722 = vpack.c.b16 %v2630, %v2626
    %v2723 = vpack.c.b16 %v2631, %v2627
    %v2724 = vpack.c.b16 %v2636, %v2632
    %v2725 = vpack.c.b16 %v2637, %v2633
    %v2726 = vpack.c.b16 %v2638, %v2634
    %v2727 = vpack.c.b16 %v2639, %v2635
    %v2728 = vpack.c.b16 %v2644, %v2640
    %v2729 = vpack.c.b16 %v2645, %v2641
    %v2730 = vpack.c.b16 %v2646, %v2642
    %v2731 = vpack.c.b16 %v2647, %v2643
    %v2732 = vpack.c.b16 %v2652, %v2648
    %v2733 = vpack.c.b16 %v2653, %v2649
    %v2734 = vpack.c.b16 %v2654, %v2650
    %v2735 = vpack.c.b16 %v2655, %v2651
    %v2736 = vpack.c.b16 %v2660, %v2656
    %v2737 = vpack.c.b16 %v2661, %v2657
    %v2738 = vpack.c.b16 %v2662, %v2658
    %v2739 = vpack.c.b16 %v2663, %v2659
    %v2740 = vpack.c.b16 %v2668, %v2664
    %v2741 = vpack.c.b16 %v2669, %v2665
    %v2742 = vpack.c.b16 %v2670, %v2666
    %v2743 = vpack.c.b16 %v2671, %v2667
    %v2816 = vsel %vm621, %v1897, 0
    %2818 = vmatprep.subr.bf16.mxu0 %v2701
    %2819 = vmatpush1.bf16.msra.mxu0 %v2700
    %2820 = vmatprep.subr.bf16.mxu0 %v2697
    %2821 = vmatpush1.bf16.msra.mxu0 %v2696
    %2822 = vmatprep.subr.bf16.mxu0 %v2693
    %2823 = vmatpush1.bf16.msra.mxu0 %v2692
    %2824 = vmatprep.subr.bf16.mxu0 %v2689
    %2825 = vmatpush1.bf16.msra.mxu0 %v2688
    %2826 = vmatprep.subr.bf16.mxu0 %v2685
    %2827 = vmatpush1.bf16.msra.mxu0 %v2684
    %2828 = vmatprep.subr.bf16.mxu0 %v2681
    %2829 = vmatpush1.bf16.msra.mxu0 %v2680
    %2830 = vmatprep.subr.bf16.mxu0 %v2677
    %2831 = vmatpush1.bf16.msra.mxu0 %v2676
    %2832 = vmatprep.subr.bf16.mxu0 %v2673
    %2833 = vmatpush1.bf16.msra.mxu0 %v2672
    %2834 = vmatprep.subr.bf16.mxu0 %v2733
    %2835 = vmatpush2.bf16.msra.mxu0 %v2732
    %2836 = vmatprep.subr.bf16.mxu0 %v2729
    %2837 = vmatpush2.bf16.msra.mxu0 %v2728
    %2838 = vmatprep.subr.bf16.mxu0 %v2725
    %2839 = vmatpush2.bf16.msra.mxu0 %v2724
    %2840 = vmatprep.subr.bf16.mxu0 %v2721
    %2841 = vmatpush2.bf16.msra.mxu0 %v2720
    %2842 = vmatprep.subr.bf16.mxu0 %v2717
    %2843 = vmatpush2.bf16.msra.mxu0 %v2716
    %2844 = vmatprep.subr.bf16.mxu0 %v2713
    %2845 = vmatpush2.bf16.msra.mxu0 %v2712
    %2846 = vmatprep.subr.bf16.mxu0 %v2709
    %2847 = vmatpush2.bf16.msra.mxu0 %v2708
    %2848 = vmatprep.subr.bf16.mxu0 %v2705
    %2849 = vmatpush2.bf16.msra.mxu0 %v2704
    %2850 = vmatprep.mubr.bf16.mxu0 %v1896
    %2851 = vmatmul.mubr.bf16.gmra.mxu0 %v1895
    %v2852 = vpop.f32.mrf.mxu0
    %v2853 = vadd.f32 %v2362, %v2852
    %v2854 = vpop.f32.mrf.mxu0
    %v2855 = vadd.f32 %v2364, %v2854
    %v2856 = vpop.f32.mrf.mxu0
    %v2857 = vadd.f32 %v2366, %v2856
    %v2858 = vpop.f32.mrf.mxu0
    %v2859 = vadd.f32 %v2368, %v2858
    %2860 = vdwg.mxu0
    %2861 = vmatprep.subr.bf16.mxu0 0
    %2862 = vmatpush1.bf16.msra.mxu0 0
    %2863 = vmatprep.subr.bf16.mxu0 0
    %2864 = vmatpush1.bf16.msra.mxu0 0
    %2865 = vmatprep.subr.bf16.mxu0 0
    %2866 = vmatpush1.bf16.msra.mxu0 0
    %2867 = vmatprep.subr.bf16.mxu0 0
    %2868 = vmatpush1.bf16.msra.mxu0 0
    %2869 = vmatprep.subr.bf16.mxu0 0
    %2870 = vmatpush1.bf16.msra.mxu0 0
    %2871 = vmatprep.subr.bf16.mxu0 0
    %2872 = vmatpush1.bf16.msra.mxu0 0
    %2873 = vmatprep.subr.bf16.mxu0 %v2741
    %2874 = vmatpush1.bf16.msra.mxu0 %v2740
    %2875 = vmatprep.subr.bf16.mxu0 %v2737
    %2876 = vmatpush1.bf16.msra.mxu0 %v2736
    %2877 = vmatprep.subr.bf16.mxu0 0
    %2878 = vmatpush2.bf16.msra.mxu0 0
    %2879 = vmatprep.subr.bf16.mxu0 0
    %2880 = vmatpush2.bf16.msra.mxu0 0
    %2881 = vmatprep.subr.bf16.mxu0 0
    %2882 = vmatpush2.bf16.msra.mxu0 0
    %2883 = vmatprep.subr.bf16.mxu0 0
    %2884 = vmatpush2.bf16.msra.mxu0 0
    %2885 = vmatprep.subr.bf16.mxu0 0
    %2886 = vmatpush2.bf16.msra.mxu0 0
    %2887 = vmatprep.subr.bf16.mxu0 0
    %2888 = vmatpush2.bf16.msra.mxu0 0
    %2889 = vmatprep.subr.bf16.mxu0 0
    %2890 = vmatpush2.bf16.msra.mxu0 0
    %2891 = vmatprep.subr.bf16.mxu0 0
    %2892 = vmatpush2.bf16.msra.mxu0 0
    %2893 = vmatprep.mubr.bf16.mxu0 0
    %2894 = vmatmul.mubr.bf16.gmra.mxu0 %v2816
    %v2895 = vpop.f32.mrf.mxu0
    %v2896 = vadd.f32 %v2853, %v2895
    %v2897 = vpop.f32.mrf.mxu0
    %v2898 = vadd.f32 %v2855, %v2897
    %v2899 = vpop.f32.mrf.mxu0
    %v2900 = vadd.f32 %v2857, %v2899
    %v2901 = vpop.f32.mrf.mxu0
    %v2902 = vadd.f32 %v2859, %v2901
    %2903 = vdwg.mxu0
    %2904 = vmatprep.subr.bf16.mxu0 %v2703
    %2905 = vmatpush1.bf16.msra.mxu0 %v2702
    %2906 = vmatprep.subr.bf16.mxu0 %v2699
    %2907 = vmatpush1.bf16.msra.mxu0 %v2698
    %2908 = vmatprep.subr.bf16.mxu0 %v2695
    %2909 = vmatpush1.bf16.msra.mxu0 %v2694
    %2910 = vmatprep.subr.bf16.mxu0 %v2691
    %2911 = vmatpush1.bf16.msra.mxu0 %v2690
    %2912 = vmatprep.subr.bf16.mxu0 %v2687
    %2913 = vmatpush1.bf16.msra.mxu0 %v2686
    %2914 = vmatprep.subr.bf16.mxu0 %v2683
    %2915 = vmatpush1.bf16.msra.mxu0 %v2682
    %2916 = vmatprep.subr.bf16.mxu0 %v2679
    %2917 = vmatpush1.bf16.msra.mxu0 %v2678
    %2918 = vmatprep.subr.bf16.mxu0 %v2675
    %2919 = vmatpush1.bf16.msra.mxu0 %v2674
    %2920 = vmatprep.subr.bf16.mxu0 %v2735
    %2921 = vmatpush2.bf16.msra.mxu0 %v2734
    %2922 = vmatprep.subr.bf16.mxu0 %v2731
    %2923 = vmatpush2.bf16.msra.mxu0 %v2730
    %2924 = vmatprep.subr.bf16.mxu0 %v2727
    %2925 = vmatpush2.bf16.msra.mxu0 %v2726
    %2926 = vmatprep.subr.bf16.mxu0 %v2723
    %2927 = vmatpush2.bf16.msra.mxu0 %v2722
    %2928 = vmatprep.subr.bf16.mxu0 %v2719
    %2929 = vmatpush2.bf16.msra.mxu0 %v2718
    %2930 = vmatprep.subr.bf16.mxu0 %v2715
    %2931 = vmatpush2.bf16.msra.mxu0 %v2714
    %2932 = vmatprep.subr.bf16.mxu0 %v2711
    %2933 = vmatpush2.bf16.msra.mxu0 %v2710
    %2934 = vmatprep.subr.bf16.mxu0 %v2707
    %2935 = vmatpush2.bf16.msra.mxu0 %v2706
    %2936 = vmatprep.mubr.bf16.mxu0 %v1896
    %2937 = vmatmul.mubr.bf16.gmra.mxu0 %v1895
    %v2938 = vpop.f32.mrf.mxu0
    %v2939 = vadd.f32 %v2448, %v2938
    %v2940 = vpop.f32.mrf.mxu0
    %v2941 = vadd.f32 %v2450, %v2940
    %v2942 = vpop.f32.mrf.mxu0
    %v2943 = vadd.f32 %v2452, %v2942
    %v2944 = vpop.f32.mrf.mxu0
    %v2945 = vadd.f32 %v2454, %v2944
    %2946 = vdwg.mxu0
    %2947 = vmatprep.subr.bf16.mxu0 0
    %2948 = vmatpush1.bf16.msra.mxu0 0
    %2949 = vmatprep.subr.bf16.mxu0 0
    %2950 = vmatpush1.bf16.msra.mxu0 0
    %2951 = vmatprep.subr.bf16.mxu0 0
    %2952 = vmatpush1.bf16.msra.mxu0 0
    %2953 = vmatprep.subr.bf16.mxu0 0
    %2954 = vmatpush1.bf16.msra.mxu0 0
    %2955 = vmatprep.subr.bf16.mxu0 0
    %2956 = vmatpush1.bf16.msra.mxu0 0
    %2957 = vmatprep.subr.bf16.mxu0 0
    %2958 = vmatpush1.bf16.msra.mxu0 0
    %2959 = vmatprep.subr.bf16.mxu0 %v2743
    %2960 = vmatpush1.bf16.msra.mxu0 %v2742
    %2961 = vmatprep.subr.bf16.mxu0 %v2739
    %2962 = vmatpush1.bf16.msra.mxu0 %v2738
    %2963 = vmatprep.subr.bf16.mxu0 0
    %2964 = vmatpush2.bf16.msra.mxu0 0
    %2965 = vmatprep.subr.bf16.mxu0 0
    %2966 = vmatpush2.bf16.msra.mxu0 0
    %2967 = vmatprep.subr.bf16.mxu0 0
    %2968 = vmatpush2.bf16.msra.mxu0 0
    %2969 = vmatprep.subr.bf16.mxu0 0
    %2970 = vmatpush2.bf16.msra.mxu0 0
    %2971 = vmatprep.subr.bf16.mxu0 0
    %2972 = vmatpush2.bf16.msra.mxu0 0
    %2973 = vmatprep.subr.bf16.mxu0 0
    %2974 = vmatpush2.bf16.msra.mxu0 0
    %2975 = vmatprep.subr.bf16.mxu0 0
    %2976 = vmatpush2.bf16.msra.mxu0 0
    %2977 = vmatprep.subr.bf16.mxu0 0
    %2978 = vmatpush2.bf16.msra.mxu0 0
    %2979 = vmatprep.mubr.bf16.mxu0 0
    %2980 = vmatmul.mubr.bf16.gmra.mxu0 %v2816
    %v2981 = vpop.f32.mrf.mxu0
    %v2982 = vadd.f32 %v2939, %v2981
    %v2983 = vpop.f32.mrf.mxu0
    %v2984 = vadd.f32 %v2941, %v2983
    %v2985 = vpop.f32.mrf.mxu0
    %v2986 = vadd.f32 %v2943, %v2985
    %v2987 = vpop.f32.mrf.mxu0
    %v2988 = vadd.f32 %v2945, %v2987
    %2989 = vdwg.mxu0
    %v2993 = vrot.slane %v1895, 1
    %v2994 = vrot.slane %v1896, 1
    %v2995 = vrot.slane %v1897, 1
    %v3070 = vunpack.c.l.b16 %v298
    %v3071 = vunpack.c.h.b16 %v298
    %v3072 = vunpack.c.l.b16 %v299
    %v3073 = vunpack.c.h.b16 %v299
    %v3074 = vunpack.c.l.b16 %v300
    %v3075 = vunpack.c.h.b16 %v300
    %v3076 = vunpack.c.l.b16 %v301
    %v3077 = vunpack.c.h.b16 %v301
    %v3078 = vunpack.c.l.b16 %v302
    %v3079 = vunpack.c.h.b16 %v302
    %v3080 = vunpack.c.l.b16 %v303
    %v3081 = vunpack.c.h.b16 %v303
    %v3082 = vunpack.c.l.b16 %v304
    %v3083 = vunpack.c.h.b16 %v304
    %v3084 = vunpack.c.l.b16 %v305
    %v3085 = vunpack.c.h.b16 %v305
    %v3086 = vunpack.c.l.b16 %v306
    %v3087 = vunpack.c.h.b16 %v306
    %v3088 = vunpack.c.l.b16 %v307
    %v3089 = vunpack.c.h.b16 %v307
    %v3090 = vunpack.c.l.b16 %v308
    %v3091 = vunpack.c.h.b16 %v308
    %v3092 = vunpack.c.l.b16 %v309
    %v3093 = vunpack.c.h.b16 %v309
    %v3094 = vunpack.c.l.b16 %v310
    %v3095 = vunpack.c.h.b16 %v310
    %v3096 = vunpack.c.l.b16 %v311
    %v3097 = vunpack.c.h.b16 %v311
    %v3098 = vunpack.c.l.b16 %v312
    %v3099 = vunpack.c.h.b16 %v312
    %v3100 = vunpack.c.l.b16 %v313
    %v3101 = vunpack.c.h.b16 %v313
    %v3102 = vunpack.c.l.b16 %v314
    %v3103 = vunpack.c.h.b16 %v314
    %v3104 = vunpack.c.l.b16 %v315
    %v3105 = vunpack.c.h.b16 %v315
    %v3106 = vunpack.c.l.b16 %v316
    %v3107 = vunpack.c.h.b16 %v316
    %v3108 = vunpack.c.l.b16 %v317
    %v3109 = vunpack.c.h.b16 %v317
    %v3110 = vunpack.c.l.b16 %v318
    %v3111 = vunpack.c.h.b16 %v318
    %v3112 = vunpack.c.l.b16 %v319
    %v3113 = vunpack.c.h.b16 %v319
    %v3114 = vunpack.c.l.b16 %v320
    %v3115 = vunpack.c.h.b16 %v320
    %v3116 = vunpack.c.l.b16 %v321
    %v3117 = vunpack.c.h.b16 %v321
    %v3118 = vunpack.c.l.b16 %v322
    %v3119 = vunpack.c.h.b16 %v322
    %v3120 = vunpack.c.l.b16 %v323
    %v3121 = vunpack.c.h.b16 %v323
    %v3122 = vunpack.c.l.b16 %v324
    %v3123 = vunpack.c.h.b16 %v324
    %v3124 = vunpack.c.l.b16 %v325
    %v3125 = vunpack.c.h.b16 %v325
    %v3126 = vunpack.c.l.b16 %v326
    %v3127 = vunpack.c.h.b16 %v326
    %v3128 = vunpack.c.l.b16 %v327
    %v3129 = vunpack.c.h.b16 %v327
    %v3130 = vunpack.c.l.b16 %v328
    %v3131 = vunpack.c.h.b16 %v328
    %v3132 = vunpack.c.l.b16 %v329
    %v3133 = vunpack.c.h.b16 %v329
    %v3134 = vunpack.c.l.b16 %v330
    %v3135 = vunpack.c.h.b16 %v330
    %v3136 = vunpack.c.l.b16 %v331
    %v3137 = vunpack.c.h.b16 %v331
    %v3138 = vunpack.c.l.b16 %v332
    %v3139 = vunpack.c.h.b16 %v332
    %v3140 = vunpack.c.l.b16 %v333
    %v3141 = vunpack.c.h.b16 %v333
    %v3142 = vunpack.c.l.b16 %v334
    %v3143 = vunpack.c.h.b16 %v334
    %v3144 = vunpack.c.l.b16 %v335
    %v3145 = vunpack.c.h.b16 %v335
    %v3146 = vunpack.c.l.b16 %v336
    %v3147 = vunpack.c.h.b16 %v336
    %v3148 = vunpack.c.l.b16 %v337
    %v3149 = vunpack.c.h.b16 %v337
    %v3150 = vunpack.c.l.b16 %v338
    %v3151 = vunpack.c.h.b16 %v338
    %v3152 = vunpack.c.l.b16 %v339
    %v3153 = vunpack.c.h.b16 %v339
    %v3154 = vunpack.c.l.b16 %v340
    %v3155 = vunpack.c.h.b16 %v340
    %v3156 = vunpack.c.l.b16 %v341
    %v3157 = vunpack.c.h.b16 %v341
    %v3158 = vunpack.c.l.b16 %v342
    %v3159 = vunpack.c.h.b16 %v342
    %v3160 = vunpack.c.l.b16 %v343
    %v3161 = vunpack.c.h.b16 %v343
    %v3162 = vunpack.c.l.b16 %v344
    %v3163 = vunpack.c.h.b16 %v344
    %v3164 = vunpack.c.l.b16 %v345
    %v3165 = vunpack.c.h.b16 %v345
    %v3166 = vunpack.c.l.b16 %v346
    %v3167 = vunpack.c.h.b16 %v346
    %v3168 = vunpack.c.l.b16 %v347
    %v3169 = vunpack.c.h.b16 %v347
    %v3170 = vunpack.c.l.b16 %v348
    %v3171 = vunpack.c.h.b16 %v348
    %v3172 = vunpack.c.l.b16 %v349
    %v3173 = vunpack.c.h.b16 %v349
    %v3174 = vunpack.c.l.b16 %v350
    %v3175 = vunpack.c.h.b16 %v350
    %v3176 = vunpack.c.l.b16 %v351
    %v3177 = vunpack.c.h.b16 %v351
    %v3178 = vunpack.c.l.b16 %v352
    %v3179 = vunpack.c.h.b16 %v352
    %v3180 = vunpack.c.l.b16 %v353
    %v3181 = vunpack.c.h.b16 %v353
    %v3182 = vunpack.c.l.b16 %v354
    %v3183 = vunpack.c.h.b16 %v354
    %v3184 = vunpack.c.l.b16 %v355
    %v3185 = vunpack.c.h.b16 %v355
    %v3186 = vunpack.c.l.b16 %v356
    %v3187 = vunpack.c.h.b16 %v356
    %v3188 = vunpack.c.l.b16 %v357
    %v3189 = vunpack.c.h.b16 %v357
    %v3190 = vunpack.c.l.b16 %v358
    %v3191 = vunpack.c.h.b16 %v358
    %v3192 = vunpack.c.l.b16 %v359
    %v3193 = vunpack.c.h.b16 %v359
    %v3194 = vunpack.c.l.b16 %v360
    %v3195 = vunpack.c.h.b16 %v360
    %v3196 = vunpack.c.l.b16 %v361
    %v3197 = vunpack.c.h.b16 %v361
    %v3198 = vunpack.c.l.b16 %v362
    %v3199 = vunpack.c.h.b16 %v362
    %v3200 = vunpack.c.l.b16 %v363
    %v3201 = vunpack.c.h.b16 %v363
    %v3202 = vunpack.c.l.b16 %v364
    %v3203 = vunpack.c.h.b16 %v364
    %v3204 = vunpack.c.l.b16 %v365
    %v3205 = vunpack.c.h.b16 %v365
    %v3206 = vunpack.c.l.b16 %v366
    %v3207 = vunpack.c.h.b16 %v366
    %v3208 = vunpack.c.l.b16 %v367
    %v3209 = vunpack.c.h.b16 %v367
    %v3210 = vunpack.c.l.b16 %v368
    %v3211 = vunpack.c.h.b16 %v368
    %v3212 = vunpack.c.l.b16 %v369
    %v3213 = vunpack.c.h.b16 %v369
    %v3214 = vpack.c.b16 %v3074, %v3070
    %v3215 = vpack.c.b16 %v3075, %v3071
    %v3216 = vpack.c.b16 %v3076, %v3072
    %v3217 = vpack.c.b16 %v3077, %v3073
    %v3218 = vpack.c.b16 %v3082, %v3078
    %v3219 = vpack.c.b16 %v3083, %v3079
    %v3220 = vpack.c.b16 %v3084, %v3080
    %v3221 = vpack.c.b16 %v3085, %v3081
    %v3222 = vpack.c.b16 %v3090, %v3086
    %v3223 = vpack.c.b16 %v3091, %v3087
    %v3224 = vpack.c.b16 %v3092, %v3088
    %v3225 = vpack.c.b16 %v3093, %v3089
    %v3226 = vpack.c.b16 %v3098, %v3094
    %v3227 = vpack.c.b16 %v3099, %v3095
    %v3228 = vpack.c.b16 %v3100, %v3096
    %v3229 = vpack.c.b16 %v3101, %v3097
    %v3230 = vpack.c.b16 %v3106, %v3102
    %v3231 = vpack.c.b16 %v3107, %v3103
    %v3232 = vpack.c.b16 %v3108, %v3104
    %v3233 = vpack.c.b16 %v3109, %v3105
    %v3234 = vpack.c.b16 %v3114, %v3110
    %v3235 = vpack.c.b16 %v3115, %v3111
    %v3236 = vpack.c.b16 %v3116, %v3112
    %v3237 = vpack.c.b16 %v3117, %v3113
    %v3238 = vpack.c.b16 %v3122, %v3118
    %v3239 = vpack.c.b16 %v3123, %v3119
    %v3240 = vpack.c.b16 %v3124, %v3120
    %v3241 = vpack.c.b16 %v3125, %v3121
    %v3242 = vpack.c.b16 %v3130, %v3126
    %v3243 = vpack.c.b16 %v3131, %v3127
    %v3244 = vpack.c.b16 %v3132, %v3128
    %v3245 = vpack.c.b16 %v3133, %v3129
    %v3246 = vpack.c.b16 %v3138, %v3134
    %v3247 = vpack.c.b16 %v3139, %v3135
    %v3248 = vpack.c.b16 %v3140, %v3136
    %v3249 = vpack.c.b16 %v3141, %v3137
    %v3250 = vpack.c.b16 %v3146, %v3142
    %v3251 = vpack.c.b16 %v3147, %v3143
    %v3252 = vpack.c.b16 %v3148, %v3144
    %v3253 = vpack.c.b16 %v3149, %v3145
    %v3254 = vpack.c.b16 %v3154, %v3150
    %v3255 = vpack.c.b16 %v3155, %v3151
    %v3256 = vpack.c.b16 %v3156, %v3152
    %v3257 = vpack.c.b16 %v3157, %v3153
    %v3258 = vpack.c.b16 %v3162, %v3158
    %v3259 = vpack.c.b16 %v3163, %v3159
    %v3260 = vpack.c.b16 %v3164, %v3160
    %v3261 = vpack.c.b16 %v3165, %v3161
    %v3262 = vpack.c.b16 %v3170, %v3166
    %v3263 = vpack.c.b16 %v3171, %v3167
    %v3264 = vpack.c.b16 %v3172, %v3168
    %v3265 = vpack.c.b16 %v3173, %v3169
    %v3266 = vpack.c.b16 %v3178, %v3174
    %v3267 = vpack.c.b16 %v3179, %v3175
    %v3268 = vpack.c.b16 %v3180, %v3176
    %v3269 = vpack.c.b16 %v3181, %v3177
    %v3270 = vpack.c.b16 %v3186, %v3182
    %v3271 = vpack.c.b16 %v3187, %v3183
    %v3272 = vpack.c.b16 %v3188, %v3184
    %v3273 = vpack.c.b16 %v3189, %v3185
    %v3274 = vpack.c.b16 %v3194, %v3190
    %v3275 = vpack.c.b16 %v3195, %v3191
    %v3276 = vpack.c.b16 %v3196, %v3192
    %v3277 = vpack.c.b16 %v3197, %v3193
    %v3278 = vpack.c.b16 %v3202, %v3198
    %v3279 = vpack.c.b16 %v3203, %v3199
    %v3280 = vpack.c.b16 %v3204, %v3200
    %v3281 = vpack.c.b16 %v3205, %v3201
    %v3282 = vpack.c.b16 %v3210, %v3206
    %v3283 = vpack.c.b16 %v3211, %v3207
    %v3284 = vpack.c.b16 %v3212, %v3208
    %v3285 = vpack.c.b16 %v3213, %v3209
    %v3359 = vsel %vm621, %v2995, 0
    %3361 = vmatprep.subr.bf16.mxu0 %v3243
    %3362 = vmatpush1.bf16.msra.mxu0 %v3242
    %3363 = vmatprep.subr.bf16.mxu0 %v3239
    %3364 = vmatpush1.bf16.msra.mxu0 %v3238
    %3365 = vmatprep.subr.bf16.mxu0 %v3235
    %3366 = vmatpush1.bf16.msra.mxu0 %v3234
    %3367 = vmatprep.subr.bf16.mxu0 %v3231
    %3368 = vmatpush1.bf16.msra.mxu0 %v3230
    %3369 = vmatprep.subr.bf16.mxu0 %v3227
    %3370 = vmatpush1.bf16.msra.mxu0 %v3226
    %3371 = vmatprep.subr.bf16.mxu0 %v3223
    %3372 = vmatpush1.bf16.msra.mxu0 %v3222
    %3373 = vmatprep.subr.bf16.mxu0 %v3219
    %3374 = vmatpush1.bf16.msra.mxu0 %v3218
    %3375 = vmatprep.subr.bf16.mxu0 %v3215
    %3376 = vmatpush1.bf16.msra.mxu0 %v3214
    %3377 = vmatprep.subr.bf16.mxu0 %v3275
    %3378 = vmatpush2.bf16.msra.mxu0 %v3274
    %3379 = vmatprep.subr.bf16.mxu0 %v3271
    %3380 = vmatpush2.bf16.msra.mxu0 %v3270
    %3381 = vmatprep.subr.bf16.mxu0 %v3267
    %3382 = vmatpush2.bf16.msra.mxu0 %v3266
    %3383 = vmatprep.subr.bf16.mxu0 %v3263
    %3384 = vmatpush2.bf16.msra.mxu0 %v3262
    %3385 = vmatprep.subr.bf16.mxu0 %v3259
    %3386 = vmatpush2.bf16.msra.mxu0 %v3258
    %3387 = vmatprep.subr.bf16.mxu0 %v3255
    %3388 = vmatpush2.bf16.msra.mxu0 %v3254
    %3389 = vmatprep.subr.bf16.mxu0 %v3251
    %3390 = vmatpush2.bf16.msra.mxu0 %v3250
    %3391 = vmatprep.subr.bf16.mxu0 %v3247
    %3392 = vmatpush2.bf16.msra.mxu0 %v3246
    %3393 = vmatprep.mubr.bf16.mxu0 %v2994
    %3394 = vmatmul.mubr.bf16.gmra.mxu0 %v2993
    %v3395 = vpop.f32.mrf.mxu0
    %v3396 = vadd.f32 0.0, %v3395
    %v3397 = vpop.f32.mrf.mxu0
    %v3398 = vadd.f32 0.0, %v3397
    %v3399 = vpop.f32.mrf.mxu0
    %v3400 = vadd.f32 0.0, %v3399
    %v3401 = vpop.f32.mrf.mxu0
    %v3402 = vadd.f32 0.0, %v3401
    %3403 = vdwg.mxu0
    %3404 = vmatprep.subr.bf16.mxu0 0
    %3405 = vmatpush1.bf16.msra.mxu0 0
    %3406 = vmatprep.subr.bf16.mxu0 0
    %3407 = vmatpush1.bf16.msra.mxu0 0
    %3408 = vmatprep.subr.bf16.mxu0 0
    %3409 = vmatpush1.bf16.msra.mxu0 0
    %3410 = vmatprep.subr.bf16.mxu0 0
    %3411 = vmatpush1.bf16.msra.mxu0 0
    %3412 = vmatprep.subr.bf16.mxu0 0
    %3413 = vmatpush1.bf16.msra.mxu0 0
    %3414 = vmatprep.subr.bf16.mxu0 0
    %3415 = vmatpush1.bf16.msra.mxu0 0
    %3416 = vmatprep.subr.bf16.mxu0 %v3283
    %3417 = vmatpush1.bf16.msra.mxu0 %v3282
    %3418 = vmatprep.subr.bf16.mxu0 %v3279
    %3419 = vmatpush1.bf16.msra.mxu0 %v3278
    %3420 = vmatprep.subr.bf16.mxu0 0
    %3421 = vmatpush2.bf16.msra.mxu0 0
    %3422 = vmatprep.subr.bf16.mxu0 0
    %3423 = vmatpush2.bf16.msra.mxu0 0
    %3424 = vmatprep.subr.bf16.mxu0 0
    %3425 = vmatpush2.bf16.msra.mxu0 0
    %3426 = vmatprep.subr.bf16.mxu0 0
    %3427 = vmatpush2.bf16.msra.mxu0 0
    %3428 = vmatprep.subr.bf16.mxu0 0
    %3429 = vmatpush2.bf16.msra.mxu0 0
    %3430 = vmatprep.subr.bf16.mxu0 0
    %3431 = vmatpush2.bf16.msra.mxu0 0
    %3432 = vmatprep.subr.bf16.mxu0 0
    %3433 = vmatpush2.bf16.msra.mxu0 0
    %3434 = vmatprep.subr.bf16.mxu0 0
    %3435 = vmatpush2.bf16.msra.mxu0 0
    %3436 = vmatprep.mubr.bf16.mxu0 0
    %3437 = vmatmul.mubr.bf16.gmra.mxu0 %v3359
    %v3438 = vpop.f32.mrf.mxu0
    %v3439 = vadd.f32 %v3396, %v3438
    %v3440 = vpop.f32.mrf.mxu0
    %v3441 = vadd.f32 %v3398, %v3440
    %v3442 = vpop.f32.mrf.mxu0
    %v3443 = vadd.f32 %v3400, %v3442
    %v3444 = vpop.f32.mrf.mxu0
    %v3445 = vadd.f32 %v3402, %v3444
    %3446 = vdwg.mxu0
    %3447 = vmatprep.subr.bf16.mxu0 %v3245
    %3448 = vmatpush1.bf16.msra.mxu0 %v3244
    %3449 = vmatprep.subr.bf16.mxu0 %v3241
    %3450 = vmatpush1.bf16.msra.mxu0 %v3240
    %3451 = vmatprep.subr.bf16.mxu0 %v3237
    %3452 = vmatpush1.bf16.msra.mxu0 %v3236
    %3453 = vmatprep.subr.bf16.mxu0 %v3233
    %3454 = vmatpush1.bf16.msra.mxu0 %v3232
    %3455 = vmatprep.subr.bf16.mxu0 %v3229
    %3456 = vmatpush1.bf16.msra.mxu0 %v3228
    %3457 = vmatprep.subr.bf16.mxu0 %v3225
    %3458 = vmatpush1.bf16.msra.mxu0 %v3224
    %3459 = vmatprep.subr.bf16.mxu0 %v3221
    %3460 = vmatpush1.bf16.msra.mxu0 %v3220
    %3461 = vmatprep.subr.bf16.mxu0 %v3217
    %3462 = vmatpush1.bf16.msra.mxu0 %v3216
    %3463 = vmatprep.subr.bf16.mxu0 %v3277
    %3464 = vmatpush2.bf16.msra.mxu0 %v3276
    %3465 = vmatprep.subr.bf16.mxu0 %v3273
    %3466 = vmatpush2.bf16.msra.mxu0 %v3272
    %3467 = vmatprep.subr.bf16.mxu0 %v3269
    %3468 = vmatpush2.bf16.msra.mxu0 %v3268
    %3469 = vmatprep.subr.bf16.mxu0 %v3265
    %3470 = vmatpush2.bf16.msra.mxu0 %v3264
    %3471 = vmatprep.subr.bf16.mxu0 %v3261
    %3472 = vmatpush2.bf16.msra.mxu0 %v3260
    %3473 = vmatprep.subr.bf16.mxu0 %v3257
    %3474 = vmatpush2.bf16.msra.mxu0 %v3256
    %3475 = vmatprep.subr.bf16.mxu0 %v3253
    %3476 = vmatpush2.bf16.msra.mxu0 %v3252
    %3477 = vmatprep.subr.bf16.mxu0 %v3249
    %3478 = vmatpush2.bf16.msra.mxu0 %v3248
    %3479 = vmatprep.mubr.bf16.mxu0 %v2994
    %3480 = vmatmul.mubr.bf16.gmra.mxu0 %v2993
    %v3481 = vpop.f32.mrf.mxu0
    %v3482 = vadd.f32 0.0, %v3481
    %v3483 = vpop.f32.mrf.mxu0
    %v3484 = vadd.f32 0.0, %v3483
    %v3485 = vpop.f32.mrf.mxu0
    %v3486 = vadd.f32 0.0, %v3485
    %v3487 = vpop.f32.mrf.mxu0
    %v3488 = vadd.f32 0.0, %v3487
    %3489 = vdwg.mxu0
    %3490 = vmatprep.subr.bf16.mxu0 0
    %3491 = vmatpush1.bf16.msra.mxu0 0
    %3492 = vmatprep.subr.bf16.mxu0 0
    %3493 = vmatpush1.bf16.msra.mxu0 0
    %3494 = vmatprep.subr.bf16.mxu0 0
    %3495 = vmatpush1.bf16.msra.mxu0 0
    %3496 = vmatprep.subr.bf16.mxu0 0
    %3497 = vmatpush1.bf16.msra.mxu0 0
    %3498 = vmatprep.subr.bf16.mxu0 0
    %3499 = vmatpush1.bf16.msra.mxu0 0
    %3500 = vmatprep.subr.bf16.mxu0 0
    %3501 = vmatpush1.bf16.msra.mxu0 0
    %3502 = vmatprep.subr.bf16.mxu0 %v3285
    %3503 = vmatpush1.bf16.msra.mxu0 %v3284
    %3504 = vmatprep.subr.bf16.mxu0 %v3281
    %3505 = vmatpush1.bf16.msra.mxu0 %v3280
    %3506 = vmatprep.subr.bf16.mxu0 0
    %3507 = vmatpush2.bf16.msra.mxu0 0
    %3508 = vmatprep.subr.bf16.mxu0 0
    %3509 = vmatpush2.bf16.msra.mxu0 0
    %3510 = vmatprep.subr.bf16.mxu0 0
    %3511 = vmatpush2.bf16.msra.mxu0 0
    %3512 = vmatprep.subr.bf16.mxu0 0
    %3513 = vmatpush2.bf16.msra.mxu0 0
    %3514 = vmatprep.subr.bf16.mxu0 0
    %3515 = vmatpush2.bf16.msra.mxu0 0
    %3516 = vmatprep.subr.bf16.mxu0 0
    %3517 = vmatpush2.bf16.msra.mxu0 0
    %3518 = vmatprep.subr.bf16.mxu0 0
    %3519 = vmatpush2.bf16.msra.mxu0 0
    %3520 = vmatprep.subr.bf16.mxu0 0
    %3521 = vmatpush2.bf16.msra.mxu0 0
    %3522 = vmatprep.mubr.bf16.mxu0 0
    %3523 = vmatmul.mubr.bf16.gmra.mxu0 %v3359
    %v3524 = vpop.f32.mrf.mxu0
    %v3525 = vadd.f32 %v3482, %v3524
    %v3526 = vpop.f32.mrf.mxu0
    %v3527 = vadd.f32 %v3484, %v3526
    %v3528 = vpop.f32.mrf.mxu0
    %v3529 = vadd.f32 %v3486, %v3528
    %v3530 = vpop.f32.mrf.mxu0
    %v3531 = vadd.f32 %v3488, %v3530
    %3532 = vdwg.mxu0
    %v3533 = vadd.f32 %v2896, %v3439
    %v3534 = vadd.f32 %v2898, %v3441
    %v3535 = vadd.f32 %v2982, %v3525
    %v3536 = vadd.f32 %v2984, %v3527
    %v3537 = vadd.f32 %v2900, %v3443
    %v3538 = vadd.f32 %v2902, %v3445
    %v3539 = vadd.f32 %v2986, %v3529
    %v3540 = vadd.f32 %v2988, %v3531
    %v3541 = vpack.c.bf16 %v1894, %v1894
    %v3542 = vpack.c.bf16 %v1884, %v1884
    %v3543 = vrot.slane %v1899, 1
    %v3544 = vrot.slane %v1901, 2
    %v3545 = vor.u32 %v3543, %v3544
    %v3547 = vshll.u32 %v3541, 16
    %v3549 = vrot.slane %v3547, 2
    %v3550 = vsel %vm1058, %v3545, %v3549
    %v3551 = vrot.slane %v1906, 1
    %v3552 = vrot.slane %v1908, 2
    %v3553 = vor.u32 %v3551, %v3552
    %v3555 = vshll.u32 %v3542, 16
    %v3557 = vrot.slane %v3555, 2
    %v3558 = vsel %vm1058, %v3553, %v3557
    %v3559 = vrot.slane %v1913, 1
    %v3560 = vrot.slane %v1915, 2
    %v3561 = vor.u32 %v3559, %v3560
    %v3562 = vsel %vm1058, %v3561, %v3560
    %v3637 = vunpack.c.l.b16 %v371
    %v3638 = vunpack.c.h.b16 %v371
    %v3639 = vunpack.c.l.b16 %v372
    %v3640 = vunpack.c.h.b16 %v372
    %v3641 = vunpack.c.l.b16 %v373
    %v3642 = vunpack.c.h.b16 %v373
    %v3643 = vunpack.c.l.b16 %v374
    %v3644 = vunpack.c.h.b16 %v374
    %v3645 = vunpack.c.l.b16 %v375
    %v3646 = vunpack.c.h.b16 %v375
    %v3647 = vunpack.c.l.b16 %v376
    %v3648 = vunpack.c.h.b16 %v376
    %v3649 = vunpack.c.l.b16 %v377
    %v3650 = vunpack.c.h.b16 %v377
    %v3651 = vunpack.c.l.b16 %v378
    %v3652 = vunpack.c.h.b16 %v378
    %v3653 = vunpack.c.l.b16 %v379
    %v3654 = vunpack.c.h.b16 %v379
    %v3655 = vunpack.c.l.b16 %v380
    %v3656 = vunpack.c.h.b16 %v380
    %v3657 = vunpack.c.l.b16 %v381
    %v3658 = vunpack.c.h.b16 %v381
    %v3659 = vunpack.c.l.b16 %v382
    %v3660 = vunpack.c.h.b16 %v382
    %v3661 = vunpack.c.l.b16 %v383
    %v3662 = vunpack.c.h.b16 %v383
    %v3663 = vunpack.c.l.b16 %v384
    %v3664 = vunpack.c.h.b16 %v384
    %v3665 = vunpack.c.l.b16 %v385
    %v3666 = vunpack.c.h.b16 %v385
    %v3667 = vunpack.c.l.b16 %v386
    %v3668 = vunpack.c.h.b16 %v386
    %v3669 = vunpack.c.l.b16 %v387
    %v3670 = vunpack.c.h.b16 %v387
    %v3671 = vunpack.c.l.b16 %v388
    %v3672 = vunpack.c.h.b16 %v388
    %v3673 = vunpack.c.l.b16 %v389
    %v3674 = vunpack.c.h.b16 %v389
    %v3675 = vunpack.c.l.b16 %v390
    %v3676 = vunpack.c.h.b16 %v390
    %v3677 = vunpack.c.l.b16 %v391
    %v3678 = vunpack.c.h.b16 %v391
    %v3679 = vunpack.c.l.b16 %v392
    %v3680 = vunpack.c.h.b16 %v392
    %v3681 = vunpack.c.l.b16 %v393
    %v3682 = vunpack.c.h.b16 %v393
    %v3683 = vunpack.c.l.b16 %v394
    %v3684 = vunpack.c.h.b16 %v394
    %v3685 = vunpack.c.l.b16 %v395
    %v3686 = vunpack.c.h.b16 %v395
    %v3687 = vunpack.c.l.b16 %v396
    %v3688 = vunpack.c.h.b16 %v396
    %v3689 = vunpack.c.l.b16 %v397
    %v3690 = vunpack.c.h.b16 %v397
    %v3691 = vunpack.c.l.b16 %v398
    %v3692 = vunpack.c.h.b16 %v398
    %v3693 = vunpack.c.l.b16 %v399
    %v3694 = vunpack.c.h.b16 %v399
    %v3695 = vunpack.c.l.b16 %v400
    %v3696 = vunpack.c.h.b16 %v400
    %v3697 = vunpack.c.l.b16 %v401
    %v3698 = vunpack.c.h.b16 %v401
    %v3699 = vunpack.c.l.b16 %v402
    %v3700 = vunpack.c.h.b16 %v402
    %v3701 = vunpack.c.l.b16 %v403
    %v3702 = vunpack.c.h.b16 %v403
    %v3703 = vunpack.c.l.b16 %v404
    %v3704 = vunpack.c.h.b16 %v404
    %v3705 = vunpack.c.l.b16 %v405
    %v3706 = vunpack.c.h.b16 %v405
    %v3707 = vunpack.c.l.b16 %v406
    %v3708 = vunpack.c.h.b16 %v406
    %v3709 = vunpack.c.l.b16 %v407
    %v3710 = vunpack.c.h.b16 %v407
    %v3711 = vunpack.c.l.b16 %v408
    %v3712 = vunpack.c.h.b16 %v408
    %v3713 = vunpack.c.l.b16 %v409
    %v3714 = vunpack.c.h.b16 %v409
    %v3715 = vunpack.c.l.b16 %v410
    %v3716 = vunpack.c.h.b16 %v410
    %v3717 = vunpack.c.l.b16 %v411
    %v3718 = vunpack.c.h.b16 %v411
    %v3719 = vunpack.c.l.b16 %v412
    %v3720 = vunpack.c.h.b16 %v412
    %v3721 = vunpack.c.l.b16 %v413
    %v3722 = vunpack.c.h.b16 %v413
    %v3723 = vunpack.c.l.b16 %v414
    %v3724 = vunpack.c.h.b16 %v414
    %v3725 = vunpack.c.l.b16 %v415
    %v3726 = vunpack.c.h.b16 %v415
    %v3727 = vunpack.c.l.b16 %v416
    %v3728 = vunpack.c.h.b16 %v416
    %v3729 = vunpack.c.l.b16 %v417
    %v3730 = vunpack.c.h.b16 %v417
    %v3731 = vunpack.c.l.b16 %v418
    %v3732 = vunpack.c.h.b16 %v418
    %v3733 = vunpack.c.l.b16 %v419
    %v3734 = vunpack.c.h.b16 %v419
    %v3735 = vunpack.c.l.b16 %v420
    %v3736 = vunpack.c.h.b16 %v420
    %v3737 = vunpack.c.l.b16 %v421
    %v3738 = vunpack.c.h.b16 %v421
    %v3739 = vunpack.c.l.b16 %v422
    %v3740 = vunpack.c.h.b16 %v422
    %v3741 = vunpack.c.l.b16 %v423
    %v3742 = vunpack.c.h.b16 %v423
    %v3743 = vunpack.c.l.b16 %v424
    %v3744 = vunpack.c.h.b16 %v424
    %v3745 = vunpack.c.l.b16 %v425
    %v3746 = vunpack.c.h.b16 %v425
    %v3747 = vunpack.c.l.b16 %v426
    %v3748 = vunpack.c.h.b16 %v426
    %v3749 = vunpack.c.l.b16 %v427
    %v3750 = vunpack.c.h.b16 %v427
    %v3751 = vunpack.c.l.b16 %v428
    %v3752 = vunpack.c.h.b16 %v428
    %v3753 = vunpack.c.l.b16 %v429
    %v3754 = vunpack.c.h.b16 %v429
    %v3755 = vunpack.c.l.b16 %v430
    %v3756 = vunpack.c.h.b16 %v430
    %v3757 = vunpack.c.l.b16 %v431
    %v3758 = vunpack.c.h.b16 %v431
    %v3759 = vunpack.c.l.b16 %v432
    %v3760 = vunpack.c.h.b16 %v432
    %v3761 = vunpack.c.l.b16 %v433
    %v3762 = vunpack.c.h.b16 %v433
    %v3763 = vunpack.c.l.b16 %v434
    %v3764 = vunpack.c.h.b16 %v434
    %v3765 = vunpack.c.l.b16 %v435
    %v3766 = vunpack.c.h.b16 %v435
    %v3767 = vunpack.c.l.b16 %v436
    %v3768 = vunpack.c.h.b16 %v436
    %v3769 = vunpack.c.l.b16 %v437
    %v3770 = vunpack.c.h.b16 %v437
    %v3771 = vunpack.c.l.b16 %v438
    %v3772 = vunpack.c.h.b16 %v438
    %v3773 = vunpack.c.l.b16 %v439
    %v3774 = vunpack.c.h.b16 %v439
    %v3775 = vunpack.c.l.b16 %v440
    %v3776 = vunpack.c.h.b16 %v440
    %v3777 = vunpack.c.l.b16 %v441
    %v3778 = vunpack.c.h.b16 %v441
    %v3779 = vunpack.c.l.b16 %v442
    %v3780 = vunpack.c.h.b16 %v442
    %v3781 = vpack.c.b16 %v3641, %v3637
    %v3782 = vpack.c.b16 %v3642, %v3638
    %v3783 = vpack.c.b16 %v3643, %v3639
    %v3784 = vpack.c.b16 %v3644, %v3640
    %v3785 = vpack.c.b16 %v3649, %v3645
    %v3786 = vpack.c.b16 %v3650, %v3646
    %v3787 = vpack.c.b16 %v3651, %v3647
    %v3788 = vpack.c.b16 %v3652, %v3648
    %v3789 = vpack.c.b16 %v3657, %v3653
    %v3790 = vpack.c.b16 %v3658, %v3654
    %v3791 = vpack.c.b16 %v3659, %v3655
    %v3792 = vpack.c.b16 %v3660, %v3656
    %v3793 = vpack.c.b16 %v3665, %v3661
    %v3794 = vpack.c.b16 %v3666, %v3662
    %v3795 = vpack.c.b16 %v3667, %v3663
    %v3796 = vpack.c.b16 %v3668, %v3664
    %v3797 = vpack.c.b16 %v3673, %v3669
    %v3798 = vpack.c.b16 %v3674, %v3670
    %v3799 = vpack.c.b16 %v3675, %v3671
    %v3800 = vpack.c.b16 %v3676, %v3672
    %v3801 = vpack.c.b16 %v3681, %v3677
    %v3802 = vpack.c.b16 %v3682, %v3678
    %v3803 = vpack.c.b16 %v3683, %v3679
    %v3804 = vpack.c.b16 %v3684, %v3680
    %v3805 = vpack.c.b16 %v3689, %v3685
    %v3806 = vpack.c.b16 %v3690, %v3686
    %v3807 = vpack.c.b16 %v3691, %v3687
    %v3808 = vpack.c.b16 %v3692, %v3688
    %v3809 = vpack.c.b16 %v3697, %v3693
    %v3810 = vpack.c.b16 %v3698, %v3694
    %v3811 = vpack.c.b16 %v3699, %v3695
    %v3812 = vpack.c.b16 %v3700, %v3696
    %v3813 = vpack.c.b16 %v3705, %v3701
    %v3814 = vpack.c.b16 %v3706, %v3702
    %v3815 = vpack.c.b16 %v3707, %v3703
    %v3816 = vpack.c.b16 %v3708, %v3704
    %v3817 = vpack.c.b16 %v3713, %v3709
    %v3818 = vpack.c.b16 %v3714, %v3710
    %v3819 = vpack.c.b16 %v3715, %v3711
    %v3820 = vpack.c.b16 %v3716, %v3712
    %v3821 = vpack.c.b16 %v3721, %v3717
    %v3822 = vpack.c.b16 %v3722, %v3718
    %v3823 = vpack.c.b16 %v3723, %v3719
    %v3824 = vpack.c.b16 %v3724, %v3720
    %v3825 = vpack.c.b16 %v3729, %v3725
    %v3826 = vpack.c.b16 %v3730, %v3726
    %v3827 = vpack.c.b16 %v3731, %v3727
    %v3828 = vpack.c.b16 %v3732, %v3728
    %v3829 = vpack.c.b16 %v3737, %v3733
    %v3830 = vpack.c.b16 %v3738, %v3734
    %v3831 = vpack.c.b16 %v3739, %v3735
    %v3832 = vpack.c.b16 %v3740, %v3736
    %v3833 = vpack.c.b16 %v3745, %v3741
    %v3834 = vpack.c.b16 %v3746, %v3742
    %v3835 = vpack.c.b16 %v3747, %v3743
    %v3836 = vpack.c.b16 %v3748, %v3744
    %v3837 = vpack.c.b16 %v3753, %v3749
    %v3838 = vpack.c.b16 %v3754, %v3750
    %v3839 = vpack.c.b16 %v3755, %v3751
    %v3840 = vpack.c.b16 %v3756, %v3752
    %v3841 = vpack.c.b16 %v3761, %v3757
    %v3842 = vpack.c.b16 %v3762, %v3758
    %v3843 = vpack.c.b16 %v3763, %v3759
    %v3844 = vpack.c.b16 %v3764, %v3760
    %v3845 = vpack.c.b16 %v3769, %v3765
    %v3846 = vpack.c.b16 %v3770, %v3766
    %v3847 = vpack.c.b16 %v3771, %v3767
    %v3848 = vpack.c.b16 %v3772, %v3768
    %v3849 = vpack.c.b16 %v3777, %v3773
    %v3850 = vpack.c.b16 %v3778, %v3774
    %v3851 = vpack.c.b16 %v3779, %v3775
    %v3852 = vpack.c.b16 %v3780, %v3776
    %v3926 = vsel %vm621, %v3562, 0
    %3928 = vmatprep.subr.bf16.mxu0 %v3810
    %3929 = vmatpush1.bf16.msra.mxu0 %v3809
    %3930 = vmatprep.subr.bf16.mxu0 %v3806
    %3931 = vmatpush1.bf16.msra.mxu0 %v3805
    %3932 = vmatprep.subr.bf16.mxu0 %v3802
    %3933 = vmatpush1.bf16.msra.mxu0 %v3801
    %3934 = vmatprep.subr.bf16.mxu0 %v3798
    %3935 = vmatpush1.bf16.msra.mxu0 %v3797
    %3936 = vmatprep.subr.bf16.mxu0 %v3794
    %3937 = vmatpush1.bf16.msra.mxu0 %v3793
    %3938 = vmatprep.subr.bf16.mxu0 %v3790
    %3939 = vmatpush1.bf16.msra.mxu0 %v3789
    %3940 = vmatprep.subr.bf16.mxu0 %v3786
    %3941 = vmatpush1.bf16.msra.mxu0 %v3785
    %3942 = vmatprep.subr.bf16.mxu0 %v3782
    %3943 = vmatpush1.bf16.msra.mxu0 %v3781
    %3944 = vmatprep.subr.bf16.mxu0 %v3842
    %3945 = vmatpush2.bf16.msra.mxu0 %v3841
    %3946 = vmatprep.subr.bf16.mxu0 %v3838
    %3947 = vmatpush2.bf16.msra.mxu0 %v3837
    %3948 = vmatprep.subr.bf16.mxu0 %v3834
    %3949 = vmatpush2.bf16.msra.mxu0 %v3833
    %3950 = vmatprep.subr.bf16.mxu0 %v3830
    %3951 = vmatpush2.bf16.msra.mxu0 %v3829
    %3952 = vmatprep.subr.bf16.mxu0 %v3826
    %3953 = vmatpush2.bf16.msra.mxu0 %v3825
    %3954 = vmatprep.subr.bf16.mxu0 %v3822
    %3955 = vmatpush2.bf16.msra.mxu0 %v3821
    %3956 = vmatprep.subr.bf16.mxu0 %v3818
    %3957 = vmatpush2.bf16.msra.mxu0 %v3817
    %3958 = vmatprep.subr.bf16.mxu0 %v3814
    %3959 = vmatpush2.bf16.msra.mxu0 %v3813
    %3960 = vmatprep.mubr.bf16.mxu0 %v3558
    %3961 = vmatmul.mubr.bf16.gmra.mxu0 %v3550
    %v3962 = vpop.f32.mrf.mxu0
    %v3963 = vadd.f32 0.0, %v3962
    %v3964 = vpop.f32.mrf.mxu0
    %v3965 = vadd.f32 0.0, %v3964
    %v3966 = vpop.f32.mrf.mxu0
    %v3967 = vadd.f32 0.0, %v3966
    %v3968 = vpop.f32.mrf.mxu0
    %v3969 = vadd.f32 0.0, %v3968
    %3970 = vdwg.mxu0
    %3971 = vmatprep.subr.bf16.mxu0 0
    %3972 = vmatpush1.bf16.msra.mxu0 0
    %3973 = vmatprep.subr.bf16.mxu0 0
    %3974 = vmatpush1.bf16.msra.mxu0 0
    %3975 = vmatprep.subr.bf16.mxu0 0
    %3976 = vmatpush1.bf16.msra.mxu0 0
    %3977 = vmatprep.subr.bf16.mxu0 0
    %3978 = vmatpush1.bf16.msra.mxu0 0
    %3979 = vmatprep.subr.bf16.mxu0 0
    %3980 = vmatpush1.bf16.msra.mxu0 0
    %3981 = vmatprep.subr.bf16.mxu0 0
    %3982 = vmatpush1.bf16.msra.mxu0 0
    %3983 = vmatprep.subr.bf16.mxu0 %v3850
    %3984 = vmatpush1.bf16.msra.mxu0 %v3849
    %3985 = vmatprep.subr.bf16.mxu0 %v3846
    %3986 = vmatpush1.bf16.msra.mxu0 %v3845
    %3987 = vmatprep.subr.bf16.mxu0 0
    %3988 = vmatpush2.bf16.msra.mxu0 0
    %3989 = vmatprep.subr.bf16.mxu0 0
    %3990 = vmatpush2.bf16.msra.mxu0 0
    %3991 = vmatprep.subr.bf16.mxu0 0
    %3992 = vmatpush2.bf16.msra.mxu0 0
    %3993 = vmatprep.subr.bf16.mxu0 0
    %3994 = vmatpush2.bf16.msra.mxu0 0
    %3995 = vmatprep.subr.bf16.mxu0 0
    %3996 = vmatpush2.bf16.msra.mxu0 0
    %3997 = vmatprep.subr.bf16.mxu0 0
    %3998 = vmatpush2.bf16.msra.mxu0 0
    %3999 = vmatprep.subr.bf16.mxu0 0
    %4000 = vmatpush2.bf16.msra.mxu0 0
    %4001 = vmatprep.subr.bf16.mxu0 0
    %4002 = vmatpush2.bf16.msra.mxu0 0
    %4003 = vmatprep.mubr.bf16.mxu0 0
    %4004 = vmatmul.mubr.bf16.gmra.mxu0 %v3926
    %v4005 = vpop.f32.mrf.mxu0
    %v4006 = vadd.f32 %v3963, %v4005
    %v4007 = vpop.f32.mrf.mxu0
    %v4008 = vadd.f32 %v3965, %v4007
    %v4009 = vpop.f32.mrf.mxu0
    %v4010 = vadd.f32 %v3967, %v4009
    %v4011 = vpop.f32.mrf.mxu0
    %v4012 = vadd.f32 %v3969, %v4011
    %4013 = vdwg.mxu0
    %4014 = vmatprep.subr.bf16.mxu0 %v3812
    %4015 = vmatpush1.bf16.msra.mxu0 %v3811
    %4016 = vmatprep.subr.bf16.mxu0 %v3808
    %4017 = vmatpush1.bf16.msra.mxu0 %v3807
    %4018 = vmatprep.subr.bf16.mxu0 %v3804
    %4019 = vmatpush1.bf16.msra.mxu0 %v3803
    %4020 = vmatprep.subr.bf16.mxu0 %v3800
    %4021 = vmatpush1.bf16.msra.mxu0 %v3799
    %4022 = vmatprep.subr.bf16.mxu0 %v3796
    %4023 = vmatpush1.bf16.msra.mxu0 %v3795
    %4024 = vmatprep.subr.bf16.mxu0 %v3792
    %4025 = vmatpush1.bf16.msra.mxu0 %v3791
    %4026 = vmatprep.subr.bf16.mxu0 %v3788
    %4027 = vmatpush1.bf16.msra.mxu0 %v3787
    %4028 = vmatprep.subr.bf16.mxu0 %v3784
    %4029 = vmatpush1.bf16.msra.mxu0 %v3783
    %4030 = vmatprep.subr.bf16.mxu0 %v3844
    %4031 = vmatpush2.bf16.msra.mxu0 %v3843
    %4032 = vmatprep.subr.bf16.mxu0 %v3840
    %4033 = vmatpush2.bf16.msra.mxu0 %v3839
    %4034 = vmatprep.subr.bf16.mxu0 %v3836
    %4035 = vmatpush2.bf16.msra.mxu0 %v3835
    %4036 = vmatprep.subr.bf16.mxu0 %v3832
    %4037 = vmatpush2.bf16.msra.mxu0 %v3831
    %4038 = vmatprep.subr.bf16.mxu0 %v3828
    %4039 = vmatpush2.bf16.msra.mxu0 %v3827
    %4040 = vmatprep.subr.bf16.mxu0 %v3824
    %4041 = vmatpush2.bf16.msra.mxu0 %v3823
    %4042 = vmatprep.subr.bf16.mxu0 %v3820
    %4043 = vmatpush2.bf16.msra.mxu0 %v3819
    %4044 = vmatprep.subr.bf16.mxu0 %v3816
    %4045 = vmatpush2.bf16.msra.mxu0 %v3815
    %4046 = vmatprep.mubr.bf16.mxu0 %v3558
    %4047 = vmatmul.mubr.bf16.gmra.mxu0 %v3550
    %v4048 = vpop.f32.mrf.mxu0
    %v4049 = vadd.f32 0.0, %v4048
    %v4050 = vpop.f32.mrf.mxu0
    %v4051 = vadd.f32 0.0, %v4050
    %v4052 = vpop.f32.mrf.mxu0
    %v4053 = vadd.f32 0.0, %v4052
    %v4054 = vpop.f32.mrf.mxu0
    %v4055 = vadd.f32 0.0, %v4054
    %4056 = vdwg.mxu0
    %4057 = vmatprep.subr.bf16.mxu0 0
    %4058 = vmatpush1.bf16.msra.mxu0 0
    %4059 = vmatprep.subr.bf16.mxu0 0
    %4060 = vmatpush1.bf16.msra.mxu0 0
    %4061 = vmatprep.subr.bf16.mxu0 0
    %4062 = vmatpush1.bf16.msra.mxu0 0
    %4063 = vmatprep.subr.bf16.mxu0 0
    %4064 = vmatpush1.bf16.msra.mxu0 0
    %4065 = vmatprep.subr.bf16.mxu0 0
    %4066 = vmatpush1.bf16.msra.mxu0 0
    %4067 = vmatprep.subr.bf16.mxu0 0
    %4068 = vmatpush1.bf16.msra.mxu0 0
    %4069 = vmatprep.subr.bf16.mxu0 %v3852
    %4070 = vmatpush1.bf16.msra.mxu0 %v3851
    %4071 = vmatprep.subr.bf16.mxu0 %v3848
    %4072 = vmatpush1.bf16.msra.mxu0 %v3847
    %4073 = vmatprep.subr.bf16.mxu0 0
    %4074 = vmatpush2.bf16.msra.mxu0 0
    %4075 = vmatprep.subr.bf16.mxu0 0
    %4076 = vmatpush2.bf16.msra.mxu0 0
    %4077 = vmatprep.subr.bf16.mxu0 0
    %4078 = vmatpush2.bf16.msra.mxu0 0
    %4079 = vmatprep.subr.bf16.mxu0 0
    %4080 = vmatpush2.bf16.msra.mxu0 0
    %4081 = vmatprep.subr.bf16.mxu0 0
    %4082 = vmatpush2.bf16.msra.mxu0 0
    %4083 = vmatprep.subr.bf16.mxu0 0
    %4084 = vmatpush2.bf16.msra.mxu0 0
    %4085 = vmatprep.subr.bf16.mxu0 0
    %4086 = vmatpush2.bf16.msra.mxu0 0
    %4087 = vmatprep.subr.bf16.mxu0 0
    %4088 = vmatpush2.bf16.msra.mxu0 0
    %4089 = vmatprep.mubr.bf16.mxu0 0
    %4090 = vmatmul.mubr.bf16.gmra.mxu0 %v3926
    %v4091 = vpop.f32.mrf.mxu0
    %v4092 = vadd.f32 %v4049, %v4091
    %v4093 = vpop.f32.mrf.mxu0
    %v4094 = vadd.f32 %v4051, %v4093
    %v4095 = vpop.f32.mrf.mxu0
    %v4096 = vadd.f32 %v4053, %v4095
    %v4097 = vpop.f32.mrf.mxu0
    %v4098 = vadd.f32 %v4055, %v4097
    %4099 = vdwg.mxu0
    %v4100 = vadd.f32 %v3533, %v4006
    %v4101 = vadd.f32 %v3534, %v4008
    %v4102 = vadd.f32 %v3535, %v4092
    %v4103 = vadd.f32 %v3536, %v4094
    %v4104 = vadd.f32 %v3537, %v4010
    %v4105 = vadd.f32 %v3538, %v4012
    %v4106 = vadd.f32 %v3539, %v4096
    %v4107 = vadd.f32 %v3540, %v4098
    %v4110 = vrot.slane %v1895, 2
    %v4111 = vrot.slane %v3541, 2
    %v4112 = vsel %vm1234, %v4110, %v4111
    %v4113 = vrot.slane %v1896, 2
    %v4114 = vrot.slane %v3542, 2
    %v4115 = vsel %vm1234, %v4113, %v4114
    %v4116 = vrot.slane %v1897, 2
    %v4117 = vsel %vm1234, %v4116, %v4116
    %v4192 = vunpack.c.l.b16 %v444
    %v4193 = vunpack.c.h.b16 %v444
    %v4194 = vunpack.c.l.b16 %v445
    %v4195 = vunpack.c.h.b16 %v445
    %v4196 = vunpack.c.l.b16 %v446
    %v4197 = vunpack.c.h.b16 %v446
    %v4198 = vunpack.c.l.b16 %v447
    %v4199 = vunpack.c.h.b16 %v447
    %v4200 = vunpack.c.l.b16 %v448
    %v4201 = vunpack.c.h.b16 %v448
    %v4202 = vunpack.c.l.b16 %v449
    %v4203 = vunpack.c.h.b16 %v449
    %v4204 = vunpack.c.l.b16 %v450
    %v4205 = vunpack.c.h.b16 %v450
    %v4206 = vunpack.c.l.b16 %v451
    %v4207 = vunpack.c.h.b16 %v451
    %v4208 = vunpack.c.l.b16 %v452
    %v4209 = vunpack.c.h.b16 %v452
    %v4210 = vunpack.c.l.b16 %v453
    %v4211 = vunpack.c.h.b16 %v453
    %v4212 = vunpack.c.l.b16 %v454
    %v4213 = vunpack.c.h.b16 %v454
    %v4214 = vunpack.c.l.b16 %v455
    %v4215 = vunpack.c.h.b16 %v455
    %v4216 = vunpack.c.l.b16 %v456
    %v4217 = vunpack.c.h.b16 %v456
    %v4218 = vunpack.c.l.b16 %v457
    %v4219 = vunpack.c.h.b16 %v457
    %v4220 = vunpack.c.l.b16 %v458
    %v4221 = vunpack.c.h.b16 %v458
    %v4222 = vunpack.c.l.b16 %v459
    %v4223 = vunpack.c.h.b16 %v459
    %v4224 = vunpack.c.l.b16 %v460
    %v4225 = vunpack.c.h.b16 %v460
    %v4226 = vunpack.c.l.b16 %v461
    %v4227 = vunpack.c.h.b16 %v461
    %v4228 = vunpack.c.l.b16 %v462
    %v4229 = vunpack.c.h.b16 %v462
    %v4230 = vunpack.c.l.b16 %v463
    %v4231 = vunpack.c.h.b16 %v463
    %v4232 = vunpack.c.l.b16 %v464
    %v4233 = vunpack.c.h.b16 %v464
    %v4234 = vunpack.c.l.b16 %v465
    %v4235 = vunpack.c.h.b16 %v465
    %v4236 = vunpack.c.l.b16 %v466
    %v4237 = vunpack.c.h.b16 %v466
    %v4238 = vunpack.c.l.b16 %v467
    %v4239 = vunpack.c.h.b16 %v467
    %v4240 = vunpack.c.l.b16 %v468
    %v4241 = vunpack.c.h.b16 %v468
    %v4242 = vunpack.c.l.b16 %v469
    %v4243 = vunpack.c.h.b16 %v469
    %v4244 = vunpack.c.l.b16 %v470
    %v4245 = vunpack.c.h.b16 %v470
    %v4246 = vunpack.c.l.b16 %v471
    %v4247 = vunpack.c.h.b16 %v471
    %v4248 = vunpack.c.l.b16 %v472
    %v4249 = vunpack.c.h.b16 %v472
    %v4250 = vunpack.c.l.b16 %v473
    %v4251 = vunpack.c.h.b16 %v473
    %v4252 = vunpack.c.l.b16 %v474
    %v4253 = vunpack.c.h.b16 %v474
    %v4254 = vunpack.c.l.b16 %v475
    %v4255 = vunpack.c.h.b16 %v475
    %v4256 = vunpack.c.l.b16 %v476
    %v4257 = vunpack.c.h.b16 %v476
    %v4258 = vunpack.c.l.b16 %v477
    %v4259 = vunpack.c.h.b16 %v477
    %v4260 = vunpack.c.l.b16 %v478
    %v4261 = vunpack.c.h.b16 %v478
    %v4262 = vunpack.c.l.b16 %v479
    %v4263 = vunpack.c.h.b16 %v479
    %v4264 = vunpack.c.l.b16 %v480
    %v4265 = vunpack.c.h.b16 %v480
    %v4266 = vunpack.c.l.b16 %v481
    %v4267 = vunpack.c.h.b16 %v481
    %v4268 = vunpack.c.l.b16 %v482
    %v4269 = vunpack.c.h.b16 %v482
    %v4270 = vunpack.c.l.b16 %v483
    %v4271 = vunpack.c.h.b16 %v483
    %v4272 = vunpack.c.l.b16 %v484
    %v4273 = vunpack.c.h.b16 %v484
    %v4274 = vunpack.c.l.b16 %v485
    %v4275 = vunpack.c.h.b16 %v485
    %v4276 = vunpack.c.l.b16 %v486
    %v4277 = vunpack.c.h.b16 %v486
    %v4278 = vunpack.c.l.b16 %v487
    %v4279 = vunpack.c.h.b16 %v487
    %v4280 = vunpack.c.l.b16 %v488
    %v4281 = vunpack.c.h.b16 %v488
    %v4282 = vunpack.c.l.b16 %v489
    %v4283 = vunpack.c.h.b16 %v489
    %v4284 = vunpack.c.l.b16 %v490
    %v4285 = vunpack.c.h.b16 %v490
    %v4286 = vunpack.c.l.b16 %v491
    %v4287 = vunpack.c.h.b16 %v491
    %v4288 = vunpack.c.l.b16 %v492
    %v4289 = vunpack.c.h.b16 %v492
    %v4290 = vunpack.c.l.b16 %v493
    %v4291 = vunpack.c.h.b16 %v493
    %v4292 = vunpack.c.l.b16 %v494
    %v4293 = vunpack.c.h.b16 %v494
    %v4294 = vunpack.c.l.b16 %v495
    %v4295 = vunpack.c.h.b16 %v495
    %v4296 = vunpack.c.l.b16 %v496
    %v4297 = vunpack.c.h.b16 %v496
    %v4298 = vunpack.c.l.b16 %v497
    %v4299 = vunpack.c.h.b16 %v497
    %v4300 = vunpack.c.l.b16 %v498
    %v4301 = vunpack.c.h.b16 %v498
    %v4302 = vunpack.c.l.b16 %v499
    %v4303 = vunpack.c.h.b16 %v499
    %v4304 = vunpack.c.l.b16 %v500
    %v4305 = vunpack.c.h.b16 %v500
    %v4306 = vunpack.c.l.b16 %v501
    %v4307 = vunpack.c.h.b16 %v501
    %v4308 = vunpack.c.l.b16 %v502
    %v4309 = vunpack.c.h.b16 %v502
    %v4310 = vunpack.c.l.b16 %v503
    %v4311 = vunpack.c.h.b16 %v503
    %v4312 = vunpack.c.l.b16 %v504
    %v4313 = vunpack.c.h.b16 %v504
    %v4314 = vunpack.c.l.b16 %v505
    %v4315 = vunpack.c.h.b16 %v505
    %v4316 = vunpack.c.l.b16 %v506
    %v4317 = vunpack.c.h.b16 %v506
    %v4318 = vunpack.c.l.b16 %v507
    %v4319 = vunpack.c.h.b16 %v507
    %v4320 = vunpack.c.l.b16 %v508
    %v4321 = vunpack.c.h.b16 %v508
    %v4322 = vunpack.c.l.b16 %v509
    %v4323 = vunpack.c.h.b16 %v509
    %v4324 = vunpack.c.l.b16 %v510
    %v4325 = vunpack.c.h.b16 %v510
    %v4326 = vunpack.c.l.b16 %v511
    %v4327 = vunpack.c.h.b16 %v511
    %v4328 = vunpack.c.l.b16 %v512
    %v4329 = vunpack.c.h.b16 %v512
    %v4330 = vunpack.c.l.b16 %v513
    %v4331 = vunpack.c.h.b16 %v513
    %v4332 = vunpack.c.l.b16 %v514
    %v4333 = vunpack.c.h.b16 %v514
    %v4334 = vunpack.c.l.b16 %v515
    %v4335 = vunpack.c.h.b16 %v515
    %v4336 = vpack.c.b16 %v4196, %v4192
    %v4337 = vpack.c.b16 %v4197, %v4193
    %v4338 = vpack.c.b16 %v4198, %v4194
    %v4339 = vpack.c.b16 %v4199, %v4195
    %v4340 = vpack.c.b16 %v4204, %v4200
    %v4341 = vpack.c.b16 %v4205, %v4201
    %v4342 = vpack.c.b16 %v4206, %v4202
    %v4343 = vpack.c.b16 %v4207, %v4203
    %v4344 = vpack.c.b16 %v4212, %v4208
    %v4345 = vpack.c.b16 %v4213, %v4209
    %v4346 = vpack.c.b16 %v4214, %v4210
    %v4347 = vpack.c.b16 %v4215, %v4211
    %v4348 = vpack.c.b16 %v4220, %v4216
    %v4349 = vpack.c.b16 %v4221, %v4217
    %v4350 = vpack.c.b16 %v4222, %v4218
    %v4351 = vpack.c.b16 %v4223, %v4219
    %v4352 = vpack.c.b16 %v4228, %v4224
    %v4353 = vpack.c.b16 %v4229, %v4225
    %v4354 = vpack.c.b16 %v4230, %v4226
    %v4355 = vpack.c.b16 %v4231, %v4227
    %v4356 = vpack.c.b16 %v4236, %v4232
    %v4357 = vpack.c.b16 %v4237, %v4233
    %v4358 = vpack.c.b16 %v4238, %v4234
    %v4359 = vpack.c.b16 %v4239, %v4235
    %v4360 = vpack.c.b16 %v4244, %v4240
    %v4361 = vpack.c.b16 %v4245, %v4241
    %v4362 = vpack.c.b16 %v4246, %v4242
    %v4363 = vpack.c.b16 %v4247, %v4243
    %v4364 = vpack.c.b16 %v4252, %v4248
    %v4365 = vpack.c.b16 %v4253, %v4249
    %v4366 = vpack.c.b16 %v4254, %v4250
    %v4367 = vpack.c.b16 %v4255, %v4251
    %v4368 = vpack.c.b16 %v4260, %v4256
    %v4369 = vpack.c.b16 %v4261, %v4257
    %v4370 = vpack.c.b16 %v4262, %v4258
    %v4371 = vpack.c.b16 %v4263, %v4259
    %v4372 = vpack.c.b16 %v4268, %v4264
    %v4373 = vpack.c.b16 %v4269, %v4265
    %v4374 = vpack.c.b16 %v4270, %v4266
    %v4375 = vpack.c.b16 %v4271, %v4267
    %v4376 = vpack.c.b16 %v4276, %v4272
    %v4377 = vpack.c.b16 %v4277, %v4273
    %v4378 = vpack.c.b16 %v4278, %v4274
    %v4379 = vpack.c.b16 %v4279, %v4275
    %v4380 = vpack.c.b16 %v4284, %v4280
    %v4381 = vpack.c.b16 %v4285, %v4281
    %v4382 = vpack.c.b16 %v4286, %v4282
    %v4383 = vpack.c.b16 %v4287, %v4283
    %v4384 = vpack.c.b16 %v4292, %v4288
    %v4385 = vpack.c.b16 %v4293, %v4289
    %v4386 = vpack.c.b16 %v4294, %v4290
    %v4387 = vpack.c.b16 %v4295, %v4291
    %v4388 = vpack.c.b16 %v4300, %v4296
    %v4389 = vpack.c.b16 %v4301, %v4297
    %v4390 = vpack.c.b16 %v4302, %v4298
    %v4391 = vpack.c.b16 %v4303, %v4299
    %v4392 = vpack.c.b16 %v4308, %v4304
    %v4393 = vpack.c.b16 %v4309, %v4305
    %v4394 = vpack.c.b16 %v4310, %v4306
    %v4395 = vpack.c.b16 %v4311, %v4307
    %v4396 = vpack.c.b16 %v4316, %v4312
    %v4397 = vpack.c.b16 %v4317, %v4313
    %v4398 = vpack.c.b16 %v4318, %v4314
    %v4399 = vpack.c.b16 %v4319, %v4315
    %v4400 = vpack.c.b16 %v4324, %v4320
    %v4401 = vpack.c.b16 %v4325, %v4321
    %v4402 = vpack.c.b16 %v4326, %v4322
    %v4403 = vpack.c.b16 %v4327, %v4323
    %v4404 = vpack.c.b16 %v4332, %v4328
    %v4405 = vpack.c.b16 %v4333, %v4329
    %v4406 = vpack.c.b16 %v4334, %v4330
    %v4407 = vpack.c.b16 %v4335, %v4331
    %v4481 = vsel %vm621, %v4117, 0
    %4483 = vmatprep.subr.bf16.mxu0 %v4365
    %4484 = vmatpush1.bf16.msra.mxu0 %v4364
    %4485 = vmatprep.subr.bf16.mxu0 %v4361
    %4486 = vmatpush1.bf16.msra.mxu0 %v4360
    %4487 = vmatprep.subr.bf16.mxu0 %v4357
    %4488 = vmatpush1.bf16.msra.mxu0 %v4356
    %4489 = vmatprep.subr.bf16.mxu0 %v4353
    %4490 = vmatpush1.bf16.msra.mxu0 %v4352
    %4491 = vmatprep.subr.bf16.mxu0 %v4349
    %4492 = vmatpush1.bf16.msra.mxu0 %v4348
    %4493 = vmatprep.subr.bf16.mxu0 %v4345
    %4494 = vmatpush1.bf16.msra.mxu0 %v4344
    %4495 = vmatprep.subr.bf16.mxu0 %v4341
    %4496 = vmatpush1.bf16.msra.mxu0 %v4340
    %4497 = vmatprep.subr.bf16.mxu0 %v4337
    %4498 = vmatpush1.bf16.msra.mxu0 %v4336
    %4499 = vmatprep.subr.bf16.mxu0 %v4397
    %4500 = vmatpush2.bf16.msra.mxu0 %v4396
    %4501 = vmatprep.subr.bf16.mxu0 %v4393
    %4502 = vmatpush2.bf16.msra.mxu0 %v4392
    %4503 = vmatprep.subr.bf16.mxu0 %v4389
    %4504 = vmatpush2.bf16.msra.mxu0 %v4388
    %4505 = vmatprep.subr.bf16.mxu0 %v4385
    %4506 = vmatpush2.bf16.msra.mxu0 %v4384
    %4507 = vmatprep.subr.bf16.mxu0 %v4381
    %4508 = vmatpush2.bf16.msra.mxu0 %v4380
    %4509 = vmatprep.subr.bf16.mxu0 %v4377
    %4510 = vmatpush2.bf16.msra.mxu0 %v4376
    %4511 = vmatprep.subr.bf16.mxu0 %v4373
    %4512 = vmatpush2.bf16.msra.mxu0 %v4372
    %4513 = vmatprep.subr.bf16.mxu0 %v4369
    %4514 = vmatpush2.bf16.msra.mxu0 %v4368
    %4515 = vmatprep.mubr.bf16.mxu0 %v4115
    %4516 = vmatmul.mubr.bf16.gmra.mxu0 %v4112
    %v4517 = vpop.f32.mrf.mxu0
    %v4518 = vadd.f32 0.0, %v4517
    %v4519 = vpop.f32.mrf.mxu0
    %v4520 = vadd.f32 0.0, %v4519
    %v4521 = vpop.f32.mrf.mxu0
    %v4522 = vadd.f32 0.0, %v4521
    %v4523 = vpop.f32.mrf.mxu0
    %v4524 = vadd.f32 0.0, %v4523
    %4525 = vdwg.mxu0
    %4526 = vmatprep.subr.bf16.mxu0 0
    %4527 = vmatpush1.bf16.msra.mxu0 0
    %4528 = vmatprep.subr.bf16.mxu0 0
    %4529 = vmatpush1.bf16.msra.mxu0 0
    %4530 = vmatprep.subr.bf16.mxu0 0
    %4531 = vmatpush1.bf16.msra.mxu0 0
    %4532 = vmatprep.subr.bf16.mxu0 0
    %4533 = vmatpush1.bf16.msra.mxu0 0
    %4534 = vmatprep.subr.bf16.mxu0 0
    %4535 = vmatpush1.bf16.msra.mxu0 0
    %4536 = vmatprep.subr.bf16.mxu0 0
    %4537 = vmatpush1.bf16.msra.mxu0 0
    %4538 = vmatprep.subr.bf16.mxu0 %v4405
    %4539 = vmatpush1.bf16.msra.mxu0 %v4404
    %4540 = vmatprep.subr.bf16.mxu0 %v4401
    %4541 = vmatpush1.bf16.msra.mxu0 %v4400
    %4542 = vmatprep.subr.bf16.mxu0 0
    %4543 = vmatpush2.bf16.msra.mxu0 0
    %4544 = vmatprep.subr.bf16.mxu0 0
    %4545 = vmatpush2.bf16.msra.mxu0 0
    %4546 = vmatprep.subr.bf16.mxu0 0
    %4547 = vmatpush2.bf16.msra.mxu0 0
    %4548 = vmatprep.subr.bf16.mxu0 0
    %4549 = vmatpush2.bf16.msra.mxu0 0
    %4550 = vmatprep.subr.bf16.mxu0 0
    %4551 = vmatpush2.bf16.msra.mxu0 0
    %4552 = vmatprep.subr.bf16.mxu0 0
    %4553 = vmatpush2.bf16.msra.mxu0 0
    %4554 = vmatprep.subr.bf16.mxu0 0
    %4555 = vmatpush2.bf16.msra.mxu0 0
    %4556 = vmatprep.subr.bf16.mxu0 0
    %4557 = vmatpush2.bf16.msra.mxu0 0
    %4558 = vmatprep.mubr.bf16.mxu0 0
    %4559 = vmatmul.mubr.bf16.gmra.mxu0 %v4481
    %v4560 = vpop.f32.mrf.mxu0
    %v4561 = vadd.f32 %v4518, %v4560
    %v4562 = vpop.f32.mrf.mxu0
    %v4563 = vadd.f32 %v4520, %v4562
    %v4564 = vpop.f32.mrf.mxu0
    %v4565 = vadd.f32 %v4522, %v4564
    %v4566 = vpop.f32.mrf.mxu0
    %v4567 = vadd.f32 %v4524, %v4566
    %4568 = vdwg.mxu0
    %4569 = vmatprep.subr.bf16.mxu0 %v4367
    %4570 = vmatpush1.bf16.msra.mxu0 %v4366
    %4571 = vmatprep.subr.bf16.mxu0 %v4363
    %4572 = vmatpush1.bf16.msra.mxu0 %v4362
    %4573 = vmatprep.subr.bf16.mxu0 %v4359
    %4574 = vmatpush1.bf16.msra.mxu0 %v4358
    %4575 = vmatprep.subr.bf16.mxu0 %v4355
    %4576 = vmatpush1.bf16.msra.mxu0 %v4354
    %4577 = vmatprep.subr.bf16.mxu0 %v4351
    %4578 = vmatpush1.bf16.msra.mxu0 %v4350
    %4579 = vmatprep.subr.bf16.mxu0 %v4347
    %4580 = vmatpush1.bf16.msra.mxu0 %v4346
    %4581 = vmatprep.subr.bf16.mxu0 %v4343
    %4582 = vmatpush1.bf16.msra.mxu0 %v4342
    %4583 = vmatprep.subr.bf16.mxu0 %v4339
    %4584 = vmatpush1.bf16.msra.mxu0 %v4338
    %4585 = vmatprep.subr.bf16.mxu0 %v4399
    %4586 = vmatpush2.bf16.msra.mxu0 %v4398
    %4587 = vmatprep.subr.bf16.mxu0 %v4395
    %4588 = vmatpush2.bf16.msra.mxu0 %v4394
    %4589 = vmatprep.subr.bf16.mxu0 %v4391
    %4590 = vmatpush2.bf16.msra.mxu0 %v4390
    %4591 = vmatprep.subr.bf16.mxu0 %v4387
    %4592 = vmatpush2.bf16.msra.mxu0 %v4386
    %4593 = vmatprep.subr.bf16.mxu0 %v4383
    %4594 = vmatpush2.bf16.msra.mxu0 %v4382
    %4595 = vmatprep.subr.bf16.mxu0 %v4379
    %4596 = vmatpush2.bf16.msra.mxu0 %v4378
    %4597 = vmatprep.subr.bf16.mxu0 %v4375
    %4598 = vmatpush2.bf16.msra.mxu0 %v4374
    %4599 = vmatprep.subr.bf16.mxu0 %v4371
    %4600 = vmatpush2.bf16.msra.mxu0 %v4370
    %4601 = vmatprep.mubr.bf16.mxu0 %v4115
    %4602 = vmatmul.mubr.bf16.gmra.mxu0 %v4112
    %v4603 = vpop.f32.mrf.mxu0
    %v4604 = vadd.f32 0.0, %v4603
    %v4605 = vpop.f32.mrf.mxu0
    %v4606 = vadd.f32 0.0, %v4605
    %v4607 = vpop.f32.mrf.mxu0
    %v4608 = vadd.f32 0.0, %v4607
    %v4609 = vpop.f32.mrf.mxu0
    %v4610 = vadd.f32 0.0, %v4609
    %4611 = vdwg.mxu0
    %4612 = vmatprep.subr.bf16.mxu0 0
    %4613 = vmatpush1.bf16.msra.mxu0 0
    %4614 = vmatprep.subr.bf16.mxu0 0
    %4615 = vmatpush1.bf16.msra.mxu0 0
    %4616 = vmatprep.subr.bf16.mxu0 0
    %4617 = vmatpush1.bf16.msra.mxu0 0
    %4618 = vmatprep.subr.bf16.mxu0 0
    %4619 = vmatpush1.bf16.msra.mxu0 0
    %4620 = vmatprep.subr.bf16.mxu0 0
    %4621 = vmatpush1.bf16.msra.mxu0 0
    %4622 = vmatprep.subr.bf16.mxu0 0
    %4623 = vmatpush1.bf16.msra.mxu0 0
    %4624 = vmatprep.subr.bf16.mxu0 %v4407
    %4625 = vmatpush1.bf16.msra.mxu0 %v4406
    %4626 = vmatprep.subr.bf16.mxu0 %v4403
    %4627 = vmatpush1.bf16.msra.mxu0 %v4402
    %4628 = vmatprep.subr.bf16.mxu0 0
    %4629 = vmatpush2.bf16.msra.mxu0 0
    %4630 = vmatprep.subr.bf16.mxu0 0
    %4631 = vmatpush2.bf16.msra.mxu0 0
    %4632 = vmatprep.subr.bf16.mxu0 0
    %4633 = vmatpush2.bf16.msra.mxu0 0
    %4634 = vmatprep.subr.bf16.mxu0 0
    %4635 = vmatpush2.bf16.msra.mxu0 0
    %4636 = vmatprep.subr.bf16.mxu0 0
    %4637 = vmatpush2.bf16.msra.mxu0 0
    %4638 = vmatprep.subr.bf16.mxu0 0
    %4639 = vmatpush2.bf16.msra.mxu0 0
    %4640 = vmatprep.subr.bf16.mxu0 0
    %4641 = vmatpush2.bf16.msra.mxu0 0
    %4642 = vmatprep.subr.bf16.mxu0 0
    %4643 = vmatpush2.bf16.msra.mxu0 0
    %4644 = vmatprep.mubr.bf16.mxu0 0
    %4645 = vmatmul.mubr.bf16.gmra.mxu0 %v4481
    %v4646 = vpop.f32.mrf.mxu0
    %v4647 = vadd.f32 %v4604, %v4646
    %v4648 = vpop.f32.mrf.mxu0
    %v4649 = vadd.f32 %v4606, %v4648
    %v4650 = vpop.f32.mrf.mxu0
    %v4651 = vadd.f32 %v4608, %v4650
    %v4652 = vpop.f32.mrf.mxu0
    %v4653 = vadd.f32 %v4610, %v4652
    %4654 = vdwg.mxu0
    %v4655 = vadd.f32 %v4100, %v4561
    %v4656 = vadd.f32 %v4101, %v4563
    %v4657 = vadd.f32 %v4102, %v4647
    %v4658 = vadd.f32 %v4103, %v4649
    %v4659 = vadd.f32 %v4104, %v4565
    %v4660 = vadd.f32 %v4105, %v4567
    %v4661 = vadd.f32 %v4106, %v4651
    %v4662 = vadd.f32 %v4107, %v4653
    %v4664 = vlaneseq
    %v4665 = vshrl.u32 %v4664, 7
    %v4666 = vsub.s32 0, %v4665
    %v4667 = vrot.slane %v517, %v4666
    %v4668 = vlaneseq
    %v4669 = vshrl.u32 %v4668, 7
    %v4670 = vsub.s32 1, %v4669
    %v4671 = vrot.slane %v517, %v4670
    %v4672 = vlaneseq
    %v4673 = vshrl.u32 %v4672, 7
    %v4674 = vsub.s32 2, %v4673
    %v4675 = vrot.slane %v517, %v4674
    %v4676 = vlaneseq
    %v4677 = vshrl.u32 %v4676, 7
    %v4678 = vsub.s32 3, %v4677
    %v4679 = vrot.slane %v517, %v4678
    %v4684 = vadd.f32 %v4655, %v4667
    %v4685 = vadd.f32 %v4656, %v4671
    %v4686 = vadd.f32 %v4657, %v4675
    %v4687 = vadd.f32 %v4658, %v4679
    %v4688 = vadd.f32 %v4659, %v4667
    %v4689 = vadd.f32 %v4660, %v4671
    %v4690 = vadd.f32 %v4661, %v4675
    %v4691 = vadd.f32 %v4662, %v4679
    %4694 = vrot.lane.b32.xlu0 %v4684, 96
    %v4695 = vpop.permute.xlu0 %4694
    %4696 = vrot.lane.b32.xlu0 %v4688, 96
    %v4697 = vpop.permute.xlu0 %4696
    %v4700 = vmax.f32 %v4684, %v4695
    %v4701 = vmax.f32 %v4688, %v4697
    %4704 = vrot.lane.b32.xlu0 %v4685, 96
    %v4705 = vpop.permute.xlu0 %4704
    %4706 = vrot.lane.b32.xlu0 %v4689, 96
    %v4707 = vpop.permute.xlu0 %4706
    %v4710 = vmax.f32 %v4685, %v4705
    %v4711 = vmax.f32 %v4689, %v4707
    %4714 = vrot.lane.b32.xlu0 %v4686, 96
    %v4715 = vpop.permute.xlu0 %4714
    %4716 = vrot.lane.b32.xlu0 %v4690, 96
    %v4717 = vpop.permute.xlu0 %4716
    %v4720 = vmax.f32 %v4686, %v4715
    %v4721 = vmax.f32 %v4690, %v4717
    %4724 = vrot.lane.b32.xlu0 %v4687, 96
    %v4725 = vpop.permute.xlu0 %4724
    %4726 = vrot.lane.b32.xlu0 %v4691, 96
    %v4727 = vpop.permute.xlu0 %4726
    %v4730 = vmax.f32 %v4687, %v4725
    %v4731 = vmax.f32 %v4691, %v4727
    %4734 = vrot.lane.b32.xlu0 %v4700, 96
    %v4735 = vpop.permute.xlu0 %4734
    %4736 = vrot.lane.b32.xlu0 %v4701, 96
    %v4737 = vpop.permute.xlu0 %4736
    %4742 = vrot.lane.b32.xlu0 %v4710, 64
    %v4743 = vpop.permute.xlu0 %4742
    %4744 = vrot.lane.b32.xlu0 %v4711, 64
    %v4745 = vpop.permute.xlu0 %4744
    %4748 = vrot.lane.b32.xlu0 %v4710, 32
    %v4749 = vpop.permute.xlu0 %4748
    %4750 = vrot.lane.b32.xlu0 %v4711, 32
    %v4751 = vpop.permute.xlu0 %4750
    %4756 = vrot.lane.b32.xlu0 %v4720, 96
    %v4757 = vpop.permute.xlu0 %4756
    %4758 = vrot.lane.b32.xlu0 %v4721, 96
    %v4759 = vpop.permute.xlu0 %4758
    %4764 = vrot.lane.b32.xlu0 %v4730, 64
    %v4765 = vpop.permute.xlu0 %4764
    %4766 = vrot.lane.b32.xlu0 %v4731, 64
    %v4767 = vpop.permute.xlu0 %4766
    %v4770 = vsel %vm621, %v4700, %v4735
    %v4771 = vsel %vm621, %v4701, %v4737
    %v4772 = vsel %vm1697, %v4770, %v4743
    %v4773 = vsel %vm1697, %v4771, %v4745
    %v4774 = vsel %vm1707, %v4772, %v4749
    %v4775 = vsel %vm1707, %v4773, %v4751
    %v4776 = vsel %vm621, %v4720, %v4757
    %v4777 = vsel %vm621, %v4721, %v4759
    %v4778 = vsel %vm1697, %v4776, %v4765
    %v4779 = vsel %vm1697, %v4777, %v4767
    %v4782 = vrot.slane %v4774, 1
    %v4783 = vrot.slane %v4778, 1
    %v4786 = vmax.f32 %v4774, %v4782
    %v4787 = vmax.f32 %v4778, %v4783
    %v4790 = vrot.slane %v4775, 1
    %v4791 = vrot.slane %v4779, 1
    %v4794 = vmax.f32 %v4775, %v4790
    %v4795 = vmax.f32 %v4779, %v4791
    %v4798 = vrot.slane %v4786, 1
    %v4799 = vrot.slane %v4787, 1
    %v4802 = vrot.slane %v4786, 2
    %v4803 = vrot.slane %v4787, 2
    %v4806 = vrot.slane %v4786, 3
    %v4807 = vrot.slane %v4787, 3
    %v4812 = vrot.slane %v4794, 4
    %v4813 = vrot.slane %v4795, 4
    %v4816 = vrot.slane %v4794, 5
    %v4817 = vrot.slane %v4795, 5
    %v4820 = vrot.slane %v4794, 6
    %v4821 = vrot.slane %v4795, 6
    %v4824 = vsel %vm1825, %v4786, %v4798
    %v4825 = vsel %vm1825, %v4787, %v4799
    %v4826 = vsel %vm526, %v4824, %v4802
    %v4827 = vsel %vm526, %v4825, %v4803
    %v4828 = vsel %vm1830, %v4826, %v4806
    %v4829 = vsel %vm1830, %v4827, %v4807
    %v4830 = vsel %vm1833, %v4828, %v4812
    %v4831 = vsel %vm1833, %v4829, %v4813
    %v4832 = vsel %vm1836, %v4830, %v4816
    %v4833 = vsel %vm1836, %v4831, %v4817
    %v4834 = vsel %vm537, %v4832, %v4820
    %v4835 = vsel %vm537, %v4833, %v4821
    %v4836 = vmax.f32 %v4834, 0.0
    %v4837 = vmax.f32 %v4835, 0.0
    %v4840 = vrot.slane %v4836, 1
    %v4841 = vrot.slane %v4837, 1
    %4842 = vrot.lane.b32.xlu0 %v4840, 96
    %v4843 = vpop.permute.xlu0 %4842
    %4844 = vrot.lane.b32.xlu0 %v4841, 96
    %v4845 = vpop.permute.xlu0 %4844
    %v4846 = vsel %vm1707, %v4843, %v4845
    %v4850 = vrot.slane %v4836, 2
    %v4851 = vrot.slane %v4837, 2
    %4852 = vrot.lane.b32.xlu0 %v4850, 64
    %v4853 = vpop.permute.xlu0 %4852
    %4854 = vrot.lane.b32.xlu0 %v4851, 64
    %v4855 = vpop.permute.xlu0 %4854
    %v4856 = vsel %vm1697, %v4853, %v4855
    %v4860 = vrot.slane %v4836, 3
    %v4861 = vrot.slane %v4837, 3
    %4862 = vrot.lane.b32.xlu0 %v4860, 32
    %v4863 = vpop.permute.xlu0 %4862
    %4864 = vrot.lane.b32.xlu0 %v4861, 32
    %v4865 = vpop.permute.xlu0 %4864
    %v4866 = vsel %vm621, %v4863, %v4865
    %v4869 = vrot.slane %v4836, 4
    %v4870 = vrot.slane %v4837, 4
    %v4873 = vrot.slane %v4836, 5
    %v4874 = vrot.slane %v4837, 5
    %4875 = vrot.lane.b32.xlu0 %v4873, 96
    %v4876 = vpop.permute.xlu0 %4875
    %4877 = vrot.lane.b32.xlu0 %v4874, 96
    %v4878 = vpop.permute.xlu0 %4877
    %v4879 = vsel %vm1707, %v4876, %v4878
    %v4883 = vrot.slane %v4836, 6
    %v4884 = vrot.slane %v4837, 6
    %4885 = vrot.lane.b32.xlu0 %v4883, 64
    %v4886 = vpop.permute.xlu0 %4885
    %4887 = vrot.lane.b32.xlu0 %v4884, 64
    %v4888 = vpop.permute.xlu0 %4887
    %v4889 = vsel %vm1697, %v4886, %v4888
    %v4893 = vsel %vm1707, %v4837, %v4843
    %v4894 = vsel %vm1697, %v4845, %v4853
    %v4895 = vsel %vm621, %v4855, %v4863
    %v4896 = vsel %vm1707, %v4870, %v4876
    %v4897 = vsel %vm1697, %v4878, %v4886
    %s4898 = scalar_lea.vmem %s0, 32
    %v4899 = vld [vmem:[%s4898] sm:$0xff]
    %v4900 = vld [vmem:[%s4898 + $0x8] sm:$0xff]
    %v4901 = vld [vmem:[%s4898 + $0x10] sm:$0xff]
    %v4902 = vld [vmem:[%s4898 + $0x18] sm:$0xf]
    %v4907 = vrot.slane %v4899, 6
    %v4908 = vrot.slane %v4900, 6
    %v4909 = vsel %vm526, %v4907, %v4908
    %v4910 = vrot.slane %v4901, 6
    %v4911 = vsel %vm526, %v4908, %v4910
    %v4912 = vrot.slane %v4902, 6
    %v4913 = vsel %vm526, %v4910, %v4912
    %v4916 = vsel %vm526, 0.0, %v4907
    %v4917 = vsel %vm537, %v4913, 0.0
    %4920 = vrot.lane.b32.xlu0 %v4916, 2
    %v4921 = vpop.permute.xlu0 %4920
    %4922 = vrot.lane.b32.xlu0 %v4909, 2
    %v4923 = vpop.permute.xlu0 %4922
    %4924 = vrot.lane.b32.xlu0 %v4911, 2
    %v4925 = vpop.permute.xlu0 %4924
    %4926 = vrot.lane.b32.xlu0 %v4917, 2
    %v4927 = vpop.permute.xlu0 %4926
    %v4932 = vsel %vm553, 0.0, %v4921
    %v4933 = vsel %vm553, 0.0, %v4923
    %v4934 = vsel %vm553, 0.0, %v4925
    %v4935 = vsel %vm553, 0.0, %v4927
    %v4936 = vsel %vm558, %v4932, 0.0
    %v4937 = vsel %vm558, %v4933, 0.0
    %v4938 = vsel %vm558, %v4934, 0.0
    %v4939 = vsel %vm558, %v4935, 0.0
    %v4940 = vpack.c.bf16 %v4937, %v4936
    %v4941 = vpack.c.bf16 %v4939, %v4938
    %v4943 = vshrl.u32 %v4940, 16
    %v4945 = vshll.u32 %v4940, 16
    %v4947 = vrot.slane %v4945, 1
    %v4948 = vor.u32 %v4943, %v4947
    %v4950 = vshll.u32 %v4941, 16
    %v4952 = vrot.slane %v4950, 1
    %v4953 = vsel %vm565, %v4948, %v4952
    %v4954 = vshrl.u32 %v4941, 16
    %v4956 = vor.u32 %v4954, %v4952
    %v4958 = vsel %vm621, %v4953, 0
    %v4961 = vsel %vm621, %v4956, 0
    %4963 = vmatprep.subr.bf16.mxu0 0
    %4964 = vmatpush1.bf16.msra.mxu0 0
    %4965 = vmatprep.subr.bf16.mxu0 0
    %4966 = vmatpush1.bf16.msra.mxu0 0
    %4967 = vmatprep.subr.bf16.mxu0 0
    %4968 = vmatpush1.bf16.msra.mxu0 0
    %4969 = vmatprep.subr.bf16.mxu0 0
    %4970 = vmatpush1.bf16.msra.mxu0 0
    %4971 = vmatprep.subr.bf16.mxu0 0
    %4972 = vmatpush1.bf16.msra.mxu0 0
    %4973 = vmatprep.subr.bf16.mxu0 0
    %4974 = vmatpush1.bf16.msra.mxu0 0
    %4975 = vmatprep.subr.bf16.mxu0 %v610
    %4976 = vmatpush1.bf16.msra.mxu0 %v609
    %4977 = vmatprep.subr.bf16.mxu0 %v606
    %4978 = vmatpush1.bf16.msra.mxu0 %v605
    %4979 = vmatprep.subr.bf16.mxu0 0
    %4980 = vmatpush2.bf16.msra.mxu0 0
    %4981 = vmatprep.subr.bf16.mxu0 0
    %4982 = vmatpush2.bf16.msra.mxu0 0
    %4983 = vmatprep.subr.bf16.mxu0 0
    %4984 = vmatpush2.bf16.msra.mxu0 0
    %4985 = vmatprep.subr.bf16.mxu0 0
    %4986 = vmatpush2.bf16.msra.mxu0 0
    %4987 = vmatprep.subr.bf16.mxu0 0
    %4988 = vmatpush2.bf16.msra.mxu0 0
    %4989 = vmatprep.subr.bf16.mxu0 0
    %4990 = vmatpush2.bf16.msra.mxu0 0
    %4991 = vmatprep.subr.bf16.mxu0 0
    %4992 = vmatpush2.bf16.msra.mxu0 0
    %4993 = vmatprep.subr.bf16.mxu0 0
    %4994 = vmatpush2.bf16.msra.mxu0 0
    %4995 = vmatprep.mubr.bf16.mxu0 0
    %4996 = vmatmul.mubr.bf16.gmra.mxu0 %v4958
    %v4997 = vpop.f32.mrf.mxu0
    %v4998 = vadd.f32 0.0, %v4997
    %v4999 = vpop.f32.mrf.mxu0
    %v5000 = vadd.f32 0.0, %v4999
    %v5001 = vpop.f32.mrf.mxu0
    %v5002 = vadd.f32 0.0, %v5001
    %v5003 = vpop.f32.mrf.mxu0
    %v5004 = vadd.f32 0.0, %v5003
    %5005 = vmatprep.mubr.bf16.mxu0 0
    %5006 = vmatmul.mubr.bf16.gmra.mxu0 %v4961
    %v5007 = vpop.f32.mrf.mxu0
    %v5008 = vadd.f32 0.0, %v5007
    %v5009 = vpop.f32.mrf.mxu0
    %v5010 = vadd.f32 0.0, %v5009
    %v5011 = vpop.f32.mrf.mxu0
    %v5012 = vadd.f32 0.0, %v5011
    %v5013 = vpop.f32.mrf.mxu0
    %v5014 = vadd.f32 0.0, %v5013
    %5015 = vdwg.mxu0
    %5016 = vmatprep.subr.bf16.mxu0 0
    %5017 = vmatpush1.bf16.msra.mxu0 0
    %5018 = vmatprep.subr.bf16.mxu0 0
    %5019 = vmatpush1.bf16.msra.mxu0 0
    %5020 = vmatprep.subr.bf16.mxu0 0
    %5021 = vmatpush1.bf16.msra.mxu0 0
    %5022 = vmatprep.subr.bf16.mxu0 0
    %5023 = vmatpush1.bf16.msra.mxu0 0
    %5024 = vmatprep.subr.bf16.mxu0 0
    %5025 = vmatpush1.bf16.msra.mxu0 0
    %5026 = vmatprep.subr.bf16.mxu0 0
    %5027 = vmatpush1.bf16.msra.mxu0 0
    %5028 = vmatprep.subr.bf16.mxu0 %v612
    %5029 = vmatpush1.bf16.msra.mxu0 %v611
    %5030 = vmatprep.subr.bf16.mxu0 %v608
    %5031 = vmatpush1.bf16.msra.mxu0 %v607
    %5032 = vmatprep.subr.bf16.mxu0 0
    %5033 = vmatpush2.bf16.msra.mxu0 0
    %5034 = vmatprep.subr.bf16.mxu0 0
    %5035 = vmatpush2.bf16.msra.mxu0 0
    %5036 = vmatprep.subr.bf16.mxu0 0
    %5037 = vmatpush2.bf16.msra.mxu0 0
    %5038 = vmatprep.subr.bf16.mxu0 0
    %5039 = vmatpush2.bf16.msra.mxu0 0
    %5040 = vmatprep.subr.bf16.mxu0 0
    %5041 = vmatpush2.bf16.msra.mxu0 0
    %5042 = vmatprep.subr.bf16.mxu0 0
    %5043 = vmatpush2.bf16.msra.mxu0 0
    %5044 = vmatprep.subr.bf16.mxu0 0
    %5045 = vmatpush2.bf16.msra.mxu0 0
    %5046 = vmatprep.subr.bf16.mxu0 0
    %5047 = vmatpush2.bf16.msra.mxu0 0
    %5048 = vmatprep.mubr.bf16.mxu0 0
    %5049 = vmatmul.mubr.bf16.gmra.mxu0 %v4958
    %v5050 = vpop.f32.mrf.mxu0
    %v5051 = vadd.f32 0.0, %v5050
    %v5052 = vpop.f32.mrf.mxu0
    %v5053 = vadd.f32 0.0, %v5052
    %v5054 = vpop.f32.mrf.mxu0
    %v5055 = vadd.f32 0.0, %v5054
    %v5056 = vpop.f32.mrf.mxu0
    %v5057 = vadd.f32 0.0, %v5056
    %5058 = vmatprep.mubr.bf16.mxu0 0
    %5059 = vmatmul.mubr.bf16.gmra.mxu0 %v4961
    %v5060 = vpop.f32.mrf.mxu0
    %v5061 = vadd.f32 0.0, %v5060
    %v5062 = vpop.f32.mrf.mxu0
    %v5063 = vadd.f32 0.0, %v5062
    %v5064 = vpop.f32.mrf.mxu0
    %v5065 = vadd.f32 0.0, %v5064
    %v5066 = vpop.f32.mrf.mxu0
    %v5067 = vadd.f32 0.0, %v5066
    %5068 = vdwg.mxu0
    %v5069 = vsel %vm621, %v4940, 0
    %v5071 = vsel %vm621, %v4941, 0
    %5073 = vmatprep.subr.bf16.mxu0 0
    %5074 = vmatpush1.bf16.msra.mxu0 0
    %5075 = vmatprep.subr.bf16.mxu0 0
    %5076 = vmatpush1.bf16.msra.mxu0 0
    %5077 = vmatprep.subr.bf16.mxu0 0
    %5078 = vmatpush1.bf16.msra.mxu0 0
    %5079 = vmatprep.subr.bf16.mxu0 0
    %5080 = vmatpush1.bf16.msra.mxu0 0
    %5081 = vmatprep.subr.bf16.mxu0 0
    %5082 = vmatpush1.bf16.msra.mxu0 0
    %5083 = vmatprep.subr.bf16.mxu0 0
    %5084 = vmatpush1.bf16.msra.mxu0 0
    %5085 = vmatprep.subr.bf16.mxu0 %v763
    %5086 = vmatpush1.bf16.msra.mxu0 %v762
    %5087 = vmatprep.subr.bf16.mxu0 %v759
    %5088 = vmatpush1.bf16.msra.mxu0 %v758
    %5089 = vmatprep.subr.bf16.mxu0 0
    %5090 = vmatpush2.bf16.msra.mxu0 0
    %5091 = vmatprep.subr.bf16.mxu0 0
    %5092 = vmatpush2.bf16.msra.mxu0 0
    %5093 = vmatprep.subr.bf16.mxu0 0
    %5094 = vmatpush2.bf16.msra.mxu0 0
    %5095 = vmatprep.subr.bf16.mxu0 0
    %5096 = vmatpush2.bf16.msra.mxu0 0
    %5097 = vmatprep.subr.bf16.mxu0 0
    %5098 = vmatpush2.bf16.msra.mxu0 0
    %5099 = vmatprep.subr.bf16.mxu0 0
    %5100 = vmatpush2.bf16.msra.mxu0 0
    %5101 = vmatprep.subr.bf16.mxu0 0
    %5102 = vmatpush2.bf16.msra.mxu0 0
    %5103 = vmatprep.subr.bf16.mxu0 0
    %5104 = vmatpush2.bf16.msra.mxu0 0
    %5105 = vmatprep.mubr.bf16.mxu0 0
    %5106 = vmatmul.mubr.bf16.gmra.mxu0 %v5069
    %v5107 = vpop.f32.mrf.mxu0
    %v5108 = vadd.f32 %v4998, %v5107
    %v5109 = vpop.f32.mrf.mxu0
    %v5110 = vadd.f32 %v5000, %v5109
    %v5111 = vpop.f32.mrf.mxu0
    %v5112 = vadd.f32 %v5002, %v5111
    %v5113 = vpop.f32.mrf.mxu0
    %v5114 = vadd.f32 %v5004, %v5113
    %5115 = vmatprep.mubr.bf16.mxu0 0
    %5116 = vmatmul.mubr.bf16.gmra.mxu0 %v5071
    %v5117 = vpop.f32.mrf.mxu0
    %v5118 = vadd.f32 %v5008, %v5117
    %v5119 = vpop.f32.mrf.mxu0
    %v5120 = vadd.f32 %v5010, %v5119
    %v5121 = vpop.f32.mrf.mxu0
    %v5122 = vadd.f32 %v5012, %v5121
    %v5123 = vpop.f32.mrf.mxu0
    %v5124 = vadd.f32 %v5014, %v5123
    %5125 = vdwg.mxu0
    %5126 = vmatprep.subr.bf16.mxu0 0
    %5127 = vmatpush1.bf16.msra.mxu0 0
    %5128 = vmatprep.subr.bf16.mxu0 0
    %5129 = vmatpush1.bf16.msra.mxu0 0
    %5130 = vmatprep.subr.bf16.mxu0 0
    %5131 = vmatpush1.bf16.msra.mxu0 0
    %5132 = vmatprep.subr.bf16.mxu0 0
    %5133 = vmatpush1.bf16.msra.mxu0 0
    %5134 = vmatprep.subr.bf16.mxu0 0
    %5135 = vmatpush1.bf16.msra.mxu0 0
    %5136 = vmatprep.subr.bf16.mxu0 0
    %5137 = vmatpush1.bf16.msra.mxu0 0
    %5138 = vmatprep.subr.bf16.mxu0 %v765
    %5139 = vmatpush1.bf16.msra.mxu0 %v764
    %5140 = vmatprep.subr.bf16.mxu0 %v761
    %5141 = vmatpush1.bf16.msra.mxu0 %v760
    %5142 = vmatprep.subr.bf16.mxu0 0
    %5143 = vmatpush2.bf16.msra.mxu0 0
    %5144 = vmatprep.subr.bf16.mxu0 0
    %5145 = vmatpush2.bf16.msra.mxu0 0
    %5146 = vmatprep.subr.bf16.mxu0 0
    %5147 = vmatpush2.bf16.msra.mxu0 0
    %5148 = vmatprep.subr.bf16.mxu0 0
    %5149 = vmatpush2.bf16.msra.mxu0 0
    %5150 = vmatprep.subr.bf16.mxu0 0
    %5151 = vmatpush2.bf16.msra.mxu0 0
    %5152 = vmatprep.subr.bf16.mxu0 0
    %5153 = vmatpush2.bf16.msra.mxu0 0
    %5154 = vmatprep.subr.bf16.mxu0 0
    %5155 = vmatpush2.bf16.msra.mxu0 0
    %5156 = vmatprep.subr.bf16.mxu0 0
    %5157 = vmatpush2.bf16.msra.mxu0 0
    %5158 = vmatprep.mubr.bf16.mxu0 0
    %5159 = vmatmul.mubr.bf16.gmra.mxu0 %v5069
    %v5160 = vpop.f32.mrf.mxu0
    %v5161 = vadd.f32 %v5051, %v5160
    %v5162 = vpop.f32.mrf.mxu0
    %v5163 = vadd.f32 %v5053, %v5162
    %v5164 = vpop.f32.mrf.mxu0
    %v5165 = vadd.f32 %v5055, %v5164
    %v5166 = vpop.f32.mrf.mxu0
    %v5167 = vadd.f32 %v5057, %v5166
    %5168 = vmatprep.mubr.bf16.mxu0 0
    %5169 = vmatmul.mubr.bf16.gmra.mxu0 %v5071
    %v5170 = vpop.f32.mrf.mxu0
    %v5171 = vadd.f32 %v5061, %v5170
    %v5172 = vpop.f32.mrf.mxu0
    %v5173 = vadd.f32 %v5063, %v5172
    %v5174 = vpop.f32.mrf.mxu0
    %v5175 = vadd.f32 %v5065, %v5174
    %v5176 = vpop.f32.mrf.mxu0
    %v5177 = vadd.f32 %v5067, %v5176
    %5178 = vdwg.mxu0
    %v5181 = vrot.slane %v4940, 1
    %v5182 = vrot.slane %v4941, 1
    %v5183 = vsel %vm886, %v5181, %v5182
    %v5185 = vsel %vm621, %v5183, 0
    %v5188 = vsel %vm621, %v5182, 0
    %5190 = vmatprep.subr.bf16.mxu0 0
    %5191 = vmatpush1.bf16.msra.mxu0 0
    %5192 = vmatprep.subr.bf16.mxu0 0
    %5193 = vmatpush1.bf16.msra.mxu0 0
    %5194 = vmatprep.subr.bf16.mxu0 0
    %5195 = vmatpush1.bf16.msra.mxu0 0
    %5196 = vmatprep.subr.bf16.mxu0 0
    %5197 = vmatpush1.bf16.msra.mxu0 0
    %5198 = vmatprep.subr.bf16.mxu0 0
    %5199 = vmatpush1.bf16.msra.mxu0 0
    %5200 = vmatprep.subr.bf16.mxu0 0
    %5201 = vmatpush1.bf16.msra.mxu0 0
    %5202 = vmatprep.subr.bf16.mxu0 %v919
    %5203 = vmatpush1.bf16.msra.mxu0 %v918
    %5204 = vmatprep.subr.bf16.mxu0 %v915
    %5205 = vmatpush1.bf16.msra.mxu0 %v914
    %5206 = vmatprep.subr.bf16.mxu0 0
    %5207 = vmatpush2.bf16.msra.mxu0 0
    %5208 = vmatprep.subr.bf16.mxu0 0
    %5209 = vmatpush2.bf16.msra.mxu0 0
    %5210 = vmatprep.subr.bf16.mxu0 0
    %5211 = vmatpush2.bf16.msra.mxu0 0
    %5212 = vmatprep.subr.bf16.mxu0 0
    %5213 = vmatpush2.bf16.msra.mxu0 0
    %5214 = vmatprep.subr.bf16.mxu0 0
    %5215 = vmatpush2.bf16.msra.mxu0 0
    %5216 = vmatprep.subr.bf16.mxu0 0
    %5217 = vmatpush2.bf16.msra.mxu0 0
    %5218 = vmatprep.subr.bf16.mxu0 0
    %5219 = vmatpush2.bf16.msra.mxu0 0
    %5220 = vmatprep.subr.bf16.mxu0 0
    %5221 = vmatpush2.bf16.msra.mxu0 0
    %5222 = vmatprep.mubr.bf16.mxu0 0
    %5223 = vmatmul.mubr.bf16.gmra.mxu0 %v5185
    %v5224 = vpop.f32.mrf.mxu0
    %v5225 = vadd.f32 0.0, %v5224
    %v5226 = vpop.f32.mrf.mxu0
    %v5227 = vadd.f32 0.0, %v5226
    %v5228 = vpop.f32.mrf.mxu0
    %v5229 = vadd.f32 0.0, %v5228
    %v5230 = vpop.f32.mrf.mxu0
    %v5231 = vadd.f32 0.0, %v5230
    %5232 = vmatprep.mubr.bf16.mxu0 0
    %5233 = vmatmul.mubr.bf16.gmra.mxu0 %v5188
    %v5234 = vpop.f32.mrf.mxu0
    %v5235 = vadd.f32 0.0, %v5234
    %v5236 = vpop.f32.mrf.mxu0
    %v5237 = vadd.f32 0.0, %v5236
    %v5238 = vpop.f32.mrf.mxu0
    %v5239 = vadd.f32 0.0, %v5238
    %v5240 = vpop.f32.mrf.mxu0
    %v5241 = vadd.f32 0.0, %v5240
    %5242 = vdwg.mxu0
    %5243 = vmatprep.subr.bf16.mxu0 0
    %5244 = vmatpush1.bf16.msra.mxu0 0
    %5245 = vmatprep.subr.bf16.mxu0 0
    %5246 = vmatpush1.bf16.msra.mxu0 0
    %5247 = vmatprep.subr.bf16.mxu0 0
    %5248 = vmatpush1.bf16.msra.mxu0 0
    %5249 = vmatprep.subr.bf16.mxu0 0
    %5250 = vmatpush1.bf16.msra.mxu0 0
    %5251 = vmatprep.subr.bf16.mxu0 0
    %5252 = vmatpush1.bf16.msra.mxu0 0
    %5253 = vmatprep.subr.bf16.mxu0 0
    %5254 = vmatpush1.bf16.msra.mxu0 0
    %5255 = vmatprep.subr.bf16.mxu0 %v921
    %5256 = vmatpush1.bf16.msra.mxu0 %v920
    %5257 = vmatprep.subr.bf16.mxu0 %v917
    %5258 = vmatpush1.bf16.msra.mxu0 %v916
    %5259 = vmatprep.subr.bf16.mxu0 0
    %5260 = vmatpush2.bf16.msra.mxu0 0
    %5261 = vmatprep.subr.bf16.mxu0 0
    %5262 = vmatpush2.bf16.msra.mxu0 0
    %5263 = vmatprep.subr.bf16.mxu0 0
    %5264 = vmatpush2.bf16.msra.mxu0 0
    %5265 = vmatprep.subr.bf16.mxu0 0
    %5266 = vmatpush2.bf16.msra.mxu0 0
    %5267 = vmatprep.subr.bf16.mxu0 0
    %5268 = vmatpush2.bf16.msra.mxu0 0
    %5269 = vmatprep.subr.bf16.mxu0 0
    %5270 = vmatpush2.bf16.msra.mxu0 0
    %5271 = vmatprep.subr.bf16.mxu0 0
    %5272 = vmatpush2.bf16.msra.mxu0 0
    %5273 = vmatprep.subr.bf16.mxu0 0
    %5274 = vmatpush2.bf16.msra.mxu0 0
    %5275 = vmatprep.mubr.bf16.mxu0 0
    %5276 = vmatmul.mubr.bf16.gmra.mxu0 %v5185
    %v5277 = vpop.f32.mrf.mxu0
    %v5278 = vadd.f32 0.0, %v5277
    %v5279 = vpop.f32.mrf.mxu0
    %v5280 = vadd.f32 0.0, %v5279
    %v5281 = vpop.f32.mrf.mxu0
    %v5282 = vadd.f32 0.0, %v5281
    %v5283 = vpop.f32.mrf.mxu0
    %v5284 = vadd.f32 0.0, %v5283
    %5285 = vmatprep.mubr.bf16.mxu0 0
    %5286 = vmatmul.mubr.bf16.gmra.mxu0 %v5188
    %v5287 = vpop.f32.mrf.mxu0
    %v5288 = vadd.f32 0.0, %v5287
    %v5289 = vpop.f32.mrf.mxu0
    %v5290 = vadd.f32 0.0, %v5289
    %v5291 = vpop.f32.mrf.mxu0
    %v5292 = vadd.f32 0.0, %v5291
    %v5293 = vpop.f32.mrf.mxu0
    %v5294 = vadd.f32 0.0, %v5293
    %5295 = vdwg.mxu0
    %v5296 = vadd.f32 %v5108, %v5225
    %v5297 = vadd.f32 %v5110, %v5227
    %v5298 = vadd.f32 %v5161, %v5278
    %v5299 = vadd.f32 %v5163, %v5280
    %v5300 = vadd.f32 %v5112, %v5229
    %v5301 = vadd.f32 %v5114, %v5231
    %v5302 = vadd.f32 %v5165, %v5282
    %v5303 = vadd.f32 %v5167, %v5284
    %v5304 = vadd.f32 %v5118, %v5235
    %v5305 = vadd.f32 %v5120, %v5237
    %v5306 = vadd.f32 %v5171, %v5288
    %v5307 = vadd.f32 %v5173, %v5290
    %v5308 = vadd.f32 %v5122, %v5239
    %v5309 = vadd.f32 %v5124, %v5241
    %v5310 = vadd.f32 %v5175, %v5292
    %v5311 = vadd.f32 %v5177, %v5294
    %v5312 = vrot.slane %v4943, 1
    %v5313 = vrot.slane %v4945, 2
    %v5314 = vor.u32 %v5312, %v5313
    %v5315 = vrot.slane %v4954, 1
    %v5316 = vrot.slane %v4950, 2
    %v5317 = vor.u32 %v5315, %v5316
    %v5318 = vsel %vm1058, %v5314, %v5317
    %v5320 = vsel %vm621, %v5318, 0
    %v5323 = vsel %vm621, %v5317, 0
    %5325 = vmatprep.subr.bf16.mxu0 0
    %5326 = vmatpush1.bf16.msra.mxu0 0
    %5327 = vmatprep.subr.bf16.mxu0 0
    %5328 = vmatpush1.bf16.msra.mxu0 0
    %5329 = vmatprep.subr.bf16.mxu0 0
    %5330 = vmatpush1.bf16.msra.mxu0 0
    %5331 = vmatprep.subr.bf16.mxu0 0
    %5332 = vmatpush1.bf16.msra.mxu0 0
    %5333 = vmatprep.subr.bf16.mxu0 0
    %5334 = vmatpush1.bf16.msra.mxu0 0
    %5335 = vmatprep.subr.bf16.mxu0 0
    %5336 = vmatpush1.bf16.msra.mxu0 0
    %5337 = vmatprep.subr.bf16.mxu0 %v1095
    %5338 = vmatpush1.bf16.msra.mxu0 %v1094
    %5339 = vmatprep.subr.bf16.mxu0 %v1091
    %5340 = vmatpush1.bf16.msra.mxu0 %v1090
    %5341 = vmatprep.subr.bf16.mxu0 0
    %5342 = vmatpush2.bf16.msra.mxu0 0
    %5343 = vmatprep.subr.bf16.mxu0 0
    %5344 = vmatpush2.bf16.msra.mxu0 0
    %5345 = vmatprep.subr.bf16.mxu0 0
    %5346 = vmatpush2.bf16.msra.mxu0 0
    %5347 = vmatprep.subr.bf16.mxu0 0
    %5348 = vmatpush2.bf16.msra.mxu0 0
    %5349 = vmatprep.subr.bf16.mxu0 0
    %5350 = vmatpush2.bf16.msra.mxu0 0
    %5351 = vmatprep.subr.bf16.mxu0 0
    %5352 = vmatpush2.bf16.msra.mxu0 0
    %5353 = vmatprep.subr.bf16.mxu0 0
    %5354 = vmatpush2.bf16.msra.mxu0 0
    %5355 = vmatprep.subr.bf16.mxu0 0
    %5356 = vmatpush2.bf16.msra.mxu0 0
    %5357 = vmatprep.mubr.bf16.mxu0 0
    %5358 = vmatmul.mubr.bf16.gmra.mxu0 %v5320
    %v5359 = vpop.f32.mrf.mxu0
    %v5360 = vadd.f32 0.0, %v5359
    %v5361 = vpop.f32.mrf.mxu0
    %v5362 = vadd.f32 0.0, %v5361
    %v5363 = vpop.f32.mrf.mxu0
    %v5364 = vadd.f32 0.0, %v5363
    %v5365 = vpop.f32.mrf.mxu0
    %v5366 = vadd.f32 0.0, %v5365
    %5367 = vmatprep.mubr.bf16.mxu0 0
    %5368 = vmatmul.mubr.bf16.gmra.mxu0 %v5323
    %v5369 = vpop.f32.mrf.mxu0
    %v5370 = vadd.f32 0.0, %v5369
    %v5371 = vpop.f32.mrf.mxu0
    %v5372 = vadd.f32 0.0, %v5371
    %v5373 = vpop.f32.mrf.mxu0
    %v5374 = vadd.f32 0.0, %v5373
    %v5375 = vpop.f32.mrf.mxu0
    %v5376 = vadd.f32 0.0, %v5375
    %5377 = vdwg.mxu0
    %5378 = vmatprep.subr.bf16.mxu0 0
    %5379 = vmatpush1.bf16.msra.mxu0 0
    %5380 = vmatprep.subr.bf16.mxu0 0
    %5381 = vmatpush1.bf16.msra.mxu0 0
    %5382 = vmatprep.subr.bf16.mxu0 0
    %5383 = vmatpush1.bf16.msra.mxu0 0
    %5384 = vmatprep.subr.bf16.mxu0 0
    %5385 = vmatpush1.bf16.msra.mxu0 0
    %5386 = vmatprep.subr.bf16.mxu0 0
    %5387 = vmatpush1.bf16.msra.mxu0 0
    %5388 = vmatprep.subr.bf16.mxu0 0
    %5389 = vmatpush1.bf16.msra.mxu0 0
    %5390 = vmatprep.subr.bf16.mxu0 %v1097
    %5391 = vmatpush1.bf16.msra.mxu0 %v1096
    %5392 = vmatprep.subr.bf16.mxu0 %v1093
    %5393 = vmatpush1.bf16.msra.mxu0 %v1092
    %5394 = vmatprep.subr.bf16.mxu0 0
    %5395 = vmatpush2.bf16.msra.mxu0 0
    %5396 = vmatprep.subr.bf16.mxu0 0
    %5397 = vmatpush2.bf16.msra.mxu0 0
    %5398 = vmatprep.subr.bf16.mxu0 0
    %5399 = vmatpush2.bf16.msra.mxu0 0
    %5400 = vmatprep.subr.bf16.mxu0 0
    %5401 = vmatpush2.bf16.msra.mxu0 0
    %5402 = vmatprep.subr.bf16.mxu0 0
    %5403 = vmatpush2.bf16.msra.mxu0 0
    %5404 = vmatprep.subr.bf16.mxu0 0
    %5405 = vmatpush2.bf16.msra.mxu0 0
    %5406 = vmatprep.subr.bf16.mxu0 0
    %5407 = vmatpush2.bf16.msra.mxu0 0
    %5408 = vmatprep.subr.bf16.mxu0 0
    %5409 = vmatpush2.bf16.msra.mxu0 0
    %5410 = vmatprep.mubr.bf16.mxu0 0
    %5411 = vmatmul.mubr.bf16.gmra.mxu0 %v5320
    %v5412 = vpop.f32.mrf.mxu0
    %v5413 = vadd.f32 0.0, %v5412
    %v5414 = vpop.f32.mrf.mxu0
    %v5415 = vadd.f32 0.0, %v5414
    %v5416 = vpop.f32.mrf.mxu0
    %v5417 = vadd.f32 0.0, %v5416
    %v5418 = vpop.f32.mrf.mxu0
    %v5419 = vadd.f32 0.0, %v5418
    %5420 = vmatprep.mubr.bf16.mxu0 0
    %5421 = vmatmul.mubr.bf16.gmra.mxu0 %v5323
    %v5422 = vpop.f32.mrf.mxu0
    %v5423 = vadd.f32 0.0, %v5422
    %v5424 = vpop.f32.mrf.mxu0
    %v5425 = vadd.f32 0.0, %v5424
    %v5426 = vpop.f32.mrf.mxu0
    %v5427 = vadd.f32 0.0, %v5426
    %v5428 = vpop.f32.mrf.mxu0
    %v5429 = vadd.f32 0.0, %v5428
    %5430 = vdwg.mxu0
    %v5431 = vadd.f32 %v5296, %v5360
    %v5432 = vadd.f32 %v5297, %v5362
    %v5433 = vadd.f32 %v5298, %v5413
    %v5434 = vadd.f32 %v5299, %v5415
    %v5435 = vadd.f32 %v5300, %v5364
    %v5436 = vadd.f32 %v5301, %v5366
    %v5437 = vadd.f32 %v5302, %v5417
    %v5438 = vadd.f32 %v5303, %v5419
    %v5439 = vadd.f32 %v5304, %v5370
    %v5440 = vadd.f32 %v5305, %v5372
    %v5441 = vadd.f32 %v5306, %v5423
    %v5442 = vadd.f32 %v5307, %v5425
    %v5443 = vadd.f32 %v5308, %v5374
    %v5444 = vadd.f32 %v5309, %v5376
    %v5445 = vadd.f32 %v5310, %v5427
    %v5446 = vadd.f32 %v5311, %v5429
    %v5447 = vrot.slane %v4940, 2
    %v5448 = vrot.slane %v4941, 2
    %v5449 = vsel %vm1234, %v5447, %v5448
    %v5451 = vsel %vm621, %v5449, 0
    %v5454 = vsel %vm621, %v5448, 0
    %5456 = vmatprep.subr.bf16.mxu0 0
    %5457 = vmatpush1.bf16.msra.mxu0 0
    %5458 = vmatprep.subr.bf16.mxu0 0
    %5459 = vmatpush1.bf16.msra.mxu0 0
    %5460 = vmatprep.subr.bf16.mxu0 0
    %5461 = vmatpush1.bf16.msra.mxu0 0
    %5462 = vmatprep.subr.bf16.mxu0 0
    %5463 = vmatpush1.bf16.msra.mxu0 0
    %5464 = vmatprep.subr.bf16.mxu0 0
    %5465 = vmatpush1.bf16.msra.mxu0 0
    %5466 = vmatprep.subr.bf16.mxu0 0
    %5467 = vmatpush1.bf16.msra.mxu0 0
    %5468 = vmatprep.subr.bf16.mxu0 %v1267
    %5469 = vmatpush1.bf16.msra.mxu0 %v1266
    %5470 = vmatprep.subr.bf16.mxu0 %v1263
    %5471 = vmatpush1.bf16.msra.mxu0 %v1262
    %5472 = vmatprep.subr.bf16.mxu0 0
    %5473 = vmatpush2.bf16.msra.mxu0 0
    %5474 = vmatprep.subr.bf16.mxu0 0
    %5475 = vmatpush2.bf16.msra.mxu0 0
    %5476 = vmatprep.subr.bf16.mxu0 0
    %5477 = vmatpush2.bf16.msra.mxu0 0
    %5478 = vmatprep.subr.bf16.mxu0 0
    %5479 = vmatpush2.bf16.msra.mxu0 0
    %5480 = vmatprep.subr.bf16.mxu0 0
    %5481 = vmatpush2.bf16.msra.mxu0 0
    %5482 = vmatprep.subr.bf16.mxu0 0
    %5483 = vmatpush2.bf16.msra.mxu0 0
    %5484 = vmatprep.subr.bf16.mxu0 0
    %5485 = vmatpush2.bf16.msra.mxu0 0
    %5486 = vmatprep.subr.bf16.mxu0 0
    %5487 = vmatpush2.bf16.msra.mxu0 0
    %5488 = vmatprep.mubr.bf16.mxu0 0
    %5489 = vmatmul.mubr.bf16.gmra.mxu0 %v5451
    %v5490 = vpop.f32.mrf.mxu0
    %v5491 = vadd.f32 0.0, %v5490
    %v5492 = vpop.f32.mrf.mxu0
    %v5493 = vadd.f32 0.0, %v5492
    %v5494 = vpop.f32.mrf.mxu0
    %v5495 = vadd.f32 0.0, %v5494
    %v5496 = vpop.f32.mrf.mxu0
    %v5497 = vadd.f32 0.0, %v5496
    %5498 = vmatprep.mubr.bf16.mxu0 0
    %5499 = vmatmul.mubr.bf16.gmra.mxu0 %v5454
    %v5500 = vpop.f32.mrf.mxu0
    %v5501 = vadd.f32 0.0, %v5500
    %v5502 = vpop.f32.mrf.mxu0
    %v5503 = vadd.f32 0.0, %v5502
    %v5504 = vpop.f32.mrf.mxu0
    %v5505 = vadd.f32 0.0, %v5504
    %v5506 = vpop.f32.mrf.mxu0
    %v5507 = vadd.f32 0.0, %v5506
    %5508 = vdwg.mxu0
    %5509 = vmatprep.subr.bf16.mxu0 0
    %5510 = vmatpush1.bf16.msra.mxu0 0
    %5511 = vmatprep.subr.bf16.mxu0 0
    %5512 = vmatpush1.bf16.msra.mxu0 0
    %5513 = vmatprep.subr.bf16.mxu0 0
    %5514 = vmatpush1.bf16.msra.mxu0 0
    %5515 = vmatprep.subr.bf16.mxu0 0
    %5516 = vmatpush1.bf16.msra.mxu0 0
    %5517 = vmatprep.subr.bf16.mxu0 0
    %5518 = vmatpush1.bf16.msra.mxu0 0
    %5519 = vmatprep.subr.bf16.mxu0 0
    %5520 = vmatpush1.bf16.msra.mxu0 0
    %5521 = vmatprep.subr.bf16.mxu0 %v1269
    %5522 = vmatpush1.bf16.msra.mxu0 %v1268
    %5523 = vmatprep.subr.bf16.mxu0 %v1265
    %5524 = vmatpush1.bf16.msra.mxu0 %v1264
    %5525 = vmatprep.subr.bf16.mxu0 0
    %5526 = vmatpush2.bf16.msra.mxu0 0
    %5527 = vmatprep.subr.bf16.mxu0 0
    %5528 = vmatpush2.bf16.msra.mxu0 0
    %5529 = vmatprep.subr.bf16.mxu0 0
    %5530 = vmatpush2.bf16.msra.mxu0 0
    %5531 = vmatprep.subr.bf16.mxu0 0
    %5532 = vmatpush2.bf16.msra.mxu0 0
    %5533 = vmatprep.subr.bf16.mxu0 0
    %5534 = vmatpush2.bf16.msra.mxu0 0
    %5535 = vmatprep.subr.bf16.mxu0 0
    %5536 = vmatpush2.bf16.msra.mxu0 0
    %5537 = vmatprep.subr.bf16.mxu0 0
    %5538 = vmatpush2.bf16.msra.mxu0 0
    %5539 = vmatprep.subr.bf16.mxu0 0
    %5540 = vmatpush2.bf16.msra.mxu0 0
    %5541 = vmatprep.mubr.bf16.mxu0 0
    %5542 = vmatmul.mubr.bf16.gmra.mxu0 %v5451
    %v5543 = vpop.f32.mrf.mxu0
    %v5544 = vadd.f32 0.0, %v5543
    %v5545 = vpop.f32.mrf.mxu0
    %v5546 = vadd.f32 0.0, %v5545
    %v5547 = vpop.f32.mrf.mxu0
    %v5548 = vadd.f32 0.0, %v5547
    %v5549 = vpop.f32.mrf.mxu0
    %v5550 = vadd.f32 0.0, %v5549
    %5551 = vmatprep.mubr.bf16.mxu0 0
    %5552 = vmatmul.mubr.bf16.gmra.mxu0 %v5454
    %v5553 = vpop.f32.mrf.mxu0
    %v5554 = vadd.f32 0.0, %v5553
    %v5555 = vpop.f32.mrf.mxu0
    %v5556 = vadd.f32 0.0, %v5555
    %v5557 = vpop.f32.mrf.mxu0
    %v5558 = vadd.f32 0.0, %v5557
    %v5559 = vpop.f32.mrf.mxu0
    %v5560 = vadd.f32 0.0, %v5559
    %5561 = vdwg.mxu0
    %v5562 = vadd.f32 %v5431, %v5491
    %v5563 = vadd.f32 %v5432, %v5493
    %v5564 = vadd.f32 %v5433, %v5544
    %v5565 = vadd.f32 %v5434, %v5546
    %v5566 = vadd.f32 %v5435, %v5495
    %v5567 = vadd.f32 %v5436, %v5497
    %v5568 = vadd.f32 %v5437, %v5548
    %v5569 = vadd.f32 %v5438, %v5550
    %v5570 = vadd.f32 %v5439, %v5501
    %v5571 = vadd.f32 %v5440, %v5503
    %v5572 = vadd.f32 %v5441, %v5554
    %v5573 = vadd.f32 %v5442, %v5556
    %v5574 = vadd.f32 %v5443, %v5505
    %v5575 = vadd.f32 %v5444, %v5507
    %v5576 = vadd.f32 %v5445, %v5558
    %v5577 = vadd.f32 %v5446, %v5560
    %v5578 = vadd.f32 %v5562, %v1410
    %v5579 = vadd.f32 %v5563, %v1414
    %v5580 = vadd.f32 %v5564, %v1418
    %v5581 = vadd.f32 %v5565, %v1422
    %v5582 = vadd.f32 %v5566, %v1410
    %v5583 = vadd.f32 %v5567, %v1414
    %v5584 = vadd.f32 %v5568, %v1418
    %v5585 = vadd.f32 %v5569, %v1422
    %v5586 = vadd.f32 %v5570, %v1410
    %v5587 = vadd.f32 %v5571, %v1414
    %v5588 = vadd.f32 %v5572, %v1418
    %v5589 = vadd.f32 %v5573, %v1422
    %v5590 = vadd.f32 %v5574, %v1410
    %v5591 = vadd.f32 %v5575, %v1414
    %v5592 = vadd.f32 %v5576, %v1418
    %v5593 = vadd.f32 %v5577, %v1422
    %5598 = vrot.lane.b32.xlu0 %v5578, 112
    %v5599 = vpop.permute.xlu0 %5598
    %5600 = vrot.lane.b32.xlu0 %v5582, 112
    %v5601 = vpop.permute.xlu0 %5600
    %5602 = vrot.lane.b32.xlu0 %v5586, 112
    %v5603 = vpop.permute.xlu0 %5602
    %5604 = vrot.lane.b32.xlu0 %v5590, 112
    %v5605 = vpop.permute.xlu0 %5604
    %v5610 = vmax.f32 %v5578, %v5599
    %v5611 = vmax.f32 %v5582, %v5601
    %v5612 = vmax.f32 %v5586, %v5603
    %v5613 = vmax.f32 %v5590, %v5605
    %5618 = vrot.lane.b32.xlu0 %v5579, 112
    %v5619 = vpop.permute.xlu0 %5618
    %5620 = vrot.lane.b32.xlu0 %v5583, 112
    %v5621 = vpop.permute.xlu0 %5620
    %5622 = vrot.lane.b32.xlu0 %v5587, 112
    %v5623 = vpop.permute.xlu0 %5622
    %5624 = vrot.lane.b32.xlu0 %v5591, 112
    %v5625 = vpop.permute.xlu0 %5624
    %v5630 = vmax.f32 %v5579, %v5619
    %v5631 = vmax.f32 %v5583, %v5621
    %v5632 = vmax.f32 %v5587, %v5623
    %v5633 = vmax.f32 %v5591, %v5625
    %5638 = vrot.lane.b32.xlu0 %v5580, 112
    %v5639 = vpop.permute.xlu0 %5638
    %5640 = vrot.lane.b32.xlu0 %v5584, 112
    %v5641 = vpop.permute.xlu0 %5640
    %5642 = vrot.lane.b32.xlu0 %v5588, 112
    %v5643 = vpop.permute.xlu0 %5642
    %5644 = vrot.lane.b32.xlu0 %v5592, 112
    %v5645 = vpop.permute.xlu0 %5644
    %v5650 = vmax.f32 %v5580, %v5639
    %v5651 = vmax.f32 %v5584, %v5641
    %v5652 = vmax.f32 %v5588, %v5643
    %v5653 = vmax.f32 %v5592, %v5645
    %5658 = vrot.lane.b32.xlu0 %v5581, 112
    %v5659 = vpop.permute.xlu0 %5658
    %5660 = vrot.lane.b32.xlu0 %v5585, 112
    %v5661 = vpop.permute.xlu0 %5660
    %5662 = vrot.lane.b32.xlu0 %v5589, 112
    %v5663 = vpop.permute.xlu0 %5662
    %5664 = vrot.lane.b32.xlu0 %v5593, 112
    %v5665 = vpop.permute.xlu0 %5664
    %v5670 = vmax.f32 %v5581, %v5659
    %v5671 = vmax.f32 %v5585, %v5661
    %v5672 = vmax.f32 %v5589, %v5663
    %v5673 = vmax.f32 %v5593, %v5665
    %5678 = vrot.lane.b32.xlu0 %v5610, 112
    %v5679 = vpop.permute.xlu0 %5678
    %5680 = vrot.lane.b32.xlu0 %v5611, 112
    %v5681 = vpop.permute.xlu0 %5680
    %5682 = vrot.lane.b32.xlu0 %v5612, 112
    %v5683 = vpop.permute.xlu0 %5682
    %5684 = vrot.lane.b32.xlu0 %v5613, 112
    %v5685 = vpop.permute.xlu0 %5684
    %5690 = vrot.lane.b32.xlu0 %v5610, 96
    %v5691 = vpop.permute.xlu0 %5690
    %5692 = vrot.lane.b32.xlu0 %v5611, 96
    %v5693 = vpop.permute.xlu0 %5692
    %5694 = vrot.lane.b32.xlu0 %v5612, 96
    %v5695 = vpop.permute.xlu0 %5694
    %5696 = vrot.lane.b32.xlu0 %v5613, 96
    %v5697 = vpop.permute.xlu0 %5696
    %5702 = vrot.lane.b32.xlu0 %v5610, 80
    %v5703 = vpop.permute.xlu0 %5702
    %5704 = vrot.lane.b32.xlu0 %v5611, 80
    %v5705 = vpop.permute.xlu0 %5704
    %5706 = vrot.lane.b32.xlu0 %v5612, 80
    %v5707 = vpop.permute.xlu0 %5706
    %5708 = vrot.lane.b32.xlu0 %v5613, 80
    %v5709 = vpop.permute.xlu0 %5708
    %5718 = vrot.lane.b32.xlu0 %v5630, 64
    %v5719 = vpop.permute.xlu0 %5718
    %5720 = vrot.lane.b32.xlu0 %v5631, 64
    %v5721 = vpop.permute.xlu0 %5720
    %5722 = vrot.lane.b32.xlu0 %v5632, 64
    %v5723 = vpop.permute.xlu0 %5722
    %5724 = vrot.lane.b32.xlu0 %v5633, 64
    %v5725 = vpop.permute.xlu0 %5724
    %5730 = vrot.lane.b32.xlu0 %v5630, 48
    %v5731 = vpop.permute.xlu0 %5730
    %5732 = vrot.lane.b32.xlu0 %v5631, 48
    %v5733 = vpop.permute.xlu0 %5732
    %5734 = vrot.lane.b32.xlu0 %v5632, 48
    %v5735 = vpop.permute.xlu0 %5734
    %5736 = vrot.lane.b32.xlu0 %v5633, 48
    %v5737 = vpop.permute.xlu0 %5736
    %5742 = vrot.lane.b32.xlu0 %v5630, 32
    %v5743 = vpop.permute.xlu0 %5742
    %5744 = vrot.lane.b32.xlu0 %v5631, 32
    %v5745 = vpop.permute.xlu0 %5744
    %5746 = vrot.lane.b32.xlu0 %v5632, 32
    %v5747 = vpop.permute.xlu0 %5746
    %5748 = vrot.lane.b32.xlu0 %v5633, 32
    %v5749 = vpop.permute.xlu0 %5748
    %5754 = vrot.lane.b32.xlu0 %v5630, 16
    %v5755 = vpop.permute.xlu0 %5754
    %5756 = vrot.lane.b32.xlu0 %v5631, 16
    %v5757 = vpop.permute.xlu0 %5756
    %5758 = vrot.lane.b32.xlu0 %v5632, 16
    %v5759 = vpop.permute.xlu0 %5758
    %5760 = vrot.lane.b32.xlu0 %v5633, 16
    %v5761 = vpop.permute.xlu0 %5760
    %5770 = vrot.lane.b32.xlu0 %v5650, 112
    %v5771 = vpop.permute.xlu0 %5770
    %5772 = vrot.lane.b32.xlu0 %v5651, 112
    %v5773 = vpop.permute.xlu0 %5772
    %5774 = vrot.lane.b32.xlu0 %v5652, 112
    %v5775 = vpop.permute.xlu0 %5774
    %5776 = vrot.lane.b32.xlu0 %v5653, 112
    %v5777 = vpop.permute.xlu0 %5776
    %5782 = vrot.lane.b32.xlu0 %v5650, 96
    %v5783 = vpop.permute.xlu0 %5782
    %5784 = vrot.lane.b32.xlu0 %v5651, 96
    %v5785 = vpop.permute.xlu0 %5784
    %5786 = vrot.lane.b32.xlu0 %v5652, 96
    %v5787 = vpop.permute.xlu0 %5786
    %5788 = vrot.lane.b32.xlu0 %v5653, 96
    %v5789 = vpop.permute.xlu0 %5788
    %5794 = vrot.lane.b32.xlu0 %v5650, 80
    %v5795 = vpop.permute.xlu0 %5794
    %5796 = vrot.lane.b32.xlu0 %v5651, 80
    %v5797 = vpop.permute.xlu0 %5796
    %5798 = vrot.lane.b32.xlu0 %v5652, 80
    %v5799 = vpop.permute.xlu0 %5798
    %5800 = vrot.lane.b32.xlu0 %v5653, 80
    %v5801 = vpop.permute.xlu0 %5800
    %5810 = vrot.lane.b32.xlu0 %v5670, 64
    %v5811 = vpop.permute.xlu0 %5810
    %5812 = vrot.lane.b32.xlu0 %v5671, 64
    %v5813 = vpop.permute.xlu0 %5812
    %5814 = vrot.lane.b32.xlu0 %v5672, 64
    %v5815 = vpop.permute.xlu0 %5814
    %5816 = vrot.lane.b32.xlu0 %v5673, 64
    %v5817 = vpop.permute.xlu0 %5816
    %5822 = vrot.lane.b32.xlu0 %v5670, 48
    %v5823 = vpop.permute.xlu0 %5822
    %5824 = vrot.lane.b32.xlu0 %v5671, 48
    %v5825 = vpop.permute.xlu0 %5824
    %5826 = vrot.lane.b32.xlu0 %v5672, 48
    %v5827 = vpop.permute.xlu0 %5826
    %5828 = vrot.lane.b32.xlu0 %v5673, 48
    %v5829 = vpop.permute.xlu0 %5828
    %v5834 = vsel %vm1683, %v5610, %v5679
    %v5835 = vsel %vm1683, %v5611, %v5681
    %v5836 = vsel %vm1683, %v5612, %v5683
    %v5837 = vsel %vm1683, %v5613, %v5685
    %v5838 = vsel %vm621, %v5834, %v5691
    %v5839 = vsel %vm621, %v5835, %v5693
    %v5840 = vsel %vm621, %v5836, %v5695
    %v5841 = vsel %vm621, %v5837, %v5697
    %v5842 = vsel %vm1692, %v5838, %v5703
    %v5843 = vsel %vm1692, %v5839, %v5705
    %v5844 = vsel %vm1692, %v5840, %v5707
    %v5845 = vsel %vm1692, %v5841, %v5709
    %v5846 = vsel %vm1697, %v5842, %v5719
    %v5847 = vsel %vm1697, %v5843, %v5721
    %v5848 = vsel %vm1697, %v5844, %v5723
    %v5849 = vsel %vm1697, %v5845, %v5725
    %v5850 = vsel %vm1702, %v5846, %v5731
    %v5851 = vsel %vm1702, %v5847, %v5733
    %v5852 = vsel %vm1702, %v5848, %v5735
    %v5853 = vsel %vm1702, %v5849, %v5737
    %v5854 = vsel %vm1707, %v5850, %v5743
    %v5855 = vsel %vm1707, %v5851, %v5745
    %v5856 = vsel %vm1707, %v5852, %v5747
    %v5857 = vsel %vm1707, %v5853, %v5749
    %v5858 = vsel %vm1712, %v5854, %v5755
    %v5859 = vsel %vm1712, %v5855, %v5757
    %v5860 = vsel %vm1712, %v5856, %v5759
    %v5861 = vsel %vm1712, %v5857, %v5761
    %v5862 = vsel %vm1683, %v5650, %v5771
    %v5863 = vsel %vm1683, %v5651, %v5773
    %v5864 = vsel %vm1683, %v5652, %v5775
    %v5865 = vsel %vm1683, %v5653, %v5777
    %v5866 = vsel %vm621, %v5862, %v5783
    %v5867 = vsel %vm621, %v5863, %v5785
    %v5868 = vsel %vm621, %v5864, %v5787
    %v5869 = vsel %vm621, %v5865, %v5789
    %v5870 = vsel %vm1692, %v5866, %v5795
    %v5871 = vsel %vm1692, %v5867, %v5797
    %v5872 = vsel %vm1692, %v5868, %v5799
    %v5873 = vsel %vm1692, %v5869, %v5801
    %v5874 = vsel %vm1697, %v5870, %v5811
    %v5875 = vsel %vm1697, %v5871, %v5813
    %v5876 = vsel %vm1697, %v5872, %v5815
    %v5877 = vsel %vm1697, %v5873, %v5817
    %v5878 = vsel %vm1702, %v5874, %v5823
    %v5879 = vsel %vm1702, %v5875, %v5825
    %v5880 = vsel %vm1702, %v5876, %v5827
    %v5881 = vsel %vm1702, %v5877, %v5829
    %v5884 = vrot.slane %v5858, 1
    %v5885 = vrot.slane %v5878, 1
    %v5888 = vmax.f32 %v5858, %v5884
    %v5889 = vmax.f32 %v5878, %v5885
    %v5892 = vrot.slane %v5859, 1
    %v5893 = vrot.slane %v5879, 1
    %v5896 = vmax.f32 %v5859, %v5892
    %v5897 = vmax.f32 %v5879, %v5893
    %v5900 = vrot.slane %v5860, 1
    %v5901 = vrot.slane %v5880, 1
    %v5904 = vmax.f32 %v5860, %v5900
    %v5905 = vmax.f32 %v5880, %v5901
    %v5908 = vrot.slane %v5861, 1
    %v5909 = vrot.slane %v5881, 1
    %v5912 = vmax.f32 %v5861, %v5908
    %v5913 = vmax.f32 %v5881, %v5909
    %v5916 = vrot.slane %v5888, 1
    %v5917 = vrot.slane %v5889, 1
    %v5920 = vrot.slane %v5888, 2
    %v5921 = vrot.slane %v5889, 2
    %v5924 = vrot.slane %v5888, 3
    %v5925 = vrot.slane %v5889, 3
    %v5930 = vrot.slane %v5896, 4
    %v5931 = vrot.slane %v5897, 4
    %v5934 = vrot.slane %v5896, 5
    %v5935 = vrot.slane %v5897, 5
    %v5938 = vrot.slane %v5896, 6
    %v5939 = vrot.slane %v5897, 6
    %v5942 = vrot.slane %v5896, 7
    %v5943 = vrot.slane %v5897, 7
    %v5948 = vrot.slane %v5904, 1
    %v5949 = vrot.slane %v5905, 1
    %v5952 = vrot.slane %v5904, 2
    %v5953 = vrot.slane %v5905, 2
    %v5956 = vrot.slane %v5904, 3
    %v5957 = vrot.slane %v5905, 3
    %v5962 = vrot.slane %v5912, 4
    %v5963 = vrot.slane %v5913, 4
    %v5966 = vrot.slane %v5912, 5
    %v5967 = vrot.slane %v5913, 5
    %v5970 = vsel %vm1825, %v5888, %v5916
    %v5971 = vsel %vm1825, %v5889, %v5917
    %v5972 = vsel %vm526, %v5970, %v5920
    %v5973 = vsel %vm526, %v5971, %v5921
    %v5974 = vsel %vm1830, %v5972, %v5924
    %v5975 = vsel %vm1830, %v5973, %v5925
    %v5976 = vsel %vm1833, %v5974, %v5930
    %v5977 = vsel %vm1833, %v5975, %v5931
    %v5978 = vsel %vm1836, %v5976, %v5934
    %v5979 = vsel %vm1836, %v5977, %v5935
    %v5980 = vsel %vm537, %v5978, %v5938
    %v5981 = vsel %vm537, %v5979, %v5939
    %v5982 = vsel %vm1841, %v5980, %v5942
    %v5983 = vsel %vm1841, %v5981, %v5943
    %v5984 = vsel %vm1825, %v5904, %v5948
    %v5985 = vsel %vm1825, %v5905, %v5949
    %v5986 = vsel %vm526, %v5984, %v5952
    %v5987 = vsel %vm526, %v5985, %v5953
    %v5988 = vsel %vm1830, %v5986, %v5956
    %v5989 = vsel %vm1830, %v5987, %v5957
    %v5990 = vsel %vm1833, %v5988, %v5962
    %v5991 = vsel %vm1833, %v5989, %v5963
    %v5992 = vsel %vm1836, %v5990, %v5966
    %v5993 = vsel %vm1836, %v5991, %v5967
    %v5994 = vmax.f32 %v5982, 0.0
    %v5995 = vmax.f32 %v5983, 0.0
    %v5996 = vmax.f32 %v5992, 0.0
    %v5997 = vmax.f32 %v5993, 0.0
    %v6002 = vrot.slane %v5994, 6
    %v6003 = vrot.slane %v5995, 6
    %v6004 = vrot.slane %v5996, 6
    %v6005 = vsel %vm526, %v6002, %v6004
    %v6006 = vrot.slane %v5997, 6
    %v6007 = vsel %vm526, %v6003, %v6006
    %v6010 = vsel %vm526, 0.0, %v6002
    %v6011 = vsel %vm526, 0.0, %v6003
    %6014 = vrot.lane.b32.xlu0 %v6010, 32
    %v6015 = vpop.permute.xlu0 %6014
    %6016 = vrot.lane.b32.xlu0 %v6011, 32
    %v6017 = vpop.permute.xlu0 %6016
    %6018 = vrot.lane.b32.xlu0 %v6005, 32
    %v6019 = vpop.permute.xlu0 %6018
    %6020 = vrot.lane.b32.xlu0 %v6007, 32
    %v6021 = vpop.permute.xlu0 %6020
    %v6022 = vsel %vm621, %v6015, %v6017
    %v6023 = vsel %vm621, %v6019, %v6021
    %v6028 = vsel %vm621, 0.0, %v6015
    %v6029 = vsel %vm621, 0.0, %v6019
    %v6030 = vpack.c.bf16 %v6029, %v6028
    %v6031 = vpack.c.bf16 %v6023, %v6022
    %v6033 = vshrl.u32 %v6030, 16
    %v6035 = vshll.u32 %v6030, 16
    %v6037 = vrot.slane %v6035, 1
    %v6038 = vor.u32 %v6033, %v6037
    %v6040 = vshrl.u32 %v6031, 16
    %v6042 = vshll.u32 %v6031, 16
    %v6044 = vrot.slane %v6042, 1
    %v6045 = vor.u32 %v6040, %v6044
    %6048 = vmatprep.subr.bf16.mxu0 %v2166
    %6049 = vmatpush1.bf16.msra.mxu0 %v2165
    %6050 = vmatprep.subr.bf16.mxu0 %v2162
    %6051 = vmatpush1.bf16.msra.mxu0 %v2161
    %6052 = vmatprep.subr.bf16.mxu0 %v2158
    %6053 = vmatpush1.bf16.msra.mxu0 %v2157
    %6054 = vmatprep.subr.bf16.mxu0 %v2154
    %6055 = vmatpush1.bf16.msra.mxu0 %v2153
    %6056 = vmatprep.subr.bf16.mxu0 %v2150
    %6057 = vmatpush1.bf16.msra.mxu0 %v2149
    %6058 = vmatprep.subr.bf16.mxu0 %v2146
    %6059 = vmatpush1.bf16.msra.mxu0 %v2145
    %6060 = vmatprep.subr.bf16.mxu0 %v2142
    %6061 = vmatpush1.bf16.msra.mxu0 %v2141
    %6062 = vmatprep.subr.bf16.mxu0 %v2138
    %6063 = vmatpush1.bf16.msra.mxu0 %v2137
    %6064 = vmatprep.subr.bf16.mxu0 %v2198
    %6065 = vmatpush2.bf16.msra.mxu0 %v2197
    %6066 = vmatprep.subr.bf16.mxu0 %v2194
    %6067 = vmatpush2.bf16.msra.mxu0 %v2193
    %6068 = vmatprep.subr.bf16.mxu0 %v2190
    %6069 = vmatpush2.bf16.msra.mxu0 %v2189
    %6070 = vmatprep.subr.bf16.mxu0 %v2186
    %6071 = vmatpush2.bf16.msra.mxu0 %v2185
    %6072 = vmatprep.subr.bf16.mxu0 %v2182
    %6073 = vmatpush2.bf16.msra.mxu0 %v2181
    %6074 = vmatprep.subr.bf16.mxu0 %v2178
    %6075 = vmatpush2.bf16.msra.mxu0 %v2177
    %6076 = vmatprep.subr.bf16.mxu0 %v2174
    %6077 = vmatpush2.bf16.msra.mxu0 %v2173
    %6078 = vmatprep.subr.bf16.mxu0 %v2170
    %6079 = vmatpush2.bf16.msra.mxu0 %v2169
    %6080 = vmatprep.mubr.bf16.mxu0 %v6045
    %6081 = vmatmul.mubr.bf16.gmra.mxu0 %v6038
    %v6082 = vpop.f32.mrf.mxu0
    %v6083 = vadd.f32 0.0, %v6082
    %v6084 = vpop.f32.mrf.mxu0
    %v6085 = vadd.f32 0.0, %v6084
    %v6086 = vpop.f32.mrf.mxu0
    %v6087 = vadd.f32 0.0, %v6086
    %v6088 = vpop.f32.mrf.mxu0
    %v6089 = vadd.f32 0.0, %v6088
    %6090 = vdwg.mxu0
    %6091 = vmatprep.subr.bf16.mxu0 0
    %6092 = vmatpush1.bf16.msra.mxu0 0
    %6093 = vmatprep.subr.bf16.mxu0 0
    %6094 = vmatpush1.bf16.msra.mxu0 0
    %6095 = vmatprep.subr.bf16.mxu0 0
    %6096 = vmatpush1.bf16.msra.mxu0 0
    %6097 = vmatprep.subr.bf16.mxu0 0
    %6098 = vmatpush1.bf16.msra.mxu0 0
    %6099 = vmatprep.subr.bf16.mxu0 0
    %6100 = vmatpush1.bf16.msra.mxu0 0
    %6101 = vmatprep.subr.bf16.mxu0 0
    %6102 = vmatpush1.bf16.msra.mxu0 0
    %6103 = vmatprep.subr.bf16.mxu0 %v2206
    %6104 = vmatpush1.bf16.msra.mxu0 %v2205
    %6105 = vmatprep.subr.bf16.mxu0 %v2202
    %6106 = vmatpush1.bf16.msra.mxu0 %v2201
    %6107 = vmatprep.subr.bf16.mxu0 0
    %6108 = vmatpush2.bf16.msra.mxu0 0
    %6109 = vmatprep.subr.bf16.mxu0 0
    %6110 = vmatpush2.bf16.msra.mxu0 0
    %6111 = vmatprep.subr.bf16.mxu0 0
    %6112 = vmatpush2.bf16.msra.mxu0 0
    %6113 = vmatprep.subr.bf16.mxu0 0
    %6114 = vmatpush2.bf16.msra.mxu0 0
    %6115 = vmatprep.subr.bf16.mxu0 0
    %6116 = vmatpush2.bf16.msra.mxu0 0
    %6117 = vmatprep.subr.bf16.mxu0 0
    %6118 = vmatpush2.bf16.msra.mxu0 0
    %6119 = vmatprep.subr.bf16.mxu0 0
    %6120 = vmatpush2.bf16.msra.mxu0 0
    %6121 = vmatprep.subr.bf16.mxu0 0
    %6122 = vmatpush2.bf16.msra.mxu0 0
    %6123 = vmatprep.mubr.bf16.mxu0 0
    %6124 = vmatmul.mubr.bf16.gmra.mxu0 %v2282
    %v6125 = vpop.f32.mrf.mxu0
    %v6126 = vadd.f32 %v6083, %v6125
    %v6127 = vpop.f32.mrf.mxu0
    %v6128 = vadd.f32 %v6085, %v6127
    %v6129 = vpop.f32.mrf.mxu0
    %v6130 = vadd.f32 %v6087, %v6129
    %v6131 = vpop.f32.mrf.mxu0
    %v6132 = vadd.f32 %v6089, %v6131
    %6133 = vdwg.mxu0
    %6134 = vmatprep.subr.bf16.mxu0 %v2168
    %6135 = vmatpush1.bf16.msra.mxu0 %v2167
    %6136 = vmatprep.subr.bf16.mxu0 %v2164
    %6137 = vmatpush1.bf16.msra.mxu0 %v2163
    %6138 = vmatprep.subr.bf16.mxu0 %v2160
    %6139 = vmatpush1.bf16.msra.mxu0 %v2159
    %6140 = vmatprep.subr.bf16.mxu0 %v2156
    %6141 = vmatpush1.bf16.msra.mxu0 %v2155
    %6142 = vmatprep.subr.bf16.mxu0 %v2152
    %6143 = vmatpush1.bf16.msra.mxu0 %v2151
    %6144 = vmatprep.subr.bf16.mxu0 %v2148
    %6145 = vmatpush1.bf16.msra.mxu0 %v2147
    %6146 = vmatprep.subr.bf16.mxu0 %v2144
    %6147 = vmatpush1.bf16.msra.mxu0 %v2143
    %6148 = vmatprep.subr.bf16.mxu0 %v2140
    %6149 = vmatpush1.bf16.msra.mxu0 %v2139
    %6150 = vmatprep.subr.bf16.mxu0 %v2200
    %6151 = vmatpush2.bf16.msra.mxu0 %v2199
    %6152 = vmatprep.subr.bf16.mxu0 %v2196
    %6153 = vmatpush2.bf16.msra.mxu0 %v2195
    %6154 = vmatprep.subr.bf16.mxu0 %v2192
    %6155 = vmatpush2.bf16.msra.mxu0 %v2191
    %6156 = vmatprep.subr.bf16.mxu0 %v2188
    %6157 = vmatpush2.bf16.msra.mxu0 %v2187
    %6158 = vmatprep.subr.bf16.mxu0 %v2184
    %6159 = vmatpush2.bf16.msra.mxu0 %v2183
    %6160 = vmatprep.subr.bf16.mxu0 %v2180
    %6161 = vmatpush2.bf16.msra.mxu0 %v2179
    %6162 = vmatprep.subr.bf16.mxu0 %v2176
    %6163 = vmatpush2.bf16.msra.mxu0 %v2175
    %6164 = vmatprep.subr.bf16.mxu0 %v2172
    %6165 = vmatpush2.bf16.msra.mxu0 %v2171
    %6166 = vmatprep.mubr.bf16.mxu0 %v6045
    %6167 = vmatmul.mubr.bf16.gmra.mxu0 %v6038
    %v6168 = vpop.f32.mrf.mxu0
    %v6169 = vadd.f32 0.0, %v6168
    %v6170 = vpop.f32.mrf.mxu0
    %v6171 = vadd.f32 0.0, %v6170
    %v6172 = vpop.f32.mrf.mxu0
    %v6173 = vadd.f32 0.0, %v6172
    %v6174 = vpop.f32.mrf.mxu0
    %v6175 = vadd.f32 0.0, %v6174
    %6176 = vdwg.mxu0
    %6177 = vmatprep.subr.bf16.mxu0 0
    %6178 = vmatpush1.bf16.msra.mxu0 0
    %6179 = vmatprep.subr.bf16.mxu0 0
    %6180 = vmatpush1.bf16.msra.mxu0 0
    %6181 = vmatprep.subr.bf16.mxu0 0
    %6182 = vmatpush1.bf16.msra.mxu0 0
    %6183 = vmatprep.subr.bf16.mxu0 0
    %6184 = vmatpush1.bf16.msra.mxu0 0
    %6185 = vmatprep.subr.bf16.mxu0 0
    %6186 = vmatpush1.bf16.msra.mxu0 0
    %6187 = vmatprep.subr.bf16.mxu0 0
    %6188 = vmatpush1.bf16.msra.mxu0 0
    %6189 = vmatprep.subr.bf16.mxu0 %v2208
    %6190 = vmatpush1.bf16.msra.mxu0 %v2207
    %6191 = vmatprep.subr.bf16.mxu0 %v2204
    %6192 = vmatpush1.bf16.msra.mxu0 %v2203
    %6193 = vmatprep.subr.bf16.mxu0 0
    %6194 = vmatpush2.bf16.msra.mxu0 0
    %6195 = vmatprep.subr.bf16.mxu0 0
    %6196 = vmatpush2.bf16.msra.mxu0 0
    %6197 = vmatprep.subr.bf16.mxu0 0
    %6198 = vmatpush2.bf16.msra.mxu0 0
    %6199 = vmatprep.subr.bf16.mxu0 0
    %6200 = vmatpush2.bf16.msra.mxu0 0
    %6201 = vmatprep.subr.bf16.mxu0 0
    %6202 = vmatpush2.bf16.msra.mxu0 0
    %6203 = vmatprep.subr.bf16.mxu0 0
    %6204 = vmatpush2.bf16.msra.mxu0 0
    %6205 = vmatprep.subr.bf16.mxu0 0
    %6206 = vmatpush2.bf16.msra.mxu0 0
    %6207 = vmatprep.subr.bf16.mxu0 0
    %6208 = vmatpush2.bf16.msra.mxu0 0
    %6209 = vmatprep.mubr.bf16.mxu0 0
    %6210 = vmatmul.mubr.bf16.gmra.mxu0 %v2282
    %v6211 = vpop.f32.mrf.mxu0
    %v6212 = vadd.f32 %v6169, %v6211
    %v6213 = vpop.f32.mrf.mxu0
    %v6214 = vadd.f32 %v6171, %v6213
    %v6215 = vpop.f32.mrf.mxu0
    %v6216 = vadd.f32 %v6173, %v6215
    %v6217 = vpop.f32.mrf.mxu0
    %v6218 = vadd.f32 %v6175, %v6217
    %6219 = vdwg.mxu0
    %6220 = vmatprep.subr.bf16.mxu0 %v2701
    %6221 = vmatpush1.bf16.msra.mxu0 %v2700
    %6222 = vmatprep.subr.bf16.mxu0 %v2697
    %6223 = vmatpush1.bf16.msra.mxu0 %v2696
    %6224 = vmatprep.subr.bf16.mxu0 %v2693
    %6225 = vmatpush1.bf16.msra.mxu0 %v2692
    %6226 = vmatprep.subr.bf16.mxu0 %v2689
    %6227 = vmatpush1.bf16.msra.mxu0 %v2688
    %6228 = vmatprep.subr.bf16.mxu0 %v2685
    %6229 = vmatpush1.bf16.msra.mxu0 %v2684
    %6230 = vmatprep.subr.bf16.mxu0 %v2681
    %6231 = vmatpush1.bf16.msra.mxu0 %v2680
    %6232 = vmatprep.subr.bf16.mxu0 %v2677
    %6233 = vmatpush1.bf16.msra.mxu0 %v2676
    %6234 = vmatprep.subr.bf16.mxu0 %v2673
    %6235 = vmatpush1.bf16.msra.mxu0 %v2672
    %6236 = vmatprep.subr.bf16.mxu0 %v2733
    %6237 = vmatpush2.bf16.msra.mxu0 %v2732
    %6238 = vmatprep.subr.bf16.mxu0 %v2729
    %6239 = vmatpush2.bf16.msra.mxu0 %v2728
    %6240 = vmatprep.subr.bf16.mxu0 %v2725
    %6241 = vmatpush2.bf16.msra.mxu0 %v2724
    %6242 = vmatprep.subr.bf16.mxu0 %v2721
    %6243 = vmatpush2.bf16.msra.mxu0 %v2720
    %6244 = vmatprep.subr.bf16.mxu0 %v2717
    %6245 = vmatpush2.bf16.msra.mxu0 %v2716
    %6246 = vmatprep.subr.bf16.mxu0 %v2713
    %6247 = vmatpush2.bf16.msra.mxu0 %v2712
    %6248 = vmatprep.subr.bf16.mxu0 %v2709
    %6249 = vmatpush2.bf16.msra.mxu0 %v2708
    %6250 = vmatprep.subr.bf16.mxu0 %v2705
    %6251 = vmatpush2.bf16.msra.mxu0 %v2704
    %6252 = vmatprep.mubr.bf16.mxu0 %v6031
    %6253 = vmatmul.mubr.bf16.gmra.mxu0 %v6030
    %v6254 = vpop.f32.mrf.mxu0
    %v6255 = vadd.f32 %v6126, %v6254
    %v6256 = vpop.f32.mrf.mxu0
    %v6257 = vadd.f32 %v6128, %v6256
    %v6258 = vpop.f32.mrf.mxu0
    %v6259 = vadd.f32 %v6130, %v6258
    %v6260 = vpop.f32.mrf.mxu0
    %v6261 = vadd.f32 %v6132, %v6260
    %6262 = vdwg.mxu0
    %6263 = vmatprep.subr.bf16.mxu0 0
    %6264 = vmatpush1.bf16.msra.mxu0 0
    %6265 = vmatprep.subr.bf16.mxu0 0
    %6266 = vmatpush1.bf16.msra.mxu0 0
    %6267 = vmatprep.subr.bf16.mxu0 0
    %6268 = vmatpush1.bf16.msra.mxu0 0
    %6269 = vmatprep.subr.bf16.mxu0 0
    %6270 = vmatpush1.bf16.msra.mxu0 0
    %6271 = vmatprep.subr.bf16.mxu0 0
    %6272 = vmatpush1.bf16.msra.mxu0 0
    %6273 = vmatprep.subr.bf16.mxu0 0
    %6274 = vmatpush1.bf16.msra.mxu0 0
    %6275 = vmatprep.subr.bf16.mxu0 %v2741
    %6276 = vmatpush1.bf16.msra.mxu0 %v2740
    %6277 = vmatprep.subr.bf16.mxu0 %v2737
    %6278 = vmatpush1.bf16.msra.mxu0 %v2736
    %6279 = vmatprep.subr.bf16.mxu0 0
    %6280 = vmatpush2.bf16.msra.mxu0 0
    %6281 = vmatprep.subr.bf16.mxu0 0
    %6282 = vmatpush2.bf16.msra.mxu0 0
    %6283 = vmatprep.subr.bf16.mxu0 0
    %6284 = vmatpush2.bf16.msra.mxu0 0
    %6285 = vmatprep.subr.bf16.mxu0 0
    %6286 = vmatpush2.bf16.msra.mxu0 0
    %6287 = vmatprep.subr.bf16.mxu0 0
    %6288 = vmatpush2.bf16.msra.mxu0 0
    %6289 = vmatprep.subr.bf16.mxu0 0
    %6290 = vmatpush2.bf16.msra.mxu0 0
    %6291 = vmatprep.subr.bf16.mxu0 0
    %6292 = vmatpush2.bf16.msra.mxu0 0
    %6293 = vmatprep.subr.bf16.mxu0 0
    %6294 = vmatpush2.bf16.msra.mxu0 0
    %6295 = vmatprep.mubr.bf16.mxu0 0
    %6296 = vmatmul.mubr.bf16.gmra.mxu0 %v2816
    %v6297 = vpop.f32.mrf.mxu0
    %v6298 = vadd.f32 %v6255, %v6297
    %v6299 = vpop.f32.mrf.mxu0
    %v6300 = vadd.f32 %v6257, %v6299
    %v6301 = vpop.f32.mrf.mxu0
    %v6302 = vadd.f32 %v6259, %v6301
    %v6303 = vpop.f32.mrf.mxu0
    %v6304 = vadd.f32 %v6261, %v6303
    %6305 = vdwg.mxu0
    %6306 = vmatprep.subr.bf16.mxu0 %v2703
    %6307 = vmatpush1.bf16.msra.mxu0 %v2702
    %6308 = vmatprep.subr.bf16.mxu0 %v2699
    %6309 = vmatpush1.bf16.msra.mxu0 %v2698
    %6310 = vmatprep.subr.bf16.mxu0 %v2695
    %6311 = vmatpush1.bf16.msra.mxu0 %v2694
    %6312 = vmatprep.subr.bf16.mxu0 %v2691
    %6313 = vmatpush1.bf16.msra.mxu0 %v2690
    %6314 = vmatprep.subr.bf16.mxu0 %v2687
    %6315 = vmatpush1.bf16.msra.mxu0 %v2686
    %6316 = vmatprep.subr.bf16.mxu0 %v2683
    %6317 = vmatpush1.bf16.msra.mxu0 %v2682
    %6318 = vmatprep.subr.bf16.mxu0 %v2679
    %6319 = vmatpush1.bf16.msra.mxu0 %v2678
    %6320 = vmatprep.subr.bf16.mxu0 %v2675
    %6321 = vmatpush1.bf16.msra.mxu0 %v2674
    %6322 = vmatprep.subr.bf16.mxu0 %v2735
    %6323 = vmatpush2.bf16.msra.mxu0 %v2734
    %6324 = vmatprep.subr.bf16.mxu0 %v2731
    %6325 = vmatpush2.bf16.msra.mxu0 %v2730
    %6326 = vmatprep.subr.bf16.mxu0 %v2727
    %6327 = vmatpush2.bf16.msra.mxu0 %v2726
    %6328 = vmatprep.subr.bf16.mxu0 %v2723
    %6329 = vmatpush2.bf16.msra.mxu0 %v2722
    %6330 = vmatprep.subr.bf16.mxu0 %v2719
    %6331 = vmatpush2.bf16.msra.mxu0 %v2718
    %6332 = vmatprep.subr.bf16.mxu0 %v2715
    %6333 = vmatpush2.bf16.msra.mxu0 %v2714
    %6334 = vmatprep.subr.bf16.mxu0 %v2711
    %6335 = vmatpush2.bf16.msra.mxu0 %v2710
    %6336 = vmatprep.subr.bf16.mxu0 %v2707
    %6337 = vmatpush2.bf16.msra.mxu0 %v2706
    %6338 = vmatprep.mubr.bf16.mxu0 %v6031
    %6339 = vmatmul.mubr.bf16.gmra.mxu0 %v6030
    %v6340 = vpop.f32.mrf.mxu0
    %v6341 = vadd.f32 %v6212, %v6340
    %v6342 = vpop.f32.mrf.mxu0
    %v6343 = vadd.f32 %v6214, %v6342
    %v6344 = vpop.f32.mrf.mxu0
    %v6345 = vadd.f32 %v6216, %v6344
    %v6346 = vpop.f32.mrf.mxu0
    %v6347 = vadd.f32 %v6218, %v6346
    %6348 = vdwg.mxu0
    %6349 = vmatprep.subr.bf16.mxu0 0
    %6350 = vmatpush1.bf16.msra.mxu0 0
    %6351 = vmatprep.subr.bf16.mxu0 0
    %6352 = vmatpush1.bf16.msra.mxu0 0
    %6353 = vmatprep.subr.bf16.mxu0 0
    %6354 = vmatpush1.bf16.msra.mxu0 0
    %6355 = vmatprep.subr.bf16.mxu0 0
    %6356 = vmatpush1.bf16.msra.mxu0 0
    %6357 = vmatprep.subr.bf16.mxu0 0
    %6358 = vmatpush1.bf16.msra.mxu0 0
    %6359 = vmatprep.subr.bf16.mxu0 0
    %6360 = vmatpush1.bf16.msra.mxu0 0
    %6361 = vmatprep.subr.bf16.mxu0 %v2743
    %6362 = vmatpush1.bf16.msra.mxu0 %v2742
    %6363 = vmatprep.subr.bf16.mxu0 %v2739
    %6364 = vmatpush1.bf16.msra.mxu0 %v2738
    %6365 = vmatprep.subr.bf16.mxu0 0
    %6366 = vmatpush2.bf16.msra.mxu0 0
    %6367 = vmatprep.subr.bf16.mxu0 0
    %6368 = vmatpush2.bf16.msra.mxu0 0
    %6369 = vmatprep.subr.bf16.mxu0 0
    %6370 = vmatpush2.bf16.msra.mxu0 0
    %6371 = vmatprep.subr.bf16.mxu0 0
    %6372 = vmatpush2.bf16.msra.mxu0 0
    %6373 = vmatprep.subr.bf16.mxu0 0
    %6374 = vmatpush2.bf16.msra.mxu0 0
    %6375 = vmatprep.subr.bf16.mxu0 0
    %6376 = vmatpush2.bf16.msra.mxu0 0
    %6377 = vmatprep.subr.bf16.mxu0 0
    %6378 = vmatpush2.bf16.msra.mxu0 0
    %6379 = vmatprep.subr.bf16.mxu0 0
    %6380 = vmatpush2.bf16.msra.mxu0 0
    %6381 = vmatprep.mubr.bf16.mxu0 0
    %6382 = vmatmul.mubr.bf16.gmra.mxu0 %v2816
    %v6383 = vpop.f32.mrf.mxu0
    %v6384 = vadd.f32 %v6341, %v6383
    %v6385 = vpop.f32.mrf.mxu0
    %v6386 = vadd.f32 %v6343, %v6385
    %v6387 = vpop.f32.mrf.mxu0
    %v6388 = vadd.f32 %v6345, %v6387
    %v6389 = vpop.f32.mrf.mxu0
    %v6390 = vadd.f32 %v6347, %v6389
    %6391 = vdwg.mxu0
    %v6394 = vrot.slane %v6030, 1
    %v6395 = vrot.slane %v6031, 1
    %6398 = vmatprep.subr.bf16.mxu0 %v3243
    %6399 = vmatpush1.bf16.msra.mxu0 %v3242
    %6400 = vmatprep.subr.bf16.mxu0 %v3239
    %6401 = vmatpush1.bf16.msra.mxu0 %v3238
    %6402 = vmatprep.subr.bf16.mxu0 %v3235
    %6403 = vmatpush1.bf16.msra.mxu0 %v3234
    %6404 = vmatprep.subr.bf16.mxu0 %v3231
    %6405 = vmatpush1.bf16.msra.mxu0 %v3230
    %6406 = vmatprep.subr.bf16.mxu0 %v3227
    %6407 = vmatpush1.bf16.msra.mxu0 %v3226
    %6408 = vmatprep.subr.bf16.mxu0 %v3223
    %6409 = vmatpush1.bf16.msra.mxu0 %v3222
    %6410 = vmatprep.subr.bf16.mxu0 %v3219
    %6411 = vmatpush1.bf16.msra.mxu0 %v3218
    %6412 = vmatprep.subr.bf16.mxu0 %v3215
    %6413 = vmatpush1.bf16.msra.mxu0 %v3214
    %6414 = vmatprep.subr.bf16.mxu0 %v3275
    %6415 = vmatpush2.bf16.msra.mxu0 %v3274
    %6416 = vmatprep.subr.bf16.mxu0 %v3271
    %6417 = vmatpush2.bf16.msra.mxu0 %v3270
    %6418 = vmatprep.subr.bf16.mxu0 %v3267
    %6419 = vmatpush2.bf16.msra.mxu0 %v3266
    %6420 = vmatprep.subr.bf16.mxu0 %v3263
    %6421 = vmatpush2.bf16.msra.mxu0 %v3262
    %6422 = vmatprep.subr.bf16.mxu0 %v3259
    %6423 = vmatpush2.bf16.msra.mxu0 %v3258
    %6424 = vmatprep.subr.bf16.mxu0 %v3255
    %6425 = vmatpush2.bf16.msra.mxu0 %v3254
    %6426 = vmatprep.subr.bf16.mxu0 %v3251
    %6427 = vmatpush2.bf16.msra.mxu0 %v3250
    %6428 = vmatprep.subr.bf16.mxu0 %v3247
    %6429 = vmatpush2.bf16.msra.mxu0 %v3246
    %6430 = vmatprep.mubr.bf16.mxu0 %v6395
    %6431 = vmatmul.mubr.bf16.gmra.mxu0 %v6394
    %v6432 = vpop.f32.mrf.mxu0
    %v6433 = vadd.f32 0.0, %v6432
    %v6434 = vpop.f32.mrf.mxu0
    %v6435 = vadd.f32 0.0, %v6434
    %v6436 = vpop.f32.mrf.mxu0
    %v6437 = vadd.f32 0.0, %v6436
    %v6438 = vpop.f32.mrf.mxu0
    %v6439 = vadd.f32 0.0, %v6438
    %6440 = vdwg.mxu0
    %6441 = vmatprep.subr.bf16.mxu0 0
    %6442 = vmatpush1.bf16.msra.mxu0 0
    %6443 = vmatprep.subr.bf16.mxu0 0
    %6444 = vmatpush1.bf16.msra.mxu0 0
    %6445 = vmatprep.subr.bf16.mxu0 0
    %6446 = vmatpush1.bf16.msra.mxu0 0
    %6447 = vmatprep.subr.bf16.mxu0 0
    %6448 = vmatpush1.bf16.msra.mxu0 0
    %6449 = vmatprep.subr.bf16.mxu0 0
    %6450 = vmatpush1.bf16.msra.mxu0 0
    %6451 = vmatprep.subr.bf16.mxu0 0
    %6452 = vmatpush1.bf16.msra.mxu0 0
    %6453 = vmatprep.subr.bf16.mxu0 %v3283
    %6454 = vmatpush1.bf16.msra.mxu0 %v3282
    %6455 = vmatprep.subr.bf16.mxu0 %v3279
    %6456 = vmatpush1.bf16.msra.mxu0 %v3278
    %6457 = vmatprep.subr.bf16.mxu0 0
    %6458 = vmatpush2.bf16.msra.mxu0 0
    %6459 = vmatprep.subr.bf16.mxu0 0
    %6460 = vmatpush2.bf16.msra.mxu0 0
    %6461 = vmatprep.subr.bf16.mxu0 0
    %6462 = vmatpush2.bf16.msra.mxu0 0
    %6463 = vmatprep.subr.bf16.mxu0 0
    %6464 = vmatpush2.bf16.msra.mxu0 0
    %6465 = vmatprep.subr.bf16.mxu0 0
    %6466 = vmatpush2.bf16.msra.mxu0 0
    %6467 = vmatprep.subr.bf16.mxu0 0
    %6468 = vmatpush2.bf16.msra.mxu0 0
    %6469 = vmatprep.subr.bf16.mxu0 0
    %6470 = vmatpush2.bf16.msra.mxu0 0
    %6471 = vmatprep.subr.bf16.mxu0 0
    %6472 = vmatpush2.bf16.msra.mxu0 0
    %6473 = vmatprep.mubr.bf16.mxu0 0
    %6474 = vmatmul.mubr.bf16.gmra.mxu0 %v3359
    %v6475 = vpop.f32.mrf.mxu0
    %v6476 = vadd.f32 %v6433, %v6475
    %v6477 = vpop.f32.mrf.mxu0
    %v6478 = vadd.f32 %v6435, %v6477
    %v6479 = vpop.f32.mrf.mxu0
    %v6480 = vadd.f32 %v6437, %v6479
    %v6481 = vpop.f32.mrf.mxu0
    %v6482 = vadd.f32 %v6439, %v6481
    %6483 = vdwg.mxu0
    %6484 = vmatprep.subr.bf16.mxu0 %v3245
    %6485 = vmatpush1.bf16.msra.mxu0 %v3244
    %6486 = vmatprep.subr.bf16.mxu0 %v3241
    %6487 = vmatpush1.bf16.msra.mxu0 %v3240
    %6488 = vmatprep.subr.bf16.mxu0 %v3237
    %6489 = vmatpush1.bf16.msra.mxu0 %v3236
    %6490 = vmatprep.subr.bf16.mxu0 %v3233
    %6491 = vmatpush1.bf16.msra.mxu0 %v3232
    %6492 = vmatprep.subr.bf16.mxu0 %v3229
    %6493 = vmatpush1.bf16.msra.mxu0 %v3228
    %6494 = vmatprep.subr.bf16.mxu0 %v3225
    %6495 = vmatpush1.bf16.msra.mxu0 %v3224
    %6496 = vmatprep.subr.bf16.mxu0 %v3221
    %6497 = vmatpush1.bf16.msra.mxu0 %v3220
    %6498 = vmatprep.subr.bf16.mxu0 %v3217
    %6499 = vmatpush1.bf16.msra.mxu0 %v3216
    %6500 = vmatprep.subr.bf16.mxu0 %v3277
    %6501 = vmatpush2.bf16.msra.mxu0 %v3276
    %6502 = vmatprep.subr.bf16.mxu0 %v3273
    %6503 = vmatpush2.bf16.msra.mxu0 %v3272
    %6504 = vmatprep.subr.bf16.mxu0 %v3269
    %6505 = vmatpush2.bf16.msra.mxu0 %v3268
    %6506 = vmatprep.subr.bf16.mxu0 %v3265
    %6507 = vmatpush2.bf16.msra.mxu0 %v3264
    %6508 = vmatprep.subr.bf16.mxu0 %v3261
    %6509 = vmatpush2.bf16.msra.mxu0 %v3260
    %6510 = vmatprep.subr.bf16.mxu0 %v3257
    %6511 = vmatpush2.bf16.msra.mxu0 %v3256
    %6512 = vmatprep.subr.bf16.mxu0 %v3253
    %6513 = vmatpush2.bf16.msra.mxu0 %v3252
    %6514 = vmatprep.subr.bf16.mxu0 %v3249
    %6515 = vmatpush2.bf16.msra.mxu0 %v3248
    %6516 = vmatprep.mubr.bf16.mxu0 %v6395
    %6517 = vmatmul.mubr.bf16.gmra.mxu0 %v6394
    %v6518 = vpop.f32.mrf.mxu0
    %v6519 = vadd.f32 0.0, %v6518
    %v6520 = vpop.f32.mrf.mxu0
    %v6521 = vadd.f32 0.0, %v6520
    %v6522 = vpop.f32.mrf.mxu0
    %v6523 = vadd.f32 0.0, %v6522
    %v6524 = vpop.f32.mrf.mxu0
    %v6525 = vadd.f32 0.0, %v6524
    %6526 = vdwg.mxu0
    %6527 = vmatprep.subr.bf16.mxu0 0
    %6528 = vmatpush1.bf16.msra.mxu0 0
    %6529 = vmatprep.subr.bf16.mxu0 0
    %6530 = vmatpush1.bf16.msra.mxu0 0
    %6531 = vmatprep.subr.bf16.mxu0 0
    %6532 = vmatpush1.bf16.msra.mxu0 0
    %6533 = vmatprep.subr.bf16.mxu0 0
    %6534 = vmatpush1.bf16.msra.mxu0 0
    %6535 = vmatprep.subr.bf16.mxu0 0
    %6536 = vmatpush1.bf16.msra.mxu0 0
    %6537 = vmatprep.subr.bf16.mxu0 0
    %6538 = vmatpush1.bf16.msra.mxu0 0
    %6539 = vmatprep.subr.bf16.mxu0 %v3285
    %6540 = vmatpush1.bf16.msra.mxu0 %v3284
    %6541 = vmatprep.subr.bf16.mxu0 %v3281
    %6542 = vmatpush1.bf16.msra.mxu0 %v3280
    %6543 = vmatprep.subr.bf16.mxu0 0
    %6544 = vmatpush2.bf16.msra.mxu0 0
    %6545 = vmatprep.subr.bf16.mxu0 0
    %6546 = vmatpush2.bf16.msra.mxu0 0
    %6547 = vmatprep.subr.bf16.mxu0 0
    %6548 = vmatpush2.bf16.msra.mxu0 0
    %6549 = vmatprep.subr.bf16.mxu0 0
    %6550 = vmatpush2.bf16.msra.mxu0 0
    %6551 = vmatprep.subr.bf16.mxu0 0
    %6552 = vmatpush2.bf16.msra.mxu0 0
    %6553 = vmatprep.subr.bf16.mxu0 0
    %6554 = vmatpush2.bf16.msra.mxu0 0
    %6555 = vmatprep.subr.bf16.mxu0 0
    %6556 = vmatpush2.bf16.msra.mxu0 0
    %6557 = vmatprep.subr.bf16.mxu0 0
    %6558 = vmatpush2.bf16.msra.mxu0 0
    %6559 = vmatprep.mubr.bf16.mxu0 0
    %6560 = vmatmul.mubr.bf16.gmra.mxu0 %v3359
    %v6561 = vpop.f32.mrf.mxu0
    %v6562 = vadd.f32 %v6519, %v6561
    %v6563 = vpop.f32.mrf.mxu0
    %v6564 = vadd.f32 %v6521, %v6563
    %v6565 = vpop.f32.mrf.mxu0
    %v6566 = vadd.f32 %v6523, %v6565
    %v6567 = vpop.f32.mrf.mxu0
    %v6568 = vadd.f32 %v6525, %v6567
    %6569 = vdwg.mxu0
    %v6570 = vadd.f32 %v6298, %v6476
    %v6571 = vadd.f32 %v6300, %v6478
    %v6572 = vadd.f32 %v6384, %v6562
    %v6573 = vadd.f32 %v6386, %v6564
    %v6574 = vadd.f32 %v6302, %v6480
    %v6575 = vadd.f32 %v6304, %v6482
    %v6576 = vadd.f32 %v6388, %v6566
    %v6577 = vadd.f32 %v6390, %v6568
    %v6578 = vrot.slane %v6033, 1
    %v6579 = vrot.slane %v6035, 2
    %v6580 = vor.u32 %v6578, %v6579
    %v6581 = vsel %vm1058, %v6580, %v3549
    %v6582 = vrot.slane %v6040, 1
    %v6583 = vrot.slane %v6042, 2
    %v6584 = vor.u32 %v6582, %v6583
    %v6585 = vsel %vm1058, %v6584, %v3557
    %6588 = vmatprep.subr.bf16.mxu0 %v3810
    %6589 = vmatpush1.bf16.msra.mxu0 %v3809
    %6590 = vmatprep.subr.bf16.mxu0 %v3806
    %6591 = vmatpush1.bf16.msra.mxu0 %v3805
    %6592 = vmatprep.subr.bf16.mxu0 %v3802
    %6593 = vmatpush1.bf16.msra.mxu0 %v3801
    %6594 = vmatprep.subr.bf16.mxu0 %v3798
    %6595 = vmatpush1.bf16.msra.mxu0 %v3797
    %6596 = vmatprep.subr.bf16.mxu0 %v3794
    %6597 = vmatpush1.bf16.msra.mxu0 %v3793
    %6598 = vmatprep.subr.bf16.mxu0 %v3790
    %6599 = vmatpush1.bf16.msra.mxu0 %v3789
    %6600 = vmatprep.subr.bf16.mxu0 %v3786
    %6601 = vmatpush1.bf16.msra.mxu0 %v3785
    %6602 = vmatprep.subr.bf16.mxu0 %v3782
    %6603 = vmatpush1.bf16.msra.mxu0 %v3781
    %6604 = vmatprep.subr.bf16.mxu0 %v3842
    %6605 = vmatpush2.bf16.msra.mxu0 %v3841
    %6606 = vmatprep.subr.bf16.mxu0 %v3838
    %6607 = vmatpush2.bf16.msra.mxu0 %v3837
    %6608 = vmatprep.subr.bf16.mxu0 %v3834
    %6609 = vmatpush2.bf16.msra.mxu0 %v3833
    %6610 = vmatprep.subr.bf16.mxu0 %v3830
    %6611 = vmatpush2.bf16.msra.mxu0 %v3829
    %6612 = vmatprep.subr.bf16.mxu0 %v3826
    %6613 = vmatpush2.bf16.msra.mxu0 %v3825
    %6614 = vmatprep.subr.bf16.mxu0 %v3822
    %6615 = vmatpush2.bf16.msra.mxu0 %v3821
    %6616 = vmatprep.subr.bf16.mxu0 %v3818
    %6617 = vmatpush2.bf16.msra.mxu0 %v3817
    %6618 = vmatprep.subr.bf16.mxu0 %v3814
    %6619 = vmatpush2.bf16.msra.mxu0 %v3813
    %6620 = vmatprep.mubr.bf16.mxu0 %v6585
    %6621 = vmatmul.mubr.bf16.gmra.mxu0 %v6581
    %v6622 = vpop.f32.mrf.mxu0
    %v6623 = vadd.f32 0.0, %v6622
    %v6624 = vpop.f32.mrf.mxu0
    %v6625 = vadd.f32 0.0, %v6624
    %v6626 = vpop.f32.mrf.mxu0
    %v6627 = vadd.f32 0.0, %v6626
    %v6628 = vpop.f32.mrf.mxu0
    %v6629 = vadd.f32 0.0, %v6628
    %6630 = vdwg.mxu0
    %6631 = vmatprep.subr.bf16.mxu0 0
    %6632 = vmatpush1.bf16.msra.mxu0 0
    %6633 = vmatprep.subr.bf16.mxu0 0
    %6634 = vmatpush1.bf16.msra.mxu0 0
    %6635 = vmatprep.subr.bf16.mxu0 0
    %6636 = vmatpush1.bf16.msra.mxu0 0
    %6637 = vmatprep.subr.bf16.mxu0 0
    %6638 = vmatpush1.bf16.msra.mxu0 0
    %6639 = vmatprep.subr.bf16.mxu0 0
    %6640 = vmatpush1.bf16.msra.mxu0 0
    %6641 = vmatprep.subr.bf16.mxu0 0
    %6642 = vmatpush1.bf16.msra.mxu0 0
    %6643 = vmatprep.subr.bf16.mxu0 %v3850
    %6644 = vmatpush1.bf16.msra.mxu0 %v3849
    %6645 = vmatprep.subr.bf16.mxu0 %v3846
    %6646 = vmatpush1.bf16.msra.mxu0 %v3845
    %6647 = vmatprep.subr.bf16.mxu0 0
    %6648 = vmatpush2.bf16.msra.mxu0 0
    %6649 = vmatprep.subr.bf16.mxu0 0
    %6650 = vmatpush2.bf16.msra.mxu0 0
    %6651 = vmatprep.subr.bf16.mxu0 0
    %6652 = vmatpush2.bf16.msra.mxu0 0
    %6653 = vmatprep.subr.bf16.mxu0 0
    %6654 = vmatpush2.bf16.msra.mxu0 0
    %6655 = vmatprep.subr.bf16.mxu0 0
    %6656 = vmatpush2.bf16.msra.mxu0 0
    %6657 = vmatprep.subr.bf16.mxu0 0
    %6658 = vmatpush2.bf16.msra.mxu0 0
    %6659 = vmatprep.subr.bf16.mxu0 0
    %6660 = vmatpush2.bf16.msra.mxu0 0
    %6661 = vmatprep.subr.bf16.mxu0 0
    %6662 = vmatpush2.bf16.msra.mxu0 0
    %6663 = vmatprep.mubr.bf16.mxu0 0
    %6664 = vmatmul.mubr.bf16.gmra.mxu0 %v3926
    %v6665 = vpop.f32.mrf.mxu0
    %v6666 = vadd.f32 %v6623, %v6665
    %v6667 = vpop.f32.mrf.mxu0
    %v6668 = vadd.f32 %v6625, %v6667
    %v6669 = vpop.f32.mrf.mxu0
    %v6670 = vadd.f32 %v6627, %v6669
    %v6671 = vpop.f32.mrf.mxu0
    %v6672 = vadd.f32 %v6629, %v6671
    %6673 = vdwg.mxu0
    %6674 = vmatprep.subr.bf16.mxu0 %v3812
    %6675 = vmatpush1.bf16.msra.mxu0 %v3811
    %6676 = vmatprep.subr.bf16.mxu0 %v3808
    %6677 = vmatpush1.bf16.msra.mxu0 %v3807
    %6678 = vmatprep.subr.bf16.mxu0 %v3804
    %6679 = vmatpush1.bf16.msra.mxu0 %v3803
    %6680 = vmatprep.subr.bf16.mxu0 %v3800
    %6681 = vmatpush1.bf16.msra.mxu0 %v3799
    %6682 = vmatprep.subr.bf16.mxu0 %v3796
    %6683 = vmatpush1.bf16.msra.mxu0 %v3795
    %6684 = vmatprep.subr.bf16.mxu0 %v3792
    %6685 = vmatpush1.bf16.msra.mxu0 %v3791
    %6686 = vmatprep.subr.bf16.mxu0 %v3788
    %6687 = vmatpush1.bf16.msra.mxu0 %v3787
    %6688 = vmatprep.subr.bf16.mxu0 %v3784
    %6689 = vmatpush1.bf16.msra.mxu0 %v3783
    %6690 = vmatprep.subr.bf16.mxu0 %v3844
    %6691 = vmatpush2.bf16.msra.mxu0 %v3843
    %6692 = vmatprep.subr.bf16.mxu0 %v3840
    %6693 = vmatpush2.bf16.msra.mxu0 %v3839
    %6694 = vmatprep.subr.bf16.mxu0 %v3836
    %6695 = vmatpush2.bf16.msra.mxu0 %v3835
    %6696 = vmatprep.subr.bf16.mxu0 %v3832
    %6697 = vmatpush2.bf16.msra.mxu0 %v3831
    %6698 = vmatprep.subr.bf16.mxu0 %v3828
    %6699 = vmatpush2.bf16.msra.mxu0 %v3827
    %6700 = vmatprep.subr.bf16.mxu0 %v3824
    %6701 = vmatpush2.bf16.msra.mxu0 %v3823
    %6702 = vmatprep.subr.bf16.mxu0 %v3820
    %6703 = vmatpush2.bf16.msra.mxu0 %v3819
    %6704 = vmatprep.subr.bf16.mxu0 %v3816
    %6705 = vmatpush2.bf16.msra.mxu0 %v3815
    %6706 = vmatprep.mubr.bf16.mxu0 %v6585
    %6707 = vmatmul.mubr.bf16.gmra.mxu0 %v6581
    %v6708 = vpop.f32.mrf.mxu0
    %v6709 = vadd.f32 0.0, %v6708
    %v6710 = vpop.f32.mrf.mxu0
    %v6711 = vadd.f32 0.0, %v6710
    %v6712 = vpop.f32.mrf.mxu0
    %v6713 = vadd.f32 0.0, %v6712
    %v6714 = vpop.f32.mrf.mxu0
    %v6715 = vadd.f32 0.0, %v6714
    %6716 = vdwg.mxu0
    %6717 = vmatprep.subr.bf16.mxu0 0
    %6718 = vmatpush1.bf16.msra.mxu0 0
    %6719 = vmatprep.subr.bf16.mxu0 0
    %6720 = vmatpush1.bf16.msra.mxu0 0
    %6721 = vmatprep.subr.bf16.mxu0 0
    %6722 = vmatpush1.bf16.msra.mxu0 0
    %6723 = vmatprep.subr.bf16.mxu0 0
    %6724 = vmatpush1.bf16.msra.mxu0 0
    %6725 = vmatprep.subr.bf16.mxu0 0
    %6726 = vmatpush1.bf16.msra.mxu0 0
    %6727 = vmatprep.subr.bf16.mxu0 0
    %6728 = vmatpush1.bf16.msra.mxu0 0
    %6729 = vmatprep.subr.bf16.mxu0 %v3852
    %6730 = vmatpush1.bf16.msra.mxu0 %v3851
    %6731 = vmatprep.subr.bf16.mxu0 %v3848
    %6732 = vmatpush1.bf16.msra.mxu0 %v3847
    %6733 = vmatprep.subr.bf16.mxu0 0
    %6734 = vmatpush2.bf16.msra.mxu0 0
    %6735 = vmatprep.subr.bf16.mxu0 0
    %6736 = vmatpush2.bf16.msra.mxu0 0
    %6737 = vmatprep.subr.bf16.mxu0 0
    %6738 = vmatpush2.bf16.msra.mxu0 0
    %6739 = vmatprep.subr.bf16.mxu0 0
    %6740 = vmatpush2.bf16.msra.mxu0 0
    %6741 = vmatprep.subr.bf16.mxu0 0
    %6742 = vmatpush2.bf16.msra.mxu0 0
    %6743 = vmatprep.subr.bf16.mxu0 0
    %6744 = vmatpush2.bf16.msra.mxu0 0
    %6745 = vmatprep.subr.bf16.mxu0 0
    %6746 = vmatpush2.bf16.msra.mxu0 0
    %6747 = vmatprep.subr.bf16.mxu0 0
    %6748 = vmatpush2.bf16.msra.mxu0 0
    %6749 = vmatprep.mubr.bf16.mxu0 0
    %6750 = vmatmul.mubr.bf16.gmra.mxu0 %v3926
    %v6751 = vpop.f32.mrf.mxu0
    %v6752 = vadd.f32 %v6709, %v6751
    %v6753 = vpop.f32.mrf.mxu0
    %v6754 = vadd.f32 %v6711, %v6753
    %v6755 = vpop.f32.mrf.mxu0
    %v6756 = vadd.f32 %v6713, %v6755
    %v6757 = vpop.f32.mrf.mxu0
    %v6758 = vadd.f32 %v6715, %v6757
    %6759 = vdwg.mxu0
    %v6760 = vadd.f32 %v6570, %v6666
    %v6761 = vadd.f32 %v6571, %v6668
    %v6762 = vadd.f32 %v6572, %v6752
    %v6763 = vadd.f32 %v6573, %v6754
    %v6764 = vadd.f32 %v6574, %v6670
    %v6765 = vadd.f32 %v6575, %v6672
    %v6766 = vadd.f32 %v6576, %v6756
    %v6767 = vadd.f32 %v6577, %v6758
    %v6768 = vrot.slane %v6030, 2
    %v6769 = vsel %vm1234, %v6768, %v4111
    %v6770 = vrot.slane %v6031, 2
    %v6771 = vsel %vm1234, %v6770, %v4114
    %6774 = vmatprep.subr.bf16.mxu0 %v4365
    %6775 = vmatpush1.bf16.msra.mxu0 %v4364
    %6776 = vmatprep.subr.bf16.mxu0 %v4361
    %6777 = vmatpush1.bf16.msra.mxu0 %v4360
    %6778 = vmatprep.subr.bf16.mxu0 %v4357
    %6779 = vmatpush1.bf16.msra.mxu0 %v4356
    %6780 = vmatprep.subr.bf16.mxu0 %v4353
    %6781 = vmatpush1.bf16.msra.mxu0 %v4352
    %6782 = vmatprep.subr.bf16.mxu0 %v4349
    %6783 = vmatpush1.bf16.msra.mxu0 %v4348
    %6784 = vmatprep.subr.bf16.mxu0 %v4345
    %6785 = vmatpush1.bf16.msra.mxu0 %v4344
    %6786 = vmatprep.subr.bf16.mxu0 %v4341
    %6787 = vmatpush1.bf16.msra.mxu0 %v4340
    %6788 = vmatprep.subr.bf16.mxu0 %v4337
    %6789 = vmatpush1.bf16.msra.mxu0 %v4336
    %6790 = vmatprep.subr.bf16.mxu0 %v4397
    %6791 = vmatpush2.bf16.msra.mxu0 %v4396
    %6792 = vmatprep.subr.bf16.mxu0 %v4393
    %6793 = vmatpush2.bf16.msra.mxu0 %v4392
    %6794 = vmatprep.subr.bf16.mxu0 %v4389
    %6795 = vmatpush2.bf16.msra.mxu0 %v4388
    %6796 = vmatprep.subr.bf16.mxu0 %v4385
    %6797 = vmatpush2.bf16.msra.mxu0 %v4384
    %6798 = vmatprep.subr.bf16.mxu0 %v4381
    %6799 = vmatpush2.bf16.msra.mxu0 %v4380
    %6800 = vmatprep.subr.bf16.mxu0 %v4377
    %6801 = vmatpush2.bf16.msra.mxu0 %v4376
    %6802 = vmatprep.subr.bf16.mxu0 %v4373
    %6803 = vmatpush2.bf16.msra.mxu0 %v4372
    %6804 = vmatprep.subr.bf16.mxu0 %v4369
    %6805 = vmatpush2.bf16.msra.mxu0 %v4368
    %6806 = vmatprep.mubr.bf16.mxu0 %v6771
    %6807 = vmatmul.mubr.bf16.gmra.mxu0 %v6769
    %v6808 = vpop.f32.mrf.mxu0
    %v6809 = vadd.f32 0.0, %v6808
    %v6810 = vpop.f32.mrf.mxu0
    %v6811 = vadd.f32 0.0, %v6810
    %v6812 = vpop.f32.mrf.mxu0
    %v6813 = vadd.f32 0.0, %v6812
    %v6814 = vpop.f32.mrf.mxu0
    %v6815 = vadd.f32 0.0, %v6814
    %6816 = vdwg.mxu0
    %6817 = vmatprep.subr.bf16.mxu0 0
    %6818 = vmatpush1.bf16.msra.mxu0 0
    %6819 = vmatprep.subr.bf16.mxu0 0
    %6820 = vmatpush1.bf16.msra.mxu0 0
    %6821 = vmatprep.subr.bf16.mxu0 0
    %6822 = vmatpush1.bf16.msra.mxu0 0
    %6823 = vmatprep.subr.bf16.mxu0 0
    %6824 = vmatpush1.bf16.msra.mxu0 0
    %6825 = vmatprep.subr.bf16.mxu0 0
    %6826 = vmatpush1.bf16.msra.mxu0 0
    %6827 = vmatprep.subr.bf16.mxu0 0
    %6828 = vmatpush1.bf16.msra.mxu0 0
    %6829 = vmatprep.subr.bf16.mxu0 %v4405
    %6830 = vmatpush1.bf16.msra.mxu0 %v4404
    %6831 = vmatprep.subr.bf16.mxu0 %v4401
    %6832 = vmatpush1.bf16.msra.mxu0 %v4400
    %6833 = vmatprep.subr.bf16.mxu0 0
    %6834 = vmatpush2.bf16.msra.mxu0 0
    %6835 = vmatprep.subr.bf16.mxu0 0
    %6836 = vmatpush2.bf16.msra.mxu0 0
    %6837 = vmatprep.subr.bf16.mxu0 0
    %6838 = vmatpush2.bf16.msra.mxu0 0
    %6839 = vmatprep.subr.bf16.mxu0 0
    %6840 = vmatpush2.bf16.msra.mxu0 0
    %6841 = vmatprep.subr.bf16.mxu0 0
    %6842 = vmatpush2.bf16.msra.mxu0 0
    %6843 = vmatprep.subr.bf16.mxu0 0
    %6844 = vmatpush2.bf16.msra.mxu0 0
    %6845 = vmatprep.subr.bf16.mxu0 0
    %6846 = vmatpush2.bf16.msra.mxu0 0
    %6847 = vmatprep.subr.bf16.mxu0 0
    %6848 = vmatpush2.bf16.msra.mxu0 0
    %6849 = vmatprep.mubr.bf16.mxu0 0
    %6850 = vmatmul.mubr.bf16.gmra.mxu0 %v4481
    %v6851 = vpop.f32.mrf.mxu0
    %v6852 = vadd.f32 %v6809, %v6851
    %v6853 = vpop.f32.mrf.mxu0
    %v6854 = vadd.f32 %v6811, %v6853
    %v6855 = vpop.f32.mrf.mxu0
    %v6856 = vadd.f32 %v6813, %v6855
    %v6857 = vpop.f32.mrf.mxu0
    %v6858 = vadd.f32 %v6815, %v6857
    %6859 = vdwg.mxu0
    %6860 = vmatprep.subr.bf16.mxu0 %v4367
    %6861 = vmatpush1.bf16.msra.mxu0 %v4366
    %6862 = vmatprep.subr.bf16.mxu0 %v4363
    %6863 = vmatpush1.bf16.msra.mxu0 %v4362
    %6864 = vmatprep.subr.bf16.mxu0 %v4359
    %6865 = vmatpush1.bf16.msra.mxu0 %v4358
    %6866 = vmatprep.subr.bf16.mxu0 %v4355
    %6867 = vmatpush1.bf16.msra.mxu0 %v4354
    %6868 = vmatprep.subr.bf16.mxu0 %v4351
    %6869 = vmatpush1.bf16.msra.mxu0 %v4350
    %6870 = vmatprep.subr.bf16.mxu0 %v4347
    %6871 = vmatpush1.bf16.msra.mxu0 %v4346
    %6872 = vmatprep.subr.bf16.mxu0 %v4343
    %6873 = vmatpush1.bf16.msra.mxu0 %v4342
    %6874 = vmatprep.subr.bf16.mxu0 %v4339
    %6875 = vmatpush1.bf16.msra.mxu0 %v4338
    %6876 = vmatprep.subr.bf16.mxu0 %v4399
    %6877 = vmatpush2.bf16.msra.mxu0 %v4398
    %6878 = vmatprep.subr.bf16.mxu0 %v4395
    %6879 = vmatpush2.bf16.msra.mxu0 %v4394
    %6880 = vmatprep.subr.bf16.mxu0 %v4391
    %6881 = vmatpush2.bf16.msra.mxu0 %v4390
    %6882 = vmatprep.subr.bf16.mxu0 %v4387
    %6883 = vmatpush2.bf16.msra.mxu0 %v4386
    %6884 = vmatprep.subr.bf16.mxu0 %v4383
    %6885 = vmatpush2.bf16.msra.mxu0 %v4382
    %6886 = vmatprep.subr.bf16.mxu0 %v4379
    %6887 = vmatpush2.bf16.msra.mxu0 %v4378
    %6888 = vmatprep.subr.bf16.mxu0 %v4375
    %6889 = vmatpush2.bf16.msra.mxu0 %v4374
    %6890 = vmatprep.subr.bf16.mxu0 %v4371
    %6891 = vmatpush2.bf16.msra.mxu0 %v4370
    %6892 = vmatprep.mubr.bf16.mxu0 %v6771
    %6893 = vmatmul.mubr.bf16.gmra.mxu0 %v6769
    %v6894 = vpop.f32.mrf.mxu0
    %v6895 = vadd.f32 0.0, %v6894
    %v6896 = vpop.f32.mrf.mxu0
    %v6897 = vadd.f32 0.0, %v6896
    %v6898 = vpop.f32.mrf.mxu0
    %v6899 = vadd.f32 0.0, %v6898
    %v6900 = vpop.f32.mrf.mxu0
    %v6901 = vadd.f32 0.0, %v6900
    %6902 = vdwg.mxu0
    %6903 = vmatprep.subr.bf16.mxu0 0
    %6904 = vmatpush1.bf16.msra.mxu0 0
    %6905 = vmatprep.subr.bf16.mxu0 0
    %6906 = vmatpush1.bf16.msra.mxu0 0
    %6907 = vmatprep.subr.bf16.mxu0 0
    %6908 = vmatpush1.bf16.msra.mxu0 0
    %6909 = vmatprep.subr.bf16.mxu0 0
    %6910 = vmatpush1.bf16.msra.mxu0 0
    %6911 = vmatprep.subr.bf16.mxu0 0
    %6912 = vmatpush1.bf16.msra.mxu0 0
    %6913 = vmatprep.subr.bf16.mxu0 0
    %6914 = vmatpush1.bf16.msra.mxu0 0
    %6915 = vmatprep.subr.bf16.mxu0 %v4407
    %6916 = vmatpush1.bf16.msra.mxu0 %v4406
    %6917 = vmatprep.subr.bf16.mxu0 %v4403
    %6918 = vmatpush1.bf16.msra.mxu0 %v4402
    %6919 = vmatprep.subr.bf16.mxu0 0
    %6920 = vmatpush2.bf16.msra.mxu0 0
    %6921 = vmatprep.subr.bf16.mxu0 0
    %6922 = vmatpush2.bf16.msra.mxu0 0
    %6923 = vmatprep.subr.bf16.mxu0 0
    %6924 = vmatpush2.bf16.msra.mxu0 0
    %6925 = vmatprep.subr.bf16.mxu0 0
    %6926 = vmatpush2.bf16.msra.mxu0 0
    %6927 = vmatprep.subr.bf16.mxu0 0
    %6928 = vmatpush2.bf16.msra.mxu0 0
    %6929 = vmatprep.subr.bf16.mxu0 0
    %6930 = vmatpush2.bf16.msra.mxu0 0
    %6931 = vmatprep.subr.bf16.mxu0 0
    %6932 = vmatpush2.bf16.msra.mxu0 0
    %6933 = vmatprep.subr.bf16.mxu0 0
    %6934 = vmatpush2.bf16.msra.mxu0 0
    %6935 = vmatprep.mubr.bf16.mxu0 0
    %6936 = vmatmul.mubr.bf16.gmra.mxu0 %v4481
    %v6937 = vpop.f32.mrf.mxu0
    %v6938 = vadd.f32 %v6895, %v6937
    %v6939 = vpop.f32.mrf.mxu0
    %v6940 = vadd.f32 %v6897, %v6939
    %v6941 = vpop.f32.mrf.mxu0
    %v6942 = vadd.f32 %v6899, %v6941
    %v6943 = vpop.f32.mrf.mxu0
    %v6944 = vadd.f32 %v6901, %v6943
    %6945 = vdwg.mxu0
    %v6946 = vadd.f32 %v6760, %v6852
    %v6947 = vadd.f32 %v6761, %v6854
    %v6948 = vadd.f32 %v6762, %v6938
    %v6949 = vadd.f32 %v6763, %v6940
    %v6950 = vadd.f32 %v6764, %v6856
    %v6951 = vadd.f32 %v6765, %v6858
    %v6952 = vadd.f32 %v6766, %v6942
    %v6953 = vadd.f32 %v6767, %v6944
    %v6954 = vadd.f32 %v6946, %v4667
    %v6955 = vadd.f32 %v6947, %v4671
    %v6956 = vadd.f32 %v6948, %v4675
    %v6957 = vadd.f32 %v6949, %v4679
    %v6958 = vadd.f32 %v6950, %v4667
    %v6959 = vadd.f32 %v6951, %v4671
    %v6960 = vadd.f32 %v6952, %v4675
    %v6961 = vadd.f32 %v6953, %v4679
    %6964 = vrot.lane.b32.xlu0 %v6954, 96
    %v6965 = vpop.permute.xlu0 %6964
    %6966 = vrot.lane.b32.xlu0 %v6958, 96
    %v6967 = vpop.permute.xlu0 %6966
    %v6970 = vmax.f32 %v6954, %v6965
    %v6971 = vmax.f32 %v6958, %v6967
    %6974 = vrot.lane.b32.xlu0 %v6955, 96
    %v6975 = vpop.permute.xlu0 %6974
    %6976 = vrot.lane.b32.xlu0 %v6959, 96
    %v6977 = vpop.permute.xlu0 %6976
    %v6980 = vmax.f32 %v6955, %v6975
    %v6981 = vmax.f32 %v6959, %v6977
    %6984 = vrot.lane.b32.xlu0 %v6956, 96
    %v6985 = vpop.permute.xlu0 %6984
    %6986 = vrot.lane.b32.xlu0 %v6960, 96
    %v6987 = vpop.permute.xlu0 %6986
    %v6990 = vmax.f32 %v6956, %v6985
    %v6991 = vmax.f32 %v6960, %v6987
    %6994 = vrot.lane.b32.xlu0 %v6957, 96
    %v6995 = vpop.permute.xlu0 %6994
    %6996 = vrot.lane.b32.xlu0 %v6961, 96
    %v6997 = vpop.permute.xlu0 %6996
    %v7000 = vmax.f32 %v6957, %v6995
    %v7001 = vmax.f32 %v6961, %v6997
    %7004 = vrot.lane.b32.xlu0 %v6970, 96
    %v7005 = vpop.permute.xlu0 %7004
    %7006 = vrot.lane.b32.xlu0 %v6971, 96
    %v7007 = vpop.permute.xlu0 %7006
    %7012 = vrot.lane.b32.xlu0 %v6980, 64
    %v7013 = vpop.permute.xlu0 %7012
    %7014 = vrot.lane.b32.xlu0 %v6981, 64
    %v7015 = vpop.permute.xlu0 %7014
    %7018 = vrot.lane.b32.xlu0 %v6980, 32
    %v7019 = vpop.permute.xlu0 %7018
    %7020 = vrot.lane.b32.xlu0 %v6981, 32
    %v7021 = vpop.permute.xlu0 %7020
    %7026 = vrot.lane.b32.xlu0 %v6990, 96
    %v7027 = vpop.permute.xlu0 %7026
    %7028 = vrot.lane.b32.xlu0 %v6991, 96
    %v7029 = vpop.permute.xlu0 %7028
    %7034 = vrot.lane.b32.xlu0 %v7000, 64
    %v7035 = vpop.permute.xlu0 %7034
    %7036 = vrot.lane.b32.xlu0 %v7001, 64
    %v7037 = vpop.permute.xlu0 %7036
    %v7040 = vsel %vm621, %v6970, %v7005
    %v7041 = vsel %vm621, %v6971, %v7007
    %v7042 = vsel %vm1697, %v7040, %v7013
    %v7043 = vsel %vm1697, %v7041, %v7015
    %v7044 = vsel %vm1707, %v7042, %v7019
    %v7045 = vsel %vm1707, %v7043, %v7021
    %v7046 = vsel %vm621, %v6990, %v7027
    %v7047 = vsel %vm621, %v6991, %v7029
    %v7048 = vsel %vm1697, %v7046, %v7035
    %v7049 = vsel %vm1697, %v7047, %v7037
    %v7052 = vrot.slane %v7044, 1
    %v7053 = vrot.slane %v7048, 1
    %v7056 = vmax.f32 %v7044, %v7052
    %v7057 = vmax.f32 %v7048, %v7053
    %v7060 = vrot.slane %v7045, 1
    %v7061 = vrot.slane %v7049, 1
    %v7064 = vmax.f32 %v7045, %v7060
    %v7065 = vmax.f32 %v7049, %v7061
    %v7068 = vrot.slane %v7056, 1
    %v7069 = vrot.slane %v7057, 1
    %v7072 = vrot.slane %v7056, 2
    %v7073 = vrot.slane %v7057, 2
    %v7076 = vrot.slane %v7056, 3
    %v7077 = vrot.slane %v7057, 3
    %v7082 = vrot.slane %v7064, 4
    %v7083 = vrot.slane %v7065, 4
    %v7086 = vrot.slane %v7064, 5
    %v7087 = vrot.slane %v7065, 5
    %v7090 = vrot.slane %v7064, 6
    %v7091 = vrot.slane %v7065, 6
    %v7094 = vsel %vm1825, %v7056, %v7068
    %v7095 = vsel %vm1825, %v7057, %v7069
    %v7096 = vsel %vm526, %v7094, %v7072
    %v7097 = vsel %vm526, %v7095, %v7073
    %v7098 = vsel %vm1830, %v7096, %v7076
    %v7099 = vsel %vm1830, %v7097, %v7077
    %v7100 = vsel %vm1833, %v7098, %v7082
    %v7101 = vsel %vm1833, %v7099, %v7083
    %v7102 = vsel %vm1836, %v7100, %v7086
    %v7103 = vsel %vm1836, %v7101, %v7087
    %v7104 = vsel %vm537, %v7102, %v7090
    %v7105 = vsel %vm537, %v7103, %v7091
    %v7106 = vmax.f32 %v7104, 0.0
    %v7107 = vmax.f32 %v7105, 0.0
    %v7110 = vrot.slane %v7106, 1
    %v7111 = vrot.slane %v7107, 1
    %7112 = vrot.lane.b32.xlu0 %v7110, 96
    %v7113 = vpop.permute.xlu0 %7112
    %7114 = vrot.lane.b32.xlu0 %v7111, 96
    %v7115 = vpop.permute.xlu0 %7114
    %v7116 = vsel %vm1707, %v7113, %v7115
    %v7119 = vrot.slane %v7106, 2
    %v7120 = vrot.slane %v7107, 2
    %7121 = vrot.lane.b32.xlu0 %v7119, 64
    %v7122 = vpop.permute.xlu0 %7121
    %7123 = vrot.lane.b32.xlu0 %v7120, 64
    %v7124 = vpop.permute.xlu0 %7123
    %v7125 = vsel %vm1697, %v7122, %v7124
    %v7128 = vrot.slane %v7106, 3
    %v7129 = vrot.slane %v7107, 3
    %7130 = vrot.lane.b32.xlu0 %v7128, 32
    %v7131 = vpop.permute.xlu0 %7130
    %7132 = vrot.lane.b32.xlu0 %v7129, 32
    %v7133 = vpop.permute.xlu0 %7132
    %v7134 = vsel %vm621, %v7131, %v7133
    %v7136 = vrot.slane %v7106, 4
    %v7137 = vrot.slane %v7107, 4
    %v7139 = vrot.slane %v7106, 5
    %v7140 = vrot.slane %v7107, 5
    %7141 = vrot.lane.b32.xlu0 %v7139, 96
    %v7142 = vpop.permute.xlu0 %7141
    %7143 = vrot.lane.b32.xlu0 %v7140, 96
    %v7144 = vpop.permute.xlu0 %7143
    %v7145 = vsel %vm1707, %v7142, %v7144
    %v7148 = vrot.slane %v7106, 6
    %v7149 = vrot.slane %v7107, 6
    %7150 = vrot.lane.b32.xlu0 %v7148, 64
    %v7151 = vpop.permute.xlu0 %7150
    %7152 = vrot.lane.b32.xlu0 %v7149, 64
    %v7153 = vpop.permute.xlu0 %7152
    %v7154 = vsel %vm1697, %v7151, %v7153
    %v7156 = vsel %vm1707, %v7107, %v7113
    %v7157 = vsel %vm1697, %v7115, %v7122
    %v7158 = vsel %vm621, %v7124, %v7131
    %v7159 = vsel %vm1707, %v7137, %v7142
    %v7160 = vsel %vm1697, %v7144, %v7151
    %v7166 = vrot.slane %v7106, 7
    %v7167 = vrot.slane %v7156, 7
    %v7168 = vrot.slane %v7116, 7
    %v7169 = vrot.slane %v7157, 7
    %v7170 = vrot.slane %v7125, 7
    %v7171 = vrot.slane %v7158, 7
    %v7172 = vrot.slane %v7134, 7
    %v7173 = vrot.slane %v7136, 7
    %v7174 = vrot.slane %v7159, 7
    %v7175 = vrot.slane %v7145, 7
    %v7176 = vrot.slane %v7160, 7
    %v7177 = vrot.slane %v7154, 7
    %v7178 = vrot.slane %v7153, 7
    %v7192 = vsel %vm1825, %v4836, %v7166
    %v7193 = vsel %vm1825, %v4893, %v7167
    %v7194 = vsel %vm1825, %v4846, %v7168
    %v7195 = vsel %vm1825, %v4894, %v7169
    %v7196 = vsel %vm1825, %v4856, %v7170
    %v7197 = vsel %vm1825, %v4895, %v7171
    %v7198 = vsel %vm1825, %v4866, %v7172
    %v7199 = vsel %vm1825, %v4869, %v7173
    %v7200 = vsel %vm1825, %v4896, %v7174
    %v7201 = vsel %vm1825, %v4879, %v7175
    %v7202 = vsel %vm1825, %v4897, %v7176
    %v7203 = vsel %vm1825, %v4889, %v7177
    %v7204 = vsel %vm1825, %v4888, %v7178
    %v7205 = vpack.c.bf16 %v7192, %v7192
    %v7206 = vpack.c.bf16 %v7193, %v7193
    %v7207 = vpack.c.bf16 %v7194, %v7194
    %v7208 = vpack.c.bf16 %v7195, %v7195
    %v7209 = vpack.c.bf16 %v7196, %v7196
    %v7210 = vpack.c.bf16 %v7197, %v7197
    %v7211 = vpack.c.bf16 %v7198, %v7198
    %v7212 = vpack.c.bf16 %v7199, %v7199
    %v7213 = vpack.c.bf16 %v7200, %v7200
    %v7214 = vpack.c.bf16 %v7201, %v7201
    %v7215 = vpack.c.bf16 %v7202, %v7202
    %v7216 = vpack.c.bf16 %v7203, %v7203
    %v7217 = vpack.c.bf16 %v7204, %v7204
    %v7218 = vld [vmem:[%s5] sm:$0xf]
    %v7219 = vld [vmem:[%s5 + $0x4] sm:$0xf]
    %v7220 = vld [vmem:[%s5 + $0x8] sm:$0xf]
    %v7221 = vld [vmem:[%s5 + $0xc] sm:$0xf]
    %v7222 = vld [vmem:[%s5 + $0x10] sm:$0xf]
    %v7223 = vld [vmem:[%s5 + $0x14] sm:$0xf]
    %v7224 = vld [vmem:[%s5 + $0x18] sm:$0xf]
    %v7225 = vld [vmem:[%s5 + $0x1c] sm:$0xf]
    %v7226 = vld [vmem:[%s5 + $0x20] sm:$0xf]
    %v7227 = vld [vmem:[%s5 + $0x24] sm:$0xf]
    %v7228 = vld [vmem:[%s5 + $0x28] sm:$0xf]
    %v7229 = vld [vmem:[%s5 + $0x2c] sm:$0xf]
    %v7230 = vld [vmem:[%s5 + $0x30] sm:$0xf]
    %v7231 = vld [vmem:[%s5 + $0x34] sm:$0xf]
    %v7232 = vld [vmem:[%s5 + $0x38] sm:$0xf]
    %v7233 = vld [vmem:[%s5 + $0x3c] sm:$0xf]
    %v7234 = vld [vmem:[%s5 + $0x40] sm:$0xf]
    %v7235 = vld [vmem:[%s5 + $0x44] sm:$0xf]
    %v7236 = vld [vmem:[%s5 + $0x48] sm:$0xf]
    %v7237 = vld [vmem:[%s5 + $0x4c] sm:$0xf]
    %v7238 = vld [vmem:[%s5 + $0x50] sm:$0xf]
    %v7239 = vld [vmem:[%s5 + $0x54] sm:$0xf]
    %v7240 = vld [vmem:[%s5 + $0x58] sm:$0xf]
    %v7241 = vld [vmem:[%s5 + $0x5c] sm:$0xf]
    %v7242 = vld [vmem:[%s5 + $0x60] sm:$0xf]
    %v7243 = vld [vmem:[%s5 + $0x64] sm:$0xf]
    %v7244 = vld [vmem:[%s5 + $0x68] sm:$0xf]
    %v7245 = vld [vmem:[%s5 + $0x6c] sm:$0xf]
    %v7246 = vld [vmem:[%s5 + $0x70] sm:$0xf]
    %v7247 = vld [vmem:[%s5 + $0x74] sm:$0xf]
    %v7248 = vld [vmem:[%s5 + $0x78] sm:$0xf]
    %v7249 = vld [vmem:[%s5 + $0x7c] sm:$0xf]
    %v7250 = vld [vmem:[%s5 + $0x80] sm:$0xf]
    %v7251 = vld [vmem:[%s5 + $0x84] sm:$0xf]
    %v7252 = vld [vmem:[%s5 + $0x88] sm:$0xf]
    %v7253 = vld [vmem:[%s5 + $0x8c] sm:$0xf]
    %v7254 = vld [vmem:[%s5 + $0x90] sm:$0xf]
    %v7255 = vld [vmem:[%s5 + $0x94] sm:$0xf]
    %v7256 = vld [vmem:[%s5 + $0x98] sm:$0xf]
    %v7257 = vld [vmem:[%s5 + $0x9c] sm:$0xf]
    %v7258 = vld [vmem:[%s5 + $0xa0] sm:$0xf]
    %v7259 = vld [vmem:[%s5 + $0xa4] sm:$0xf]
    %v7260 = vld [vmem:[%s5 + $0xa8] sm:$0xf]
    %v7261 = vld [vmem:[%s5 + $0xac] sm:$0xf]
    %v7262 = vld [vmem:[%s5 + $0xb0] sm:$0xf]
    %v7263 = vld [vmem:[%s5 + $0xb4] sm:$0xf]
    %v7264 = vld [vmem:[%s5 + $0xb8] sm:$0xf]
    %v7265 = vld [vmem:[%s5 + $0xbc] sm:$0xf]
    %v7266 = vld [vmem:[%s5 + $0xc0] sm:$0xf]
    %v7267 = vld [vmem:[%s5 + $0xc4] sm:$0xf]
    %v7268 = vld [vmem:[%s5 + $0xc8] sm:$0xf]
    %v7269 = vld [vmem:[%s5 + $0xcc] sm:$0xf]
    %v7270 = vld [vmem:[%s5 + $0xd0] sm:$0xf]
    %v7271 = vld [vmem:[%s5 + $0xd4] sm:$0xf]
    %v7272 = vld [vmem:[%s5 + $0xd8] sm:$0xf]
    %v7273 = vld [vmem:[%s5 + $0xdc] sm:$0xf]
    %v7274 = vld [vmem:[%s5 + $0xe0] sm:$0xf]
    %v7275 = vld [vmem:[%s5 + $0xe4] sm:$0xf]
    %v7276 = vld [vmem:[%s5 + $0xe8] sm:$0xf]
    %v7277 = vld [vmem:[%s5 + $0xec] sm:$0xf]
    %v7278 = vld [vmem:[%s5 + $0xf0] sm:$0xf]
    %v7279 = vld [vmem:[%s5 + $0xf4] sm:$0xf]
    %v7280 = vld [vmem:[%s5 + $0xf8] sm:$0xf]
    %v7281 = vld [vmem:[%s5 + $0xfc] sm:$0xf]
    %v7282 = vld [vmem:[%s5 + $0x100] sm:$0xf]
    %v7283 = vld [vmem:[%s5 + $0x104] sm:$0xf]
    %v7284 = vld [vmem:[%s5 + $0x108] sm:$0xf]
    %v7285 = vld [vmem:[%s5 + $0x10c] sm:$0xf]
    %v7286 = vld [vmem:[%s5 + $0x110] sm:$0xf]
    %v7287 = vld [vmem:[%s5 + $0x114] sm:$0xf]
    %v7288 = vld [vmem:[%s5 + $0x118] sm:$0xf]
    %v7289 = vld [vmem:[%s5 + $0x11c] sm:$0xf]
    %v7290 = vld [vmem:[%s5 + $0x120] sm:$0xf]
    %v7291 = vld [vmem:[%s5 + $0x124] sm:$0xf]
    %v7292 = vld [vmem:[%s5 + $0x128] sm:$0xf]
    %v7293 = vld [vmem:[%s5 + $0x12c] sm:$0xf]
    %v7294 = vld [vmem:[%s5 + $0x130] sm:$0xf]
    %v7295 = vld [vmem:[%s5 + $0x134] sm:$0xf]
    %v7296 = vld [vmem:[%s5 + $0x138] sm:$0xf]
    %v7297 = vld [vmem:[%s5 + $0x13c] sm:$0xf]
    %v7298 = vld [vmem:[%s5 + $0x140] sm:$0xf]
    %v7299 = vld [vmem:[%s5 + $0x144] sm:$0xf]
    %v7300 = vld [vmem:[%s5 + $0x148] sm:$0xf]
    %v7301 = vld [vmem:[%s5 + $0x14c] sm:$0xf]
    %v7302 = vld [vmem:[%s5 + $0x150] sm:$0xf]
    %v7303 = vld [vmem:[%s5 + $0x154] sm:$0xf]
    %v7304 = vld [vmem:[%s5 + $0x158] sm:$0xf]
    %v7305 = vld [vmem:[%s5 + $0x15c] sm:$0xf]
    %v7306 = vld [vmem:[%s5 + $0x160] sm:$0xf]
    %v7307 = vld [vmem:[%s5 + $0x164] sm:$0xf]
    %v7308 = vld [vmem:[%s5 + $0x168] sm:$0xf]
    %v7309 = vld [vmem:[%s5 + $0x16c] sm:$0xf]
    %v7310 = vld [vmem:[%s5 + $0x170] sm:$0xf]
    %v7311 = vld [vmem:[%s5 + $0x174] sm:$0xf]
    %v7312 = vld [vmem:[%s5 + $0x178] sm:$0xf]
    %v7313 = vld [vmem:[%s5 + $0x17c] sm:$0xf]
    %v7314 = vld [vmem:[%s5 + $0x180] sm:$0xf]
    %v7315 = vld [vmem:[%s5 + $0x184] sm:$0xf]
    %v7316 = vld [vmem:[%s5 + $0x188] sm:$0xf]
    %v7317 = vld [vmem:[%s5 + $0x18c] sm:$0xf]
    %v7318 = vld [vmem:[%s5 + $0x190] sm:$0xf]
    %v7319 = vld [vmem:[%s5 + $0x194] sm:$0xf]
    %v7320 = vld [vmem:[%s5 + $0x198] sm:$0xf]
    %v7321 = vld [vmem:[%s5 + $0x19c] sm:$0xf]
    %v7322 = vld [vmem:[%s5 + $0x1a0] sm:$0xf]
    %v7323 = vld [vmem:[%s5 + $0x1a4] sm:$0xf]
    %v7324 = vld [vmem:[%s5 + $0x1a8] sm:$0xf]
    %v7325 = vld [vmem:[%s5 + $0x1ac] sm:$0xf]
    %v7326 = vld [vmem:[%s5 + $0x1b0] sm:$0xf]
    %v7327 = vld [vmem:[%s5 + $0x1b4] sm:$0xf]
    %v7328 = vld [vmem:[%s5 + $0x1b8] sm:$0xf]
    %v7329 = vld [vmem:[%s5 + $0x1bc] sm:$0xf]
    %v7330 = vld [vmem:[%s5 + $0x1c0] sm:$0xf]
    %v7331 = vld [vmem:[%s5 + $0x1c4] sm:$0xf]
    %v7332 = vld [vmem:[%s5 + $0x1c8] sm:$0xf]
    %v7333 = vld [vmem:[%s5 + $0x1cc] sm:$0xf]
    %v7334 = vld [vmem:[%s5 + $0x1d0] sm:$0xf]
    %v7335 = vld [vmem:[%s5 + $0x1d4] sm:$0xf]
    %v7336 = vld [vmem:[%s5 + $0x1d8] sm:$0xf]
    %v7337 = vld [vmem:[%s5 + $0x1dc] sm:$0xf]
    %v7338 = vld [vmem:[%s5 + $0x1e0] sm:$0xf]
    %v7339 = vld [vmem:[%s5 + $0x1e4] sm:$0xf]
    %v7340 = vld [vmem:[%s5 + $0x1e8] sm:$0xf]
    %v7341 = vld [vmem:[%s5 + $0x1ec] sm:$0xf]
    %v7342 = vld [vmem:[%s5 + $0x1f0] sm:$0xf]
    %v7343 = vld [vmem:[%s5 + $0x1f4] sm:$0xf]
    %v7344 = vld [vmem:[%s5 + $0x1f8] sm:$0xf]
    %v7345 = vld [vmem:[%s5 + $0x1fc] sm:$0xf]
    %v7346 = vld [vmem:[%s5 + $0x200] sm:$0xf]
    %v7347 = vld [vmem:[%s5 + $0x204] sm:$0xf]
    %v7348 = vld [vmem:[%s5 + $0x208] sm:$0xf]
    %v7349 = vld [vmem:[%s5 + $0x20c] sm:$0xf]
    %v7350 = vld [vmem:[%s5 + $0x210] sm:$0xf]
    %v7351 = vld [vmem:[%s5 + $0x214] sm:$0xf]
    %v7352 = vld [vmem:[%s5 + $0x218] sm:$0xf]
    %v7353 = vld [vmem:[%s5 + $0x21c] sm:$0xf]
    %v7354 = vld [vmem:[%s5 + $0x220] sm:$0xf]
    %v7355 = vld [vmem:[%s5 + $0x224] sm:$0xf]
    %v7356 = vld [vmem:[%s5 + $0x228] sm:$0xf]
    %v7357 = vld [vmem:[%s5 + $0x22c] sm:$0xf]
    %v7358 = vld [vmem:[%s5 + $0x230] sm:$0xf]
    %v7359 = vld [vmem:[%s5 + $0x234] sm:$0xf]
    %v7360 = vld [vmem:[%s5 + $0x238] sm:$0xf]
    %v7361 = vld [vmem:[%s5 + $0x23c] sm:$0xf]
    %v7362 = vld [vmem:[%s5 + $0x240] sm:$0xf]
    %v7363 = vld [vmem:[%s5 + $0x244] sm:$0xf]
    %v7364 = vld [vmem:[%s5 + $0x248] sm:$0xf]
    %v7365 = vld [vmem:[%s5 + $0x24c] sm:$0xf]
    %v7366 = vld [vmem:[%s5 + $0x250] sm:$0xf]
    %v7367 = vld [vmem:[%s5 + $0x254] sm:$0xf]
    %v7368 = vld [vmem:[%s5 + $0x258] sm:$0xf]
    %v7369 = vld [vmem:[%s5 + $0x25c] sm:$0xf]
    %v7370 = vld [vmem:[%s5 + $0x260] sm:$0xf]
    %v7371 = vld [vmem:[%s5 + $0x264] sm:$0xf]
    %v7372 = vld [vmem:[%s5 + $0x268] sm:$0xf]
    %v7373 = vld [vmem:[%s5 + $0x26c] sm:$0xf]
    %v7374 = vld [vmem:[%s5 + $0x270] sm:$0xf]
    %v7375 = vld [vmem:[%s5 + $0x274] sm:$0xf]
    %v7376 = vld [vmem:[%s5 + $0x278] sm:$0xf]
    %v7377 = vld [vmem:[%s5 + $0x27c] sm:$0xf]
    %v7378 = vld [vmem:[%s5 + $0x280] sm:$0xf]
    %v7379 = vld [vmem:[%s5 + $0x284] sm:$0xf]
    %v7380 = vld [vmem:[%s5 + $0x288] sm:$0xf]
    %v7381 = vld [vmem:[%s5 + $0x28c] sm:$0xf]
    %v7382 = vld [vmem:[%s5 + $0x290] sm:$0xf]
    %v7383 = vld [vmem:[%s5 + $0x294] sm:$0xf]
    %v7384 = vld [vmem:[%s5 + $0x298] sm:$0xf]
    %v7385 = vld [vmem:[%s5 + $0x29c] sm:$0xf]
    %v7386 = vld [vmem:[%s5 + $0x2a0] sm:$0xf]
    %v7387 = vld [vmem:[%s5 + $0x2a4] sm:$0xf]
    %v7388 = vld [vmem:[%s5 + $0x2a8] sm:$0xf]
    %v7389 = vld [vmem:[%s5 + $0x2ac] sm:$0xf]
    %v7390 = vld [vmem:[%s5 + $0x2b0] sm:$0xf]
    %v7391 = vld [vmem:[%s5 + $0x2b4] sm:$0xf]
    %v7392 = vld [vmem:[%s5 + $0x2b8] sm:$0xf]
    %v7393 = vld [vmem:[%s5 + $0x2bc] sm:$0xf]
    %v7394 = vld [vmem:[%s5 + $0x2c0] sm:$0xf]
    %v7395 = vld [vmem:[%s5 + $0x2c4] sm:$0xf]
    %v7396 = vld [vmem:[%s5 + $0x2c8] sm:$0xf]
    %v7397 = vld [vmem:[%s5 + $0x2cc] sm:$0xf]
    %v7398 = vld [vmem:[%s5 + $0x2d0] sm:$0xf]
    %v7399 = vld [vmem:[%s5 + $0x2d4] sm:$0xf]
    %v7400 = vld [vmem:[%s5 + $0x2d8] sm:$0xf]
    %v7401 = vld [vmem:[%s5 + $0x2dc] sm:$0xf]
    %v7402 = vld [vmem:[%s5 + $0x2e0] sm:$0xf]
    %v7403 = vld [vmem:[%s5 + $0x2e4] sm:$0xf]
    %v7404 = vld [vmem:[%s5 + $0x2e8] sm:$0xf]
    %v7405 = vld [vmem:[%s5 + $0x2ec] sm:$0xf]
    %v7406 = vld [vmem:[%s5 + $0x2f0] sm:$0xf]
    %v7407 = vld [vmem:[%s5 + $0x2f4] sm:$0xf]
    %v7408 = vld [vmem:[%s5 + $0x2f8] sm:$0xf]
    %v7409 = vld [vmem:[%s5 + $0x2fc] sm:$0xf]
    %v7410 = vld [vmem:[%s5 + $0x300] sm:$0xf]
    %v7411 = vld [vmem:[%s5 + $0x304] sm:$0xf]
    %v7412 = vld [vmem:[%s5 + $0x308] sm:$0xf]
    %v7413 = vld [vmem:[%s5 + $0x30c] sm:$0xf]
    %v7414 = vld [vmem:[#allocation10] sm:$0x1]
    %v7416 = vlaneseq
    %v7417 = vshrl.u32 %v7416, 7
    %v7418 = vsub.s32 0, %v7417
    %v7419 = vrot.slane %v7414, %v7418
    %v7617 = vunpack.c.l.b16 %v7218
    %v7618 = vunpack.c.l.b16 %v7219
    %v7619 = vunpack.c.l.b16 %v7220
    %v7620 = vunpack.c.l.b16 %v7221
    %v7621 = vunpack.c.l.b16 %v7222
    %v7622 = vunpack.c.l.b16 %v7223
    %v7623 = vunpack.c.l.b16 %v7224
    %v7624 = vunpack.c.l.b16 %v7225
    %v7625 = vunpack.c.l.b16 %v7226
    %v7626 = vunpack.c.l.b16 %v7227
    %v7627 = vunpack.c.l.b16 %v7228
    %v7628 = vunpack.c.l.b16 %v7229
    %v7629 = vunpack.c.l.b16 %v7230
    %v7630 = vunpack.c.l.b16 %v7231
    %v7631 = vunpack.c.l.b16 %v7232
    %v7632 = vunpack.c.l.b16 %v7233
    %v7633 = vunpack.c.l.b16 %v7234
    %v7634 = vunpack.c.l.b16 %v7235
    %v7635 = vunpack.c.l.b16 %v7236
    %v7636 = vunpack.c.l.b16 %v7237
    %v7637 = vunpack.c.l.b16 %v7238
    %v7638 = vunpack.c.l.b16 %v7239
    %v7639 = vunpack.c.l.b16 %v7240
    %v7640 = vunpack.c.l.b16 %v7241
    %v7641 = vunpack.c.l.b16 %v7242
    %v7642 = vunpack.c.l.b16 %v7243
    %v7643 = vunpack.c.l.b16 %v7244
    %v7644 = vunpack.c.l.b16 %v7245
    %v7645 = vunpack.c.l.b16 %v7246
    %v7646 = vunpack.c.l.b16 %v7247
    %v7647 = vunpack.c.l.b16 %v7248
    %v7648 = vunpack.c.l.b16 %v7249
    %v7649 = vunpack.c.l.b16 %v7250
    %v7650 = vunpack.c.l.b16 %v7251
    %v7651 = vunpack.c.l.b16 %v7252
    %v7652 = vunpack.c.l.b16 %v7253
    %v7653 = vunpack.c.l.b16 %v7254
    %v7654 = vunpack.c.l.b16 %v7255
    %v7655 = vunpack.c.l.b16 %v7256
    %v7656 = vunpack.c.l.b16 %v7257
    %v7657 = vunpack.c.l.b16 %v7258
    %v7658 = vunpack.c.l.b16 %v7259
    %v7659 = vunpack.c.l.b16 %v7260
    %v7660 = vunpack.c.l.b16 %v7261
    %v7661 = vunpack.c.l.b16 %v7262
    %v7662 = vunpack.c.l.b16 %v7263
    %v7663 = vunpack.c.l.b16 %v7264
    %v7664 = vunpack.c.l.b16 %v7265
    %v7665 = vunpack.c.l.b16 %v7266
    %v7666 = vunpack.c.l.b16 %v7267
    %v7667 = vunpack.c.l.b16 %v7268
    %v7668 = vunpack.c.l.b16 %v7269
    %v7669 = vunpack.c.l.b16 %v7270
    %v7670 = vunpack.c.l.b16 %v7271
    %v7671 = vunpack.c.l.b16 %v7272
    %v7672 = vunpack.c.l.b16 %v7273
    %v7673 = vunpack.c.l.b16 %v7274
    %v7674 = vunpack.c.l.b16 %v7275
    %v7675 = vunpack.c.l.b16 %v7276
    %v7676 = vunpack.c.l.b16 %v7277
    %v7677 = vunpack.c.l.b16 %v7278
    %v7678 = vunpack.c.l.b16 %v7279
    %v7679 = vunpack.c.l.b16 %v7280
    %v7680 = vunpack.c.l.b16 %v7281
    %v7681 = vunpack.c.l.b16 %v7282
    %v7682 = vunpack.c.l.b16 %v7283
    %v7683 = vunpack.c.l.b16 %v7284
    %v7684 = vunpack.c.l.b16 %v7285
    %v7685 = vunpack.c.l.b16 %v7286
    %v7686 = vunpack.c.l.b16 %v7287
    %v7687 = vunpack.c.l.b16 %v7288
    %v7688 = vunpack.c.l.b16 %v7289
    %v7689 = vunpack.c.l.b16 %v7290
    %v7690 = vunpack.c.l.b16 %v7291
    %v7691 = vunpack.c.l.b16 %v7292
    %v7692 = vunpack.c.l.b16 %v7293
    %v7693 = vunpack.c.l.b16 %v7294
    %v7694 = vunpack.c.l.b16 %v7295
    %v7695 = vunpack.c.l.b16 %v7296
    %v7696 = vunpack.c.l.b16 %v7297
    %v7697 = vunpack.c.l.b16 %v7298
    %v7698 = vunpack.c.l.b16 %v7299
    %v7699 = vunpack.c.l.b16 %v7300
    %v7700 = vunpack.c.l.b16 %v7301
    %v7701 = vunpack.c.l.b16 %v7302
    %v7702 = vunpack.c.l.b16 %v7303
    %v7703 = vunpack.c.l.b16 %v7304
    %v7704 = vunpack.c.l.b16 %v7305
    %v7705 = vunpack.c.l.b16 %v7306
    %v7706 = vunpack.c.l.b16 %v7307
    %v7707 = vunpack.c.l.b16 %v7308
    %v7708 = vunpack.c.l.b16 %v7309
    %v7709 = vunpack.c.l.b16 %v7310
    %v7710 = vunpack.c.l.b16 %v7311
    %v7711 = vunpack.c.l.b16 %v7312
    %v7712 = vunpack.c.l.b16 %v7313
    %v7713 = vunpack.c.l.b16 %v7314
    %v7714 = vunpack.c.l.b16 %v7315
    %v7715 = vunpack.c.l.b16 %v7316
    %v7716 = vunpack.c.l.b16 %v7317
    %v7717 = vunpack.c.l.b16 %v7318
    %v7718 = vunpack.c.l.b16 %v7319
    %v7719 = vunpack.c.l.b16 %v7320
    %v7720 = vunpack.c.l.b16 %v7321
    %v7721 = vunpack.c.l.b16 %v7322
    %v7722 = vunpack.c.l.b16 %v7323
    %v7723 = vunpack.c.l.b16 %v7324
    %v7724 = vunpack.c.l.b16 %v7325
    %v7725 = vunpack.c.l.b16 %v7326
    %v7726 = vunpack.c.l.b16 %v7327
    %v7727 = vunpack.c.l.b16 %v7328
    %v7728 = vunpack.c.l.b16 %v7329
    %v7729 = vunpack.c.l.b16 %v7330
    %v7730 = vunpack.c.l.b16 %v7331
    %v7731 = vunpack.c.l.b16 %v7332
    %v7732 = vunpack.c.l.b16 %v7333
    %v7733 = vunpack.c.l.b16 %v7334
    %v7734 = vunpack.c.l.b16 %v7335
    %v7735 = vunpack.c.l.b16 %v7336
    %v7736 = vunpack.c.l.b16 %v7337
    %v7737 = vunpack.c.l.b16 %v7338
    %v7738 = vunpack.c.l.b16 %v7339
    %v7739 = vunpack.c.l.b16 %v7340
    %v7740 = vunpack.c.l.b16 %v7341
    %v7741 = vunpack.c.l.b16 %v7342
    %v7742 = vunpack.c.l.b16 %v7343
    %v7743 = vunpack.c.l.b16 %v7344
    %v7744 = vunpack.c.l.b16 %v7345
    %v7745 = vunpack.c.l.b16 %v7346
    %v7746 = vunpack.c.l.b16 %v7347
    %v7747 = vunpack.c.l.b16 %v7348
    %v7748 = vunpack.c.l.b16 %v7349
    %v7749 = vunpack.c.l.b16 %v7350
    %v7750 = vunpack.c.l.b16 %v7351
    %v7751 = vunpack.c.l.b16 %v7352
    %v7752 = vunpack.c.l.b16 %v7353
    %v7753 = vunpack.c.l.b16 %v7354
    %v7754 = vunpack.c.l.b16 %v7355
    %v7755 = vunpack.c.l.b16 %v7356
    %v7756 = vunpack.c.l.b16 %v7357
    %v7757 = vunpack.c.l.b16 %v7358
    %v7758 = vunpack.c.l.b16 %v7359
    %v7759 = vunpack.c.l.b16 %v7360
    %v7760 = vunpack.c.l.b16 %v7361
    %v7761 = vunpack.c.l.b16 %v7362
    %v7762 = vunpack.c.l.b16 %v7363
    %v7763 = vunpack.c.l.b16 %v7364
    %v7764 = vunpack.c.l.b16 %v7365
    %v7765 = vunpack.c.l.b16 %v7366
    %v7766 = vunpack.c.l.b16 %v7367
    %v7767 = vunpack.c.l.b16 %v7368
    %v7768 = vunpack.c.l.b16 %v7369
    %v7769 = vunpack.c.l.b16 %v7370
    %v7770 = vunpack.c.l.b16 %v7371
    %v7771 = vunpack.c.l.b16 %v7372
    %v7772 = vunpack.c.l.b16 %v7373
    %v7773 = vunpack.c.l.b16 %v7374
    %v7774 = vunpack.c.l.b16 %v7375
    %v7775 = vunpack.c.l.b16 %v7376
    %v7776 = vunpack.c.l.b16 %v7377
    %v7777 = vunpack.c.l.b16 %v7378
    %v7778 = vunpack.c.l.b16 %v7379
    %v7779 = vunpack.c.l.b16 %v7380
    %v7780 = vunpack.c.l.b16 %v7381
    %v7781 = vunpack.c.l.b16 %v7382
    %v7782 = vunpack.c.l.b16 %v7383
    %v7783 = vunpack.c.l.b16 %v7384
    %v7784 = vunpack.c.l.b16 %v7385
    %v7785 = vunpack.c.l.b16 %v7386
    %v7786 = vunpack.c.l.b16 %v7387
    %v7787 = vunpack.c.l.b16 %v7388
    %v7788 = vunpack.c.l.b16 %v7389
    %v7789 = vunpack.c.l.b16 %v7390
    %v7790 = vunpack.c.l.b16 %v7391
    %v7791 = vunpack.c.l.b16 %v7392
    %v7792 = vunpack.c.l.b16 %v7393
    %v7793 = vunpack.c.l.b16 %v7394
    %v7794 = vunpack.c.l.b16 %v7395
    %v7795 = vunpack.c.l.b16 %v7396
    %v7796 = vunpack.c.l.b16 %v7397
    %v7797 = vunpack.c.l.b16 %v7398
    %v7798 = vunpack.c.l.b16 %v7399
    %v7799 = vunpack.c.l.b16 %v7400
    %v7800 = vunpack.c.l.b16 %v7401
    %v7801 = vunpack.c.l.b16 %v7402
    %v7802 = vunpack.c.l.b16 %v7403
    %v7803 = vunpack.c.l.b16 %v7404
    %v7804 = vunpack.c.l.b16 %v7405
    %v7805 = vunpack.c.l.b16 %v7406
    %v7806 = vunpack.c.l.b16 %v7407
    %v7807 = vunpack.c.l.b16 %v7408
    %v7808 = vunpack.c.l.b16 %v7409
    %v7809 = vunpack.c.l.b16 %v7410
    %v7810 = vunpack.c.l.b16 %v7411
    %v7811 = vunpack.c.l.b16 %v7412
    %v7812 = vunpack.c.l.b16 %v7413
    %v7813 = vpack.c.b16 %v7618, %v7617
    %v7814 = vpack.c.b16 %v7620, %v7619
    %v7815 = vpack.c.b16 %v7622, %v7621
    %v7816 = vpack.c.b16 %v7624, %v7623
    %v7817 = vpack.c.b16 %v7626, %v7625
    %v7818 = vpack.c.b16 %v7628, %v7627
    %v7819 = vpack.c.b16 %v7630, %v7629
    %v7820 = vpack.c.b16 %v7632, %v7631
    %v7821 = vpack.c.b16 %v7634, %v7633
    %v7822 = vpack.c.b16 %v7636, %v7635
    %v7823 = vpack.c.b16 %v7638, %v7637
    %v7824 = vpack.c.b16 %v7640, %v7639
    %v7825 = vpack.c.b16 %v7642, %v7641
    %v7826 = vpack.c.b16 %v7644, %v7643
    %v7827 = vpack.c.b16 %v7646, %v7645
    %v7828 = vpack.c.b16 %v7648, %v7647
    %v7829 = vpack.c.b16 %v7650, %v7649
    %v7830 = vpack.c.b16 %v7652, %v7651
    %v7831 = vpack.c.b16 %v7654, %v7653
    %v7832 = vpack.c.b16 %v7656, %v7655
    %v7833 = vpack.c.b16 %v7658, %v7657
    %v7834 = vpack.c.b16 %v7660, %v7659
    %v7835 = vpack.c.b16 %v7662, %v7661
    %v7836 = vpack.c.b16 %v7664, %v7663
    %v7837 = vpack.c.b16 %v7666, %v7665
    %v7838 = vpack.c.b16 %v7668, %v7667
    %v7839 = vpack.c.b16 %v7670, %v7669
    %v7840 = vpack.c.b16 %v7672, %v7671
    %v7841 = vpack.c.b16 %v7674, %v7673
    %v7842 = vpack.c.b16 %v7676, %v7675
    %v7843 = vpack.c.b16 %v7678, %v7677
    %v7844 = vpack.c.b16 %v7680, %v7679
    %v7845 = vpack.c.b16 %v7682, %v7681
    %v7846 = vpack.c.b16 %v7684, %v7683
    %v7847 = vpack.c.b16 %v7686, %v7685
    %v7848 = vpack.c.b16 %v7688, %v7687
    %v7849 = vpack.c.b16 %v7690, %v7689
    %v7850 = vpack.c.b16 %v7692, %v7691
    %v7851 = vpack.c.b16 %v7694, %v7693
    %v7852 = vpack.c.b16 %v7696, %v7695
    %v7853 = vpack.c.b16 %v7698, %v7697
    %v7854 = vpack.c.b16 %v7700, %v7699
    %v7855 = vpack.c.b16 %v7702, %v7701
    %v7856 = vpack.c.b16 %v7704, %v7703
    %v7857 = vpack.c.b16 %v7706, %v7705
    %v7858 = vpack.c.b16 %v7708, %v7707
    %v7859 = vpack.c.b16 %v7710, %v7709
    %v7860 = vpack.c.b16 %v7712, %v7711
    %v7861 = vpack.c.b16 %v7714, %v7713
    %v7862 = vpack.c.b16 %v7716, %v7715
    %v7863 = vpack.c.b16 %v7718, %v7717
    %v7864 = vpack.c.b16 %v7720, %v7719
    %v7865 = vpack.c.b16 %v7722, %v7721
    %v7866 = vpack.c.b16 %v7724, %v7723
    %v7867 = vpack.c.b16 %v7726, %v7725
    %v7868 = vpack.c.b16 %v7728, %v7727
    %v7869 = vpack.c.b16 %v7730, %v7729
    %v7870 = vpack.c.b16 %v7732, %v7731
    %v7871 = vpack.c.b16 %v7734, %v7733
    %v7872 = vpack.c.b16 %v7736, %v7735
    %v7873 = vpack.c.b16 %v7738, %v7737
    %v7874 = vpack.c.b16 %v7740, %v7739
    %v7875 = vpack.c.b16 %v7742, %v7741
    %v7876 = vpack.c.b16 %v7744, %v7743
    %v7877 = vpack.c.b16 %v7746, %v7745
    %v7878 = vpack.c.b16 %v7748, %v7747
    %v7879 = vpack.c.b16 %v7750, %v7749
    %v7880 = vpack.c.b16 %v7752, %v7751
    %v7881 = vpack.c.b16 %v7754, %v7753
    %v7882 = vpack.c.b16 %v7756, %v7755
    %v7883 = vpack.c.b16 %v7758, %v7757
    %v7884 = vpack.c.b16 %v7760, %v7759
    %v7885 = vpack.c.b16 %v7762, %v7761
    %v7886 = vpack.c.b16 %v7764, %v7763
    %v7887 = vpack.c.b16 %v7766, %v7765
    %v7888 = vpack.c.b16 %v7768, %v7767
    %v7889 = vpack.c.b16 %v7770, %v7769
    %v7890 = vpack.c.b16 %v7772, %v7771
    %v7891 = vpack.c.b16 %v7774, %v7773
    %v7892 = vpack.c.b16 %v7776, %v7775
    %v7893 = vpack.c.b16 %v7778, %v7777
    %v7894 = vpack.c.b16 %v7780, %v7779
    %v7895 = vpack.c.b16 %v7782, %v7781
    %v7896 = vpack.c.b16 %v7784, %v7783
    %v7897 = vpack.c.b16 %v7786, %v7785
    %v7898 = vpack.c.b16 %v7788, %v7787
    %v7899 = vpack.c.b16 %v7790, %v7789
    %v7900 = vpack.c.b16 %v7792, %v7791
    %v7901 = vpack.c.b16 %v7794, %v7793
    %v7902 = vpack.c.b16 %v7796, %v7795
    %v7903 = vpack.c.b16 %v7798, %v7797
    %v7904 = vpack.c.b16 %v7800, %v7799
    %v7905 = vpack.c.b16 %v7802, %v7801
    %v7906 = vpack.c.b16 %v7804, %v7803
    %v7907 = vpack.c.b16 %v7806, %v7805
    %v7908 = vpack.c.b16 %v7808, %v7807
    %v7909 = vpack.c.b16 %v7810, %v7809
    %v7910 = vpack.c.b16 %v7812, %v7811
    %v8010 = vsel %vm621, %v7217, 0
    %8012 = vmatprep.subr.bf16.mxu0 0
    %8013 = vmatpush1.bf16.msra.mxu0 %v7820
    %8014 = vmatprep.subr.bf16.mxu0 0
    %8015 = vmatpush1.bf16.msra.mxu0 %v7819
    %8016 = vmatprep.subr.bf16.mxu0 0
    %8017 = vmatpush1.bf16.msra.mxu0 %v7818
    %8018 = vmatprep.subr.bf16.mxu0 0
    %8019 = vmatpush1.bf16.msra.mxu0 %v7817
    %8020 = vmatprep.subr.bf16.mxu0 0
    %8021 = vmatpush1.bf16.msra.mxu0 %v7816
    %8022 = vmatprep.subr.bf16.mxu0 0
    %8023 = vmatpush1.bf16.msra.mxu0 %v7815
    %8024 = vmatprep.subr.bf16.mxu0 0
    %8025 = vmatpush1.bf16.msra.mxu0 %v7814
    %8026 = vmatprep.subr.bf16.mxu0 0
    %8027 = vmatpush1.bf16.msra.mxu0 %v7813
    %8028 = vmatprep.subr.bf16.mxu0 0
    %8029 = vmatpush2.bf16.msra.mxu0 %v7828
    %8030 = vmatprep.subr.bf16.mxu0 0
    %8031 = vmatpush2.bf16.msra.mxu0 %v7827
    %8032 = vmatprep.subr.bf16.mxu0 0
    %8033 = vmatpush2.bf16.msra.mxu0 %v7826
    %8034 = vmatprep.subr.bf16.mxu0 0
    %8035 = vmatpush2.bf16.msra.mxu0 %v7825
    %8036 = vmatprep.subr.bf16.mxu0 0
    %8037 = vmatpush2.bf16.msra.mxu0 %v7824
    %8038 = vmatprep.subr.bf16.mxu0 0
    %8039 = vmatpush2.bf16.msra.mxu0 %v7823
    %8040 = vmatprep.subr.bf16.mxu0 0
    %8041 = vmatpush2.bf16.msra.mxu0 %v7822
    %8042 = vmatprep.subr.bf16.mxu0 0
    %8043 = vmatpush2.bf16.msra.mxu0 %v7821
    %8044 = vmatprep.mubr.bf16.mxu0 %v7206
    %8045 = vmatmul.mubr.bf16.gmra.mxu0 %v7205
    %v8046 = vpop.f32.mrf.mxu0
    %v8047 = vadd.f32 %v7419, %v8046
    %v8048 = vpop.f32.mrf.mxu0
    %v8049 = vpop.f32.mrf.mxu0
    %v8050 = vpop.f32.mrf.mxu0
    %8051 = vdwg.mxu0
    %8052 = vmatprep.subr.bf16.mxu0 0
    %8053 = vmatpush1.bf16.msra.mxu0 %v7836
    %8054 = vmatprep.subr.bf16.mxu0 0
    %8055 = vmatpush1.bf16.msra.mxu0 %v7835
    %8056 = vmatprep.subr.bf16.mxu0 0
    %8057 = vmatpush1.bf16.msra.mxu0 %v7834
    %8058 = vmatprep.subr.bf16.mxu0 0
    %8059 = vmatpush1.bf16.msra.mxu0 %v7833
    %8060 = vmatprep.subr.bf16.mxu0 0
    %8061 = vmatpush1.bf16.msra.mxu0 %v7832
    %8062 = vmatprep.subr.bf16.mxu0 0
    %8063 = vmatpush1.bf16.msra.mxu0 %v7831
    %8064 = vmatprep.subr.bf16.mxu0 0
    %8065 = vmatpush1.bf16.msra.mxu0 %v7830
    %8066 = vmatprep.subr.bf16.mxu0 0
    %8067 = vmatpush1.bf16.msra.mxu0 %v7829
    %8068 = vmatprep.subr.bf16.mxu0 0
    %8069 = vmatpush2.bf16.msra.mxu0 %v7844
    %8070 = vmatprep.subr.bf16.mxu0 0
    %8071 = vmatpush2.bf16.msra.mxu0 %v7843
    %8072 = vmatprep.subr.bf16.mxu0 0
    %8073 = vmatpush2.bf16.msra.mxu0 %v7842
    %8074 = vmatprep.subr.bf16.mxu0 0
    %8075 = vmatpush2.bf16.msra.mxu0 %v7841
    %8076 = vmatprep.subr.bf16.mxu0 0
    %8077 = vmatpush2.bf16.msra.mxu0 %v7840
    %8078 = vmatprep.subr.bf16.mxu0 0
    %8079 = vmatpush2.bf16.msra.mxu0 %v7839
    %8080 = vmatprep.subr.bf16.mxu0 0
    %8081 = vmatpush2.bf16.msra.mxu0 %v7838
    %8082 = vmatprep.subr.bf16.mxu0 0
    %8083 = vmatpush2.bf16.msra.mxu0 %v7837
    %8084 = vmatprep.mubr.bf16.mxu0 %v7208
    %8085 = vmatmul.mubr.bf16.gmra.mxu0 %v7207
    %v8086 = vpop.f32.mrf.mxu0
    %v8087 = vadd.f32 %v8047, %v8086
    %v8088 = vpop.f32.mrf.mxu0
    %v8089 = vpop.f32.mrf.mxu0
    %v8090 = vpop.f32.mrf.mxu0
    %8091 = vdwg.mxu0
    %8092 = vmatprep.subr.bf16.mxu0 0
    %8093 = vmatpush1.bf16.msra.mxu0 %v7852
    %8094 = vmatprep.subr.bf16.mxu0 0
    %8095 = vmatpush1.bf16.msra.mxu0 %v7851
    %8096 = vmatprep.subr.bf16.mxu0 0
    %8097 = vmatpush1.bf16.msra.mxu0 %v7850
    %8098 = vmatprep.subr.bf16.mxu0 0
    %8099 = vmatpush1.bf16.msra.mxu0 %v7849
    %8100 = vmatprep.subr.bf16.mxu0 0
    %8101 = vmatpush1.bf16.msra.mxu0 %v7848
    %8102 = vmatprep.subr.bf16.mxu0 0
    %8103 = vmatpush1.bf16.msra.mxu0 %v7847
    %8104 = vmatprep.subr.bf16.mxu0 0
    %8105 = vmatpush1.bf16.msra.mxu0 %v7846
    %8106 = vmatprep.subr.bf16.mxu0 0
    %8107 = vmatpush1.bf16.msra.mxu0 %v7845
    %8108 = vmatprep.subr.bf16.mxu0 0
    %8109 = vmatpush2.bf16.msra.mxu0 %v7860
    %8110 = vmatprep.subr.bf16.mxu0 0
    %8111 = vmatpush2.bf16.msra.mxu0 %v7859
    %8112 = vmatprep.subr.bf16.mxu0 0
    %8113 = vmatpush2.bf16.msra.mxu0 %v7858
    %8114 = vmatprep.subr.bf16.mxu0 0
    %8115 = vmatpush2.bf16.msra.mxu0 %v7857
    %8116 = vmatprep.subr.bf16.mxu0 0
    %8117 = vmatpush2.bf16.msra.mxu0 %v7856
    %8118 = vmatprep.subr.bf16.mxu0 0
    %8119 = vmatpush2.bf16.msra.mxu0 %v7855
    %8120 = vmatprep.subr.bf16.mxu0 0
    %8121 = vmatpush2.bf16.msra.mxu0 %v7854
    %8122 = vmatprep.subr.bf16.mxu0 0
    %8123 = vmatpush2.bf16.msra.mxu0 %v7853
    %8124 = vmatprep.mubr.bf16.mxu0 %v7210
    %8125 = vmatmul.mubr.bf16.gmra.mxu0 %v7209
    %v8126 = vpop.f32.mrf.mxu0
    %v8127 = vadd.f32 %v8087, %v8126
    %v8128 = vpop.f32.mrf.mxu0
    %v8129 = vpop.f32.mrf.mxu0
    %v8130 = vpop.f32.mrf.mxu0
    %8131 = vdwg.mxu0
    %8132 = vmatprep.subr.bf16.mxu0 0
    %8133 = vmatpush1.bf16.msra.mxu0 %v7868
    %8134 = vmatprep.subr.bf16.mxu0 0
    %8135 = vmatpush1.bf16.msra.mxu0 %v7867
    %8136 = vmatprep.subr.bf16.mxu0 0
    %8137 = vmatpush1.bf16.msra.mxu0 %v7866
    %8138 = vmatprep.subr.bf16.mxu0 0
    %8139 = vmatpush1.bf16.msra.mxu0 %v7865
    %8140 = vmatprep.subr.bf16.mxu0 0
    %8141 = vmatpush1.bf16.msra.mxu0 %v7864
    %8142 = vmatprep.subr.bf16.mxu0 0
    %8143 = vmatpush1.bf16.msra.mxu0 %v7863
    %8144 = vmatprep.subr.bf16.mxu0 0
    %8145 = vmatpush1.bf16.msra.mxu0 %v7862
    %8146 = vmatprep.subr.bf16.mxu0 0
    %8147 = vmatpush1.bf16.msra.mxu0 %v7861
    %8148 = vmatprep.subr.bf16.mxu0 0
    %8149 = vmatpush2.bf16.msra.mxu0 %v7876
    %8150 = vmatprep.subr.bf16.mxu0 0
    %8151 = vmatpush2.bf16.msra.mxu0 %v7875
    %8152 = vmatprep.subr.bf16.mxu0 0
    %8153 = vmatpush2.bf16.msra.mxu0 %v7874
    %8154 = vmatprep.subr.bf16.mxu0 0
    %8155 = vmatpush2.bf16.msra.mxu0 %v7873
    %8156 = vmatprep.subr.bf16.mxu0 0
    %8157 = vmatpush2.bf16.msra.mxu0 %v7872
    %8158 = vmatprep.subr.bf16.mxu0 0
    %8159 = vmatpush2.bf16.msra.mxu0 %v7871
    %8160 = vmatprep.subr.bf16.mxu0 0
    %8161 = vmatpush2.bf16.msra.mxu0 %v7870
    %8162 = vmatprep.subr.bf16.mxu0 0
    %8163 = vmatpush2.bf16.msra.mxu0 %v7869
    %8164 = vmatprep.mubr.bf16.mxu0 %v7212
    %8165 = vmatmul.mubr.bf16.gmra.mxu0 %v7211
    %v8166 = vpop.f32.mrf.mxu0
    %v8167 = vadd.f32 %v8127, %v8166
    %v8168 = vpop.f32.mrf.mxu0
    %v8169 = vpop.f32.mrf.mxu0
    %v8170 = vpop.f32.mrf.mxu0
    %8171 = vdwg.mxu0
    %8172 = vmatprep.subr.bf16.mxu0 0
    %8173 = vmatpush1.bf16.msra.mxu0 %v7884
    %8174 = vmatprep.subr.bf16.mxu0 0
    %8175 = vmatpush1.bf16.msra.mxu0 %v7883
    %8176 = vmatprep.subr.bf16.mxu0 0
    %8177 = vmatpush1.bf16.msra.mxu0 %v7882
    %8178 = vmatprep.subr.bf16.mxu0 0
    %8179 = vmatpush1.bf16.msra.mxu0 %v7881
    %8180 = vmatprep.subr.bf16.mxu0 0
    %8181 = vmatpush1.bf16.msra.mxu0 %v7880
    %8182 = vmatprep.subr.bf16.mxu0 0
    %8183 = vmatpush1.bf16.msra.mxu0 %v7879
    %8184 = vmatprep.subr.bf16.mxu0 0
    %8185 = vmatpush1.bf16.msra.mxu0 %v7878
    %8186 = vmatprep.subr.bf16.mxu0 0
    %8187 = vmatpush1.bf16.msra.mxu0 %v7877
    %8188 = vmatprep.subr.bf16.mxu0 0
    %8189 = vmatpush2.bf16.msra.mxu0 %v7892
    %8190 = vmatprep.subr.bf16.mxu0 0
    %8191 = vmatpush2.bf16.msra.mxu0 %v7891
    %8192 = vmatprep.subr.bf16.mxu0 0
    %8193 = vmatpush2.bf16.msra.mxu0 %v7890
    %8194 = vmatprep.subr.bf16.mxu0 0
    %8195 = vmatpush2.bf16.msra.mxu0 %v7889
    %8196 = vmatprep.subr.bf16.mxu0 0
    %8197 = vmatpush2.bf16.msra.mxu0 %v7888
    %8198 = vmatprep.subr.bf16.mxu0 0
    %8199 = vmatpush2.bf16.msra.mxu0 %v7887
    %8200 = vmatprep.subr.bf16.mxu0 0
    %8201 = vmatpush2.bf16.msra.mxu0 %v7886
    %8202 = vmatprep.subr.bf16.mxu0 0
    %8203 = vmatpush2.bf16.msra.mxu0 %v7885
    %8204 = vmatprep.mubr.bf16.mxu0 %v7214
    %8205 = vmatmul.mubr.bf16.gmra.mxu0 %v7213
    %v8206 = vpop.f32.mrf.mxu0
    %v8207 = vadd.f32 %v8167, %v8206
    %v8208 = vpop.f32.mrf.mxu0
    %v8209 = vpop.f32.mrf.mxu0
    %v8210 = vpop.f32.mrf.mxu0
    %8211 = vdwg.mxu0
    %8212 = vmatprep.subr.bf16.mxu0 0
    %8213 = vmatpush1.bf16.msra.mxu0 %v7900
    %8214 = vmatprep.subr.bf16.mxu0 0
    %8215 = vmatpush1.bf16.msra.mxu0 %v7899
    %8216 = vmatprep.subr.bf16.mxu0 0
    %8217 = vmatpush1.bf16.msra.mxu0 %v7898
    %8218 = vmatprep.subr.bf16.mxu0 0
    %8219 = vmatpush1.bf16.msra.mxu0 %v7897
    %8220 = vmatprep.subr.bf16.mxu0 0
    %8221 = vmatpush1.bf16.msra.mxu0 %v7896
    %8222 = vmatprep.subr.bf16.mxu0 0
    %8223 = vmatpush1.bf16.msra.mxu0 %v7895
    %8224 = vmatprep.subr.bf16.mxu0 0
    %8225 = vmatpush1.bf16.msra.mxu0 %v7894
    %8226 = vmatprep.subr.bf16.mxu0 0
    %8227 = vmatpush1.bf16.msra.mxu0 %v7893
    %8228 = vmatprep.subr.bf16.mxu0 0
    %8229 = vmatpush2.bf16.msra.mxu0 %v7908
    %8230 = vmatprep.subr.bf16.mxu0 0
    %8231 = vmatpush2.bf16.msra.mxu0 %v7907
    %8232 = vmatprep.subr.bf16.mxu0 0
    %8233 = vmatpush2.bf16.msra.mxu0 %v7906
    %8234 = vmatprep.subr.bf16.mxu0 0
    %8235 = vmatpush2.bf16.msra.mxu0 %v7905
    %8236 = vmatprep.subr.bf16.mxu0 0
    %8237 = vmatpush2.bf16.msra.mxu0 %v7904
    %8238 = vmatprep.subr.bf16.mxu0 0
    %8239 = vmatpush2.bf16.msra.mxu0 %v7903
    %8240 = vmatprep.subr.bf16.mxu0 0
    %8241 = vmatpush2.bf16.msra.mxu0 %v7902
    %8242 = vmatprep.subr.bf16.mxu0 0
    %8243 = vmatpush2.bf16.msra.mxu0 %v7901
    %8244 = vmatprep.mubr.bf16.mxu0 %v7216
    %8245 = vmatmul.mubr.bf16.gmra.mxu0 %v7215
    %v8246 = vpop.f32.mrf.mxu0
    %v8247 = vadd.f32 %v8207, %v8246
    %v8248 = vpop.f32.mrf.mxu0
    %v8249 = vpop.f32.mrf.mxu0
    %v8250 = vpop.f32.mrf.mxu0
    %8251 = vdwg.mxu0
    %8252 = vmatprep.subr.bf16.mxu0 0
    %8253 = vmatpush1.bf16.msra.mxu0 0
    %8254 = vmatprep.subr.bf16.mxu0 0
    %8255 = vmatpush1.bf16.msra.mxu0 0
    %8256 = vmatprep.subr.bf16.mxu0 0
    %8257 = vmatpush1.bf16.msra.mxu0 0
    %8258 = vmatprep.subr.bf16.mxu0 0
    %8259 = vmatpush1.bf16.msra.mxu0 0
    %8260 = vmatprep.subr.bf16.mxu0 0
    %8261 = vmatpush1.bf16.msra.mxu0 0
    %8262 = vmatprep.subr.bf16.mxu0 0
    %8263 = vmatpush1.bf16.msra.mxu0 0
    %8264 = vmatprep.subr.bf16.mxu0 0
    %8265 = vmatpush1.bf16.msra.mxu0 %v7910
    %8266 = vmatprep.subr.bf16.mxu0 0
    %8267 = vmatpush1.bf16.msra.mxu0 %v7909
    %8268 = vmatprep.subr.bf16.mxu0 0
    %8269 = vmatpush2.bf16.msra.mxu0 0
    %8270 = vmatprep.subr.bf16.mxu0 0
    %8271 = vmatpush2.bf16.msra.mxu0 0
    %8272 = vmatprep.subr.bf16.mxu0 0
    %8273 = vmatpush2.bf16.msra.mxu0 0
    %8274 = vmatprep.subr.bf16.mxu0 0
    %8275 = vmatpush2.bf16.msra.mxu0 0
    %8276 = vmatprep.subr.bf16.mxu0 0
    %8277 = vmatpush2.bf16.msra.mxu0 0
    %8278 = vmatprep.subr.bf16.mxu0 0
    %8279 = vmatpush2.bf16.msra.mxu0 0
    %8280 = vmatprep.subr.bf16.mxu0 0
    %8281 = vmatpush2.bf16.msra.mxu0 0
    %8282 = vmatprep.subr.bf16.mxu0 0
    %8283 = vmatpush2.bf16.msra.mxu0 0
    %8284 = vmatprep.mubr.bf16.mxu0 0
    %8285 = vmatmul.mubr.bf16.gmra.mxu0 %v8010
    %v8286 = vpop.f32.mrf.mxu0
    %v8287 = vadd.f32 %v8247, %v8286
    %v8288 = vpop.f32.mrf.mxu0
    %v8289 = vpop.f32.mrf.mxu0
    %v8290 = vpop.f32.mrf.mxu0
    %8291 = vdwg.mxu0
    %v8292 = vmax.f32 %v8287, 0.0
    %v8293 = vpack.c.bf16 %v8292, %v8292
    %v8294 = vld [vmem:[%s7] sm:$0xf]
    %v8295 = vld [vmem:[%s7 + $0x4] sm:$0xf]
    %v8296 = vld [vmem:[%s7 + $0x8] sm:$0xf]
    %v8297 = vld [vmem:[%s7 + $0xc] sm:$0xf]
    %v8298 = vld [vmem:[%s7 + $0x10] sm:$0xf]
    %v8299 = vld [vmem:[%s7 + $0x14] sm:$0xf]
    %v8300 = vld [vmem:[%s7 + $0x18] sm:$0xf]
    %v8301 = vld [vmem:[%s7 + $0x1c] sm:$0xf]
    %v8302 = vld [vmem:[#allocation11] sm:$0x1]
    %v8304 = vlaneseq
    %v8305 = vshrl.u32 %v8304, 7
    %v8306 = vsub.s32 0, %v8305
    %v8307 = vrot.slane %v8302, %v8306
    %v8317 = vunpack.c.l.b16 %v8294
    %v8318 = vunpack.c.l.b16 %v8295
    %v8319 = vunpack.c.l.b16 %v8296
    %v8320 = vunpack.c.l.b16 %v8297
    %v8321 = vunpack.c.l.b16 %v8298
    %v8322 = vunpack.c.l.b16 %v8299
    %v8323 = vunpack.c.l.b16 %v8300
    %v8324 = vunpack.c.l.b16 %v8301
    %v8325 = vpack.c.b16 %v8318, %v8317
    %v8326 = vpack.c.b16 %v8320, %v8319
    %v8327 = vpack.c.b16 %v8322, %v8321
    %v8328 = vpack.c.b16 %v8324, %v8323
    %v8334 = vsel %vm1697, %v8293, 0
    %8336 = vmatprep.subr.bf16.mxu0 0
    %8337 = vmatpush1.bf16.msra.mxu0 0
    %8338 = vmatprep.subr.bf16.mxu0 0
    %8339 = vmatpush1.bf16.msra.mxu0 0
    %8340 = vmatprep.subr.bf16.mxu0 0
    %8341 = vmatpush1.bf16.msra.mxu0 0
    %8342 = vmatprep.subr.bf16.mxu0 0
    %8343 = vmatpush1.bf16.msra.mxu0 0
    %8344 = vmatprep.subr.bf16.mxu0 0
    %8345 = vmatpush1.bf16.msra.mxu0 %v8328
    %8346 = vmatprep.subr.bf16.mxu0 0
    %8347 = vmatpush1.bf16.msra.mxu0 %v8327
    %8348 = vmatprep.subr.bf16.mxu0 0
    %8349 = vmatpush1.bf16.msra.mxu0 %v8326
    %8350 = vmatprep.subr.bf16.mxu0 0
    %8351 = vmatpush1.bf16.msra.mxu0 %v8325
    %8352 = vmatprep.subr.bf16.mxu0 0
    %8353 = vmatpush2.bf16.msra.mxu0 0
    %8354 = vmatprep.subr.bf16.mxu0 0
    %8355 = vmatpush2.bf16.msra.mxu0 0
    %8356 = vmatprep.subr.bf16.mxu0 0
    %8357 = vmatpush2.bf16.msra.mxu0 0
    %8358 = vmatprep.subr.bf16.mxu0 0
    %8359 = vmatpush2.bf16.msra.mxu0 0
    %8360 = vmatprep.subr.bf16.mxu0 0
    %8361 = vmatpush2.bf16.msra.mxu0 0
    %8362 = vmatprep.subr.bf16.mxu0 0
    %8363 = vmatpush2.bf16.msra.mxu0 0
    %8364 = vmatprep.subr.bf16.mxu0 0
    %8365 = vmatpush2.bf16.msra.mxu0 0
    %8366 = vmatprep.subr.bf16.mxu0 0
    %8367 = vmatpush2.bf16.msra.mxu0 0
    %8368 = vmatprep.mubr.bf16.mxu0 0
    %8369 = vmatmul.mubr.bf16.gmra.mxu0 %v8334
    %v8370 = vpop.f32.mrf.mxu0
    %v8371 = vadd.f32 %v8307, %v8370
    %v8372 = vpop.f32.mrf.mxu0
    %v8373 = vpop.f32.mrf.mxu0
    %v8374 = vpop.f32.mrf.mxu0
    %8375 = vdwg.mxu0
    %vm8376 = vcmask 74752
    %v8377 = vsel %vm8376, %v8371, -inf
    %8378 = vmax.xlane.f32.xlu0 %v8377
    %v8379 = vpop.xlane.xlu0 %8378
    %v8380 = vsub.f32 %v8371, %v8379
    %v8381 = vmul.f32 %v8380, 1.442695
    %v8382 = vpow.pop %v8381
    %v8383 = vsel %vm8376, %v8382, 0.0
    %8384 = vadd.xlane.f32.xlu0 %v8383
    %v8385 = vpop.xlane.xlu0 %8384
    %v8386 = vrcp.pop %v8385
    %v8387 = vmul.f32 %v8382, %v8386
    %8388 = vst.msk [vmem:[#allocation13] sm:$0x3] %vm8376, %v8387
    // Predicated region
    $region62: #{tpu_custom_call.1} parent=1 // pred_check
      _
    $region63: #{tpu_custom_call.1} parent=1 // pred_check_branch
      %8390 = sbr.rel (0) target = $region65
    $region64: #{tpu_custom_call.1} parent=1 // pred_region
      %s8392 = ssub.s32 32, 32
      %8393 = vsyncadd [#allocation4], %s8392
      %s8395 = sshll.u32 [#allocation13], 4
      %s8396 = int_to_ptr.vmem [resolvable:$true] %s8395
      %8398 = dma.vmem_to_hbm [thread:$0]  %s8396, 32, %s9, [#allocation4]
    $region65: #{tpu_custom_call.1} parent=1 // pred_fallthru
      _
    // Predicated region
    $region66: #{tpu_custom_call.1} parent=1 // pred_check
      _
    $region67: #{tpu_custom_call.1} parent=1 // pred_check_branch
      %8400 = sbr.rel (0) target = $region69
    $region68: #{tpu_custom_call.1} parent=1 // pred_region
      %8401 = dma.done [#allocation4], 32
    $region69: #{tpu_custom_call.1} parent=1 // pred_fallthru
      _
    %8402 = vsyncpa [#allocation3], 1
    %8403 = vsyncpa [#allocation6], 1
    %8404 = vsyncpa [#allocation9], 1
    %8405 = vsyncpa [#allocation12], 1
    %8406 = vsyncpa [#allocation4], 1

</llo_original>
